<compile_context>
chip_gen: v6e
topology: v6e:2x2x1
jax: 0.10.0
libtpu: 0.0.40
codegen_flags: <defaults>
</compile_context>

<pallas_src>
import functools

import numpy as np
import jax
import jax.numpy as jnp
from jax.experimental import pallas as pl
from jax.experimental.pallas import tpu as pltpu

LEAKY_SLOPE = 0.2
BN_EPS = 1e-5
OUT_W = 128  # lane-dense head output width: [dis | aux(num_classes) | zero pad]


# ----------------------------------------------------------------------------
# Fused whole-network kernel (one grid step == one image)
# ----------------------------------------------------------------------------
def _fused_disc_kernel(*refs, layer_cfg, num_classes, T):
    """refs layout:
      refs[0]              : (H, W*Cin0) image rows (input)
      refs[1 : 1+L]        : (3, (Win+2)*Cin, Wout*Cout) bf16 block-banded tap weights
      refs[1+L : 1+2L]     : (1, Wout*Cout) f32 folded-BN shift rows
      refs[1+2L]           : (Hf, Wf*Cf, OUT_W) f32 fused FC head weight
      refs[2+2L]           : (1, OUT_W) f32 fused FC head bias
      refs[3+2L]           : (1, OUT_W) f32 output
      refs[4+2L : 4+3L]    : per-layer zero-padded activation VMEM scratch
    """
    L = len(layer_cfg)
    x_ref = refs[0]
    w_refs = refs[1:1 + L]
    sh_refs = refs[1 + L:1 + 2 * L]
    whead_ref = refs[1 + 2 * L]
    bhead_ref = refs[2 + 2 * L]
    o_ref = refs[3 + 2 * L]
    pad_refs = refs[4 + 2 * L:4 + 3 * L]

    # Zero the padded activation buffers (only the borders really need it).
    for p in pad_refs:
        p[...] = jnp.zeros(p.shape, p.dtype)

    # Stage the image into the first padded buffer's interior.
    H0, W0, C0 = layer_cfg[0][0], layer_cfg[0][1], layer_cfg[0][2]
    pad_refs[0][1:1 + H0, C0:C0 + W0 * C0] = x_ref[...]

    feat = None
    for l, (Hin, Win, Cin, Hout, Wout, Cout, stride) in enumerate(layer_cfg):
        Hp = Hin + 2
        padvals = pad_refs[l][...] if stride != 1 else None
        acc = None
        for kh in range(3):
            if stride == 1:
                # rows[ho] = xpad[ho + kh]  (contiguous static slice)
                rows = pad_refs[l][kh:kh + Hout, :]
            else:
                # rows[ho] = xpad[stride*ho + kh] via a tiny 0/1 selection matmul
                i0 = jax.lax.broadcasted_iota(jnp.int32, (Hout, Hp), 0)
                i1 = jax.lax.broadcasted_iota(jnp.int32, (Hout, Hp), 1)
                sel = (i1 == stride * i0 + kh).astype(jnp.float32)
                rows = jnp.dot(sel, padvals, preferred_element_type=jnp.float32)
            t = jnp.dot(rows, w_refs[l][kh].astype(jnp.float32),
                        preferred_element_type=jnp.float32)
            acc = t if acc is None else acc + t
        y = acc + sh_refs[l][...]                     # folded-BN shift (bias)
        y = jnp.maximum(y, LEAKY_SLOPE * y)           # leaky_relu(0.2)
        # Dropout(0.5): identity at inference (see TODO at top).
        if l + 1 < L:
            nH, nW, nC = layer_cfg[l + 1][0], layer_cfg[l + 1][1], layer_cfg[l + 1][2]
            pad_refs[l + 1][1:1 + nH, nC:nC + nW * nC] = y
        else:
            feat = y                                  # (Hf, Wf*Cf)

    # Fused FC heads: z = feat_flat @ [fc_dis | fc_aux | 0] + b   (one 128-lane row)
    z = bhead_ref[...]
    for ho in range(feat.shape[0]):
        z = z + jnp.dot(feat[ho:ho + 1, :], whead_ref[ho],
                        preferred_element_type=jnp.float32)

    col = jax.lax.broadcasted_iota(jnp.int32, z.shape, 1)
    sig = 1.0 / (1.0 + jnp.exp(-z))                          # sigmoid(fc_dis)
    valid = jnp.logical_and(col >= 1, col <= num_classes)    # fc_aux columns
    zs = jnp.where(valid, z * (1.0 / T), -1e30)
    m = jnp.max(zs, axis=-1, keepdims=True)
    e = jnp.where(valid, jnp.exp(zs - m), 0.0)
    probs = e / jnp.sum(e, axis=-1, keepdims=True)           # exact softmax(fc_aux / T)
    o_ref[...] = jnp.where(col == 0, sig, probs)


# ----------------------------------------------------------------------------
# Parameter construction + packing (done once, outside the forward)
# ----------------------------------------------------------------------------
def init_params(key, d, c, num_classes, H=32, W=32):
    """Synthetic Discriminator parameters, pre-packed for the fused kernel.

    Returns (prep, ref): kernel-ready packed params, plus plain-JAX params that
    use the same (bf16-rounded) folded conv weights for an fp32 reference.
    """
    ch_cfg = [(c, d, 2, False), (d, 2 * d, 1, True), (2 * d, 4 * d, 2, True),
              (4 * d, 8 * d, 1, True), (8 * d, 16 * d, 2, True), (16 * d, 32 * d, 1, True)]
    layer_cfg, tap_w, shift_rows, ref_convs = [], [], [], []
    h, w = H, W
    k = key
    for (cin, cout, stride, has_bn) in ch_cfg:
        k, kw, kg, kb, km, kv = jax.random.split(k, 6)
        wconv = 0.02 * jax.random.normal(kw, (3, 3, cin, cout), jnp.float32)
        if has_bn:
            gamma = 1.0 + 0.02 * jax.random.normal(kg, (cout,), jnp.float32)
            beta = 0.02 * jax.random.normal(kb, (cout,), jnp.float32)
            rmean = 0.02 * jax.random.normal(km, (cout,), jnp.float32)
            rvar = 1.0 + 0.01 * jnp.abs(jax.random.normal(kv, (cout,), jnp.float32))
            scale = gamma / jnp.sqrt(rvar + BN_EPS)
            shift = beta - rmean * scale
        else:
            scale = jnp.ones((cout,), jnp.float32)
            shift = jnp.zeros((cout,), jnp.float32)
        hout = (h - 1) // stride + 1
        wout = (w - 1) // stride + 1

        # Fold the BN scale into the conv weight; round to bf16 once (storage dtype).
        folded = (wconv * scale[None, None, None, :]).astype(jnp.bfloat16).astype(jnp.float32)
        fb = np.asarray(folded)                                   # (3, 3, cin, cout)

        # Block-banded per-tap weight: maps one padded input row ((w+2)*cin) to
        # one output row (wout*cout); the W stride/offsets are baked in here.
        big = np.zeros((3, (w + 2) * cin, wout * cout), np.float32)
        for kh in range(3):
            for wo in range(wout):
                for kw2 in range(3):
                    j = stride * wo + kw2
                    big[kh, j * cin:(j + 1) * cin, wo * cout:(wo + 1) * cout] = fb[kh, kw2]
        tap_w.append(jnp.asarray(big, dtype=jnp.bfloat16))
        shift_rows.append(jnp.tile(shift, wout).reshape(1, wout * cout).astype(jnp.float32))
        ref_convs.append((folded, shift, stride))
        layer_cfg.append((h, w, cin, hout, wout, cout, stride))
        h, w = hout, wout

    c_last = ch_cfg[-1][1]
    feat_dim = h * w * c_last                                     # 4*4*32*d
    k, k1, k2, k3, k4 = jax.random.split(k, 5)
    fc_dis_w = 0.02 * jax.random.normal(k1, (feat_dim, 1), jnp.float32)
    fc_dis_b = 0.02 * jax.random.normal(k2, (1,), jnp.float32)
    fc_aux_w = 0.02 * jax.random.normal(k3, (feat_dim, num_classes), jnp.float32)
    fc_aux_b = 0.02 * jax.random.normal(k4, (num_classes,), jnp.float32)

    assert 1 + num_classes <= OUT_W
    wcomb = jnp.zeros((feat_dim, OUT_W), jnp.float32)
    wcomb = wcomb.at[:, 0:1].set(fc_dis_w).at[:, 1:1 + num_classes].set(fc_aux_w)
    w_head = wcomb.reshape(h, w * c_last, OUT_W)                  # rows = final H
    b_head = jnp.zeros((1, OUT_W), jnp.float32)
    b_head = b_head.at[0, 0].set(fc_dis_b[0]).at[0, 1:1 + num_classes].set(fc_aux_b)

    prep = dict(layer_cfg=tuple(layer_cfg), tap_w=tap_w, shift_rows=shift_rows,
                w_head=w_head, b_head=b_head, num_classes=num_classes)
    ref = dict(convs=ref_convs, fc_dis_w=fc_dis_w, fc_dis_b=fc_dis_b,
               fc_aux_w=fc_aux_w, fc_aux_b=fc_aux_b, num_classes=num_classes)
    return prep, ref


# ----------------------------------------------------------------------------
# Forward pass (single fused pallas_call)
# ----------------------------------------------------------------------------
def discriminator_forward(prep, img, T=1.0):
    """img: (N, H, W, c) NHWC (32x32 so the final feature map is 4x4).

    Returns (sigmoid(fc_dis)  -> (N,),  softmax(fc_aux / T) -> (N, num_classes)).
    """
    N, H, W, c = img.shape
    cfg = prep["layer_cfg"]
    assert (H, W, c) == (cfg[0][0], cfg[0][1], cfg[0][2])
    x_rows = img.reshape(N, H, W * c).astype(jnp.float32)     # free metadata reshape

    kernel = functools.partial(_fused_disc_kernel, layer_cfg=cfg,
                               num_classes=prep["num_classes"], T=float(T))

    in_specs = [pl.BlockSpec((None, H, W * c), lambda i: (i, 0, 0))]
    inputs = [x_rows]
    for wt in prep["tap_w"]:
        in_specs.append(pl.BlockSpec(wt.shape, lambda i: (0, 0, 0)))
        inputs.append(wt)
    for sh in prep["shift_rows"]:
        in_specs.append(pl.BlockSpec(sh.shape, lambda i: (0, 0)))
        inputs.append(sh)
    in_specs.append(pl.BlockSpec(prep["w_head"].shape, lambda i: (0, 0, 0)))
    inputs.append(prep["w_head"])
    in_specs.append(pl.BlockSpec(prep["b_head"].shape, lambda i: (0, 0)))
    inputs.append(prep["b_head"])

    scratch = [pltpu.VMEM((Hin + 2, (Win + 2) * Cin), jnp.float32)
               for (Hin, Win, Cin, _, _, _, _) in cfg]

    out = pl.pallas_call(
        kernel,
        out_shape=jax.ShapeDtypeStruct((N, 1, OUT_W), jnp.float32),
        grid=(N,),
        in_specs=in_specs,
        out_specs=pl.BlockSpec((None, 1, OUT_W), lambda i: (i, 0, 0)),
        scratch_shapes=scratch,
        compiler_params=pltpu.CompilerParams(dimension_semantics=("parallel",)),
    )(*inputs)

    head = out.reshape(N, OUT_W)
    nc = prep["num_classes"]
    return head[:, 0], head[:, 1:1 + nc]


# ----------------------------------------------------------------------------
# Plain-JAX fp32 reference (same folded/rounded weights, NHWC)
# ----------------------------------------------------------------------------
def reference_forward(ref, img, T=1.0):
    hp = jax.lax.Precision.HIGHEST
    x = img.astype(jnp.float32)
    for (wf, shift, stride) in ref["convs"]:
        y = jax.lax.conv_general_dilated(
            x, wf, window_strides=(stride, stride), padding=((1, 1), (1, 1)),
            dimension_numbers=("NHWC", "HWIO", "NHWC"), precision=hp)
        y = y + shift[None, None, None, :]
        x = jnp.maximum(y, LEAKY_SLOPE * y)
    feat = x.reshape(x.shape[0], -1)
    z_dis = jnp.dot(feat, ref["fc_dis_w"], precision=hp) + ref["fc_dis_b"]
    z_aux = jnp.dot(feat, ref["fc_aux_w"], precision=hp) + ref["fc_aux_b"]
    return jax.nn.sigmoid(z_dis[:, 0]), jax.nn.softmax(z_aux / T, axis=-1)


# ----------------------------------------------------------------------------
if __name__ == "__main__":
    # Small shapes consistent with the module: d=4, c=1, 32x32 input so the
    # final feature map is 4x4 as required by fc_dis/fc_aux.
    d, c, num_classes = 4, 1, 10
    N, H, W = 2, 32, 32

    key = jax.random.PRNGKey(0)
    kp, ki = jax.random.split(key)
    prep, ref = init_params(kp, d, c, num_classes, H, W)
    img = jax.random.normal(ki, (N, H, W, c), jnp.float32)

    dis, aux = discriminator_forward(prep, img, T=1.0)
    jax.block_until_ready((dis, aux))

    assert dis.shape == (N,)
    assert aux.shape == (N, num_classes)
    assert bool(jnp.all(jnp.isfinite(dis))) and bool(jnp.all(jnp.isfinite(aux)))
    assert bool(jnp.all((dis >= 0.0) & (dis <= 1.0)))
    assert bool(jnp.all(jnp.abs(jnp.sum(aux, axis=-1) - 1.0) < 1e-3))

    # Validate against the fp32 reference (same bf16-rounded folded weights).
    ref_dis, ref_aux = reference_forward(ref, img, T=1.0)
    assert bool(jnp.max(jnp.abs(dis - ref_dis)) < 2e-2), float(jnp.max(jnp.abs(dis - ref_dis)))
    assert bool(jnp.max(jnp.abs(aux - ref_aux)) < 2e-2), float(jnp.max(jnp.abs(aux - ref_aux)))

    print("KERNEL_OK")
</pallas_src>

<mosaic_0001>
module attributes {stable_mosaic.version = 11 : i64} {
  func.func @_fused_disc_kernel(%arg0: i32, %arg1: memref<1x32x32xf32, #tpu.memory_space<vmem>>, %arg2: memref<3x34x64xbf16, #tpu.memory_space<vmem>>, %arg3: memref<3x72x128xbf16, #tpu.memory_space<vmem>>, %arg4: memref<3x144x128xbf16, #tpu.memory_space<vmem>>, %arg5: memref<3x160x256xbf16, #tpu.memory_space<vmem>>, %arg6: memref<3x320x256xbf16, #tpu.memory_space<vmem>>, %arg7: memref<3x384x512xbf16, #tpu.memory_space<vmem>>, %arg8: memref<1x64xf32, #tpu.memory_space<vmem>>, %arg9: memref<1x128xf32, #tpu.memory_space<vmem>>, %arg10: memref<1x128xf32, #tpu.memory_space<vmem>>, %arg11: memref<1x256xf32, #tpu.memory_space<vmem>>, %arg12: memref<1x256xf32, #tpu.memory_space<vmem>>, %arg13: memref<1x512xf32, #tpu.memory_space<vmem>>, %arg14: memref<4x512x128xf32, #tpu.memory_space<vmem>>, %arg15: memref<1x128xf32, #tpu.memory_space<vmem>>, %arg16: memref<1x1x128xf32, #tpu.memory_space<vmem>>, %arg17: memref<34x34xf32, #tpu.memory_space<vmem>>, %arg18: memref<18x72xf32, #tpu.memory_space<vmem>>, %arg19: memref<18x144xf32, #tpu.memory_space<vmem>>, %arg20: memref<10x160xf32, #tpu.memory_space<vmem>>, %arg21: memref<10x320xf32, #tpu.memory_space<vmem>>, %arg22: memref<6x384xf32, #tpu.memory_space<vmem>>) attributes {dimension_semantics = [#tpu.dimension_semantics<parallel>], iteration_bounds = array<i64: 2>, scalar_prefetch = 0 : i64, scratch_operands = 6 : i64, tpu.core_type = #tpu.core_type<tc>, window_params = [{transform_indices = @transform_0, window_bounds = array<i64: 1, 32, 32>}, {pipeline_mode = #tpu.pipeline_mode<synchronous>, transform_indices = @transform_1, window_bounds = array<i64: 3, 34, 64>}, {pipeline_mode = #tpu.pipeline_mode<synchronous>, transform_indices = @transform_2, window_bounds = array<i64: 3, 72, 128>}, {pipeline_mode = #tpu.pipeline_mode<synchronous>, transform_indices = @transform_3, window_bounds = array<i64: 3, 144, 128>}, {pipeline_mode = #tpu.pipeline_mode<synchronous>, transform_indices = @transform_4, window_bounds = array<i64: 3, 160, 256>}, {pipeline_mode = #tpu.pipeline_mode<synchronous>, transform_indices = @transform_5, window_bounds = array<i64: 3, 320, 256>}, {pipeline_mode = #tpu.pipeline_mode<synchronous>, transform_indices = @transform_6, window_bounds = array<i64: 3, 384, 512>}, {pipeline_mode = #tpu.pipeline_mode<synchronous>, transform_indices = @transform_7, window_bounds = array<i64: 1, 64>}, {pipeline_mode = #tpu.pipeline_mode<synchronous>, transform_indices = @transform_8, window_bounds = array<i64: 1, 128>}, {pipeline_mode = #tpu.pipeline_mode<synchronous>, transform_indices = @transform_9, window_bounds = array<i64: 1, 128>}, {pipeline_mode = #tpu.pipeline_mode<synchronous>, transform_indices = @transform_10, window_bounds = array<i64: 1, 256>}, {pipeline_mode = #tpu.pipeline_mode<synchronous>, transform_indices = @transform_11, window_bounds = array<i64: 1, 256>}, {pipeline_mode = #tpu.pipeline_mode<synchronous>, transform_indices = @transform_12, window_bounds = array<i64: 1, 512>}, {pipeline_mode = #tpu.pipeline_mode<synchronous>, transform_indices = @transform_13, window_bounds = array<i64: 4, 512, 128>}, {pipeline_mode = #tpu.pipeline_mode<synchronous>, transform_indices = @transform_14, window_bounds = array<i64: 1, 128>}, {transform_indices = @transform_15, window_bounds = array<i64: 1, 1, 128>}]} {
    %cst = arith.constant 0.000000e+00 : f32
    %0 = vector.broadcast %cst : f32 to vector<34x34xf32>
    %c0 = arith.constant 0 : index
    %c0_0 = arith.constant 0 : index
    %1 = vector.load %arg17[%c0, %c0_0] : memref<34x34xf32, #tpu.memory_space<vmem>>, vector<34x34xf32>
    tpu.vector_store %arg17[%c0, %c0_0], %0 {strides = array<i32>} : memref<34x34xf32, #tpu.memory_space<vmem>>, vector<34x34xf32>,
    %cst_1 = arith.constant 0.000000e+00 : f32
    %2 = vector.broadcast %cst_1 : f32 to vector<18x72xf32>
    %c0_2 = arith.constant 0 : index
    %c0_3 = arith.constant 0 : index
    %3 = vector.load %arg18[%c0_2, %c0_3] : memref<18x72xf32, #tpu.memory_space<vmem>>, vector<18x72xf32>
    tpu.vector_store %arg18[%c0_2, %c0_3], %2 {strides = array<i32>} : memref<18x72xf32, #tpu.memory_space<vmem>>, vector<18x72xf32>,
    %cst_4 = arith.constant 0.000000e+00 : f32
    %4 = vector.broadcast %cst_4 : f32 to vector<18x144xf32>
    %c0_5 = arith.constant 0 : index
    %c0_6 = arith.constant 0 : index
    %5 = vector.load %arg19[%c0_5, %c0_6] : memref<18x144xf32, #tpu.memory_space<vmem>>, vector<18x144xf32>
    tpu.vector_store %arg19[%c0_5, %c0_6], %4 {strides = array<i32>} : memref<18x144xf32, #tpu.memory_space<vmem>>, vector<18x144xf32>,
    %cst_7 = arith.constant 0.000000e+00 : f32
    %6 = vector.broadcast %cst_7 : f32 to vector<10x160xf32>
    %c0_8 = arith.constant 0 : index
    %c0_9 = arith.constant 0 : index
    %7 = vector.load %arg20[%c0_8, %c0_9] : memref<10x160xf32, #tpu.memory_space<vmem>>, vector<10x160xf32>
    tpu.vector_store %arg20[%c0_8, %c0_9], %6 {strides = array<i32>} : memref<10x160xf32, #tpu.memory_space<vmem>>, vector<10x160xf32>,
    %cst_10 = arith.constant 0.000000e+00 : f32
    %8 = vector.broadcast %cst_10 : f32 to vector<10x320xf32>
    %c0_11 = arith.constant 0 : index
    %c0_12 = arith.constant 0 : index
    %9 = vector.load %arg21[%c0_11, %c0_12] : memref<10x320xf32, #tpu.memory_space<vmem>>, vector<10x320xf32>
    tpu.vector_store %arg21[%c0_11, %c0_12], %8 {strides = array<i32>} : memref<10x320xf32, #tpu.memory_space<vmem>>, vector<10x320xf32>,
    %cst_13 = arith.constant 0.000000e+00 : f32
    %10 = vector.broadcast %cst_13 : f32 to vector<6x384xf32>
    %c0_14 = arith.constant 0 : index
    %c0_15 = arith.constant 0 : index
    %11 = vector.load %arg22[%c0_14, %c0_15] : memref<6x384xf32, #tpu.memory_space<vmem>>, vector<6x384xf32>
    tpu.vector_store %arg22[%c0_14, %c0_15], %10 {strides = array<i32>} : memref<6x384xf32, #tpu.memory_space<vmem>>, vector<6x384xf32>,
    %c0_16 = arith.constant 0 : index
    %c0_17 = arith.constant 0 : index
    %c0_18 = arith.constant 0 : index
    %12 = vector.load %arg1[%c0_16, %c0_17, %c0_18] : memref<1x32x32xf32, #tpu.memory_space<vmem>>, vector<1x32x32xf32>
    %13 = vector.shape_cast %12 : vector<1x32x32xf32> to vector<32x32xf32>
    %c1 = arith.constant 1 : index
    %c1_19 = arith.constant 1 : index
    %14 = vector.load %arg17[%c1, %c1_19] : memref<34x34xf32, #tpu.memory_space<vmem>>, vector<32x32xf32>
    tpu.vector_store %arg17[%c1, %c1_19], %13 {strides = array<i32>} : memref<34x34xf32, #tpu.memory_space<vmem>>, vector<32x32xf32>,
    %c0_20 = arith.constant 0 : index
    %c0_21 = arith.constant 0 : index
    %15 = vector.load %arg17[%c0_20, %c0_21] : memref<34x34xf32, #tpu.memory_space<vmem>>, vector<34x34xf32>
    %16 = tpu.iota {dimensions = array<i32: 0>} : vector<16x34xi32>
    %17 = tpu.iota {dimensions = array<i32: 1>} : vector<16x34xi32>
    %c2_i32 = arith.constant 2 : i32
    %18 = vector.broadcast %c2_i32 : i32 to vector<16x34xi32>
    %19 = arith.muli %18, %16 : vector<16x34xi32>
    %c0_i32 = arith.constant 0 : i32
    %20 = vector.broadcast %c0_i32 : i32 to vector<16x34xi32>
    %21 = arith.addi %19, %20 : vector<16x34xi32>
    %22 = arith.cmpi eq, %17, %21 : vector<16x34xi32>
    %23 = arith.extui %22 : vector<16x34xi1> to vector<16x34xi32>
    %24 = arith.sitofp %23 : vector<16x34xi32> to vector<16x34xf32>
    %cst_22 = arith.constant dense<0.000000e+00> : vector<16x34xf32>
    %25 = tpu.matmul %24, %15, %cst_22 {dimension_numbers = #tpu.dot_dimension_numbers<[1], [0], [0], [1], [0, 0, 1, 1], [], []>} : vector<16x34xf32>, vector<34x34xf32>, vector<16x34xf32> -> vector<16x34xf32>
    %c0_23 = arith.constant 0 : index
    %c0_24 = arith.constant 0 : index
    %c0_25 = arith.constant 0 : index
    %26 = vector.load %arg2[%c0_23, %c0_24, %c0_25] : memref<3x34x64xbf16, #tpu.memory_space<vmem>>, vector<1x34x64xbf16>
    %27 = vector.shape_cast %26 : vector<1x34x64xbf16> to vector<34x64xbf16>
    %28 = arith.extf %27 : vector<34x64xbf16> to vector<34x64xf32>
    %cst_26 = arith.constant dense<0.000000e+00> : vector<16x64xf32>
    %29 = tpu.matmul %25, %28, %cst_26 {dimension_numbers = #tpu.dot_dimension_numbers<[1], [0], [0], [1], [0, 0, 1, 1], [], []>} : vector<16x34xf32>, vector<34x64xf32>, vector<16x64xf32> -> vector<16x64xf32>
    %30 = tpu.iota {dimensions = array<i32: 0>} : vector<16x34xi32>
    %31 = tpu.iota {dimensions = array<i32: 1>} : vector<16x34xi32>
    %c2_i32_27 = arith.constant 2 : i32
    %32 = vector.broadcast %c2_i32_27 : i32 to vector<16x34xi32>
    %33 = arith.muli %32, %30 : vector<16x34xi32>
    %c1_i32 = arith.constant 1 : i32
    %34 = vector.broadcast %c1_i32 : i32 to vector<16x34xi32>
    %35 = arith.addi %33, %34 : vector<16x34xi32>
    %36 = arith.cmpi eq, %31, %35 : vector<16x34xi32>
    %37 = arith.extui %36 : vector<16x34xi1> to vector<16x34xi32>
    %38 = arith.sitofp %37 : vector<16x34xi32> to vector<16x34xf32>
    %cst_28 = arith.constant dense<0.000000e+00> : vector<16x34xf32>
    %39 = tpu.matmul %38, %15, %cst_28 {dimension_numbers = #tpu.dot_dimension_numbers<[1], [0], [0], [1], [0, 0, 1, 1], [], []>} : vector<16x34xf32>, vector<34x34xf32>, vector<16x34xf32> -> vector<16x34xf32>
    %c1_29 = arith.constant 1 : index
    %c0_30 = arith.constant 0 : index
    %c0_31 = arith.constant 0 : index
    %40 = vector.load %arg2[%c1_29, %c0_30, %c0_31] : memref<3x34x64xbf16, #tpu.memory_space<vmem>>, vector<1x34x64xbf16>
    %41 = vector.shape_cast %40 : vector<1x34x64xbf16> to vector<34x64xbf16>
    %42 = arith.extf %41 : vector<34x64xbf16> to vector<34x64xf32>
    %cst_32 = arith.constant dense<0.000000e+00> : vector<16x64xf32>
    %43 = tpu.matmul %39, %42, %cst_32 {dimension_numbers = #tpu.dot_dimension_numbers<[1], [0], [0], [1], [0, 0, 1, 1], [], []>} : vector<16x34xf32>, vector<34x64xf32>, vector<16x64xf32> -> vector<16x64xf32>
    %44 = arith.addf %29, %43 : vector<16x64xf32>
    %45 = tpu.iota {dimensions = array<i32: 0>} : vector<16x34xi32>
    %46 = tpu.iota {dimensions = array<i32: 1>} : vector<16x34xi32>
    %c2_i32_33 = arith.constant 2 : i32
    %47 = vector.broadcast %c2_i32_33 : i32 to vector<16x34xi32>
    %48 = arith.muli %47, %45 : vector<16x34xi32>
    %c2_i32_34 = arith.constant 2 : i32
    %49 = vector.broadcast %c2_i32_34 : i32 to vector<16x34xi32>
    %50 = arith.addi %48, %49 : vector<16x34xi32>
    %51 = arith.cmpi eq, %46, %50 : vector<16x34xi32>
    %52 = arith.extui %51 : vector<16x34xi1> to vector<16x34xi32>
    %53 = arith.sitofp %52 : vector<16x34xi32> to vector<16x34xf32>
    %cst_35 = arith.constant dense<0.000000e+00> : vector<16x34xf32>
    %54 = tpu.matmul %53, %15, %cst_35 {dimension_numbers = #tpu.dot_dimension_numbers<[1], [0], [0], [1], [0, 0, 1, 1], [], []>} : vector<16x34xf32>, vector<34x34xf32>, vector<16x34xf32> -> vector<16x34xf32>
    %c2 = arith.constant 2 : index
    %c0_36 = arith.constant 0 : index
    %c0_37 = arith.constant 0 : index
    %55 = vector.load %arg2[%c2, %c0_36, %c0_37] : memref<3x34x64xbf16, #tpu.memory_space<vmem>>, vector<1x34x64xbf16>
    %56 = vector.shape_cast %55 : vector<1x34x64xbf16> to vector<34x64xbf16>
    %57 = arith.extf %56 : vector<34x64xbf16> to vector<34x64xf32>
    %cst_38 = arith.constant dense<0.000000e+00> : vector<16x64xf32>
    %58 = tpu.matmul %54, %57, %cst_38 {dimension_numbers = #tpu.dot_dimension_numbers<[1], [0], [0], [1], [0, 0, 1, 1], [], []>} : vector<16x34xf32>, vector<34x64xf32>, vector<16x64xf32> -> vector<16x64xf32>
    %59 = arith.addf %44, %58 : vector<16x64xf32>
    %c0_39 = arith.constant 0 : index
    %c0_40 = arith.constant 0 : index
    %60 = vector.load %arg8[%c0_39, %c0_40] : memref<1x64xf32, #tpu.memory_space<vmem>>, vector<1x64xf32>
    %61 = vector.broadcast %60 : vector<1x64xf32> to vector<16x64xf32>
    %62 = arith.addf %59, %61 : vector<16x64xf32>
    %cst_41 = arith.constant 2.000000e-01 : f32
    %63 = vector.broadcast %cst_41 : f32 to vector<16x64xf32>
    %64 = arith.mulf %63, %62 : vector<16x64xf32>
    %65 = arith.maximumf %62, %64 : vector<16x64xf32>
    %c1_42 = arith.constant 1 : index
    %c4 = arith.constant 4 : index
    %66 = vector.load %arg18[%c1_42, %c4] : memref<18x72xf32, #tpu.memory_space<vmem>>, vector<16x64xf32>
    tpu.vector_store %arg18[%c1_42, %c4], %65 {strides = array<i32>} : memref<18x72xf32, #tpu.memory_space<vmem>>, vector<16x64xf32>,
    %c0_43 = arith.constant 0 : index
    %c0_44 = arith.constant 0 : index
    %67 = vector.load %arg18[%c0_43, %c0_44] : memref<18x72xf32, #tpu.memory_space<vmem>>, vector<16x72xf32>
    %c0_45 = arith.constant 0 : index
    %c0_46 = arith.constant 0 : index
    %c0_47 = arith.constant 0 : index
    %68 = vector.load %arg3[%c0_45, %c0_46, %c0_47] : memref<3x72x128xbf16, #tpu.memory_space<vmem>>, vector<1x72x128xbf16>
    %69 = vector.shape_cast %68 : vector<1x72x128xbf16> to vector<72x128xbf16>
    %70 = arith.extf %69 : vector<72x128xbf16> to vector<72x128xf32>
    %cst_48 = arith.constant dense<0.000000e+00> : vector<16x128xf32>
    %71 = tpu.matmul %67, %70, %cst_48 {dimension_numbers = #tpu.dot_dimension_numbers<[1], [0], [0], [1], [0, 0, 1, 1], [], []>} : vector<16x72xf32>, vector<72x128xf32>, vector<16x128xf32> -> vector<16x128xf32>
    %c1_49 = arith.constant 1 : index
    %c0_50 = arith.constant 0 : index
    %72 = vector.load %arg18[%c1_49, %c0_50] : memref<18x72xf32, #tpu.memory_space<vmem>>, vector<16x72xf32>
    %c1_51 = arith.constant 1 : index
    %c0_52 = arith.constant 0 : index
    %c0_53 = arith.constant 0 : index
    %73 = vector.load %arg3[%c1_51, %c0_52, %c0_53] : memref<3x72x128xbf16, #tpu.memory_space<vmem>>, vector<1x72x128xbf16>
    %74 = vector.shape_cast %73 : vector<1x72x128xbf16> to vector<72x128xbf16>
    %75 = arith.extf %74 : vector<72x128xbf16> to vector<72x128xf32>
    %cst_54 = arith.constant dense<0.000000e+00> : vector<16x128xf32>
    %76 = tpu.matmul %72, %75, %cst_54 {dimension_numbers = #tpu.dot_dimension_numbers<[1], [0], [0], [1], [0, 0, 1, 1], [], []>} : vector<16x72xf32>, vector<72x128xf32>, vector<16x128xf32> -> vector<16x128xf32>
    %77 = arith.addf %71, %76 : vector<16x128xf32>
    %c2_55 = arith.constant 2 : index
    %c0_56 = arith.constant 0 : index
    %78 = vector.load %arg18[%c2_55, %c0_56] : memref<18x72xf32, #tpu.memory_space<vmem>>, vector<16x72xf32>
    %c2_57 = arith.constant 2 : index
    %c0_58 = arith.constant 0 : index
    %c0_59 = arith.constant 0 : index
    %79 = vector.load %arg3[%c2_57, %c0_58, %c0_59] : memref<3x72x128xbf16, #tpu.memory_space<vmem>>, vector<1x72x128xbf16>
    %80 = vector.shape_cast %79 : vector<1x72x128xbf16> to vector<72x128xbf16>
    %81 = arith.extf %80 : vector<72x128xbf16> to vector<72x128xf32>
    %cst_60 = arith.constant dense<0.000000e+00> : vector<16x128xf32>
    %82 = tpu.matmul %78, %81, %cst_60 {dimension_numbers = #tpu.dot_dimension_numbers<[1], [0], [0], [1], [0, 0, 1, 1], [], []>} : vector<16x72xf32>, vector<72x128xf32>, vector<16x128xf32> -> vector<16x128xf32>
    %83 = arith.addf %77, %82 : vector<16x128xf32>
    %c0_61 = arith.constant 0 : index
    %c0_62 = arith.constant 0 : index
    %84 = vector.load %arg9[%c0_61, %c0_62] : memref<1x128xf32, #tpu.memory_space<vmem>>, vector<1x128xf32>
    %85 = vector.broadcast %84 : vector<1x128xf32> to vector<16x128xf32>
    %86 = arith.addf %83, %85 : vector<16x128xf32>
    %cst_63 = arith.constant 2.000000e-01 : f32
    %87 = vector.broadcast %cst_63 : f32 to vector<16x128xf32>
    %88 = arith.mulf %87, %86 : vector<16x128xf32>
    %89 = arith.maximumf %86, %88 : vector<16x128xf32>
    %c1_64 = arith.constant 1 : index
    %c8 = arith.constant 8 : index
    %90 = vector.load %arg19[%c1_64, %c8] : memref<18x144xf32, #tpu.memory_space<vmem>>, vector<16x128xf32>
    tpu.vector_store %arg19[%c1_64, %c8], %89 {strides = array<i32>} : memref<18x144xf32, #tpu.memory_space<vmem>>, vector<16x128xf32>,
    %c0_65 = arith.constant 0 : index
    %c0_66 = arith.constant 0 : index
    %91 = vector.load %arg19[%c0_65, %c0_66] : memref<18x144xf32, #tpu.memory_space<vmem>>, vector<18x144xf32>
    %92 = tpu.iota {dimensions = array<i32: 0>} : vector<8x18xi32>
    %93 = tpu.iota {dimensions = array<i32: 1>} : vector<8x18xi32>
    %c2_i32_67 = arith.constant 2 : i32
    %94 = vector.broadcast %c2_i32_67 : i32 to vector<8x18xi32>
    %95 = arith.muli %94, %92 : vector<8x18xi32>
    %c0_i32_68 = arith.constant 0 : i32
    %96 = vector.broadcast %c0_i32_68 : i32 to vector<8x18xi32>
    %97 = arith.addi %95, %96 : vector<8x18xi32>
    %98 = arith.cmpi eq, %93, %97 : vector<8x18xi32>
    %99 = arith.extui %98 : vector<8x18xi1> to vector<8x18xi32>
    %100 = arith.sitofp %99 : vector<8x18xi32> to vector<8x18xf32>
    %cst_69 = arith.constant dense<0.000000e+00> : vector<8x144xf32>
    %101 = tpu.matmul %100, %91, %cst_69 {dimension_numbers = #tpu.dot_dimension_numbers<[1], [0], [0], [1], [0, 0, 1, 1], [], []>} : vector<8x18xf32>, vector<18x144xf32>, vector<8x144xf32> -> vector<8x144xf32>
    %c0_70 = arith.constant 0 : index
    %c0_71 = arith.constant 0 : index
    %c0_72 = arith.constant 0 : index
    %102 = vector.load %arg4[%c0_70, %c0_71, %c0_72] : memref<3x144x128xbf16, #tpu.memory_space<vmem>>, vector<1x144x128xbf16>
    %103 = vector.shape_cast %102 : vector<1x144x128xbf16> to vector<144x128xbf16>
    %104 = arith.extf %103 : vector<144x128xbf16> to vector<144x128xf32>
    %cst_73 = arith.constant dense<0.000000e+00> : vector<8x128xf32>
    %105 = tpu.matmul %101, %104, %cst_73 {dimension_numbers = #tpu.dot_dimension_numbers<[1], [0], [0], [1], [0, 0, 1, 1], [], []>} : vector<8x144xf32>, vector<144x128xf32>, vector<8x128xf32> -> vector<8x128xf32>
    %106 = tpu.iota {dimensions = array<i32: 0>} : vector<8x18xi32>
    %107 = tpu.iota {dimensions = array<i32: 1>} : vector<8x18xi32>
    %c2_i32_74 = arith.constant 2 : i32
    %108 = vector.broadcast %c2_i32_74 : i32 to vector<8x18xi32>
    %109 = arith.muli %108, %106 : vector<8x18xi32>
    %c1_i32_75 = arith.constant 1 : i32
    %110 = vector.broadcast %c1_i32_75 : i32 to vector<8x18xi32>
    %111 = arith.addi %109, %110 : vector<8x18xi32>
    %112 = arith.cmpi eq, %107, %111 : vector<8x18xi32>
    %113 = arith.extui %112 : vector<8x18xi1> to vector<8x18xi32>
    %114 = arith.sitofp %113 : vector<8x18xi32> to vector<8x18xf32>
    %cst_76 = arith.constant dense<0.000000e+00> : vector<8x144xf32>
    %115 = tpu.matmul %114, %91, %cst_76 {dimension_numbers = #tpu.dot_dimension_numbers<[1], [0], [0], [1], [0, 0, 1, 1], [], []>} : vector<8x18xf32>, vector<18x144xf32>, vector<8x144xf32> -> vector<8x144xf32>
    %c1_77 = arith.constant 1 : index
    %c0_78 = arith.constant 0 : index
    %c0_79 = arith.constant 0 : index
    %116 = vector.load %arg4[%c1_77, %c0_78, %c0_79] : memref<3x144x128xbf16, #tpu.memory_space<vmem>>, vector<1x144x128xbf16>
    %117 = vector.shape_cast %116 : vector<1x144x128xbf16> to vector<144x128xbf16>
    %118 = arith.extf %117 : vector<144x128xbf16> to vector<144x128xf32>
    %cst_80 = arith.constant dense<0.000000e+00> : vector<8x128xf32>
    %119 = tpu.matmul %115, %118, %cst_80 {dimension_numbers = #tpu.dot_dimension_numbers<[1], [0], [0], [1], [0, 0, 1, 1], [], []>} : vector<8x144xf32>, vector<144x128xf32>, vector<8x128xf32> -> vector<8x128xf32>
    %120 = arith.addf %105, %119 : vector<8x128xf32>
    %121 = tpu.iota {dimensions = array<i32: 0>} : vector<8x18xi32>
    %122 = tpu.iota {dimensions = array<i32: 1>} : vector<8x18xi32>
    %c2_i32_81 = arith.constant 2 : i32
    %123 = vector.broadcast %c2_i32_81 : i32 to vector<8x18xi32>
    %124 = arith.muli %123, %121 : vector<8x18xi32>
    %c2_i32_82 = arith.constant 2 : i32
    %125 = vector.broadcast %c2_i32_82 : i32 to vector<8x18xi32>
    %126 = arith.addi %124, %125 : vector<8x18xi32>
    %127 = arith.cmpi eq, %122, %126 : vector<8x18xi32>
    %128 = arith.extui %127 : vector<8x18xi1> to vector<8x18xi32>
    %129 = arith.sitofp %128 : vector<8x18xi32> to vector<8x18xf32>
    %cst_83 = arith.constant dense<0.000000e+00> : vector<8x144xf32>
    %130 = tpu.matmul %129, %91, %cst_83 {dimension_numbers = #tpu.dot_dimension_numbers<[1], [0], [0], [1], [0, 0, 1, 1], [], []>} : vector<8x18xf32>, vector<18x144xf32>, vector<8x144xf32> -> vector<8x144xf32>
    %c2_84 = arith.constant 2 : index
    %c0_85 = arith.constant 0 : index
    %c0_86 = arith.constant 0 : index
    %131 = vector.load %arg4[%c2_84, %c0_85, %c0_86] : memref<3x144x128xbf16, #tpu.memory_space<vmem>>, vector<1x144x128xbf16>
    %132 = vector.shape_cast %131 : vector<1x144x128xbf16> to vector<144x128xbf16>
    %133 = arith.extf %132 : vector<144x128xbf16> to vector<144x128xf32>
    %cst_87 = arith.constant dense<0.000000e+00> : vector<8x128xf32>
    %134 = tpu.matmul %130, %133, %cst_87 {dimension_numbers = #tpu.dot_dimension_numbers<[1], [0], [0], [1], [0, 0, 1, 1], [], []>} : vector<8x144xf32>, vector<144x128xf32>, vector<8x128xf32> -> vector<8x128xf32>
    %135 = arith.addf %120, %134 : vector<8x128xf32>
    %c0_88 = arith.constant 0 : index
    %c0_89 = arith.constant 0 : index
    %136 = vector.load %arg10[%c0_88, %c0_89] : memref<1x128xf32, #tpu.memory_space<vmem>>, vector<1x128xf32>
    %137 = vector.broadcast %136 : vector<1x128xf32> to vector<8x128xf32>
    %138 = arith.addf %135, %137 : vector<8x128xf32>
    %cst_90 = arith.constant 2.000000e-01 : f32
    %139 = vector.broadcast %cst_90 : f32 to vector<8x128xf32>
    %140 = arith.mulf %139, %138 : vector<8x128xf32>
    %141 = arith.maximumf %138, %140 : vector<8x128xf32>
    %c1_91 = arith.constant 1 : index
    %c16 = arith.constant 16 : index
    %142 = vector.load %arg20[%c1_91, %c16] : memref<10x160xf32, #tpu.memory_space<vmem>>, vector<8x128xf32>
    tpu.vector_store %arg20[%c1_91, %c16], %141 {strides = array<i32>} : memref<10x160xf32, #tpu.memory_space<vmem>>, vector<8x128xf32>,
    %c0_92 = arith.constant 0 : index
    %c0_93 = arith.constant 0 : index
    %143 = vector.load %arg20[%c0_92, %c0_93] : memref<10x160xf32, #tpu.memory_space<vmem>>, vector<8x160xf32>
    %c0_94 = arith.constant 0 : index
    %c0_95 = arith.constant 0 : index
    %c0_96 = arith.constant 0 : index
    %144 = vector.load %arg5[%c0_94, %c0_95, %c0_96] : memref<3x160x256xbf16, #tpu.memory_space<vmem>>, vector<1x160x256xbf16>
    %145 = vector.shape_cast %144 : vector<1x160x256xbf16> to vector<160x256xbf16>
    %146 = arith.extf %145 : vector<160x256xbf16> to vector<160x256xf32>
    %cst_97 = arith.constant dense<0.000000e+00> : vector<8x256xf32>
    %147 = tpu.matmul %143, %146, %cst_97 {dimension_numbers = #tpu.dot_dimension_numbers<[1], [0], [0], [1], [0, 0, 1, 1], [], []>} : vector<8x160xf32>, vector<160x256xf32>, vector<8x256xf32> -> vector<8x256xf32>
    %c1_98 = arith.constant 1 : index
    %c0_99 = arith.constant 0 : index
    %148 = vector.load %arg20[%c1_98, %c0_99] : memref<10x160xf32, #tpu.memory_space<vmem>>, vector<8x160xf32>
    %c1_100 = arith.constant 1 : index
    %c0_101 = arith.constant 0 : index
    %c0_102 = arith.constant 0 : index
    %149 = vector.load %arg5[%c1_100, %c0_101, %c0_102] : memref<3x160x256xbf16, #tpu.memory_space<vmem>>, vector<1x160x256xbf16>
    %150 = vector.shape_cast %149 : vector<1x160x256xbf16> to vector<160x256xbf16>
    %151 = arith.extf %150 : vector<160x256xbf16> to vector<160x256xf32>
    %cst_103 = arith.constant dense<0.000000e+00> : vector<8x256xf32>
    %152 = tpu.matmul %148, %151, %cst_103 {dimension_numbers = #tpu.dot_dimension_numbers<[1], [0], [0], [1], [0, 0, 1, 1], [], []>} : vector<8x160xf32>, vector<160x256xf32>, vector<8x256xf32> -> vector<8x256xf32>
    %153 = arith.addf %147, %152 : vector<8x256xf32>
    %c2_104 = arith.constant 2 : index
    %c0_105 = arith.constant 0 : index
    %154 = vector.load %arg20[%c2_104, %c0_105] : memref<10x160xf32, #tpu.memory_space<vmem>>, vector<8x160xf32>
    %c2_106 = arith.constant 2 : index
    %c0_107 = arith.constant 0 : index
    %c0_108 = arith.constant 0 : index
    %155 = vector.load %arg5[%c2_106, %c0_107, %c0_108] : memref<3x160x256xbf16, #tpu.memory_space<vmem>>, vector<1x160x256xbf16>
    %156 = vector.shape_cast %155 : vector<1x160x256xbf16> to vector<160x256xbf16>
    %157 = arith.extf %156 : vector<160x256xbf16> to vector<160x256xf32>
    %cst_109 = arith.constant dense<0.000000e+00> : vector<8x256xf32>
    %158 = tpu.matmul %154, %157, %cst_109 {dimension_numbers = #tpu.dot_dimension_numbers<[1], [0], [0], [1], [0, 0, 1, 1], [], []>} : vector<8x160xf32>, vector<160x256xf32>, vector<8x256xf32> -> vector<8x256xf32>
    %159 = arith.addf %153, %158 : vector<8x256xf32>
    %c0_110 = arith.constant 0 : index
    %c0_111 = arith.constant 0 : index
    %160 = vector.load %arg11[%c0_110, %c0_111] : memref<1x256xf32, #tpu.memory_space<vmem>>, vector<1x256xf32>
    %161 = vector.broadcast %160 : vector<1x256xf32> to vector<8x256xf32>
    %162 = arith.addf %159, %161 : vector<8x256xf32>
    %cst_112 = arith.constant 2.000000e-01 : f32
    %163 = vector.broadcast %cst_112 : f32 to vector<8x256xf32>
    %164 = arith.mulf %163, %162 : vector<8x256xf32>
    %165 = arith.maximumf %162, %164 : vector<8x256xf32>
    %c1_113 = arith.constant 1 : index
    %c32 = arith.constant 32 : index
    %166 = vector.load %arg21[%c1_113, %c32] : memref<10x320xf32, #tpu.memory_space<vmem>>, vector<8x256xf32>
    tpu.vector_store %arg21[%c1_113, %c32], %165 {strides = array<i32>} : memref<10x320xf32, #tpu.memory_space<vmem>>, vector<8x256xf32>,
    %c0_114 = arith.constant 0 : index
    %c0_115 = arith.constant 0 : index
    %167 = vector.load %arg21[%c0_114, %c0_115] : memref<10x320xf32, #tpu.memory_space<vmem>>, vector<10x320xf32>
    %168 = tpu.iota {dimensions = array<i32: 0>} : vector<4x10xi32>
    %169 = tpu.iota {dimensions = array<i32: 1>} : vector<4x10xi32>
    %c2_i32_116 = arith.constant 2 : i32
    %170 = vector.broadcast %c2_i32_116 : i32 to vector<4x10xi32>
    %171 = arith.muli %170, %168 : vector<4x10xi32>
    %c0_i32_117 = arith.constant 0 : i32
    %172 = vector.broadcast %c0_i32_117 : i32 to vector<4x10xi32>
    %173 = arith.addi %171, %172 : vector<4x10xi32>
    %174 = arith.cmpi eq, %169, %173 : vector<4x10xi32>
    %175 = arith.extui %174 : vector<4x10xi1> to vector<4x10xi32>
    %176 = arith.sitofp %175 : vector<4x10xi32> to vector<4x10xf32>
    %cst_118 = arith.constant dense<0.000000e+00> : vector<4x320xf32>
    %177 = tpu.matmul %176, %167, %cst_118 {dimension_numbers = #tpu.dot_dimension_numbers<[1], [0], [0], [1], [0, 0, 1, 1], [], []>} : vector<4x10xf32>, vector<10x320xf32>, vector<4x320xf32> -> vector<4x320xf32>
    %c0_119 = arith.constant 0 : index
    %c0_120 = arith.constant 0 : index
    %c0_121 = arith.constant 0 : index
    %178 = vector.load %arg6[%c0_119, %c0_120, %c0_121] : memref<3x320x256xbf16, #tpu.memory_space<vmem>>, vector<1x320x256xbf16>
    %179 = vector.shape_cast %178 : vector<1x320x256xbf16> to vector<320x256xbf16>
    %180 = arith.extf %179 : vector<320x256xbf16> to vector<320x256xf32>
    %cst_122 = arith.constant dense<0.000000e+00> : vector<4x256xf32>
    %181 = tpu.matmul %177, %180, %cst_122 {dimension_numbers = #tpu.dot_dimension_numbers<[1], [0], [0], [1], [0, 0, 1, 1], [], []>} : vector<4x320xf32>, vector<320x256xf32>, vector<4x256xf32> -> vector<4x256xf32>
    %182 = tpu.iota {dimensions = array<i32: 0>} : vector<4x10xi32>
    %183 = tpu.iota {dimensions = array<i32: 1>} : vector<4x10xi32>
    %c2_i32_123 = arith.constant 2 : i32
    %184 = vector.broadcast %c2_i32_123 : i32 to vector<4x10xi32>
    %185 = arith.muli %184, %182 : vector<4x10xi32>
    %c1_i32_124 = arith.constant 1 : i32
    %186 = vector.broadcast %c1_i32_124 : i32 to vector<4x10xi32>
    %187 = arith.addi %185, %186 : vector<4x10xi32>
    %188 = arith.cmpi eq, %183, %187 : vector<4x10xi32>
    %189 = arith.extui %188 : vector<4x10xi1> to vector<4x10xi32>
    %190 = arith.sitofp %189 : vector<4x10xi32> to vector<4x10xf32>
    %cst_125 = arith.constant dense<0.000000e+00> : vector<4x320xf32>
    %191 = tpu.matmul %190, %167, %cst_125 {dimension_numbers = #tpu.dot_dimension_numbers<[1], [0], [0], [1], [0, 0, 1, 1], [], []>} : vector<4x10xf32>, vector<10x320xf32>, vector<4x320xf32> -> vector<4x320xf32>
    %c1_126 = arith.constant 1 : index
    %c0_127 = arith.constant 0 : index
    %c0_128 = arith.constant 0 : index
    %192 = vector.load %arg6[%c1_126, %c0_127, %c0_128] : memref<3x320x256xbf16, #tpu.memory_space<vmem>>, vector<1x320x256xbf16>
    %193 = vector.shape_cast %192 : vector<1x320x256xbf16> to vector<320x256xbf16>
    %194 = arith.extf %193 : vector<320x256xbf16> to vector<320x256xf32>
    %cst_129 = arith.constant dense<0.000000e+00> : vector<4x256xf32>
    %195 = tpu.matmul %191, %194, %cst_129 {dimension_numbers = #tpu.dot_dimension_numbers<[1], [0], [0], [1], [0, 0, 1, 1], [], []>} : vector<4x320xf32>, vector<320x256xf32>, vector<4x256xf32> -> vector<4x256xf32>
    %196 = arith.addf %181, %195 : vector<4x256xf32>
    %197 = tpu.iota {dimensions = array<i32: 0>} : vector<4x10xi32>
    %198 = tpu.iota {dimensions = array<i32: 1>} : vector<4x10xi32>
    %c2_i32_130 = arith.constant 2 : i32
    %199 = vector.broadcast %c2_i32_130 : i32 to vector<4x10xi32>
    %200 = arith.muli %199, %197 : vector<4x10xi32>
    %c2_i32_131 = arith.constant 2 : i32
    %201 = vector.broadcast %c2_i32_131 : i32 to vector<4x10xi32>
    %202 = arith.addi %200, %201 : vector<4x10xi32>
    %203 = arith.cmpi eq, %198, %202 : vector<4x10xi32>
    %204 = arith.extui %203 : vector<4x10xi1> to vector<4x10xi32>
    %205 = arith.sitofp %204 : vector<4x10xi32> to vector<4x10xf32>
    %cst_132 = arith.constant dense<0.000000e+00> : vector<4x320xf32>
    %206 = tpu.matmul %205, %167, %cst_132 {dimension_numbers = #tpu.dot_dimension_numbers<[1], [0], [0], [1], [0, 0, 1, 1], [], []>} : vector<4x10xf32>, vector<10x320xf32>, vector<4x320xf32> -> vector<4x320xf32>
    %c2_133 = arith.constant 2 : index
    %c0_134 = arith.constant 0 : index
    %c0_135 = arith.constant 0 : index
    %207 = vector.load %arg6[%c2_133, %c0_134, %c0_135] : memref<3x320x256xbf16, #tpu.memory_space<vmem>>, vector<1x320x256xbf16>
    %208 = vector.shape_cast %207 : vector<1x320x256xbf16> to vector<320x256xbf16>
    %209 = arith.extf %208 : vector<320x256xbf16> to vector<320x256xf32>
    %cst_136 = arith.constant dense<0.000000e+00> : vector<4x256xf32>
    %210 = tpu.matmul %206, %209, %cst_136 {dimension_numbers = #tpu.dot_dimension_numbers<[1], [0], [0], [1], [0, 0, 1, 1], [], []>} : vector<4x320xf32>, vector<320x256xf32>, vector<4x256xf32> -> vector<4x256xf32>
    %211 = arith.addf %196, %210 : vector<4x256xf32>
    %c0_137 = arith.constant 0 : index
    %c0_138 = arith.constant 0 : index
    %212 = vector.load %arg12[%c0_137, %c0_138] : memref<1x256xf32, #tpu.memory_space<vmem>>, vector<1x256xf32>
    %213 = vector.broadcast %212 : vector<1x256xf32> to vector<4x256xf32>
    %214 = arith.addf %211, %213 : vector<4x256xf32>
    %cst_139 = arith.constant 2.000000e-01 : f32
    %215 = vector.broadcast %cst_139 : f32 to vector<4x256xf32>
    %216 = arith.mulf %215, %214 : vector<4x256xf32>
    %217 = arith.maximumf %214, %216 : vector<4x256xf32>
    %c1_140 = arith.constant 1 : index
    %c64 = arith.constant 64 : index
    %218 = vector.load %arg22[%c1_140, %c64] : memref<6x384xf32, #tpu.memory_space<vmem>>, vector<4x256xf32>
    tpu.vector_store %arg22[%c1_140, %c64], %217 {strides = array<i32>} : memref<6x384xf32, #tpu.memory_space<vmem>>, vector<4x256xf32>,
    %c0_141 = arith.constant 0 : index
    %c0_142 = arith.constant 0 : index
    %219 = vector.load %arg22[%c0_141, %c0_142] : memref<6x384xf32, #tpu.memory_space<vmem>>, vector<4x384xf32>
    %c0_143 = arith.constant 0 : index
    %c0_144 = arith.constant 0 : index
    %c0_145 = arith.constant 0 : index
    %220 = vector.load %arg7[%c0_143, %c0_144, %c0_145] : memref<3x384x512xbf16, #tpu.memory_space<vmem>>, vector<1x384x512xbf16>
    %221 = vector.shape_cast %220 : vector<1x384x512xbf16> to vector<384x512xbf16>
    %222 = arith.extf %221 : vector<384x512xbf16> to vector<384x512xf32>
    %cst_146 = arith.constant dense<0.000000e+00> : vector<4x512xf32>
    %223 = tpu.matmul %219, %222, %cst_146 {dimension_numbers = #tpu.dot_dimension_numbers<[1], [0], [0], [1], [0, 0, 1, 1], [], []>} : vector<4x384xf32>, vector<384x512xf32>, vector<4x512xf32> -> vector<4x512xf32>
    %c1_147 = arith.constant 1 : index
    %c0_148 = arith.constant 0 : index
    %224 = vector.load %arg22[%c1_147, %c0_148] : memref<6x384xf32, #tpu.memory_space<vmem>>, vector<4x384xf32>
    %c1_149 = arith.constant 1 : index
    %c0_150 = arith.constant 0 : index
    %c0_151 = arith.constant 0 : index
    %225 = vector.load %arg7[%c1_149, %c0_150, %c0_151] : memref<3x384x512xbf16, #tpu.memory_space<vmem>>, vector<1x384x512xbf16>
    %226 = vector.shape_cast %225 : vector<1x384x512xbf16> to vector<384x512xbf16>
    %227 = arith.extf %226 : vector<384x512xbf16> to vector<384x512xf32>
    %cst_152 = arith.constant dense<0.000000e+00> : vector<4x512xf32>
    %228 = tpu.matmul %224, %227, %cst_152 {dimension_numbers = #tpu.dot_dimension_numbers<[1], [0], [0], [1], [0, 0, 1, 1], [], []>} : vector<4x384xf32>, vector<384x512xf32>, vector<4x512xf32> -> vector<4x512xf32>
    %229 = arith.addf %223, %228 : vector<4x512xf32>
    %c2_153 = arith.constant 2 : index
    %c0_154 = arith.constant 0 : index
    %230 = vector.load %arg22[%c2_153, %c0_154] : memref<6x384xf32, #tpu.memory_space<vmem>>, vector<4x384xf32>
    %c2_155 = arith.constant 2 : index
    %c0_156 = arith.constant 0 : index
    %c0_157 = arith.constant 0 : index
    %231 = vector.load %arg7[%c2_155, %c0_156, %c0_157] : memref<3x384x512xbf16, #tpu.memory_space<vmem>>, vector<1x384x512xbf16>
    %232 = vector.shape_cast %231 : vector<1x384x512xbf16> to vector<384x512xbf16>
    %233 = arith.extf %232 : vector<384x512xbf16> to vector<384x512xf32>
    %cst_158 = arith.constant dense<0.000000e+00> : vector<4x512xf32>
    %234 = tpu.matmul %230, %233, %cst_158 {dimension_numbers = #tpu.dot_dimension_numbers<[1], [0], [0], [1], [0, 0, 1, 1], [], []>} : vector<4x384xf32>, vector<384x512xf32>, vector<4x512xf32> -> vector<4x512xf32>
    %235 = arith.addf %229, %234 : vector<4x512xf32>
    %c0_159 = arith.constant 0 : index
    %c0_160 = arith.constant 0 : index
    %236 = vector.load %arg13[%c0_159, %c0_160] : memref<1x512xf32, #tpu.memory_space<vmem>>, vector<1x512xf32>
    %237 = vector.broadcast %236 : vector<1x512xf32> to vector<4x512xf32>
    %238 = arith.addf %235, %237 : vector<4x512xf32>
    %cst_161 = arith.constant 2.000000e-01 : f32
    %239 = vector.broadcast %cst_161 : f32 to vector<4x512xf32>
    %240 = arith.mulf %239, %238 : vector<4x512xf32>
    %241 = arith.maximumf %238, %240 : vector<4x512xf32>
    %c0_162 = arith.constant 0 : index
    %c0_163 = arith.constant 0 : index
    %242 = vector.load %arg15[%c0_162, %c0_163] : memref<1x128xf32, #tpu.memory_space<vmem>>, vector<1x128xf32>
    %243 = vector.extract_strided_slice %241 {offsets = [0, 0], sizes = [1, 512], strides = [1, 1]} : vector<4x512xf32> to vector<1x512xf32>
    %c0_164 = arith.constant 0 : index
    %c0_165 = arith.constant 0 : index
    %c0_166 = arith.constant 0 : index
    %244 = vector.load %arg14[%c0_164, %c0_165, %c0_166] : memref<4x512x128xf32, #tpu.memory_space<vmem>>, vector<1x512x128xf32>
    %245 = vector.shape_cast %244 : vector<1x512x128xf32> to vector<512x128xf32>
    %cst_167 = arith.constant dense<0.000000e+00> : vector<1x128xf32>
    %246 = tpu.matmul %243, %245, %cst_167 {dimension_numbers = #tpu.dot_dimension_numbers<[1], [0], [0], [1], [0, 0, 1, 1], [], []>} : vector<1x512xf32>, vector<512x128xf32>, vector<1x128xf32> -> vector<1x128xf32>
    %247 = arith.addf %242, %246 : vector<1x128xf32>
    %248 = vector.extract_strided_slice %241 {offsets = [1, 0], sizes = [1, 512], strides = [1, 1]} : vector<4x512xf32> to vector<1x512xf32>
    %c1_168 = arith.constant 1 : index
    %c0_169 = arith.constant 0 : index
    %c0_170 = arith.constant 0 : index
    %249 = vector.load %arg14[%c1_168, %c0_169, %c0_170] : memref<4x512x128xf32, #tpu.memory_space<vmem>>, vector<1x512x128xf32>
    %250 = vector.shape_cast %249 : vector<1x512x128xf32> to vector<512x128xf32>
    %cst_171 = arith.constant dense<0.000000e+00> : vector<1x128xf32>
    %251 = tpu.matmul %248, %250, %cst_171 {dimension_numbers = #tpu.dot_dimension_numbers<[1], [0], [0], [1], [0, 0, 1, 1], [], []>} : vector<1x512xf32>, vector<512x128xf32>, vector<1x128xf32> -> vector<1x128xf32>
    %252 = arith.addf %247, %251 : vector<1x128xf32>
    %253 = vector.extract_strided_slice %241 {offsets = [2, 0], sizes = [1, 512], strides = [1, 1]} : vector<4x512xf32> to vector<1x512xf32>
    %c2_172 = arith.constant 2 : index
    %c0_173 = arith.constant 0 : index
    %c0_174 = arith.constant 0 : index
    %254 = vector.load %arg14[%c2_172, %c0_173, %c0_174] : memref<4x512x128xf32, #tpu.memory_space<vmem>>, vector<1x512x128xf32>
    %255 = vector.shape_cast %254 : vector<1x512x128xf32> to vector<512x128xf32>
    %cst_175 = arith.constant dense<0.000000e+00> : vector<1x128xf32>
    %256 = tpu.matmul %253, %255, %cst_175 {dimension_numbers = #tpu.dot_dimension_numbers<[1], [0], [0], [1], [0, 0, 1, 1], [], []>} : vector<1x512xf32>, vector<512x128xf32>, vector<1x128xf32> -> vector<1x128xf32>
    %257 = arith.addf %252, %256 : vector<1x128xf32>
    %258 = vector.extract_strided_slice %241 {offsets = [3, 0], sizes = [1, 512], strides = [1, 1]} : vector<4x512xf32> to vector<1x512xf32>
    %c3 = arith.constant 3 : index
    %c0_176 = arith.constant 0 : index
    %c0_177 = arith.constant 0 : index
    %259 = vector.load %arg14[%c3, %c0_176, %c0_177] : memref<4x512x128xf32, #tpu.memory_space<vmem>>, vector<1x512x128xf32>
    %260 = vector.shape_cast %259 : vector<1x512x128xf32> to vector<512x128xf32>
    %cst_178 = arith.constant dense<0.000000e+00> : vector<1x128xf32>
    %261 = tpu.matmul %258, %260, %cst_178 {dimension_numbers = #tpu.dot_dimension_numbers<[1], [0], [0], [1], [0, 0, 1, 1], [], []>} : vector<1x512xf32>, vector<512x128xf32>, vector<1x128xf32> -> vector<1x128xf32>
    %262 = arith.addf %257, %261 : vector<1x128xf32>
    %263 = tpu.iota {dimensions = array<i32: 1>} : vector<1x128xi32>
    %cst_179 = arith.constant 0.000000e+00 : f32
    %264 = vector.broadcast %cst_179 : f32 to vector<1x128xf32>
    %265 = arith.subf %264, %262 : vector<1x128xf32>
    %266 = math.exp %265 : vector<1x128xf32>
    %cst_180 = arith.constant 1.000000e+00 : f32
    %267 = vector.broadcast %cst_180 : f32 to vector<1x128xf32>
    %268 = arith.addf %267, %266 : vector<1x128xf32>
    %cst_181 = arith.constant 1.000000e+00 : f32
    %269 = vector.broadcast %cst_181 : f32 to vector<1x128xf32>
    %270 = arith.divf %269, %268 : vector<1x128xf32>
    %c1_i32_182 = arith.constant 1 : i32
    %271 = vector.broadcast %c1_i32_182 : i32 to vector<1x128xi32>
    %272 = arith.cmpi sge, %263, %271 : vector<1x128xi32>
    %c10_i32 = arith.constant 10 : i32
    %273 = vector.broadcast %c10_i32 : i32 to vector<1x128xi32>
    %274 = arith.cmpi sle, %263, %273 : vector<1x128xi32>
    %275 = arith.andi %272, %274 : vector<1x128xi1>
    %cst_183 = arith.constant 1.000000e+00 : f32
    %276 = vector.broadcast %cst_183 : f32 to vector<1x128xf32>
    %277 = arith.mulf %262, %276 : vector<1x128xf32>
    %cst_184 = arith.constant -1.000000e+30 : f32
    %278 = vector.broadcast %cst_184 : f32 to vector<1x128xf32>
    %279 = arith.select %275, %277, %278 : vector<1x128xi1>, vector<1x128xf32>
    %cst_185 = arith.constant dense<0xFF800000> : vector<1xf32>
    %280 = vector.multi_reduction <maximumf>, %279, %cst_185 [1] : vector<1x128xf32> to vector<1xf32>
    %281 = vector.shape_cast %280 : vector<1xf32> to vector<1x1xf32>
    %282 = vector.broadcast %281 : vector<1x1xf32> to vector<1x128xf32>
    %283 = arith.subf %279, %282 : vector<1x128xf32>
    %284 = math.exp %283 : vector<1x128xf32>
    %cst_186 = arith.constant 0.000000e+00 : f32
    %285 = vector.broadcast %cst_186 : f32 to vector<1x128xf32>
    %286 = arith.select %275, %284, %285 : vector<1x128xi1>, vector<1x128xf32>
    %cst_187 = arith.constant dense<0.000000e+00> : vector<1xf32>
    %287 = vector.multi_reduction <add>, %286, %cst_187 [1] : vector<1x128xf32> to vector<1xf32>
    %288 = vector.shape_cast %287 : vector<1xf32> to vector<1x1xf32>
    %289 = vector.broadcast %288 : vector<1x1xf32> to vector<1x128xf32>
    %290 = arith.divf %286, %289 : vector<1x128xf32>
    %c0_i32_188 = arith.constant 0 : i32
    %291 = vector.broadcast %c0_i32_188 : i32 to vector<1x128xi32>
    %292 = arith.cmpi eq, %263, %291 : vector<1x128xi32>
    %293 = arith.select %292, %270, %290 : vector<1x128xi1>, vector<1x128xf32>
    %c0_189 = arith.constant 0 : index
    %c0_190 = arith.constant 0 : index
    %c0_191 = arith.constant 0 : index
    %294 = vector.load %arg16[%c0_189, %c0_190, %c0_191] : memref<1x1x128xf32, #tpu.memory_space<vmem>>, vector<1x1x128xf32>
    %295 = vector.shape_cast %294 : vector<1x1x128xf32> to vector<1x128xf32>
    %296 = vector.shape_cast %293 : vector<1x128xf32> to vector<1x1x128xf32>
    tpu.vector_store %arg16[%c0_189, %c0_190, %c0_191], %296 {strides = array<i32>} : memref<1x1x128xf32, #tpu.memory_space<vmem>>, vector<1x1x128xf32>,
    return
  }
  func.func @transform_0(%arg0: i32) -> (i32, i32, i32) {
    %c0_i32 = arith.constant 0 : i32
    %c0_i32_0 = arith.constant 0 : i32
    %c0_i32_1 = arith.constant 0 : i32
    return %arg0, %c0_i32, %c0_i32_0 : i32, i32, i32
  }
  func.func @transform_1(%arg0: i32) -> (i32, i32, i32) {
    %c0_i32 = arith.constant 0 : i32
    %c0_i32_0 = arith.constant 0 : i32
    %c0_i32_1 = arith.constant 0 : i32
    %c0_i32_2 = arith.constant 0 : i32
    return %c0_i32, %c0_i32_0, %c0_i32_1 : i32, i32, i32
  }
  func.func @transform_2(%arg0: i32) -> (i32, i32, i32) {
    %c0_i32 = arith.constant 0 : i32
    %c0_i32_0 = arith.constant 0 : i32
    %c0_i32_1 = arith.constant 0 : i32
    %c0_i32_2 = arith.constant 0 : i32
    return %c0_i32, %c0_i32_0, %c0_i32_1 : i32, i32, i32
  }
  func.func @transform_3(%arg0: i32) -> (i32, i32, i32) {
    %c0_i32 = arith.constant 0 : i32
    %c0_i32_0 = arith.constant 0 : i32
    %c0_i32_1 = arith.constant 0 : i32
    %c0_i32_2 = arith.constant 0 : i32
    return %c0_i32, %c0_i32_0, %c0_i32_1 : i32, i32, i32
  }
  func.func @transform_4(%arg0: i32) -> (i32, i32, i32) {
    %c0_i32 = arith.constant 0 : i32
    %c0_i32_0 = arith.constant 0 : i32
    %c0_i32_1 = arith.constant 0 : i32
    %c0_i32_2 = arith.constant 0 : i32
    return %c0_i32, %c0_i32_0, %c0_i32_1 : i32, i32, i32
  }
  func.func @transform_5(%arg0: i32) -> (i32, i32, i32) {
    %c0_i32 = arith.constant 0 : i32
    %c0_i32_0 = arith.constant 0 : i32
    %c0_i32_1 = arith.constant 0 : i32
    %c0_i32_2 = arith.constant 0 : i32
    return %c0_i32, %c0_i32_0, %c0_i32_1 : i32, i32, i32
  }
  func.func @transform_6(%arg0: i32) -> (i32, i32, i32) {
    %c0_i32 = arith.constant 0 : i32
    %c0_i32_0 = arith.constant 0 : i32
    %c0_i32_1 = arith.constant 0 : i32
    %c0_i32_2 = arith.constant 0 : i32
    return %c0_i32, %c0_i32_0, %c0_i32_1 : i32, i32, i32
  }
  func.func @transform_7(%arg0: i32) -> (i32, i32) {
    %c0_i32 = arith.constant 0 : i32
    %c0_i32_0 = arith.constant 0 : i32
    %c0_i32_1 = arith.constant 0 : i32
    return %c0_i32, %c0_i32_0 : i32, i32
  }
  func.func @transform_8(%arg0: i32) -> (i32, i32) {
    %c0_i32 = arith.constant 0 : i32
    %c0_i32_0 = arith.constant 0 : i32
    %c0_i32_1 = arith.constant 0 : i32
    return %c0_i32, %c0_i32_0 : i32, i32
  }
  func.func @transform_9(%arg0: i32) -> (i32, i32) {
    %c0_i32 = arith.constant 0 : i32
    %c0_i32_0 = arith.constant 0 : i32
    %c0_i32_1 = arith.constant 0 : i32
    return %c0_i32, %c0_i32_0 : i32, i32
  }
  func.func @transform_10(%arg0: i32) -> (i32, i32) {
    %c0_i32 = arith.constant 0 : i32
    %c0_i32_0 = arith.constant 0 : i32
    %c0_i32_1 = arith.constant 0 : i32
    return %c0_i32, %c0_i32_0 : i32, i32
  }
  func.func @transform_11(%arg0: i32) -> (i32, i32) {
    %c0_i32 = arith.constant 0 : i32
    %c0_i32_0 = arith.constant 0 : i32
    %c0_i32_1 = arith.constant 0 : i32
    return %c0_i32, %c0_i32_0 : i32, i32
  }
  func.func @transform_12(%arg0: i32) -> (i32, i32) {
    %c0_i32 = arith.constant 0 : i32
    %c0_i32_0 = arith.constant 0 : i32
    %c0_i32_1 = arith.constant 0 : i32
    return %c0_i32, %c0_i32_0 : i32, i32
  }
  func.func @transform_13(%arg0: i32) -> (i32, i32, i32) {
    %c0_i32 = arith.constant 0 : i32
    %c0_i32_0 = arith.constant 0 : i32
    %c0_i32_1 = arith.constant 0 : i32
    %c0_i32_2 = arith.constant 0 : i32
    return %c0_i32, %c0_i32_0, %c0_i32_1 : i32, i32, i32
  }
  func.func @transform_14(%arg0: i32) -> (i32, i32) {
    %c0_i32 = arith.constant 0 : i32
    %c0_i32_0 = arith.constant 0 : i32
    %c0_i32_1 = arith.constant 0 : i32
    return %c0_i32, %c0_i32_0 : i32, i32
  }
  func.func @transform_15(%arg0: i32) -> (i32, i32, i32) {
    %c0_i32 = arith.constant 0 : i32
    %c0_i32_0 = arith.constant 0 : i32
    %c0_i32_1 = arith.constant 0 : i32
    return %arg0, %c0_i32, %c0_i32_0 : i32, i32, i32
  }
}

</mosaic_0001>

<llo_original>
// kernel: tpu_custom_call.1
$region0: #{tpu_custom_call.1}
  #allocation0 [shape = 'u32[]', space=smem, size = 0x4, offset = 0x4, fixed_abs, tag = 'smem constant byte address 0x4 - core index']
  #allocation1 [shape = 'u32[144,128]{1,0:T(1,128)}', space=vmem, size = 0x12000, scoped, tag = 'internal scratch']
  #allocation2 [shape = 'f32[34,34]{1,0:T(8,128)}', space=vmem, size = 0x5000, scoped, tag = 'scratch operand']
  #allocation3 [shape = 'f32[18,72]{1,0:T(8,128)}', space=vmem, size = 0x3000, scoped, tag = 'scratch operand']
  #allocation4 [shape = 'f32[18,144]{1,0:T(8,128)}', space=vmem, size = 0x6000, scoped, tag = 'scratch operand']
  #allocation5 [shape = 'f32[10,160]{1,0:T(8,128)}', space=vmem, size = 0x4000, scoped, tag = 'scratch operand']
  #allocation6 [shape = 'f32[10,320]{1,0:T(8,128)}', space=vmem, size = 0x6000, scoped, tag = 'scratch operand']
  #allocation7 [shape = 'f32[6,384]{1,0:T(8,128)}', space=vmem, size = 0x3000, scoped, tag = 'scratch operand']
  %s0 = inlined_call_operand.hbm [shape: f32[2,32,32], index: 0, kind: input, shape index: {}]
  %s1 = inlined_call_operand.hbm [shape: bf16[3,34,64], index: 1, kind: input, shape index: {}]
  %s2 = inlined_call_operand.hbm [shape: bf16[3,72,128], index: 2, kind: input, shape index: {}]
  %s3 = inlined_call_operand.hbm [shape: bf16[3,144,128], index: 3, kind: input, shape index: {}]
  %s4 = inlined_call_operand.hbm [shape: bf16[3,160,256], index: 4, kind: input, shape index: {}]
  %s5 = inlined_call_operand.hbm [shape: bf16[3,320,256], index: 5, kind: input, shape index: {}]
  %s6 = inlined_call_operand.hbm [shape: bf16[3,384,512], index: 6, kind: input, shape index: {}]
  %s7 = inlined_call_operand.hbm [shape: f32[1,64], index: 7, kind: input, shape index: {}]
  %s8 = inlined_call_operand.hbm [shape: f32[1,128], index: 8, kind: input, shape index: {}]
  %s9 = inlined_call_operand.hbm [shape: f32[1,128], index: 9, kind: input, shape index: {}]
  %s10 = inlined_call_operand.hbm [shape: f32[1,256], index: 10, kind: input, shape index: {}]
  %s11 = inlined_call_operand.hbm [shape: f32[1,256], index: 11, kind: input, shape index: {}]
  %s12 = inlined_call_operand.hbm [shape: f32[1,512], index: 12, kind: input, shape index: {}]
  %s13 = inlined_call_operand.hbm [shape: f32[4,512,128], index: 13, kind: input, shape index: {}]
  %s14 = inlined_call_operand.hbm [shape: f32[1,128], index: 14, kind: input, shape index: {}]
  %s15 = inlined_call_operand.hbm [shape: f32[2,1,128], index: 15, kind: output, shape index: {}]
  %s16 = sld [smem:[#allocation0]]
  $region153: #{tpu_custom_call.1} parent=0
    _
  %s18 = ssub.s32 1, %s16
  %s19 = scalar_select 0, %s18, %s16
  $region1: #{tpu_custom_call.1} parent=0
    #allocation8 [shape = 'u8[32768]{0}', space=vmem, size = 0x8000, scoped, tag = 'input window, operand 0']
    #allocation9 [shape = 's32[2]{0}', space=sflag, size = 0x8, scoped, tag = 'scoped memory for tpu_custom_call.1']
    #allocation10 [shape = 's32[2]{0}', space=sflag, size = 0x8, scoped, tag = 'scoped memory for tpu_custom_call.1']
    #allocation11 [shape = 'u8[30720]{0}', space=vmem, size = 0x7800, scoped, tag = 'input window, operand 1, single buffered']
    #allocation12 [shape = 's32[1]{0}', space=sflag, size = 0x4, scoped, tag = 'scoped memory for tpu_custom_call.1']
    #allocation13 [shape = 'u8[55296]{0}', space=vmem, size = 0xd800, scoped, tag = 'input window, operand 2, single buffered']
    #allocation14 [shape = 'u8[110592]{0}', space=vmem, size = 0x1b000, scoped, tag = 'input window, operand 3, single buffered']
    #allocation15 [shape = 's32[1]{0}', space=sflag, size = 0x4, scoped, tag = 'scoped memory for tpu_custom_call.1']
    #allocation16 [shape = 'u8[245760]{0}', space=vmem, size = 0x3c000, scoped, tag = 'input window, operand 4, single buffered']
    #allocation17 [shape = 'u8[491520]{0}', space=vmem, size = 0x78000, scoped, tag = 'input window, operand 5, single buffered']
    #allocation18 [shape = 's32[1]{0}', space=sflag, size = 0x4, scoped, tag = 'scoped memory for tpu_custom_call.1']
    #allocation19 [shape = 'u8[1179648]{0}', space=vmem, size = 0x120000, scoped, tag = 'input window, operand 6, single buffered']
    #allocation20 [shape = 'u8[512]{0}', space=vmem, size = 0x400, scoped, tag = 'input window, operand 7, single buffered']
    #allocation21 [shape = 's32[1]{0}', space=sflag, size = 0x4, scoped, tag = 'scoped memory for tpu_custom_call.1']
    #allocation22 [shape = 'u8[512]{0}', space=vmem, size = 0x400, scoped, tag = 'input window, operand 8, single buffered']
    #allocation23 [shape = 'u8[512]{0}', space=vmem, size = 0x400, scoped, tag = 'input window, operand 9, single buffered']
    #allocation24 [shape = 's32[1]{0}', space=sflag, size = 0x4, scoped, tag = 'scoped memory for tpu_custom_call.1']
    #allocation25 [shape = 'u8[1024]{0}', space=vmem, size = 0x400, scoped, tag = 'input window, operand 10, single buffered']
    #allocation26 [shape = 'u8[1024]{0}', space=vmem, size = 0x400, scoped, tag = 'input window, operand 11, single buffered']
    #allocation27 [shape = 's32[1]{0}', space=sflag, size = 0x4, scoped, tag = 'scoped memory for tpu_custom_call.1']
    #allocation28 [shape = 'u8[2048]{0}', space=vmem, size = 0x800, scoped, tag = 'input window, operand 12, single buffered']
    #allocation29 [shape = 'u8[1048576]{0}', space=vmem, size = 0x100000, scoped, tag = 'input window, operand 13, single buffered']
    #allocation30 [shape = 's32[1]{0}', space=sflag, size = 0x4, scoped, tag = 'scoped memory for tpu_custom_call.1']
    #allocation31 [shape = 'u8[512]{0}', space=vmem, size = 0x400, scoped, tag = 'input window, operand 14, single buffered']
    #allocation32 [shape = 'u8[1024]{0}', space=vmem, size = 0x400, scoped, tag = 'output window, operand 0']
    %20 = vsyncpa [#allocation9], 0
    %s21 = scalar_lea.sflag [#allocation9], 1
    %22 = vsyncpa %s21, 0
    %23 = vsyncpa [#allocation12], 0
    %24 = vsyncpa [#allocation15], 0
    %25 = vsyncpa [#allocation18], 0
    %26 = vsyncpa [#allocation21], 0
    %27 = vsyncpa [#allocation24], 0
    %28 = vsyncpa [#allocation27], 0
    %29 = vsyncpa [#allocation30], 0
    %30 = vsyncpa [#allocation10], 0
    %s31 = scalar_lea.sflag [#allocation10], 1
    %32 = vsyncpa %s31, 0
    loop: start=0, step=1, limit=4
    $region2: #{tpu_custom_call.1} parent=1 // loop_pre_header
      _
    $region3: #{tpu_custom_call.1} parent=1 // loop_header
      %s34 = sphi 0, %s38
      %p35 = scmp.ge.s32.totalorder %s34, 4
      %s44 = sphi 0, %s46
      %s47 = sphi 0, %s44
      %s48 = sphi 0, %s47
      %s64 = sphi 0, %s48
      %s68 = sphi 0, %s68
      %s70 = sphi 0, %s68
      %s71 = sphi 0, %s70
      %s85 = sphi 0, %s71
      %s89 = sphi 0, %s89
      %s91 = sphi 0, %s89
      %s92 = sphi 0, %s91
      %s106 = sphi 0, %s92
      %s110 = sphi 0, %s110
      %s112 = sphi 0, %s110
      %s113 = sphi 0, %s112
      %s127 = sphi 0, %s113
      %s131 = sphi 0, %s131
      %s133 = sphi 0, %s131
      %s134 = sphi 0, %s133
      %s148 = sphi 0, %s134
      %s152 = sphi 0, %s152
      %s154 = sphi 0, %s152
      %s155 = sphi 0, %s154
      %s169 = sphi 0, %s155
      %s173 = sphi 0, %s173
      %s175 = sphi 0, %s173
      %s176 = sphi 0, %s175
      %s190 = sphi 0, %s176
      %s194 = sphi 0, %s194
      %s196 = sphi 0, %s194
      %s197 = sphi 0, %s196
      %s211 = sphi 0, %s197
      %s215 = sphi 0, %s215
      %s217 = sphi 0, %s215
      %s218 = sphi 0, %s217
      %s232 = sphi 0, %s218
      %s236 = sphi 0, %s236
      %s238 = sphi 0, %s236
      %s239 = sphi 0, %s238
      %s253 = sphi 0, %s239
      %s257 = sphi 0, %s257
      %s259 = sphi 0, %s257
      %s260 = sphi 0, %s259
      %s274 = sphi 0, %s260
      %s278 = sphi 0, %s278
      %s280 = sphi 0, %s278
      %s281 = sphi 0, %s280
      %s295 = sphi 0, %s281
      %s299 = sphi 0, %s299
      %s301 = sphi 0, %s299
      %s302 = sphi 0, %s301
      %s316 = sphi 0, %s302
      %s320 = sphi 0, %s320
      %s322 = sphi 0, %s320
      %s323 = sphi 0, %s322
      %s337 = sphi 0, %s323
      %s341 = sphi 0, %s341
      %s343 = sphi 0, %s341
      %s344 = sphi 0, %s343
      %s358 = sphi 0, %s344
      %s364 = sphi 0, %s366
      %s367 = sphi 0, %s364
      %s368 = sphi 0, %s367
      %s384 = sphi 0, %s368
    $region4: #{tpu_custom_call.1} parent=1 // loop_header_branch
      %37 = sbr.rel (%p35) target = $region8
    $region5: #{tpu_custom_call.1} parent=1 // loop_body
      %s39 = ssub.s32 %s34, 1
      %s40 = ssub.s32 %s34, 2
      %s41 = sadd.s32 %s34, 1
      %s42 = ssub.s32 %s34, %s41
      %p43 = scmp.eq.s32.totalorder %s42, 0
      %s45 = sadd.s32 %s44, 1
      %s46 = scalar_select %p43, %s44, %s45
      %p49 = pneg %p43
      %p50 = scmp.eq.s32.totalorder %s34, 1
      %p51 = por %p49, %p50
      %p52 = scmp.ne.s32.totalorder %s44, %s47
      %p53 = scmp.eq.s32.totalorder %s34, 0
      %p54 = por %p52, %p53
      %p55 = scmp.ne.s32.totalorder %s44, %s47
      %p56 = scmp.eq.s32.totalorder %s39, 1
      %p57 = por %p55, %p56
      %p58 = scmp.ne.s32.totalorder %s47, %s48
      %p59 = scmp.eq.s32.totalorder %s39, 0
      %p60 = por %p58, %p59
      %p61 = scmp.ne.s32.totalorder %s47, %s48
      %p62 = scmp.eq.s32.totalorder %s40, 1
      %p63 = por %p61, %p62
      %p65 = scmp.ne.s32.totalorder %s48, %s64
      %p66 = scmp.eq.s32.totalorder %s40, 0
      %p67 = por %p65, %p66
      %s69 = sadd.s32 %s68, 1
      %p72 = scmp.eq.s32.totalorder %s34, 1
      %p73 = scmp.ne.s32.totalorder %s68, %s70
      %p74 = scmp.eq.s32.totalorder %s34, 0
      %p75 = por %p73, %p74
      %p76 = scmp.ne.s32.totalorder %s68, %s70
      %p77 = scmp.eq.s32.totalorder %s39, 1
      %p78 = por %p76, %p77
      %p79 = scmp.ne.s32.totalorder %s70, %s71
      %p80 = scmp.eq.s32.totalorder %s39, 0
      %p81 = por %p79, %p80
      %p82 = scmp.ne.s32.totalorder %s70, %s71
      %p83 = scmp.eq.s32.totalorder %s40, 1
      %p84 = por %p82, %p83
      %p86 = scmp.ne.s32.totalorder %s71, %s85
      %p87 = scmp.eq.s32.totalorder %s40, 0
      %p88 = por %p86, %p87
      %s90 = sadd.s32 %s89, 1
      %p93 = scmp.eq.s32.totalorder %s34, 1
      %p94 = scmp.ne.s32.totalorder %s89, %s91
      %p95 = scmp.eq.s32.totalorder %s34, 0
      %p96 = por %p94, %p95
      %p97 = scmp.ne.s32.totalorder %s89, %s91
      %p98 = scmp.eq.s32.totalorder %s39, 1
      %p99 = por %p97, %p98
      %p100 = scmp.ne.s32.totalorder %s91, %s92
      %p101 = scmp.eq.s32.totalorder %s39, 0
      %p102 = por %p100, %p101
      %p103 = scmp.ne.s32.totalorder %s91, %s92
      %p104 = scmp.eq.s32.totalorder %s40, 1
      %p105 = por %p103, %p104
      %p107 = scmp.ne.s32.totalorder %s92, %s106
      %p108 = scmp.eq.s32.totalorder %s40, 0
      %p109 = por %p107, %p108
      %s111 = sadd.s32 %s110, 1
      %p114 = scmp.eq.s32.totalorder %s34, 1
      %p115 = scmp.ne.s32.totalorder %s110, %s112
      %p116 = scmp.eq.s32.totalorder %s34, 0
      %p117 = por %p115, %p116
      %p118 = scmp.ne.s32.totalorder %s110, %s112
      %p119 = scmp.eq.s32.totalorder %s39, 1
      %p120 = por %p118, %p119
      %p121 = scmp.ne.s32.totalorder %s112, %s113
      %p122 = scmp.eq.s32.totalorder %s39, 0
      %p123 = por %p121, %p122
      %p124 = scmp.ne.s32.totalorder %s112, %s113
      %p125 = scmp.eq.s32.totalorder %s40, 1
      %p126 = por %p124, %p125
      %p128 = scmp.ne.s32.totalorder %s113, %s127
      %p129 = scmp.eq.s32.totalorder %s40, 0
      %p130 = por %p128, %p129
      %s132 = sadd.s32 %s131, 1
      %p135 = scmp.eq.s32.totalorder %s34, 1
      %p136 = scmp.ne.s32.totalorder %s131, %s133
      %p137 = scmp.eq.s32.totalorder %s34, 0
      %p138 = por %p136, %p137
      %p139 = scmp.ne.s32.totalorder %s131, %s133
      %p140 = scmp.eq.s32.totalorder %s39, 1
      %p141 = por %p139, %p140
      %p142 = scmp.ne.s32.totalorder %s133, %s134
      %p143 = scmp.eq.s32.totalorder %s39, 0
      %p144 = por %p142, %p143
      %p145 = scmp.ne.s32.totalorder %s133, %s134
      %p146 = scmp.eq.s32.totalorder %s40, 1
      %p147 = por %p145, %p146
      %p149 = scmp.ne.s32.totalorder %s134, %s148
      %p150 = scmp.eq.s32.totalorder %s40, 0
      %p151 = por %p149, %p150
      %s153 = sadd.s32 %s152, 1
      %p156 = scmp.eq.s32.totalorder %s34, 1
      %p157 = scmp.ne.s32.totalorder %s152, %s154
      %p158 = scmp.eq.s32.totalorder %s34, 0
      %p159 = por %p157, %p158
      %p160 = scmp.ne.s32.totalorder %s152, %s154
      %p161 = scmp.eq.s32.totalorder %s39, 1
      %p162 = por %p160, %p161
      %p163 = scmp.ne.s32.totalorder %s154, %s155
      %p164 = scmp.eq.s32.totalorder %s39, 0
      %p165 = por %p163, %p164
      %p166 = scmp.ne.s32.totalorder %s154, %s155
      %p167 = scmp.eq.s32.totalorder %s40, 1
      %p168 = por %p166, %p167
      %p170 = scmp.ne.s32.totalorder %s155, %s169
      %p171 = scmp.eq.s32.totalorder %s40, 0
      %p172 = por %p170, %p171
      %s174 = sadd.s32 %s173, 1
      %p177 = scmp.eq.s32.totalorder %s34, 1
      %p178 = scmp.ne.s32.totalorder %s173, %s175
      %p179 = scmp.eq.s32.totalorder %s34, 0
      %p180 = por %p178, %p179
      %p181 = scmp.ne.s32.totalorder %s173, %s175
      %p182 = scmp.eq.s32.totalorder %s39, 1
      %p183 = por %p181, %p182
      %p184 = scmp.ne.s32.totalorder %s175, %s176
      %p185 = scmp.eq.s32.totalorder %s39, 0
      %p186 = por %p184, %p185
      %p187 = scmp.ne.s32.totalorder %s175, %s176
      %p188 = scmp.eq.s32.totalorder %s40, 1
      %p189 = por %p187, %p188
      %p191 = scmp.ne.s32.totalorder %s176, %s190
      %p192 = scmp.eq.s32.totalorder %s40, 0
      %p193 = por %p191, %p192
      %s195 = sadd.s32 %s194, 1
      %p198 = scmp.eq.s32.totalorder %s34, 1
      %p199 = scmp.ne.s32.totalorder %s194, %s196
      %p200 = scmp.eq.s32.totalorder %s34, 0
      %p201 = por %p199, %p200
      %p202 = scmp.ne.s32.totalorder %s194, %s196
      %p203 = scmp.eq.s32.totalorder %s39, 1
      %p204 = por %p202, %p203
      %p205 = scmp.ne.s32.totalorder %s196, %s197
      %p206 = scmp.eq.s32.totalorder %s39, 0
      %p207 = por %p205, %p206
      %p208 = scmp.ne.s32.totalorder %s196, %s197
      %p209 = scmp.eq.s32.totalorder %s40, 1
      %p210 = por %p208, %p209
      %p212 = scmp.ne.s32.totalorder %s197, %s211
      %p213 = scmp.eq.s32.totalorder %s40, 0
      %p214 = por %p212, %p213
      %s216 = sadd.s32 %s215, 1
      %p219 = scmp.eq.s32.totalorder %s34, 1
      %p220 = scmp.ne.s32.totalorder %s215, %s217
      %p221 = scmp.eq.s32.totalorder %s34, 0
      %p222 = por %p220, %p221
      %p223 = scmp.ne.s32.totalorder %s215, %s217
      %p224 = scmp.eq.s32.totalorder %s39, 1
      %p225 = por %p223, %p224
      %p226 = scmp.ne.s32.totalorder %s217, %s218
      %p227 = scmp.eq.s32.totalorder %s39, 0
      %p228 = por %p226, %p227
      %p229 = scmp.ne.s32.totalorder %s217, %s218
      %p230 = scmp.eq.s32.totalorder %s40, 1
      %p231 = por %p229, %p230
      %p233 = scmp.ne.s32.totalorder %s218, %s232
      %p234 = scmp.eq.s32.totalorder %s40, 0
      %p235 = por %p233, %p234
      %s237 = sadd.s32 %s236, 1
      %p240 = scmp.eq.s32.totalorder %s34, 1
      %p241 = scmp.ne.s32.totalorder %s236, %s238
      %p242 = scmp.eq.s32.totalorder %s34, 0
      %p243 = por %p241, %p242
      %p244 = scmp.ne.s32.totalorder %s236, %s238
      %p245 = scmp.eq.s32.totalorder %s39, 1
      %p246 = por %p244, %p245
      %p247 = scmp.ne.s32.totalorder %s238, %s239
      %p248 = scmp.eq.s32.totalorder %s39, 0
      %p249 = por %p247, %p248
      %p250 = scmp.ne.s32.totalorder %s238, %s239
      %p251 = scmp.eq.s32.totalorder %s40, 1
      %p252 = por %p250, %p251
      %p254 = scmp.ne.s32.totalorder %s239, %s253
      %p255 = scmp.eq.s32.totalorder %s40, 0
      %p256 = por %p254, %p255
      %s258 = sadd.s32 %s257, 1
      %p261 = scmp.eq.s32.totalorder %s34, 1
      %p262 = scmp.ne.s32.totalorder %s257, %s259
      %p263 = scmp.eq.s32.totalorder %s34, 0
      %p264 = por %p262, %p263
      %p265 = scmp.ne.s32.totalorder %s257, %s259
      %p266 = scmp.eq.s32.totalorder %s39, 1
      %p267 = por %p265, %p266
      %p268 = scmp.ne.s32.totalorder %s259, %s260
      %p269 = scmp.eq.s32.totalorder %s39, 0
      %p270 = por %p268, %p269
      %p271 = scmp.ne.s32.totalorder %s259, %s260
      %p272 = scmp.eq.s32.totalorder %s40, 1
      %p273 = por %p271, %p272
      %p275 = scmp.ne.s32.totalorder %s260, %s274
      %p276 = scmp.eq.s32.totalorder %s40, 0
      %p277 = por %p275, %p276
      %s279 = sadd.s32 %s278, 1
      %p282 = scmp.eq.s32.totalorder %s34, 1
      %p283 = scmp.ne.s32.totalorder %s278, %s280
      %p284 = scmp.eq.s32.totalorder %s34, 0
      %p285 = por %p283, %p284
      %p286 = scmp.ne.s32.totalorder %s278, %s280
      %p287 = scmp.eq.s32.totalorder %s39, 1
      %p288 = por %p286, %p287
      %p289 = scmp.ne.s32.totalorder %s280, %s281
      %p290 = scmp.eq.s32.totalorder %s39, 0
      %p291 = por %p289, %p290
      %p292 = scmp.ne.s32.totalorder %s280, %s281
      %p293 = scmp.eq.s32.totalorder %s40, 1
      %p294 = por %p292, %p293
      %p296 = scmp.ne.s32.totalorder %s281, %s295
      %p297 = scmp.eq.s32.totalorder %s40, 0
      %p298 = por %p296, %p297
      %s300 = sadd.s32 %s299, 1
      %p303 = scmp.eq.s32.totalorder %s34, 1
      %p304 = scmp.ne.s32.totalorder %s299, %s301
      %p305 = scmp.eq.s32.totalorder %s34, 0
      %p306 = por %p304, %p305
      %p307 = scmp.ne.s32.totalorder %s299, %s301
      %p308 = scmp.eq.s32.totalorder %s39, 1
      %p309 = por %p307, %p308
      %p310 = scmp.ne.s32.totalorder %s301, %s302
      %p311 = scmp.eq.s32.totalorder %s39, 0
      %p312 = por %p310, %p311
      %p313 = scmp.ne.s32.totalorder %s301, %s302
      %p314 = scmp.eq.s32.totalorder %s40, 1
      %p315 = por %p313, %p314
      %p317 = scmp.ne.s32.totalorder %s302, %s316
      %p318 = scmp.eq.s32.totalorder %s40, 0
      %p319 = por %p317, %p318
      %s321 = sadd.s32 %s320, 1
      %p324 = scmp.eq.s32.totalorder %s34, 1
      %p325 = scmp.ne.s32.totalorder %s320, %s322
      %p326 = scmp.eq.s32.totalorder %s34, 0
      %p327 = por %p325, %p326
      %p328 = scmp.ne.s32.totalorder %s320, %s322
      %p329 = scmp.eq.s32.totalorder %s39, 1
      %p330 = por %p328, %p329
      %p331 = scmp.ne.s32.totalorder %s322, %s323
      %p332 = scmp.eq.s32.totalorder %s39, 0
      %p333 = por %p331, %p332
      %p334 = scmp.ne.s32.totalorder %s322, %s323
      %p335 = scmp.eq.s32.totalorder %s40, 1
      %p336 = por %p334, %p335
      %p338 = scmp.ne.s32.totalorder %s323, %s337
      %p339 = scmp.eq.s32.totalorder %s40, 0
      %p340 = por %p338, %p339
      %s342 = sadd.s32 %s341, 1
      %p345 = scmp.eq.s32.totalorder %s34, 1
      %p346 = scmp.ne.s32.totalorder %s341, %s343
      %p347 = scmp.eq.s32.totalorder %s34, 0
      %p348 = por %p346, %p347
      %p349 = scmp.ne.s32.totalorder %s341, %s343
      %p350 = scmp.eq.s32.totalorder %s39, 1
      %p351 = por %p349, %p350
      %p352 = scmp.ne.s32.totalorder %s343, %s344
      %p353 = scmp.eq.s32.totalorder %s39, 0
      %p354 = por %p352, %p353
      %p355 = scmp.ne.s32.totalorder %s343, %s344
      %p356 = scmp.eq.s32.totalorder %s40, 1
      %p357 = por %p355, %p356
      %p359 = scmp.ne.s32.totalorder %s344, %s358
      %p360 = scmp.eq.s32.totalorder %s40, 0
      %p361 = por %p359, %p360
      %s362 = ssub.s32 %s34, %s41
      %p363 = scmp.eq.s32.totalorder %s362, 0
      %s365 = sadd.s32 %s364, 1
      %s366 = scalar_select %p363, %s364, %s365
      %p369 = pneg %p363
      %p370 = scmp.eq.s32.totalorder %s34, 1
      %p371 = por %p369, %p370
      %p372 = scmp.ne.s32.totalorder %s364, %s367
      %p373 = scmp.eq.s32.totalorder %s34, 0
      %p374 = por %p372, %p373
      %p375 = scmp.ne.s32.totalorder %s364, %s367
      %p376 = scmp.eq.s32.totalorder %s39, 1
      %p377 = por %p375, %p376
      %p378 = scmp.ne.s32.totalorder %s367, %s368
      %p379 = scmp.eq.s32.totalorder %s39, 0
      %p380 = por %p378, %p379
      %p381 = scmp.ne.s32.totalorder %s367, %s368
      %p382 = scmp.eq.s32.totalorder %s40, 1
      %p383 = por %p381, %p382
      %p385 = scmp.ne.s32.totalorder %s368, %s384
      %p386 = scmp.eq.s32.totalorder %s40, 0
      %p387 = por %p385, %p386
      %p388 = scmp.le.s32.totalorder 1, %s34
      %p389 = scmp.lt.s32.totalorder %s34, 3
      %p390 = pnand %p388, %p389
      %p391 = pneg %p390
      // Predicated region
      $region9: #{tpu_custom_call.1} parent=5 // pred_check
        _
      $region10: #{tpu_custom_call.1} parent=5 // pred_check_branch
        %393 = sbr.rel (%p390) target = $region12
      $region11: #{tpu_custom_call.1} parent=5 // pred_region
        %s394 = ssub.s32 %s34, 1
        // Predicated region
        $region13: #{tpu_custom_call.1} parent=11 // pred_check
          %p395 = pneg %p81
        $region14: #{tpu_custom_call.1} parent=11 // pred_check_branch
          %397 = sbr.rel (%p395) target = $region16
        $region15: #{tpu_custom_call.1} parent=11 // pred_region
          %s399 = ssub.s32 960, 960
          %400 = vsyncadd [#allocation12], %s399
          %s401 = sshll.u32 [#allocation11], 4
          %s402 = int_to_ptr.vmem [resolvable:$true] %s401
          %407 = dma.hbm_to_vmem [thread:$0]  %s1, 960, %s402, [#allocation12], 64, 64, 4
        $region16: #{tpu_custom_call.1} parent=11 // pred_fallthru
          _
        // Predicated region
        $region17: #{tpu_custom_call.1} parent=11 // pred_check
          %p408 = pneg %p102
        $region18: #{tpu_custom_call.1} parent=11 // pred_check_branch
          %410 = sbr.rel (%p408) target = $region20
        $region19: #{tpu_custom_call.1} parent=11 // pred_region
          %s412 = ssub.s32 1728, 1728
          %413 = vsyncadd [#allocation12], %s412
          %s414 = sshll.u32 [#allocation13], 4
          %s415 = int_to_ptr.vmem [resolvable:$true] %s414
          %420 = dma.hbm_to_vmem [thread:$0]  %s2, 1728, %s415, [#allocation12], 64, 64, 4
        $region20: #{tpu_custom_call.1} parent=11 // pred_fallthru
          _
        // Predicated region
        $region21: #{tpu_custom_call.1} parent=11 // pred_check
          %p421 = pneg %p123
        $region22: #{tpu_custom_call.1} parent=11 // pred_check_branch
          %423 = sbr.rel (%p421) target = $region24
        $region23: #{tpu_custom_call.1} parent=11 // pred_region
          %s425 = ssub.s32 3456, 3456
          %426 = vsyncadd [#allocation15], %s425
          %s427 = sshll.u32 [#allocation14], 4
          %s428 = int_to_ptr.vmem [resolvable:$true] %s427
          %433 = dma.hbm_to_vmem [thread:$0]  %s3, 3456, %s428, [#allocation15], 64, 64, 4
        $region24: #{tpu_custom_call.1} parent=11 // pred_fallthru
          _
        // Predicated region
        $region25: #{tpu_custom_call.1} parent=11 // pred_check
          %p434 = pneg %p144
        $region26: #{tpu_custom_call.1} parent=11 // pred_check_branch
          %436 = sbr.rel (%p434) target = $region28
        $region27: #{tpu_custom_call.1} parent=11 // pred_region
          %s438 = ssub.s32 7680, 7680
          %439 = vsyncadd [#allocation15], %s438
          %s440 = sshll.u32 [#allocation16], 4
          %s441 = int_to_ptr.vmem [resolvable:$true] %s440
          %446 = dma.hbm_to_vmem [thread:$0]  %s4, 7680, %s441, [#allocation15], 128, 128, 8
        $region28: #{tpu_custom_call.1} parent=11 // pred_fallthru
          _
        // Predicated region
        $region29: #{tpu_custom_call.1} parent=11 // pred_check
          %p447 = pneg %p165
        $region30: #{tpu_custom_call.1} parent=11 // pred_check_branch
          %449 = sbr.rel (%p447) target = $region32
        $region31: #{tpu_custom_call.1} parent=11 // pred_region
          %s451 = ssub.s32 15360, 15360
          %452 = vsyncadd [#allocation18], %s451
          %s453 = sshll.u32 [#allocation17], 4
          %s454 = int_to_ptr.vmem [resolvable:$true] %s453
          %459 = dma.hbm_to_vmem [thread:$0]  %s5, 15360, %s454, [#allocation18], 128, 128, 8
        $region32: #{tpu_custom_call.1} parent=11 // pred_fallthru
          _
        // Predicated region
        $region33: #{tpu_custom_call.1} parent=11 // pred_check
          %p460 = pneg %p186
        $region34: #{tpu_custom_call.1} parent=11 // pred_check_branch
          %462 = sbr.rel (%p460) target = $region36
        $region35: #{tpu_custom_call.1} parent=11 // pred_region
          %s464 = ssub.s32 36864, 36864
          %465 = vsyncadd [#allocation18], %s464
          %s466 = sshll.u32 [#allocation19], 4
          %s467 = int_to_ptr.vmem [resolvable:$true] %s466
          %472 = dma.hbm_to_vmem [thread:$0]  %s6, 36864, %s467, [#allocation18], 256, 256, 16
        $region36: #{tpu_custom_call.1} parent=11 // pred_fallthru
          _
        // Predicated region
        $region37: #{tpu_custom_call.1} parent=11 // pred_check
          %p473 = pneg %p207
        $region38: #{tpu_custom_call.1} parent=11 // pred_check_branch
          %475 = sbr.rel (%p473) target = $region40
        $region39: #{tpu_custom_call.1} parent=11 // pred_region
          %s477 = ssub.s32 16, 16
          %478 = vsyncadd [#allocation21], %s477
          %s480 = sshll.u32 [#allocation20], 4
          %s481 = int_to_ptr.vmem [resolvable:$true] %s480
          %483 = dma.hbm_to_vmem [thread:$0]  %s7, 16, %s481, [#allocation21]
        $region40: #{tpu_custom_call.1} parent=11 // pred_fallthru
          _
        // Predicated region
        $region41: #{tpu_custom_call.1} parent=11 // pred_check
          %p484 = pneg %p228
        $region42: #{tpu_custom_call.1} parent=11 // pred_check_branch
          %486 = sbr.rel (%p484) target = $region44
        $region43: #{tpu_custom_call.1} parent=11 // pred_region
          %s488 = ssub.s32 16, 16
          %489 = vsyncadd [#allocation21], %s488
          %s491 = sshll.u32 [#allocation22], 4
          %s492 = int_to_ptr.vmem [resolvable:$true] %s491
          %494 = dma.hbm_to_vmem [thread:$0]  %s8, 16, %s492, [#allocation21]
        $region44: #{tpu_custom_call.1} parent=11 // pred_fallthru
          _
        // Predicated region
        $region45: #{tpu_custom_call.1} parent=11 // pred_check
          %p495 = pneg %p249
        $region46: #{tpu_custom_call.1} parent=11 // pred_check_branch
          %497 = sbr.rel (%p495) target = $region48
        $region47: #{tpu_custom_call.1} parent=11 // pred_region
          %s499 = ssub.s32 16, 16
          %500 = vsyncadd [#allocation24], %s499
          %s502 = sshll.u32 [#allocation23], 4
          %s503 = int_to_ptr.vmem [resolvable:$true] %s502
          %505 = dma.hbm_to_vmem [thread:$0]  %s9, 16, %s503, [#allocation24]
        $region48: #{tpu_custom_call.1} parent=11 // pred_fallthru
          _
        // Predicated region
        $region49: #{tpu_custom_call.1} parent=11 // pred_check
          %p506 = pneg %p270
        $region50: #{tpu_custom_call.1} parent=11 // pred_check_branch
          %508 = sbr.rel (%p506) target = $region52
        $region51: #{tpu_custom_call.1} parent=11 // pred_region
          %s510 = ssub.s32 32, 32
          %511 = vsyncadd [#allocation24], %s510
          %s513 = sshll.u32 [#allocation25], 4
          %s514 = int_to_ptr.vmem [resolvable:$true] %s513
          %516 = dma.hbm_to_vmem [thread:$0]  %s10, 32, %s514, [#allocation24]
        $region52: #{tpu_custom_call.1} parent=11 // pred_fallthru
          _
        // Predicated region
        $region53: #{tpu_custom_call.1} parent=11 // pred_check
          %p517 = pneg %p291
        $region54: #{tpu_custom_call.1} parent=11 // pred_check_branch
          %519 = sbr.rel (%p517) target = $region56
        $region55: #{tpu_custom_call.1} parent=11 // pred_region
          %s521 = ssub.s32 32, 32
          %522 = vsyncadd [#allocation27], %s521
          %s524 = sshll.u32 [#allocation26], 4
          %s525 = int_to_ptr.vmem [resolvable:$true] %s524
          %527 = dma.hbm_to_vmem [thread:$0]  %s11, 32, %s525, [#allocation27]
        $region56: #{tpu_custom_call.1} parent=11 // pred_fallthru
          _
        // Predicated region
        $region57: #{tpu_custom_call.1} parent=11 // pred_check
          %p528 = pneg %p312
        $region58: #{tpu_custom_call.1} parent=11 // pred_check_branch
          %530 = sbr.rel (%p528) target = $region60
        $region59: #{tpu_custom_call.1} parent=11 // pred_region
          %s532 = ssub.s32 64, 64
          %533 = vsyncadd [#allocation27], %s532
          %s535 = sshll.u32 [#allocation28], 4
          %s536 = int_to_ptr.vmem [resolvable:$true] %s535
          %538 = dma.hbm_to_vmem [thread:$0]  %s12, 64, %s536, [#allocation27]
        $region60: #{tpu_custom_call.1} parent=11 // pred_fallthru
          _
        // Predicated region
        $region61: #{tpu_custom_call.1} parent=11 // pred_check
          %p539 = pneg %p333
        $region62: #{tpu_custom_call.1} parent=11 // pred_check_branch
          %541 = sbr.rel (%p539) target = $region64
        $region63: #{tpu_custom_call.1} parent=11 // pred_region
          %s543 = ssub.s32 32768, 32768
          %544 = vsyncadd [#allocation30], %s543
          %s545 = sshll.u32 [#allocation29], 4
          %s546 = int_to_ptr.vmem [resolvable:$true] %s545
          %551 = dma.hbm_to_vmem [thread:$0]  %s13, 32768, %s546, [#allocation30], 128, 128, 8
        $region64: #{tpu_custom_call.1} parent=11 // pred_fallthru
          _
        // Predicated region
        $region65: #{tpu_custom_call.1} parent=11 // pred_check
          %p552 = pneg %p354
        $region66: #{tpu_custom_call.1} parent=11 // pred_check_branch
          %554 = sbr.rel (%p552) target = $region68
        $region67: #{tpu_custom_call.1} parent=11 // pred_region
          %s556 = ssub.s32 16, 16
          %557 = vsyncadd [#allocation30], %s556
          %s559 = sshll.u32 [#allocation31], 4
          %s560 = int_to_ptr.vmem [resolvable:$true] %s559
          %562 = dma.hbm_to_vmem [thread:$0]  %s14, 16, %s560, [#allocation30]
        $region68: #{tpu_custom_call.1} parent=11 // pred_fallthru
          _
      $region12: #{tpu_custom_call.1} parent=5 // pred_fallthru
        _
      %p563 = scmp.lt.s32.totalorder %s34, 2
      // Predicated region
      $region69: #{tpu_custom_call.1} parent=5 // pred_check
        %p564 = pneg %p563
      $region70: #{tpu_custom_call.1} parent=5 // pred_check_branch
        %566 = sbr.rel (%p564) target = $region72
      $region71: #{tpu_custom_call.1} parent=5 // pred_region
        // Predicated region
        $region73: #{tpu_custom_call.1} parent=71 // pred_check
          %p567 = pneg %p54
        $region74: #{tpu_custom_call.1} parent=71 // pred_check_branch
          %569 = sbr.rel (%p567) target = $region76
        $region75: #{tpu_custom_call.1} parent=71 // pred_region
          %s570 = sand.u32 %s44, 1
          %s571 = scalar_lea.sflag [#allocation9], %s570
          %s572 = sand.u32 %s44, 1
          %s573 = smul.addr %s572, 32
          %s574 = scalar_lea.vmem [#allocation8], %s573
          %s576 = ssub.s32 512, 512
          %577 = vsyncadd %s571, %s576
          %s578 = smul.addr %s34, 4
          %s579 = smul.addr %s578, 128
          %s580 = scalar_lea.hbm %s0, %s579
          %s581 = sshll.u32 %s574, 4
          %s582 = int_to_ptr.vmem [resolvable:$true] %s581
          %587 = dma.hbm_to_vmem [thread:$0]  %s580, 512, %s582, %s571, 128, 128, 8
        $region76: #{tpu_custom_call.1} parent=71 // pred_fallthru
          _
      $region72: #{tpu_custom_call.1} parent=5 // pred_fallthru
        _
      %p588 = scmp.le.s32.totalorder 1, %s34
      %p589 = scmp.lt.s32.totalorder %s34, 3
      %p590 = pnand %p588, %p589
      %p591 = pneg %p590
      // Predicated region
      $region77: #{tpu_custom_call.1} parent=5 // pred_check
        _
      $region78: #{tpu_custom_call.1} parent=5 // pred_check_branch
        %593 = sbr.rel (%p590) target = $region80
      $region79: #{tpu_custom_call.1} parent=5 // pred_region
        %s594 = ssub.s32 %s34, 1
        %s595 = sand.u32 %s47, 1
        %s596 = scalar_lea.sflag [#allocation9], %s595
        %s597 = sand.u32 %s47, 1
        %s598 = smul.addr %s597, 32
        %s599 = scalar_lea.vmem [#allocation8], %s598
        // Predicated region
        $region81: #{tpu_custom_call.1} parent=79 // pred_check
          %p600 = pneg %p60
        $region82: #{tpu_custom_call.1} parent=79 // pred_check_branch
          %602 = sbr.rel (%p600) target = $region84
        $region83: #{tpu_custom_call.1} parent=79 // pred_region
          %603 = dma.done %s596, 512
        $region84: #{tpu_custom_call.1} parent=79 // pred_fallthru
          _
        // Predicated region
        $region85: #{tpu_custom_call.1} parent=79 // pred_check
          %p604 = pneg %p81
        $region86: #{tpu_custom_call.1} parent=79 // pred_check_branch
          %606 = sbr.rel (%p604) target = $region88
        $region87: #{tpu_custom_call.1} parent=79 // pred_region
          %607 = dma.done [#allocation12], 960
        $region88: #{tpu_custom_call.1} parent=79 // pred_fallthru
          _
        // Predicated region
        $region89: #{tpu_custom_call.1} parent=79 // pred_check
          %p608 = pneg %p102
        $region90: #{tpu_custom_call.1} parent=79 // pred_check_branch
          %610 = sbr.rel (%p608) target = $region92
        $region91: #{tpu_custom_call.1} parent=79 // pred_region
          %611 = dma.done [#allocation12], 1728
        $region92: #{tpu_custom_call.1} parent=79 // pred_fallthru
          _
        // Predicated region
        $region93: #{tpu_custom_call.1} parent=79 // pred_check
          %p612 = pneg %p123
        $region94: #{tpu_custom_call.1} parent=79 // pred_check_branch
          %614 = sbr.rel (%p612) target = $region96
        $region95: #{tpu_custom_call.1} parent=79 // pred_region
          %615 = dma.done [#allocation15], 3456
        $region96: #{tpu_custom_call.1} parent=79 // pred_fallthru
          _
        // Predicated region
        $region97: #{tpu_custom_call.1} parent=79 // pred_check
          %p616 = pneg %p144
        $region98: #{tpu_custom_call.1} parent=79 // pred_check_branch
          %618 = sbr.rel (%p616) target = $region100
        $region99: #{tpu_custom_call.1} parent=79 // pred_region
          %619 = dma.done [#allocation15], 7680
        $region100: #{tpu_custom_call.1} parent=79 // pred_fallthru
          _
        // Predicated region
        $region101: #{tpu_custom_call.1} parent=79 // pred_check
          %p620 = pneg %p165
        $region102: #{tpu_custom_call.1} parent=79 // pred_check_branch
          %622 = sbr.rel (%p620) target = $region104
        $region103: #{tpu_custom_call.1} parent=79 // pred_region
          %623 = dma.done [#allocation18], 15360
        $region104: #{tpu_custom_call.1} parent=79 // pred_fallthru
          _
        // Predicated region
        $region105: #{tpu_custom_call.1} parent=79 // pred_check
          %p624 = pneg %p186
        $region106: #{tpu_custom_call.1} parent=79 // pred_check_branch
          %626 = sbr.rel (%p624) target = $region108
        $region107: #{tpu_custom_call.1} parent=79 // pred_region
          %627 = dma.done [#allocation18], 36864
        $region108: #{tpu_custom_call.1} parent=79 // pred_fallthru
          _
        // Predicated region
        $region109: #{tpu_custom_call.1} parent=79 // pred_check
          %p628 = pneg %p207
        $region110: #{tpu_custom_call.1} parent=79 // pred_check_branch
          %630 = sbr.rel (%p628) target = $region112
        $region111: #{tpu_custom_call.1} parent=79 // pred_region
          %631 = dma.done [#allocation21], 16
        $region112: #{tpu_custom_call.1} parent=79 // pred_fallthru
          _
        // Predicated region
        $region113: #{tpu_custom_call.1} parent=79 // pred_check
          %p632 = pneg %p228
        $region114: #{tpu_custom_call.1} parent=79 // pred_check_branch
          %634 = sbr.rel (%p632) target = $region116
        $region115: #{tpu_custom_call.1} parent=79 // pred_region
          %635 = dma.done [#allocation21], 16
        $region116: #{tpu_custom_call.1} parent=79 // pred_fallthru
          _
        // Predicated region
        $region117: #{tpu_custom_call.1} parent=79 // pred_check
          %p636 = pneg %p249
        $region118: #{tpu_custom_call.1} parent=79 // pred_check_branch
          %638 = sbr.rel (%p636) target = $region120
        $region119: #{tpu_custom_call.1} parent=79 // pred_region
          %639 = dma.done [#allocation24], 16
        $region120: #{tpu_custom_call.1} parent=79 // pred_fallthru
          _
        // Predicated region
        $region121: #{tpu_custom_call.1} parent=79 // pred_check
          %p640 = pneg %p270
        $region122: #{tpu_custom_call.1} parent=79 // pred_check_branch
          %642 = sbr.rel (%p640) target = $region124
        $region123: #{tpu_custom_call.1} parent=79 // pred_region
          %643 = dma.done [#allocation24], 32
        $region124: #{tpu_custom_call.1} parent=79 // pred_fallthru
          _
        // Predicated region
        $region125: #{tpu_custom_call.1} parent=79 // pred_check
          %p644 = pneg %p291
        $region126: #{tpu_custom_call.1} parent=79 // pred_check_branch
          %646 = sbr.rel (%p644) target = $region128
        $region127: #{tpu_custom_call.1} parent=79 // pred_region
          %647 = dma.done [#allocation27], 32
        $region128: #{tpu_custom_call.1} parent=79 // pred_fallthru
          _
        // Predicated region
        $region129: #{tpu_custom_call.1} parent=79 // pred_check
          %p648 = pneg %p312
        $region130: #{tpu_custom_call.1} parent=79 // pred_check_branch
          %650 = sbr.rel (%p648) target = $region132
        $region131: #{tpu_custom_call.1} parent=79 // pred_region
          %651 = dma.done [#allocation27], 64
        $region132: #{tpu_custom_call.1} parent=79 // pred_fallthru
          _
        // Predicated region
        $region133: #{tpu_custom_call.1} parent=79 // pred_check
          %p652 = pneg %p333
        $region134: #{tpu_custom_call.1} parent=79 // pred_check_branch
          %654 = sbr.rel (%p652) target = $region136
        $region135: #{tpu_custom_call.1} parent=79 // pred_region
          %655 = dma.done [#allocation30], 32768
        $region136: #{tpu_custom_call.1} parent=79 // pred_fallthru
          _
        // Predicated region
        $region137: #{tpu_custom_call.1} parent=79 // pred_check
          %p656 = pneg %p354
        $region138: #{tpu_custom_call.1} parent=79 // pred_check_branch
          %658 = sbr.rel (%p656) target = $region140
        $region139: #{tpu_custom_call.1} parent=79 // pred_region
          %659 = dma.done [#allocation30], 16
        $region140: #{tpu_custom_call.1} parent=79 // pred_fallthru
          _
        %s660 = sand.u32 %s47, 1
        %s661 = scalar_lea.sflag [#allocation9], %s660
        %s662 = sand.u32 %s47, 1
        %s663 = smul.addr %s662, 32
        %s664 = scalar_lea.vmem [#allocation8], %s663
        %p665 = pneg %p60
        %p666 = pneg %p57
        %p667 = pneg %p81
        %p668 = pneg %p78
        %p669 = pneg %p102
        %p670 = pneg %p99
        %p671 = pneg %p123
        %p672 = pneg %p120
        %p673 = pneg %p144
        %p674 = pneg %p141
        %p675 = pneg %p165
        %p676 = pneg %p162
        %p677 = pneg %p186
        %p678 = pneg %p183
        %p679 = pneg %p207
        %p680 = pneg %p204
        %p681 = pneg %p228
        %p682 = pneg %p225
        %p683 = pneg %p249
        %p684 = pneg %p246
        %p685 = pneg %p270
        %p686 = pneg %p267
        %p687 = pneg %p291
        %p688 = pneg %p288
        %p689 = pneg %p312
        %p690 = pneg %p309
        %p691 = pneg %p333
        %p692 = pneg %p330
        %p693 = pneg %p354
        %p694 = pneg %p351
        %p695 = pneg %p380
        %p696 = pneg %p377
        %s697 = sand.u32 %s367, 1
        %s698 = scalar_lea.sflag [#allocation10], %s697
        %s699 = sand.u32 %s367, 1
        %s700 = scalar_lea.vmem [#allocation32], %s699
        %vm701 = vcmask 277504
        %702 = vst.msk [vmem:[#allocation2] sm:$0xff] %vm701, 0.0
        %703 = vst.msk [vmem:[#allocation2 + $0x8] sm:$0xff] %vm701, 0.0
        %704 = vst.msk [vmem:[#allocation2 + $0x10] sm:$0xff] %vm701, 0.0
        %705 = vst.msk [vmem:[#allocation2 + $0x18] sm:$0xff] %vm701, 0.0
        %vm706 = vcmask 271360
        %707 = vst.msk [vmem:[#allocation2 + $0x20] sm:$0x3] %vm706, 0.0
        %vm708 = vcmask 588800
        %709 = vst.msk [vmem:[#allocation3] sm:$0xff] %vm708, 0.0
        %710 = vst.msk [vmem:[#allocation3 + $0x8] sm:$0xff] %vm708, 0.0
        %vm711 = vcmask 582656
        %712 = vst.msk [vmem:[#allocation3 + $0x10] sm:$0x3] %vm711, 0.0
        %713 = vst [vmem:[#allocation4] sm:$0xff] 0.0
        %vm714 = vcmask 130048
        %715 = vst.msk [vmem:[#allocation4 + $0x8] sm:$0xff] %vm714, 0.0
        %716 = vst [vmem:[#allocation4 + $0x10] sm:$0xff] 0.0
        %717 = vst.msk [vmem:[#allocation4 + $0x18] sm:$0xff] %vm714, 0.0
        %718 = vst [vmem:[#allocation4 + $0x20] sm:$0x3] 0.0
        %vm719 = vcmask 123904
        %720 = vst.msk [vmem:[#allocation4 + $0x28] sm:$0x3] %vm719, 0.0
        %721 = vst [vmem:[#allocation5] sm:$0xff] 0.0
        %vm722 = vcmask 261120
        %723 = vst.msk [vmem:[#allocation5 + $0x8] sm:$0xff] %vm722, 0.0
        %724 = vst [vmem:[#allocation5 + $0x10] sm:$0x3] 0.0
        %vm725 = vcmask 254976
        %726 = vst.msk [vmem:[#allocation5 + $0x18] sm:$0x3] %vm725, 0.0
        %727 = vst [vmem:[#allocation6] sm:$0xff] 0.0
        %728 = vst [vmem:[#allocation6 + $0x8] sm:$0xff] 0.0
        %vm729 = vcmask 523264
        %730 = vst.msk [vmem:[#allocation6 + $0x10] sm:$0xff] %vm729, 0.0
        %731 = vst [vmem:[#allocation6 + $0x18] sm:$0x3] 0.0
        %732 = vst [vmem:[#allocation6 + $0x20] sm:$0x3] 0.0
        %vm733 = vcmask 517120
        %734 = vst.msk [vmem:[#allocation6 + $0x28] sm:$0x3] %vm733, 0.0
        %735 = vst [vmem:[#allocation7] sm:$0x3f] 0.0
        %736 = vst [vmem:[#allocation7 + $0x8] sm:$0x3f] 0.0
        %737 = vst [vmem:[#allocation7 + $0x10] sm:$0x3f] 0.0
        %v738 = vld [vmem:[%s599] sm:$0xff]
        %v739 = vld [vmem:[%s599 + $0x8] sm:$0xff]
        %v740 = vld [vmem:[%s599 + $0x10] sm:$0xff]
        %v741 = vld [vmem:[%s599 + $0x18] sm:$0xff]
        %746 = vrot.lane.b32.xlu0 %v738, 1
        %v747 = vpop.permute.xlu0 %746
        %748 = vrot.lane.b32.xlu0 %v739, 1
        %v749 = vpop.permute.xlu0 %748
        %750 = vrot.lane.b32.xlu0 %v740, 1
        %v751 = vpop.permute.xlu0 %750
        %752 = vrot.lane.b32.xlu0 %v741, 1
        %v753 = vpop.permute.xlu0 %752
        %vm758 = vcmask 269320
        %759 = vst.msk [vmem:[#allocation2 + $0x1] sm:$0xff] %vm758, %v747
        %760 = vst.msk [vmem:[#allocation2 + $0x9] sm:$0xff] %vm758, %v749
        %761 = vst.msk [vmem:[#allocation2 + $0x11] sm:$0xff] %vm758, %v751
        %762 = vst.msk [vmem:[#allocation2 + $0x19] sm:$0xff] %vm758, %v753
        %v763 = vld [vmem:[#allocation2] sm:$0xff]
        %v764 = vld [vmem:[#allocation2 + $0x8] sm:$0xff]
        %v765 = vld [vmem:[#allocation2 + $0x10] sm:$0xff]
        %v766 = vld [vmem:[#allocation2 + $0x18] sm:$0xff]
        %v767 = vld [vmem:[#allocation2 + $0x20] sm:$0x3]
        %v768 = vlaneseq
        %v769 = vshrl.u32 %v768, 7
        %v770 = vadd.s32 %v769, 8
        %v771 = vlaneseq
        %v772 = vand.u32 %v771, 127
        %v773 = vmul.u32 %v769, 2
        %v774 = vmul.u32 %v770, 2
        %vm775 = vcmp.eq.s32.totalorder %v772, %v773
        %vm776 = vcmp.eq.s32.totalorder %v772, %v774
        %v777 = vsel %vm775, 1, 0
        %v778 = vsel %vm776, 1, 0
        %v779 = vcvt.s32.f32 %v777
        %v780 = vcvt.s32.f32 %v778
        %v782 = vsel %vm701, %v779, 0
        %v785 = vsel %vm701, %v780, 0
        %vm787 = vcmask 1041408
        %v789 = vsel %vm787, %v767, 0
        %791 = vmatprep.subr.mxu0 0.0
        %792 = vmatpush1.msra.mxu0 0.0
        %793 = vmatprep.subr.mxu0 0.0
        %794 = vmatpush1.msra.mxu0 0.0
        %795 = vmatprep.subr.mxu0 0.0
        %796 = vmatpush1.msra.mxu0 0.0
        %797 = vmatprep.subr.mxu0 0.0
        %798 = vmatpush1.msra.mxu0 0.0
        %799 = vmatprep.subr.mxu0 0.0
        %800 = vmatpush1.msra.mxu0 0.0
        %801 = vmatprep.subr.mxu0 0.0
        %802 = vmatpush1.msra.mxu0 0.0
        %803 = vmatprep.subr.mxu0 0.0
        %804 = vmatpush1.msra.mxu0 0.0
        %805 = vmatprep.subr.mxu0 0.0
        %806 = vmatpush1.msra.mxu0 0.0
        %807 = vmatprep.subr.mxu0 0.0
        %808 = vmatpush1.msra.mxu0 0.0
        %809 = vmatprep.subr.mxu0 0.0
        %810 = vmatpush1.msra.mxu0 0.0
        %811 = vmatprep.subr.mxu0 0.0
        %812 = vmatpush1.msra.mxu0 0.0
        %813 = vmatprep.subr.mxu0 0.0
        %814 = vmatpush1.msra.mxu0 %v789
        %815 = vmatprep.subr.mxu0 0.0
        %816 = vmatpush1.msra.mxu0 %v766
        %817 = vmatprep.subr.mxu0 0.0
        %818 = vmatpush1.msra.mxu0 %v765
        %819 = vmatprep.subr.mxu0 0.0
        %820 = vmatpush1.msra.mxu0 %v764
        %821 = vmatprep.subr.mxu0 0.0
        %822 = vmatpush1.msra.mxu0 %v763
        %823 = vmatprep.subr.mxu0 0.0
        %824 = vmatpush2.msra.mxu0 0.0
        %825 = vmatprep.subr.mxu0 0.0
        %826 = vmatpush2.msra.mxu0 0.0
        %827 = vmatprep.subr.mxu0 0.0
        %828 = vmatpush2.msra.mxu0 0.0
        %829 = vmatprep.subr.mxu0 0.0
        %830 = vmatpush2.msra.mxu0 0.0
        %831 = vmatprep.subr.mxu0 0.0
        %832 = vmatpush2.msra.mxu0 0.0
        %833 = vmatprep.subr.mxu0 0.0
        %834 = vmatpush2.msra.mxu0 0.0
        %835 = vmatprep.subr.mxu0 0.0
        %836 = vmatpush2.msra.mxu0 0.0
        %837 = vmatprep.subr.mxu0 0.0
        %838 = vmatpush2.msra.mxu0 0.0
        %839 = vmatprep.subr.mxu0 0.0
        %840 = vmatpush2.msra.mxu0 0.0
        %841 = vmatprep.subr.mxu0 0.0
        %842 = vmatpush2.msra.mxu0 0.0
        %843 = vmatprep.subr.mxu0 0.0
        %844 = vmatpush2.msra.mxu0 0.0
        %845 = vmatprep.subr.mxu0 0.0
        %846 = vmatpush2.msra.mxu0 0.0
        %847 = vmatprep.subr.mxu0 0.0
        %848 = vmatpush2.msra.mxu0 0.0
        %849 = vmatprep.subr.mxu0 0.0
        %850 = vmatpush2.msra.mxu0 0.0
        %851 = vmatprep.subr.mxu0 0.0
        %852 = vmatpush2.msra.mxu0 0.0
        %853 = vmatprep.subr.mxu0 0.0
        %854 = vmatpush2.msra.mxu0 0.0
        %855 = vmatprep.mubr.f32.mxu0 0.0
        %856 = vmatmul.mubr.f32.gmra.mxu0 %v782
        %v857 = vpop.f32.mrf.mxu0
        %v858 = vadd.f32 0.0, %v857
        %v859 = vpop.f32.mrf.mxu0
        %860 = vmatprep.mubr.f32.mxu0 0.0
        %861 = vmatmul.mubr.f32.gmra.mxu0 %v785
        %v862 = vpop.f32.mrf.mxu0
        %v863 = vadd.f32 0.0, %v862
        %v864 = vpop.f32.mrf.mxu0
        %865 = vdwg.mxu0
        %v866 = vld [vmem:[#allocation11] sm:$0xf]
        %v867 = vld [vmem:[#allocation11 + $0x4] sm:$0xf]
        %v868 = vld [vmem:[#allocation11 + $0x8] sm:$0xf]
        %v869 = vld [vmem:[#allocation11 + $0xc] sm:$0xf]
        %v870 = vld [vmem:[#allocation11 + $0x10] sm:$0x1]
        %v871 = vunpack.c.l.bf16 %v866
        %v872 = vunpack.c.l.bf16 %v867
        %v873 = vunpack.c.l.bf16 %v868
        %v874 = vunpack.c.l.bf16 %v869
        %v875 = vunpack.c.l.bf16 %v870
        %v876 = vadd.s32 %v773, 1
        %v877 = vadd.s32 %v774, 1
        %vm878 = vcmp.eq.s32.totalorder %v772, %v876
        %vm879 = vcmp.eq.s32.totalorder %v772, %v877
        %v880 = vsel %vm878, 1, 0
        %v881 = vsel %vm879, 1, 0
        %v882 = vcvt.s32.f32 %v880
        %v883 = vcvt.s32.f32 %v881
        %v885 = vsel %vm701, %v882, 0
        %v888 = vsel %vm701, %v883, 0
        %890 = vmatprep.subr.mxu0 0.0
        %891 = vmatpush1.msra.mxu0 0.0
        %892 = vmatprep.subr.mxu0 0.0
        %893 = vmatpush1.msra.mxu0 0.0
        %894 = vmatprep.subr.mxu0 0.0
        %895 = vmatpush1.msra.mxu0 0.0
        %896 = vmatprep.subr.mxu0 0.0
        %897 = vmatpush1.msra.mxu0 0.0
        %898 = vmatprep.subr.mxu0 0.0
        %899 = vmatpush1.msra.mxu0 0.0
        %900 = vmatprep.subr.mxu0 0.0
        %901 = vmatpush1.msra.mxu0 0.0
        %902 = vmatprep.subr.mxu0 0.0
        %903 = vmatpush1.msra.mxu0 0.0
        %904 = vmatprep.subr.mxu0 0.0
        %905 = vmatpush1.msra.mxu0 0.0
        %906 = vmatprep.subr.mxu0 0.0
        %907 = vmatpush1.msra.mxu0 0.0
        %908 = vmatprep.subr.mxu0 0.0
        %909 = vmatpush1.msra.mxu0 0.0
        %910 = vmatprep.subr.mxu0 0.0
        %911 = vmatpush1.msra.mxu0 0.0
        %912 = vmatprep.subr.mxu0 0.0
        %913 = vmatpush1.msra.mxu0 %v789
        %914 = vmatprep.subr.mxu0 0.0
        %915 = vmatpush1.msra.mxu0 %v766
        %916 = vmatprep.subr.mxu0 0.0
        %917 = vmatpush1.msra.mxu0 %v765
        %918 = vmatprep.subr.mxu0 0.0
        %919 = vmatpush1.msra.mxu0 %v764
        %920 = vmatprep.subr.mxu0 0.0
        %921 = vmatpush1.msra.mxu0 %v763
        %922 = vmatprep.subr.mxu0 0.0
        %923 = vmatpush2.msra.mxu0 0.0
        %924 = vmatprep.subr.mxu0 0.0
        %925 = vmatpush2.msra.mxu0 0.0
        %926 = vmatprep.subr.mxu0 0.0
        %927 = vmatpush2.msra.mxu0 0.0
        %928 = vmatprep.subr.mxu0 0.0
        %929 = vmatpush2.msra.mxu0 0.0
        %930 = vmatprep.subr.mxu0 0.0
        %931 = vmatpush2.msra.mxu0 0.0
        %932 = vmatprep.subr.mxu0 0.0
        %933 = vmatpush2.msra.mxu0 0.0
        %934 = vmatprep.subr.mxu0 0.0
        %935 = vmatpush2.msra.mxu0 0.0
        %936 = vmatprep.subr.mxu0 0.0
        %937 = vmatpush2.msra.mxu0 0.0
        %938 = vmatprep.subr.mxu0 0.0
        %939 = vmatpush2.msra.mxu0 0.0
        %940 = vmatprep.subr.mxu0 0.0
        %941 = vmatpush2.msra.mxu0 0.0
        %942 = vmatprep.subr.mxu0 0.0
        %943 = vmatpush2.msra.mxu0 0.0
        %944 = vmatprep.subr.mxu0 0.0
        %945 = vmatpush2.msra.mxu0 0.0
        %946 = vmatprep.subr.mxu0 0.0
        %947 = vmatpush2.msra.mxu0 0.0
        %948 = vmatprep.subr.mxu0 0.0
        %949 = vmatpush2.msra.mxu0 0.0
        %950 = vmatprep.subr.mxu0 0.0
        %951 = vmatpush2.msra.mxu0 0.0
        %952 = vmatprep.subr.mxu0 0.0
        %953 = vmatpush2.msra.mxu0 0.0
        %954 = vmatprep.mubr.f32.mxu0 0.0
        %955 = vmatmul.mubr.f32.gmra.mxu0 %v885
        %v956 = vpop.f32.mrf.mxu0
        %v957 = vadd.f32 0.0, %v956
        %v958 = vpop.f32.mrf.mxu0
        %959 = vmatprep.mubr.f32.mxu0 0.0
        %960 = vmatmul.mubr.f32.gmra.mxu0 %v888
        %v961 = vpop.f32.mrf.mxu0
        %v962 = vadd.f32 0.0, %v961
        %v963 = vpop.f32.mrf.mxu0
        %964 = vdwg.mxu0
        %s965 = scalar_lea.vmem [#allocation11], 20
        %v966 = vld [vmem:[%s965] sm:$0xf]
        %v967 = vld [vmem:[%s965 + $0x4] sm:$0xf]
        %v968 = vld [vmem:[%s965 + $0x8] sm:$0xf]
        %v969 = vld [vmem:[%s965 + $0xc] sm:$0xf]
        %v970 = vld [vmem:[%s965 + $0x10] sm:$0x1]
        %v971 = vunpack.c.l.bf16 %v966
        %v972 = vunpack.c.l.bf16 %v967
        %v973 = vunpack.c.l.bf16 %v968
        %v974 = vunpack.c.l.bf16 %v969
        %v975 = vunpack.c.l.bf16 %v970
        %v977 = vsel %vm701, %v957, 0
        %v980 = vsel %vm701, %v962, 0
        %v983 = vsel %vm787, %v975, 0
        %985 = vmatprep.subr.mxu0 0.0
        %986 = vmatpush1.msra.mxu0 0.0
        %987 = vmatprep.subr.mxu0 0.0
        %988 = vmatpush1.msra.mxu0 0.0
        %989 = vmatprep.subr.mxu0 0.0
        %990 = vmatpush1.msra.mxu0 0.0
        %991 = vmatprep.subr.mxu0 0.0
        %992 = vmatpush1.msra.mxu0 0.0
        %993 = vmatprep.subr.mxu0 0.0
        %994 = vmatpush1.msra.mxu0 0.0
        %995 = vmatprep.subr.mxu0 0.0
        %996 = vmatpush1.msra.mxu0 0.0
        %997 = vmatprep.subr.mxu0 0.0
        %998 = vmatpush1.msra.mxu0 0.0
        %999 = vmatprep.subr.mxu0 0.0
        %1000 = vmatpush1.msra.mxu0 0.0
        %1001 = vmatprep.subr.mxu0 0.0
        %1002 = vmatpush1.msra.mxu0 0.0
        %1003 = vmatprep.subr.mxu0 0.0
        %1004 = vmatpush1.msra.mxu0 0.0
        %1005 = vmatprep.subr.mxu0 0.0
        %1006 = vmatpush1.msra.mxu0 0.0
        %1007 = vmatprep.subr.mxu0 0.0
        %1008 = vmatpush1.msra.mxu0 %v983
        %1009 = vmatprep.subr.mxu0 0.0
        %1010 = vmatpush1.msra.mxu0 %v974
        %1011 = vmatprep.subr.mxu0 0.0
        %1012 = vmatpush1.msra.mxu0 %v973
        %1013 = vmatprep.subr.mxu0 0.0
        %1014 = vmatpush1.msra.mxu0 %v972
        %1015 = vmatprep.subr.mxu0 0.0
        %1016 = vmatpush1.msra.mxu0 %v971
        %1017 = vmatprep.subr.mxu0 0.0
        %1018 = vmatpush2.msra.mxu0 0.0
        %1019 = vmatprep.subr.mxu0 0.0
        %1020 = vmatpush2.msra.mxu0 0.0
        %1021 = vmatprep.subr.mxu0 0.0
        %1022 = vmatpush2.msra.mxu0 0.0
        %1023 = vmatprep.subr.mxu0 0.0
        %1024 = vmatpush2.msra.mxu0 0.0
        %1025 = vmatprep.subr.mxu0 0.0
        %1026 = vmatpush2.msra.mxu0 0.0
        %1027 = vmatprep.subr.mxu0 0.0
        %1028 = vmatpush2.msra.mxu0 0.0
        %1029 = vmatprep.subr.mxu0 0.0
        %1030 = vmatpush2.msra.mxu0 0.0
        %1031 = vmatprep.subr.mxu0 0.0
        %1032 = vmatpush2.msra.mxu0 0.0
        %1033 = vmatprep.subr.mxu0 0.0
        %1034 = vmatpush2.msra.mxu0 0.0
        %1035 = vmatprep.subr.mxu0 0.0
        %1036 = vmatpush2.msra.mxu0 0.0
        %1037 = vmatprep.subr.mxu0 0.0
        %1038 = vmatpush2.msra.mxu0 0.0
        %1039 = vmatprep.subr.mxu0 0.0
        %1040 = vmatpush2.msra.mxu0 0.0
        %1041 = vmatprep.subr.mxu0 0.0
        %1042 = vmatpush2.msra.mxu0 0.0
        %1043 = vmatprep.subr.mxu0 0.0
        %1044 = vmatpush2.msra.mxu0 0.0
        %1045 = vmatprep.subr.mxu0 0.0
        %1046 = vmatpush2.msra.mxu0 0.0
        %1047 = vmatprep.subr.mxu0 0.0
        %1048 = vmatpush2.msra.mxu0 0.0
        %1049 = vmatprep.mubr.f32.mxu0 0.0
        %1050 = vmatmul.mubr.f32.gmra.mxu0 %v977
        %v1051 = vpop.f32.mrf.mxu0
        %v1052 = vadd.f32 0.0, %v1051
        %v1053 = vpop.f32.mrf.mxu0
        %1054 = vmatprep.mubr.f32.mxu0 0.0
        %1055 = vmatmul.mubr.f32.gmra.mxu0 %v980
        %v1056 = vpop.f32.mrf.mxu0
        %v1057 = vadd.f32 0.0, %v1056
        %v1058 = vpop.f32.mrf.mxu0
        %1059 = vdwg.mxu0
        %v1061 = vsel %vm701, %v858, 0
        %v1064 = vsel %vm701, %v863, 0
        %v1067 = vsel %vm787, %v875, 0
        %1069 = vmatprep.subr.mxu0 0.0
        %1070 = vmatpush1.msra.mxu0 0.0
        %1071 = vmatprep.subr.mxu0 0.0
        %1072 = vmatpush1.msra.mxu0 0.0
        %1073 = vmatprep.subr.mxu0 0.0
        %1074 = vmatpush1.msra.mxu0 0.0
        %1075 = vmatprep.subr.mxu0 0.0
        %1076 = vmatpush1.msra.mxu0 0.0
        %1077 = vmatprep.subr.mxu0 0.0
        %1078 = vmatpush1.msra.mxu0 0.0
        %1079 = vmatprep.subr.mxu0 0.0
        %1080 = vmatpush1.msra.mxu0 0.0
        %1081 = vmatprep.subr.mxu0 0.0
        %1082 = vmatpush1.msra.mxu0 0.0
        %1083 = vmatprep.subr.mxu0 0.0
        %1084 = vmatpush1.msra.mxu0 0.0
        %1085 = vmatprep.subr.mxu0 0.0
        %1086 = vmatpush1.msra.mxu0 0.0
        %1087 = vmatprep.subr.mxu0 0.0
        %1088 = vmatpush1.msra.mxu0 0.0
        %1089 = vmatprep.subr.mxu0 0.0
        %1090 = vmatpush1.msra.mxu0 0.0
        %1091 = vmatprep.subr.mxu0 0.0
        %1092 = vmatpush1.msra.mxu0 %v1067
        %1093 = vmatprep.subr.mxu0 0.0
        %1094 = vmatpush1.msra.mxu0 %v874
        %1095 = vmatprep.subr.mxu0 0.0
        %1096 = vmatpush1.msra.mxu0 %v873
        %1097 = vmatprep.subr.mxu0 0.0
        %1098 = vmatpush1.msra.mxu0 %v872
        %1099 = vmatprep.subr.mxu0 0.0
        %1100 = vmatpush1.msra.mxu0 %v871
        %1101 = vmatprep.subr.mxu0 0.0
        %1102 = vmatpush2.msra.mxu0 0.0
        %1103 = vmatprep.subr.mxu0 0.0
        %1104 = vmatpush2.msra.mxu0 0.0
        %1105 = vmatprep.subr.mxu0 0.0
        %1106 = vmatpush2.msra.mxu0 0.0
        %1107 = vmatprep.subr.mxu0 0.0
        %1108 = vmatpush2.msra.mxu0 0.0
        %1109 = vmatprep.subr.mxu0 0.0
        %1110 = vmatpush2.msra.mxu0 0.0
        %1111 = vmatprep.subr.mxu0 0.0
        %1112 = vmatpush2.msra.mxu0 0.0
        %1113 = vmatprep.subr.mxu0 0.0
        %1114 = vmatpush2.msra.mxu0 0.0
        %1115 = vmatprep.subr.mxu0 0.0
        %1116 = vmatpush2.msra.mxu0 0.0
        %1117 = vmatprep.subr.mxu0 0.0
        %1118 = vmatpush2.msra.mxu0 0.0
        %1119 = vmatprep.subr.mxu0 0.0
        %1120 = vmatpush2.msra.mxu0 0.0
        %1121 = vmatprep.subr.mxu0 0.0
        %1122 = vmatpush2.msra.mxu0 0.0
        %1123 = vmatprep.subr.mxu0 0.0
        %1124 = vmatpush2.msra.mxu0 0.0
        %1125 = vmatprep.subr.mxu0 0.0
        %1126 = vmatpush2.msra.mxu0 0.0
        %1127 = vmatprep.subr.mxu0 0.0
        %1128 = vmatpush2.msra.mxu0 0.0
        %1129 = vmatprep.subr.mxu0 0.0
        %1130 = vmatpush2.msra.mxu0 0.0
        %1131 = vmatprep.subr.mxu0 0.0
        %1132 = vmatpush2.msra.mxu0 0.0
        %1133 = vmatprep.mubr.f32.mxu0 0.0
        %1134 = vmatmul.mubr.f32.gmra.mxu0 %v1061
        %v1135 = vpop.f32.mrf.mxu0
        %v1136 = vadd.f32 %v1052, %v1135
        %v1137 = vpop.f32.mrf.mxu0
        %1138 = vmatprep.mubr.f32.mxu0 0.0
        %1139 = vmatmul.mubr.f32.gmra.mxu0 %v1064
        %v1140 = vpop.f32.mrf.mxu0
        %v1141 = vadd.f32 %v1057, %v1140
        %v1142 = vpop.f32.mrf.mxu0
        %1143 = vdwg.mxu0
        %v1144 = vadd.s32 %v773, 2
        %v1145 = vadd.s32 %v774, 2
        %vm1146 = vcmp.eq.s32.totalorder %v772, %v1144
        %vm1147 = vcmp.eq.s32.totalorder %v772, %v1145
        %v1148 = vsel %vm1146, 1, 0
        %v1149 = vsel %vm1147, 1, 0
        %v1150 = vcvt.s32.f32 %v1148
        %v1151 = vcvt.s32.f32 %v1149
        %v1153 = vsel %vm701, %v1150, 0
        %v1156 = vsel %vm701, %v1151, 0
        %1158 = vmatprep.subr.mxu0 0.0
        %1159 = vmatpush1.msra.mxu0 0.0
        %1160 = vmatprep.subr.mxu0 0.0
        %1161 = vmatpush1.msra.mxu0 0.0
        %1162 = vmatprep.subr.mxu0 0.0
        %1163 = vmatpush1.msra.mxu0 0.0
        %1164 = vmatprep.subr.mxu0 0.0
        %1165 = vmatpush1.msra.mxu0 0.0
        %1166 = vmatprep.subr.mxu0 0.0
        %1167 = vmatpush1.msra.mxu0 0.0
        %1168 = vmatprep.subr.mxu0 0.0
        %1169 = vmatpush1.msra.mxu0 0.0
        %1170 = vmatprep.subr.mxu0 0.0
        %1171 = vmatpush1.msra.mxu0 0.0
        %1172 = vmatprep.subr.mxu0 0.0
        %1173 = vmatpush1.msra.mxu0 0.0
        %1174 = vmatprep.subr.mxu0 0.0
        %1175 = vmatpush1.msra.mxu0 0.0
        %1176 = vmatprep.subr.mxu0 0.0
        %1177 = vmatpush1.msra.mxu0 0.0
        %1178 = vmatprep.subr.mxu0 0.0
        %1179 = vmatpush1.msra.mxu0 0.0
        %1180 = vmatprep.subr.mxu0 0.0
        %1181 = vmatpush1.msra.mxu0 %v789
        %1182 = vmatprep.subr.mxu0 0.0
        %1183 = vmatpush1.msra.mxu0 %v766
        %1184 = vmatprep.subr.mxu0 0.0
        %1185 = vmatpush1.msra.mxu0 %v765
        %1186 = vmatprep.subr.mxu0 0.0
        %1187 = vmatpush1.msra.mxu0 %v764
        %1188 = vmatprep.subr.mxu0 0.0
        %1189 = vmatpush1.msra.mxu0 %v763
        %1190 = vmatprep.subr.mxu0 0.0
        %1191 = vmatpush2.msra.mxu0 0.0
        %1192 = vmatprep.subr.mxu0 0.0
        %1193 = vmatpush2.msra.mxu0 0.0
        %1194 = vmatprep.subr.mxu0 0.0
        %1195 = vmatpush2.msra.mxu0 0.0
        %1196 = vmatprep.subr.mxu0 0.0
        %1197 = vmatpush2.msra.mxu0 0.0
        %1198 = vmatprep.subr.mxu0 0.0
        %1199 = vmatpush2.msra.mxu0 0.0
        %1200 = vmatprep.subr.mxu0 0.0
        %1201 = vmatpush2.msra.mxu0 0.0
        %1202 = vmatprep.subr.mxu0 0.0
        %1203 = vmatpush2.msra.mxu0 0.0
        %1204 = vmatprep.subr.mxu0 0.0
        %1205 = vmatpush2.msra.mxu0 0.0
        %1206 = vmatprep.subr.mxu0 0.0
        %1207 = vmatpush2.msra.mxu0 0.0
        %1208 = vmatprep.subr.mxu0 0.0
        %1209 = vmatpush2.msra.mxu0 0.0
        %1210 = vmatprep.subr.mxu0 0.0
        %1211 = vmatpush2.msra.mxu0 0.0
        %1212 = vmatprep.subr.mxu0 0.0
        %1213 = vmatpush2.msra.mxu0 0.0
        %1214 = vmatprep.subr.mxu0 0.0
        %1215 = vmatpush2.msra.mxu0 0.0
        %1216 = vmatprep.subr.mxu0 0.0
        %1217 = vmatpush2.msra.mxu0 0.0
        %1218 = vmatprep.subr.mxu0 0.0
        %1219 = vmatpush2.msra.mxu0 0.0
        %1220 = vmatprep.subr.mxu0 0.0
        %1221 = vmatpush2.msra.mxu0 0.0
        %1222 = vmatprep.mubr.f32.mxu0 0.0
        %1223 = vmatmul.mubr.f32.gmra.mxu0 %v1153
        %v1224 = vpop.f32.mrf.mxu0
        %v1225 = vadd.f32 0.0, %v1224
        %v1226 = vpop.f32.mrf.mxu0
        %1227 = vmatprep.mubr.f32.mxu0 0.0
        %1228 = vmatmul.mubr.f32.gmra.mxu0 %v1156
        %v1229 = vpop.f32.mrf.mxu0
        %v1230 = vadd.f32 0.0, %v1229
        %v1231 = vpop.f32.mrf.mxu0
        %1232 = vdwg.mxu0
        %s1233 = scalar_lea.vmem [#allocation11], 40
        %v1234 = vld [vmem:[%s1233] sm:$0xf]
        %v1235 = vld [vmem:[%s1233 + $0x4] sm:$0xf]
        %v1236 = vld [vmem:[%s1233 + $0x8] sm:$0xf]
        %v1237 = vld [vmem:[%s1233 + $0xc] sm:$0xf]
        %v1238 = vld [vmem:[%s1233 + $0x10] sm:$0x1]
        %v1239 = vunpack.c.l.bf16 %v1234
        %v1240 = vunpack.c.l.bf16 %v1235
        %v1241 = vunpack.c.l.bf16 %v1236
        %v1242 = vunpack.c.l.bf16 %v1237
        %v1243 = vunpack.c.l.bf16 %v1238
        %v1245 = vsel %vm701, %v1225, 0
        %v1248 = vsel %vm701, %v1230, 0
        %v1251 = vsel %vm787, %v1243, 0
        %1253 = vmatprep.subr.mxu0 0.0
        %1254 = vmatpush1.msra.mxu0 0.0
        %1255 = vmatprep.subr.mxu0 0.0
        %1256 = vmatpush1.msra.mxu0 0.0
        %1257 = vmatprep.subr.mxu0 0.0
        %1258 = vmatpush1.msra.mxu0 0.0
        %1259 = vmatprep.subr.mxu0 0.0
        %1260 = vmatpush1.msra.mxu0 0.0
        %1261 = vmatprep.subr.mxu0 0.0
        %1262 = vmatpush1.msra.mxu0 0.0
        %1263 = vmatprep.subr.mxu0 0.0
        %1264 = vmatpush1.msra.mxu0 0.0
        %1265 = vmatprep.subr.mxu0 0.0
        %1266 = vmatpush1.msra.mxu0 0.0
        %1267 = vmatprep.subr.mxu0 0.0
        %1268 = vmatpush1.msra.mxu0 0.0
        %1269 = vmatprep.subr.mxu0 0.0
        %1270 = vmatpush1.msra.mxu0 0.0
        %1271 = vmatprep.subr.mxu0 0.0
        %1272 = vmatpush1.msra.mxu0 0.0
        %1273 = vmatprep.subr.mxu0 0.0
        %1274 = vmatpush1.msra.mxu0 0.0
        %1275 = vmatprep.subr.mxu0 0.0
        %1276 = vmatpush1.msra.mxu0 %v1251
        %1277 = vmatprep.subr.mxu0 0.0
        %1278 = vmatpush1.msra.mxu0 %v1242
        %1279 = vmatprep.subr.mxu0 0.0
        %1280 = vmatpush1.msra.mxu0 %v1241
        %1281 = vmatprep.subr.mxu0 0.0
        %1282 = vmatpush1.msra.mxu0 %v1240
        %1283 = vmatprep.subr.mxu0 0.0
        %1284 = vmatpush1.msra.mxu0 %v1239
        %1285 = vmatprep.subr.mxu0 0.0
        %1286 = vmatpush2.msra.mxu0 0.0
        %1287 = vmatprep.subr.mxu0 0.0
        %1288 = vmatpush2.msra.mxu0 0.0
        %1289 = vmatprep.subr.mxu0 0.0
        %1290 = vmatpush2.msra.mxu0 0.0
        %1291 = vmatprep.subr.mxu0 0.0
        %1292 = vmatpush2.msra.mxu0 0.0
        %1293 = vmatprep.subr.mxu0 0.0
        %1294 = vmatpush2.msra.mxu0 0.0
        %1295 = vmatprep.subr.mxu0 0.0
        %1296 = vmatpush2.msra.mxu0 0.0
        %1297 = vmatprep.subr.mxu0 0.0
        %1298 = vmatpush2.msra.mxu0 0.0
        %1299 = vmatprep.subr.mxu0 0.0
        %1300 = vmatpush2.msra.mxu0 0.0
        %1301 = vmatprep.subr.mxu0 0.0
        %1302 = vmatpush2.msra.mxu0 0.0
        %1303 = vmatprep.subr.mxu0 0.0
        %1304 = vmatpush2.msra.mxu0 0.0
        %1305 = vmatprep.subr.mxu0 0.0
        %1306 = vmatpush2.msra.mxu0 0.0
        %1307 = vmatprep.subr.mxu0 0.0
        %1308 = vmatpush2.msra.mxu0 0.0
        %1309 = vmatprep.subr.mxu0 0.0
        %1310 = vmatpush2.msra.mxu0 0.0
        %1311 = vmatprep.subr.mxu0 0.0
        %1312 = vmatpush2.msra.mxu0 0.0
        %1313 = vmatprep.subr.mxu0 0.0
        %1314 = vmatpush2.msra.mxu0 0.0
        %1315 = vmatprep.subr.mxu0 0.0
        %1316 = vmatpush2.msra.mxu0 0.0
        %1317 = vmatprep.mubr.f32.mxu0 0.0
        %1318 = vmatmul.mubr.f32.gmra.mxu0 %v1245
        %v1319 = vpop.f32.mrf.mxu0
        %v1320 = vadd.f32 0.0, %v1319
        %v1321 = vpop.f32.mrf.mxu0
        %1322 = vmatprep.mubr.f32.mxu0 0.0
        %1323 = vmatmul.mubr.f32.gmra.mxu0 %v1248
        %v1324 = vpop.f32.mrf.mxu0
        %v1325 = vadd.f32 0.0, %v1324
        %v1326 = vpop.f32.mrf.mxu0
        %1327 = vdwg.mxu0
        %v1328 = vadd.f32 %v1136, %v1320
        %v1329 = vadd.f32 %v1141, %v1325
        %v1330 = vld [vmem:[#allocation20] sm:$0x1]
        %v1332 = vlaneseq
        %v1333 = vshrl.u32 %v1332, 7
        %v1334 = vsub.s32 0, %v1333
        %v1335 = vrot.slane %v1330, %v1334
        %v1337 = vadd.f32 %v1328, %v1335
        %v1338 = vadd.f32 %v1329, %v1335
        %v1339 = vmul.f32 %v1337, 0.2
        %v1340 = vmul.f32 %v1338, 0.2
        %v1341 = vmax.f32 %v1337, %v1339
        %v1342 = vmax.f32 %v1338, %v1340
        %1345 = vrot.lane.b32.xlu0 %v1341, 4
        %v1346 = vpop.permute.xlu0 %1345
        %1347 = vrot.lane.b32.xlu0 %v1342, 4
        %v1348 = vpop.permute.xlu0 %1347
        %vm1351 = vcmask 556064
        %1352 = vst.msk [vmem:[#allocation3 + $0x1] sm:$0xff] %vm1351, %v1346
        %1353 = vst.msk [vmem:[#allocation3 + $0x9] sm:$0xff] %vm1351, %v1348
        %v1354 = vld [vmem:[#allocation3] sm:$0xff]
        %v1355 = vld [vmem:[#allocation3 + $0x8] sm:$0xff]
        %v1356 = vld [vmem:[#allocation13] sm:$0xf]
        %v1357 = vld [vmem:[#allocation13 + $0x4] sm:$0xf]
        %v1358 = vld [vmem:[#allocation13 + $0x8] sm:$0xf]
        %v1359 = vld [vmem:[#allocation13 + $0xc] sm:$0xf]
        %v1360 = vld [vmem:[#allocation13 + $0x10] sm:$0xf]
        %v1361 = vld [vmem:[#allocation13 + $0x14] sm:$0xf]
        %v1362 = vld [vmem:[#allocation13 + $0x18] sm:$0xf]
        %v1363 = vld [vmem:[#allocation13 + $0x1c] sm:$0xf]
        %v1364 = vld [vmem:[#allocation13 + $0x20] sm:$0xf]
        %v1365 = vunpack.c.l.bf16 %v1356
        %v1366 = vunpack.c.l.bf16 %v1357
        %v1367 = vunpack.c.l.bf16 %v1358
        %v1368 = vunpack.c.l.bf16 %v1359
        %v1369 = vunpack.c.l.bf16 %v1360
        %v1370 = vunpack.c.l.bf16 %v1361
        %v1371 = vunpack.c.l.bf16 %v1362
        %v1372 = vunpack.c.l.bf16 %v1363
        %v1373 = vunpack.c.l.bf16 %v1364
        %v1374 = vld [vmem:[#allocation3 + $0x1] sm:$0xff]
        %v1375 = vld [vmem:[#allocation3 + $0x9] sm:$0xff]
        %s1376 = scalar_lea.vmem [#allocation13], 36
        %v1377 = vld [vmem:[%s1376] sm:$0xf]
        %v1378 = vld [vmem:[%s1376 + $0x4] sm:$0xf]
        %v1379 = vld [vmem:[%s1376 + $0x8] sm:$0xf]
        %v1380 = vld [vmem:[%s1376 + $0xc] sm:$0xf]
        %v1381 = vld [vmem:[%s1376 + $0x10] sm:$0xf]
        %v1382 = vld [vmem:[%s1376 + $0x14] sm:$0xf]
        %v1383 = vld [vmem:[%s1376 + $0x18] sm:$0xf]
        %v1384 = vld [vmem:[%s1376 + $0x1c] sm:$0xf]
        %v1385 = vld [vmem:[%s1376 + $0x20] sm:$0xf]
        %v1386 = vunpack.c.l.bf16 %v1377
        %v1387 = vunpack.c.l.bf16 %v1378
        %v1388 = vunpack.c.l.bf16 %v1379
        %v1389 = vunpack.c.l.bf16 %v1380
        %v1390 = vunpack.c.l.bf16 %v1381
        %v1391 = vunpack.c.l.bf16 %v1382
        %v1392 = vunpack.c.l.bf16 %v1383
        %v1393 = vunpack.c.l.bf16 %v1384
        %v1394 = vunpack.c.l.bf16 %v1385
        %v1396 = vsel %vm708, %v1374, 0
        %v1399 = vsel %vm708, %v1375, 0
        %1401 = vmatprep.subr.mxu0 0.0
        %1402 = vmatpush1.msra.mxu0 0.0
        %1403 = vmatprep.subr.mxu0 0.0
        %1404 = vmatpush1.msra.mxu0 0.0
        %1405 = vmatprep.subr.mxu0 0.0
        %1406 = vmatpush1.msra.mxu0 0.0
        %1407 = vmatprep.subr.mxu0 0.0
        %1408 = vmatpush1.msra.mxu0 0.0
        %1409 = vmatprep.subr.mxu0 0.0
        %1410 = vmatpush1.msra.mxu0 0.0
        %1411 = vmatprep.subr.mxu0 0.0
        %1412 = vmatpush1.msra.mxu0 0.0
        %1413 = vmatprep.subr.mxu0 0.0
        %1414 = vmatpush1.msra.mxu0 0.0
        %1415 = vmatprep.subr.mxu0 0.0
        %1416 = vmatpush1.msra.mxu0 %v1394
        %1417 = vmatprep.subr.mxu0 0.0
        %1418 = vmatpush1.msra.mxu0 %v1393
        %1419 = vmatprep.subr.mxu0 0.0
        %1420 = vmatpush1.msra.mxu0 %v1392
        %1421 = vmatprep.subr.mxu0 0.0
        %1422 = vmatpush1.msra.mxu0 %v1391
        %1423 = vmatprep.subr.mxu0 0.0
        %1424 = vmatpush1.msra.mxu0 %v1390
        %1425 = vmatprep.subr.mxu0 0.0
        %1426 = vmatpush1.msra.mxu0 %v1389
        %1427 = vmatprep.subr.mxu0 0.0
        %1428 = vmatpush1.msra.mxu0 %v1388
        %1429 = vmatprep.subr.mxu0 0.0
        %1430 = vmatpush1.msra.mxu0 %v1387
        %1431 = vmatprep.subr.mxu0 0.0
        %1432 = vmatpush1.msra.mxu0 %v1386
        %1433 = vmatprep.subr.mxu0 0.0
        %1434 = vmatpush2.msra.mxu0 0.0
        %1435 = vmatprep.subr.mxu0 0.0
        %1436 = vmatpush2.msra.mxu0 0.0
        %1437 = vmatprep.subr.mxu0 0.0
        %1438 = vmatpush2.msra.mxu0 0.0
        %1439 = vmatprep.subr.mxu0 0.0
        %1440 = vmatpush2.msra.mxu0 0.0
        %1441 = vmatprep.subr.mxu0 0.0
        %1442 = vmatpush2.msra.mxu0 0.0
        %1443 = vmatprep.subr.mxu0 0.0
        %1444 = vmatpush2.msra.mxu0 0.0
        %1445 = vmatprep.subr.mxu0 0.0
        %1446 = vmatpush2.msra.mxu0 0.0
        %1447 = vmatprep.subr.mxu0 0.0
        %1448 = vmatpush2.msra.mxu0 0.0
        %1449 = vmatprep.subr.mxu0 0.0
        %1450 = vmatpush2.msra.mxu0 0.0
        %1451 = vmatprep.subr.mxu0 0.0
        %1452 = vmatpush2.msra.mxu0 0.0
        %1453 = vmatprep.subr.mxu0 0.0
        %1454 = vmatpush2.msra.mxu0 0.0
        %1455 = vmatprep.subr.mxu0 0.0
        %1456 = vmatpush2.msra.mxu0 0.0
        %1457 = vmatprep.subr.mxu0 0.0
        %1458 = vmatpush2.msra.mxu0 0.0
        %1459 = vmatprep.subr.mxu0 0.0
        %1460 = vmatpush2.msra.mxu0 0.0
        %1461 = vmatprep.subr.mxu0 0.0
        %1462 = vmatpush2.msra.mxu0 0.0
        %1463 = vmatprep.subr.mxu0 0.0
        %1464 = vmatpush2.msra.mxu0 0.0
        %1465 = vmatprep.mubr.f32.mxu0 0.0
        %1466 = vmatmul.mubr.f32.gmra.mxu0 %v1396
        %v1467 = vpop.f32.mrf.mxu0
        %v1468 = vadd.f32 0.0, %v1467
        %v1469 = vpop.f32.mrf.mxu0
        %1470 = vmatprep.mubr.f32.mxu0 0.0
        %1471 = vmatmul.mubr.f32.gmra.mxu0 %v1399
        %v1472 = vpop.f32.mrf.mxu0
        %v1473 = vadd.f32 0.0, %v1472
        %v1474 = vpop.f32.mrf.mxu0
        %1475 = vdwg.mxu0
        %v1477 = vsel %vm708, %v1354, 0
        %v1480 = vsel %vm708, %v1355, 0
        %1482 = vmatprep.subr.mxu0 0.0
        %1483 = vmatpush1.msra.mxu0 0.0
        %1484 = vmatprep.subr.mxu0 0.0
        %1485 = vmatpush1.msra.mxu0 0.0
        %1486 = vmatprep.subr.mxu0 0.0
        %1487 = vmatpush1.msra.mxu0 0.0
        %1488 = vmatprep.subr.mxu0 0.0
        %1489 = vmatpush1.msra.mxu0 0.0
        %1490 = vmatprep.subr.mxu0 0.0
        %1491 = vmatpush1.msra.mxu0 0.0
        %1492 = vmatprep.subr.mxu0 0.0
        %1493 = vmatpush1.msra.mxu0 0.0
        %1494 = vmatprep.subr.mxu0 0.0
        %1495 = vmatpush1.msra.mxu0 0.0
        %1496 = vmatprep.subr.mxu0 0.0
        %1497 = vmatpush1.msra.mxu0 %v1373
        %1498 = vmatprep.subr.mxu0 0.0
        %1499 = vmatpush1.msra.mxu0 %v1372
        %1500 = vmatprep.subr.mxu0 0.0
        %1501 = vmatpush1.msra.mxu0 %v1371
        %1502 = vmatprep.subr.mxu0 0.0
        %1503 = vmatpush1.msra.mxu0 %v1370
        %1504 = vmatprep.subr.mxu0 0.0
        %1505 = vmatpush1.msra.mxu0 %v1369
        %1506 = vmatprep.subr.mxu0 0.0
        %1507 = vmatpush1.msra.mxu0 %v1368
        %1508 = vmatprep.subr.mxu0 0.0
        %1509 = vmatpush1.msra.mxu0 %v1367
        %1510 = vmatprep.subr.mxu0 0.0
        %1511 = vmatpush1.msra.mxu0 %v1366
        %1512 = vmatprep.subr.mxu0 0.0
        %1513 = vmatpush1.msra.mxu0 %v1365
        %1514 = vmatprep.subr.mxu0 0.0
        %1515 = vmatpush2.msra.mxu0 0.0
        %1516 = vmatprep.subr.mxu0 0.0
        %1517 = vmatpush2.msra.mxu0 0.0
        %1518 = vmatprep.subr.mxu0 0.0
        %1519 = vmatpush2.msra.mxu0 0.0
        %1520 = vmatprep.subr.mxu0 0.0
        %1521 = vmatpush2.msra.mxu0 0.0
        %1522 = vmatprep.subr.mxu0 0.0
        %1523 = vmatpush2.msra.mxu0 0.0
        %1524 = vmatprep.subr.mxu0 0.0
        %1525 = vmatpush2.msra.mxu0 0.0
        %1526 = vmatprep.subr.mxu0 0.0
        %1527 = vmatpush2.msra.mxu0 0.0
        %1528 = vmatprep.subr.mxu0 0.0
        %1529 = vmatpush2.msra.mxu0 0.0
        %1530 = vmatprep.subr.mxu0 0.0
        %1531 = vmatpush2.msra.mxu0 0.0
        %1532 = vmatprep.subr.mxu0 0.0
        %1533 = vmatpush2.msra.mxu0 0.0
        %1534 = vmatprep.subr.mxu0 0.0
        %1535 = vmatpush2.msra.mxu0 0.0
        %1536 = vmatprep.subr.mxu0 0.0
        %1537 = vmatpush2.msra.mxu0 0.0
        %1538 = vmatprep.subr.mxu0 0.0
        %1539 = vmatpush2.msra.mxu0 0.0
        %1540 = vmatprep.subr.mxu0 0.0
        %1541 = vmatpush2.msra.mxu0 0.0
        %1542 = vmatprep.subr.mxu0 0.0
        %1543 = vmatpush2.msra.mxu0 0.0
        %1544 = vmatprep.subr.mxu0 0.0
        %1545 = vmatpush2.msra.mxu0 0.0
        %1546 = vmatprep.mubr.f32.mxu0 0.0
        %1547 = vmatmul.mubr.f32.gmra.mxu0 %v1477
        %v1548 = vpop.f32.mrf.mxu0
        %v1549 = vadd.f32 %v1468, %v1548
        %v1550 = vpop.f32.mrf.mxu0
        %1551 = vmatprep.mubr.f32.mxu0 0.0
        %1552 = vmatmul.mubr.f32.gmra.mxu0 %v1480
        %v1553 = vpop.f32.mrf.mxu0
        %v1554 = vadd.f32 %v1473, %v1553
        %v1555 = vpop.f32.mrf.mxu0
        %1556 = vdwg.mxu0
        %v1557 = vld [vmem:[#allocation3 + $0x2] sm:$0xff]
        %v1558 = vld [vmem:[#allocation3 + $0xa] sm:$0xff]
        %s1559 = scalar_lea.vmem [#allocation13], 72
        %v1560 = vld [vmem:[%s1559] sm:$0xf]
        %v1561 = vld [vmem:[%s1559 + $0x4] sm:$0xf]
        %v1562 = vld [vmem:[%s1559 + $0x8] sm:$0xf]
        %v1563 = vld [vmem:[%s1559 + $0xc] sm:$0xf]
        %v1564 = vld [vmem:[%s1559 + $0x10] sm:$0xf]
        %v1565 = vld [vmem:[%s1559 + $0x14] sm:$0xf]
        %v1566 = vld [vmem:[%s1559 + $0x18] sm:$0xf]
        %v1567 = vld [vmem:[%s1559 + $0x1c] sm:$0xf]
        %v1568 = vld [vmem:[%s1559 + $0x20] sm:$0xf]
        %v1569 = vunpack.c.l.bf16 %v1560
        %v1570 = vunpack.c.l.bf16 %v1561
        %v1571 = vunpack.c.l.bf16 %v1562
        %v1572 = vunpack.c.l.bf16 %v1563
        %v1573 = vunpack.c.l.bf16 %v1564
        %v1574 = vunpack.c.l.bf16 %v1565
        %v1575 = vunpack.c.l.bf16 %v1566
        %v1576 = vunpack.c.l.bf16 %v1567
        %v1577 = vunpack.c.l.bf16 %v1568
        %v1579 = vsel %vm708, %v1557, 0
        %v1582 = vsel %vm708, %v1558, 0
        %1584 = vmatprep.subr.mxu0 0.0
        %1585 = vmatpush1.msra.mxu0 0.0
        %1586 = vmatprep.subr.mxu0 0.0
        %1587 = vmatpush1.msra.mxu0 0.0
        %1588 = vmatprep.subr.mxu0 0.0
        %1589 = vmatpush1.msra.mxu0 0.0
        %1590 = vmatprep.subr.mxu0 0.0
        %1591 = vmatpush1.msra.mxu0 0.0
        %1592 = vmatprep.subr.mxu0 0.0
        %1593 = vmatpush1.msra.mxu0 0.0
        %1594 = vmatprep.subr.mxu0 0.0
        %1595 = vmatpush1.msra.mxu0 0.0
        %1596 = vmatprep.subr.mxu0 0.0
        %1597 = vmatpush1.msra.mxu0 0.0
        %1598 = vmatprep.subr.mxu0 0.0
        %1599 = vmatpush1.msra.mxu0 %v1577
        %1600 = vmatprep.subr.mxu0 0.0
        %1601 = vmatpush1.msra.mxu0 %v1576
        %1602 = vmatprep.subr.mxu0 0.0
        %1603 = vmatpush1.msra.mxu0 %v1575
        %1604 = vmatprep.subr.mxu0 0.0
        %1605 = vmatpush1.msra.mxu0 %v1574
        %1606 = vmatprep.subr.mxu0 0.0
        %1607 = vmatpush1.msra.mxu0 %v1573
        %1608 = vmatprep.subr.mxu0 0.0
        %1609 = vmatpush1.msra.mxu0 %v1572
        %1610 = vmatprep.subr.mxu0 0.0
        %1611 = vmatpush1.msra.mxu0 %v1571
        %1612 = vmatprep.subr.mxu0 0.0
        %1613 = vmatpush1.msra.mxu0 %v1570
        %1614 = vmatprep.subr.mxu0 0.0
        %1615 = vmatpush1.msra.mxu0 %v1569
        %1616 = vmatprep.subr.mxu0 0.0
        %1617 = vmatpush2.msra.mxu0 0.0
        %1618 = vmatprep.subr.mxu0 0.0
        %1619 = vmatpush2.msra.mxu0 0.0
        %1620 = vmatprep.subr.mxu0 0.0
        %1621 = vmatpush2.msra.mxu0 0.0
        %1622 = vmatprep.subr.mxu0 0.0
        %1623 = vmatpush2.msra.mxu0 0.0
        %1624 = vmatprep.subr.mxu0 0.0
        %1625 = vmatpush2.msra.mxu0 0.0
        %1626 = vmatprep.subr.mxu0 0.0
        %1627 = vmatpush2.msra.mxu0 0.0
        %1628 = vmatprep.subr.mxu0 0.0
        %1629 = vmatpush2.msra.mxu0 0.0
        %1630 = vmatprep.subr.mxu0 0.0
        %1631 = vmatpush2.msra.mxu0 0.0
        %1632 = vmatprep.subr.mxu0 0.0
        %1633 = vmatpush2.msra.mxu0 0.0
        %1634 = vmatprep.subr.mxu0 0.0
        %1635 = vmatpush2.msra.mxu0 0.0
        %1636 = vmatprep.subr.mxu0 0.0
        %1637 = vmatpush2.msra.mxu0 0.0
        %1638 = vmatprep.subr.mxu0 0.0
        %1639 = vmatpush2.msra.mxu0 0.0
        %1640 = vmatprep.subr.mxu0 0.0
        %1641 = vmatpush2.msra.mxu0 0.0
        %1642 = vmatprep.subr.mxu0 0.0
        %1643 = vmatpush2.msra.mxu0 0.0
        %1644 = vmatprep.subr.mxu0 0.0
        %1645 = vmatpush2.msra.mxu0 0.0
        %1646 = vmatprep.subr.mxu0 0.0
        %1647 = vmatpush2.msra.mxu0 0.0
        %1648 = vmatprep.mubr.f32.mxu0 0.0
        %1649 = vmatmul.mubr.f32.gmra.mxu0 %v1579
        %v1650 = vpop.f32.mrf.mxu0
        %v1651 = vadd.f32 0.0, %v1650
        %v1652 = vpop.f32.mrf.mxu0
        %1653 = vmatprep.mubr.f32.mxu0 0.0
        %1654 = vmatmul.mubr.f32.gmra.mxu0 %v1582
        %v1655 = vpop.f32.mrf.mxu0
        %v1656 = vadd.f32 0.0, %v1655
        %v1657 = vpop.f32.mrf.mxu0
        %1658 = vdwg.mxu0
        %v1659 = vadd.f32 %v1549, %v1651
        %v1660 = vadd.f32 %v1554, %v1656
        %v1661 = vld [vmem:[#allocation22] sm:$0x1]
        %v1663 = vlaneseq
        %v1664 = vshrl.u32 %v1663, 7
        %v1665 = vsub.s32 0, %v1664
        %v1666 = vrot.slane %v1661, %v1665
        %v1668 = vadd.f32 %v1659, %v1666
        %v1669 = vadd.f32 %v1660, %v1666
        %v1670 = vmul.f32 %v1668, 0.2
        %v1671 = vmul.f32 %v1669, 0.2
        %v1672 = vmax.f32 %v1668, %v1670
        %v1673 = vmax.f32 %v1669, %v1671
        %vm1676 = vcmask 1040384
        %v1677 = vrot.slane %v1672, 7
        %v1678 = vrot.slane %v1673, 7
        %v1679 = vsel %vm1676, %v1677, %v1678
        %1680 = vrot.lane.b32.xlu0 %v1677, 8
        %v1681 = vpop.permute.xlu0 %1680
        %1682 = vrot.lane.b32.xlu0 %v1679, 8
        %v1683 = vpop.permute.xlu0 %1682
        %1684 = vrot.lane.b32.xlu0 %v1678, 8
        %v1685 = vpop.permute.xlu0 %1684
        %vm1689 = vcmask 1047617
        %1690 = vst.msk [vmem:[#allocation4] sm:$0xfe] %vm1689, %v1681
        %vm1691 = vcmask 64513
        %1692 = vst.msk [vmem:[#allocation4 + $0x8] sm:$0xfe] %vm1691, %v1681
        %vm1693 = vcmask 1047616
        %1694 = vst.msk [vmem:[#allocation4 + $0x10] sm:$0xff] %vm1693, %v1683
        %vm1695 = vcmask 64512
        %1696 = vst.msk [vmem:[#allocation4 + $0x18] sm:$0xff] %vm1695, %v1683
        %vm1697 = vcmask 1040448
        %1698 = vst.msk [vmem:[#allocation4 + $0x20] sm:$0x1] %vm1697, %v1685
        %vm1699 = vcmask 57344
        %1700 = vst.msk [vmem:[#allocation4 + $0x28] sm:$0x1] %vm1699, %v1685
        %v1701 = vld [vmem:[#allocation4] sm:$0xff]
        %v1702 = vld [vmem:[#allocation4 + $0x8] sm:$0xff]
        %v1703 = vld [vmem:[#allocation4 + $0x10] sm:$0xff]
        %v1704 = vld [vmem:[#allocation4 + $0x18] sm:$0xff]
        %v1705 = vld [vmem:[#allocation4 + $0x20] sm:$0x3]
        %v1706 = vld [vmem:[#allocation4 + $0x28] sm:$0x3]
        %vm1707 = vcmask 146432
        %v1708 = vsel %vm1707, %v779, 0
        %v1711 = vsel %vm787, %v1705, 0
        %v1714 = vsel %vm787, %v1706, 0
        %1716 = vmatprep.subr.mxu0 0.0
        %1717 = vmatpush1.msra.mxu0 0.0
        %1718 = vmatprep.subr.mxu0 0.0
        %1719 = vmatpush1.msra.mxu0 0.0
        %1720 = vmatprep.subr.mxu0 0.0
        %1721 = vmatpush1.msra.mxu0 0.0
        %1722 = vmatprep.subr.mxu0 0.0
        %1723 = vmatpush1.msra.mxu0 0.0
        %1724 = vmatprep.subr.mxu0 0.0
        %1725 = vmatpush1.msra.mxu0 0.0
        %1726 = vmatprep.subr.mxu0 0.0
        %1727 = vmatpush1.msra.mxu0 0.0
        %1728 = vmatprep.subr.mxu0 0.0
        %1729 = vmatpush1.msra.mxu0 0.0
        %1730 = vmatprep.subr.mxu0 0.0
        %1731 = vmatpush1.msra.mxu0 0.0
        %1732 = vmatprep.subr.mxu0 0.0
        %1733 = vmatpush1.msra.mxu0 0.0
        %1734 = vmatprep.subr.mxu0 0.0
        %1735 = vmatpush1.msra.mxu0 0.0
        %1736 = vmatprep.subr.mxu0 0.0
        %1737 = vmatpush1.msra.mxu0 0.0
        %1738 = vmatprep.subr.mxu0 0.0
        %1739 = vmatpush1.msra.mxu0 0.0
        %1740 = vmatprep.subr.mxu0 0.0
        %1741 = vmatpush1.msra.mxu0 0.0
        %1742 = vmatprep.subr.mxu0 %v1714
        %1743 = vmatpush1.msra.mxu0 %v1711
        %1744 = vmatprep.subr.mxu0 %v1704
        %1745 = vmatpush1.msra.mxu0 %v1703
        %1746 = vmatprep.subr.mxu0 %v1702
        %1747 = vmatpush1.msra.mxu0 %v1701
        %1748 = vmatprep.subr.mxu0 0.0
        %1749 = vmatpush2.msra.mxu0 0.0
        %1750 = vmatprep.subr.mxu0 0.0
        %1751 = vmatpush2.msra.mxu0 0.0
        %1752 = vmatprep.subr.mxu0 0.0
        %1753 = vmatpush2.msra.mxu0 0.0
        %1754 = vmatprep.subr.mxu0 0.0
        %1755 = vmatpush2.msra.mxu0 0.0
        %1756 = vmatprep.subr.mxu0 0.0
        %1757 = vmatpush2.msra.mxu0 0.0
        %1758 = vmatprep.subr.mxu0 0.0
        %1759 = vmatpush2.msra.mxu0 0.0
        %1760 = vmatprep.subr.mxu0 0.0
        %1761 = vmatpush2.msra.mxu0 0.0
        %1762 = vmatprep.subr.mxu0 0.0
        %1763 = vmatpush2.msra.mxu0 0.0
        %1764 = vmatprep.subr.mxu0 0.0
        %1765 = vmatpush2.msra.mxu0 0.0
        %1766 = vmatprep.subr.mxu0 0.0
        %1767 = vmatpush2.msra.mxu0 0.0
        %1768 = vmatprep.subr.mxu0 0.0
        %1769 = vmatpush2.msra.mxu0 0.0
        %1770 = vmatprep.subr.mxu0 0.0
        %1771 = vmatpush2.msra.mxu0 0.0
        %1772 = vmatprep.subr.mxu0 0.0
        %1773 = vmatpush2.msra.mxu0 0.0
        %1774 = vmatprep.subr.mxu0 0.0
        %1775 = vmatpush2.msra.mxu0 0.0
        %1776 = vmatprep.subr.mxu0 0.0
        %1777 = vmatpush2.msra.mxu0 0.0
        %1778 = vmatprep.subr.mxu0 0.0
        %1779 = vmatpush2.msra.mxu0 0.0
        %1780 = vmatprep.mubr.f32.mxu0 0.0
        %1781 = vmatmul.mubr.f32.gmra.mxu0 %v1708
        %v1782 = vpop.f32.mrf.mxu0
        %v1783 = vadd.f32 0.0, %v1782
        %v1784 = vpop.f32.mrf.mxu0
        %v1785 = vadd.f32 0.0, %v1784
        %1786 = vdwg.mxu0
        %v1787 = vld [vmem:[#allocation14] sm:$0xf]
        %v1788 = vld [vmem:[#allocation14 + $0x4] sm:$0xf]
        %v1789 = vld [vmem:[#allocation14 + $0x8] sm:$0xf]
        %v1790 = vld [vmem:[#allocation14 + $0xc] sm:$0xf]
        %v1791 = vld [vmem:[#allocation14 + $0x10] sm:$0xf]
        %v1792 = vld [vmem:[#allocation14 + $0x14] sm:$0xf]
        %v1793 = vld [vmem:[#allocation14 + $0x18] sm:$0xf]
        %v1794 = vld [vmem:[#allocation14 + $0x1c] sm:$0xf]
        %v1795 = vld [vmem:[#allocation14 + $0x20] sm:$0xf]
        %v1796 = vld [vmem:[#allocation14 + $0x24] sm:$0xf]
        %v1797 = vld [vmem:[#allocation14 + $0x28] sm:$0xf]
        %v1798 = vld [vmem:[#allocation14 + $0x2c] sm:$0xf]
        %v1799 = vld [vmem:[#allocation14 + $0x30] sm:$0xf]
        %v1800 = vld [vmem:[#allocation14 + $0x34] sm:$0xf]
        %v1801 = vld [vmem:[#allocation14 + $0x38] sm:$0xf]
        %v1802 = vld [vmem:[#allocation14 + $0x3c] sm:$0xf]
        %v1803 = vld [vmem:[#allocation14 + $0x40] sm:$0xf]
        %v1804 = vld [vmem:[#allocation14 + $0x44] sm:$0xf]
        %v1805 = vunpack.c.l.bf16 %v1787
        %v1806 = vunpack.c.l.bf16 %v1788
        %v1807 = vunpack.c.l.bf16 %v1789
        %v1808 = vunpack.c.l.bf16 %v1790
        %v1809 = vunpack.c.l.bf16 %v1791
        %v1810 = vunpack.c.l.bf16 %v1792
        %v1811 = vunpack.c.l.bf16 %v1793
        %v1812 = vunpack.c.l.bf16 %v1794
        %v1813 = vunpack.c.l.bf16 %v1795
        %v1814 = vunpack.c.l.bf16 %v1796
        %v1815 = vunpack.c.l.bf16 %v1797
        %v1816 = vunpack.c.l.bf16 %v1798
        %v1817 = vunpack.c.l.bf16 %v1799
        %v1818 = vunpack.c.l.bf16 %v1800
        %v1819 = vunpack.c.l.bf16 %v1801
        %v1820 = vunpack.c.l.bf16 %v1802
        %v1821 = vunpack.c.l.bf16 %v1803
        %v1822 = vunpack.c.l.bf16 %v1804
        %v1823 = vsel %vm1707, %v882, 0
        %1825 = vmatprep.subr.mxu0 0.0
        %1826 = vmatpush1.msra.mxu0 0.0
        %1827 = vmatprep.subr.mxu0 0.0
        %1828 = vmatpush1.msra.mxu0 0.0
        %1829 = vmatprep.subr.mxu0 0.0
        %1830 = vmatpush1.msra.mxu0 0.0
        %1831 = vmatprep.subr.mxu0 0.0
        %1832 = vmatpush1.msra.mxu0 0.0
        %1833 = vmatprep.subr.mxu0 0.0
        %1834 = vmatpush1.msra.mxu0 0.0
        %1835 = vmatprep.subr.mxu0 0.0
        %1836 = vmatpush1.msra.mxu0 0.0
        %1837 = vmatprep.subr.mxu0 0.0
        %1838 = vmatpush1.msra.mxu0 0.0
        %1839 = vmatprep.subr.mxu0 0.0
        %1840 = vmatpush1.msra.mxu0 0.0
        %1841 = vmatprep.subr.mxu0 0.0
        %1842 = vmatpush1.msra.mxu0 0.0
        %1843 = vmatprep.subr.mxu0 0.0
        %1844 = vmatpush1.msra.mxu0 0.0
        %1845 = vmatprep.subr.mxu0 0.0
        %1846 = vmatpush1.msra.mxu0 0.0
        %1847 = vmatprep.subr.mxu0 0.0
        %1848 = vmatpush1.msra.mxu0 0.0
        %1849 = vmatprep.subr.mxu0 0.0
        %1850 = vmatpush1.msra.mxu0 0.0
        %1851 = vmatprep.subr.mxu0 %v1714
        %1852 = vmatpush1.msra.mxu0 %v1711
        %1853 = vmatprep.subr.mxu0 %v1704
        %1854 = vmatpush1.msra.mxu0 %v1703
        %1855 = vmatprep.subr.mxu0 %v1702
        %1856 = vmatpush1.msra.mxu0 %v1701
        %1857 = vmatprep.subr.mxu0 0.0
        %1858 = vmatpush2.msra.mxu0 0.0
        %1859 = vmatprep.subr.mxu0 0.0
        %1860 = vmatpush2.msra.mxu0 0.0
        %1861 = vmatprep.subr.mxu0 0.0
        %1862 = vmatpush2.msra.mxu0 0.0
        %1863 = vmatprep.subr.mxu0 0.0
        %1864 = vmatpush2.msra.mxu0 0.0
        %1865 = vmatprep.subr.mxu0 0.0
        %1866 = vmatpush2.msra.mxu0 0.0
        %1867 = vmatprep.subr.mxu0 0.0
        %1868 = vmatpush2.msra.mxu0 0.0
        %1869 = vmatprep.subr.mxu0 0.0
        %1870 = vmatpush2.msra.mxu0 0.0
        %1871 = vmatprep.subr.mxu0 0.0
        %1872 = vmatpush2.msra.mxu0 0.0
        %1873 = vmatprep.subr.mxu0 0.0
        %1874 = vmatpush2.msra.mxu0 0.0
        %1875 = vmatprep.subr.mxu0 0.0
        %1876 = vmatpush2.msra.mxu0 0.0
        %1877 = vmatprep.subr.mxu0 0.0
        %1878 = vmatpush2.msra.mxu0 0.0
        %1879 = vmatprep.subr.mxu0 0.0
        %1880 = vmatpush2.msra.mxu0 0.0
        %1881 = vmatprep.subr.mxu0 0.0
        %1882 = vmatpush2.msra.mxu0 0.0
        %1883 = vmatprep.subr.mxu0 0.0
        %1884 = vmatpush2.msra.mxu0 0.0
        %1885 = vmatprep.subr.mxu0 0.0
        %1886 = vmatpush2.msra.mxu0 0.0
        %1887 = vmatprep.subr.mxu0 0.0
        %1888 = vmatpush2.msra.mxu0 0.0
        %1889 = vmatprep.mubr.f32.mxu0 0.0
        %1890 = vmatmul.mubr.f32.gmra.mxu0 %v1823
        %v1891 = vpop.f32.mrf.mxu0
        %v1892 = vadd.f32 0.0, %v1891
        %v1893 = vpop.f32.mrf.mxu0
        %v1894 = vadd.f32 0.0, %v1893
        %1895 = vdwg.mxu0
        %s1896 = scalar_lea.vmem [#allocation14], 72
        %v1897 = vld [vmem:[%s1896] sm:$0xf]
        %v1898 = vld [vmem:[%s1896 + $0x4] sm:$0xf]
        %v1899 = vld [vmem:[%s1896 + $0x8] sm:$0xf]
        %v1900 = vld [vmem:[%s1896 + $0xc] sm:$0xf]
        %v1901 = vld [vmem:[%s1896 + $0x10] sm:$0xf]
        %v1902 = vld [vmem:[%s1896 + $0x14] sm:$0xf]
        %v1903 = vld [vmem:[%s1896 + $0x18] sm:$0xf]
        %v1904 = vld [vmem:[%s1896 + $0x1c] sm:$0xf]
        %v1905 = vld [vmem:[%s1896 + $0x20] sm:$0xf]
        %v1906 = vld [vmem:[%s1896 + $0x24] sm:$0xf]
        %v1907 = vld [vmem:[%s1896 + $0x28] sm:$0xf]
        %v1908 = vld [vmem:[%s1896 + $0x2c] sm:$0xf]
        %v1909 = vld [vmem:[%s1896 + $0x30] sm:$0xf]
        %v1910 = vld [vmem:[%s1896 + $0x34] sm:$0xf]
        %v1911 = vld [vmem:[%s1896 + $0x38] sm:$0xf]
        %v1912 = vld [vmem:[%s1896 + $0x3c] sm:$0xf]
        %v1913 = vld [vmem:[%s1896 + $0x40] sm:$0xf]
        %v1914 = vld [vmem:[%s1896 + $0x44] sm:$0xf]
        %v1915 = vunpack.c.l.bf16 %v1897
        %v1916 = vunpack.c.l.bf16 %v1898
        %v1917 = vunpack.c.l.bf16 %v1899
        %v1918 = vunpack.c.l.bf16 %v1900
        %v1919 = vunpack.c.l.bf16 %v1901
        %v1920 = vunpack.c.l.bf16 %v1902
        %v1921 = vunpack.c.l.bf16 %v1903
        %v1922 = vunpack.c.l.bf16 %v1904
        %v1923 = vunpack.c.l.bf16 %v1905
        %v1924 = vunpack.c.l.bf16 %v1906
        %v1925 = vunpack.c.l.bf16 %v1907
        %v1926 = vunpack.c.l.bf16 %v1908
        %v1927 = vunpack.c.l.bf16 %v1909
        %v1928 = vunpack.c.l.bf16 %v1910
        %v1929 = vunpack.c.l.bf16 %v1911
        %v1930 = vunpack.c.l.bf16 %v1912
        %v1931 = vunpack.c.l.bf16 %v1913
        %v1932 = vunpack.c.l.bf16 %v1914
        %v1934 = vsel %vm714, %v1894, 0
        %1936 = vmatprep.subr.mxu0 0.0
        %1937 = vmatpush1.msra.mxu0 %v1930
        %1938 = vmatprep.subr.mxu0 0.0
        %1939 = vmatpush1.msra.mxu0 %v1929
        %1940 = vmatprep.subr.mxu0 0.0
        %1941 = vmatpush1.msra.mxu0 %v1928
        %1942 = vmatprep.subr.mxu0 0.0
        %1943 = vmatpush1.msra.mxu0 %v1927
        %1944 = vmatprep.subr.mxu0 0.0
        %1945 = vmatpush1.msra.mxu0 %v1926
        %1946 = vmatprep.subr.mxu0 0.0
        %1947 = vmatpush1.msra.mxu0 %v1925
        %1948 = vmatprep.subr.mxu0 0.0
        %1949 = vmatpush1.msra.mxu0 %v1924
        %1950 = vmatprep.subr.mxu0 0.0
        %1951 = vmatpush1.msra.mxu0 %v1923
        %1952 = vmatprep.subr.mxu0 0.0
        %1953 = vmatpush1.msra.mxu0 %v1922
        %1954 = vmatprep.subr.mxu0 0.0
        %1955 = vmatpush1.msra.mxu0 %v1921
        %1956 = vmatprep.subr.mxu0 0.0
        %1957 = vmatpush1.msra.mxu0 %v1920
        %1958 = vmatprep.subr.mxu0 0.0
        %1959 = vmatpush1.msra.mxu0 %v1919
        %1960 = vmatprep.subr.mxu0 0.0
        %1961 = vmatpush1.msra.mxu0 %v1918
        %1962 = vmatprep.subr.mxu0 0.0
        %1963 = vmatpush1.msra.mxu0 %v1917
        %1964 = vmatprep.subr.mxu0 0.0
        %1965 = vmatpush1.msra.mxu0 %v1916
        %1966 = vmatprep.subr.mxu0 0.0
        %1967 = vmatpush1.msra.mxu0 %v1915
        %1968 = vmatprep.subr.mxu0 0.0
        %1969 = vmatpush2.msra.mxu0 0.0
        %1970 = vmatprep.subr.mxu0 0.0
        %1971 = vmatpush2.msra.mxu0 0.0
        %1972 = vmatprep.subr.mxu0 0.0
        %1973 = vmatpush2.msra.mxu0 0.0
        %1974 = vmatprep.subr.mxu0 0.0
        %1975 = vmatpush2.msra.mxu0 0.0
        %1976 = vmatprep.subr.mxu0 0.0
        %1977 = vmatpush2.msra.mxu0 0.0
        %1978 = vmatprep.subr.mxu0 0.0
        %1979 = vmatpush2.msra.mxu0 0.0
        %1980 = vmatprep.subr.mxu0 0.0
        %1981 = vmatpush2.msra.mxu0 0.0
        %1982 = vmatprep.subr.mxu0 0.0
        %1983 = vmatpush2.msra.mxu0 0.0
        %1984 = vmatprep.subr.mxu0 0.0
        %1985 = vmatpush2.msra.mxu0 0.0
        %1986 = vmatprep.subr.mxu0 0.0
        %1987 = vmatpush2.msra.mxu0 0.0
        %1988 = vmatprep.subr.mxu0 0.0
        %1989 = vmatpush2.msra.mxu0 0.0
        %1990 = vmatprep.subr.mxu0 0.0
        %1991 = vmatpush2.msra.mxu0 0.0
        %1992 = vmatprep.subr.mxu0 0.0
        %1993 = vmatpush2.msra.mxu0 0.0
        %1994 = vmatprep.subr.mxu0 0.0
        %1995 = vmatpush2.msra.mxu0 0.0
        %1996 = vmatprep.subr.mxu0 0.0
        %1997 = vmatpush2.msra.mxu0 %v1932
        %1998 = vmatprep.subr.mxu0 0.0
        %1999 = vmatpush2.msra.mxu0 %v1931
        %2000 = vmatprep.mubr.f32.mxu0 %v1934
        %2001 = vmatmul.mubr.f32.gmra.mxu0 %v1892
        %v2002 = vpop.f32.mrf.mxu0
        %v2003 = vadd.f32 0.0, %v2002
        %v2004 = vpop.f32.mrf.mxu0
        %2005 = vdwg.mxu0
        %v2007 = vsel %vm714, %v1785, 0
        %2009 = vmatprep.subr.mxu0 0.0
        %2010 = vmatpush1.msra.mxu0 %v1820
        %2011 = vmatprep.subr.mxu0 0.0
        %2012 = vmatpush1.msra.mxu0 %v1819
        %2013 = vmatprep.subr.mxu0 0.0
        %2014 = vmatpush1.msra.mxu0 %v1818
        %2015 = vmatprep.subr.mxu0 0.0
        %2016 = vmatpush1.msra.mxu0 %v1817
        %2017 = vmatprep.subr.mxu0 0.0
        %2018 = vmatpush1.msra.mxu0 %v1816
        %2019 = vmatprep.subr.mxu0 0.0
        %2020 = vmatpush1.msra.mxu0 %v1815
        %2021 = vmatprep.subr.mxu0 0.0
        %2022 = vmatpush1.msra.mxu0 %v1814
        %2023 = vmatprep.subr.mxu0 0.0
        %2024 = vmatpush1.msra.mxu0 %v1813
        %2025 = vmatprep.subr.mxu0 0.0
        %2026 = vmatpush1.msra.mxu0 %v1812
        %2027 = vmatprep.subr.mxu0 0.0
        %2028 = vmatpush1.msra.mxu0 %v1811
        %2029 = vmatprep.subr.mxu0 0.0
        %2030 = vmatpush1.msra.mxu0 %v1810
        %2031 = vmatprep.subr.mxu0 0.0
        %2032 = vmatpush1.msra.mxu0 %v1809
        %2033 = vmatprep.subr.mxu0 0.0
        %2034 = vmatpush1.msra.mxu0 %v1808
        %2035 = vmatprep.subr.mxu0 0.0
        %2036 = vmatpush1.msra.mxu0 %v1807
        %2037 = vmatprep.subr.mxu0 0.0
        %2038 = vmatpush1.msra.mxu0 %v1806
        %2039 = vmatprep.subr.mxu0 0.0
        %2040 = vmatpush1.msra.mxu0 %v1805
        %2041 = vmatprep.subr.mxu0 0.0
        %2042 = vmatpush2.msra.mxu0 0.0
        %2043 = vmatprep.subr.mxu0 0.0
        %2044 = vmatpush2.msra.mxu0 0.0
        %2045 = vmatprep.subr.mxu0 0.0
        %2046 = vmatpush2.msra.mxu0 0.0
        %2047 = vmatprep.subr.mxu0 0.0
        %2048 = vmatpush2.msra.mxu0 0.0
        %2049 = vmatprep.subr.mxu0 0.0
        %2050 = vmatpush2.msra.mxu0 0.0
        %2051 = vmatprep.subr.mxu0 0.0
        %2052 = vmatpush2.msra.mxu0 0.0
        %2053 = vmatprep.subr.mxu0 0.0
        %2054 = vmatpush2.msra.mxu0 0.0
        %2055 = vmatprep.subr.mxu0 0.0
        %2056 = vmatpush2.msra.mxu0 0.0
        %2057 = vmatprep.subr.mxu0 0.0
        %2058 = vmatpush2.msra.mxu0 0.0
        %2059 = vmatprep.subr.mxu0 0.0
        %2060 = vmatpush2.msra.mxu0 0.0
        %2061 = vmatprep.subr.mxu0 0.0
        %2062 = vmatpush2.msra.mxu0 0.0
        %2063 = vmatprep.subr.mxu0 0.0
        %2064 = vmatpush2.msra.mxu0 0.0
        %2065 = vmatprep.subr.mxu0 0.0
        %2066 = vmatpush2.msra.mxu0 0.0
        %2067 = vmatprep.subr.mxu0 0.0
        %2068 = vmatpush2.msra.mxu0 0.0
        %2069 = vmatprep.subr.mxu0 0.0
        %2070 = vmatpush2.msra.mxu0 %v1822
        %2071 = vmatprep.subr.mxu0 0.0
        %2072 = vmatpush2.msra.mxu0 %v1821
        %2073 = vmatprep.mubr.f32.mxu0 %v2007
        %2074 = vmatmul.mubr.f32.gmra.mxu0 %v1783
        %v2075 = vpop.f32.mrf.mxu0
        %v2076 = vadd.f32 %v2003, %v2075
        %v2077 = vpop.f32.mrf.mxu0
        %2078 = vdwg.mxu0
        %v2079 = vsel %vm1707, %v1150, 0
        %2081 = vmatprep.subr.mxu0 0.0
        %2082 = vmatpush1.msra.mxu0 0.0
        %2083 = vmatprep.subr.mxu0 0.0
        %2084 = vmatpush1.msra.mxu0 0.0
        %2085 = vmatprep.subr.mxu0 0.0
        %2086 = vmatpush1.msra.mxu0 0.0
        %2087 = vmatprep.subr.mxu0 0.0
        %2088 = vmatpush1.msra.mxu0 0.0
        %2089 = vmatprep.subr.mxu0 0.0
        %2090 = vmatpush1.msra.mxu0 0.0
        %2091 = vmatprep.subr.mxu0 0.0
        %2092 = vmatpush1.msra.mxu0 0.0
        %2093 = vmatprep.subr.mxu0 0.0
        %2094 = vmatpush1.msra.mxu0 0.0
        %2095 = vmatprep.subr.mxu0 0.0
        %2096 = vmatpush1.msra.mxu0 0.0
        %2097 = vmatprep.subr.mxu0 0.0
        %2098 = vmatpush1.msra.mxu0 0.0
        %2099 = vmatprep.subr.mxu0 0.0
        %2100 = vmatpush1.msra.mxu0 0.0
        %2101 = vmatprep.subr.mxu0 0.0
        %2102 = vmatpush1.msra.mxu0 0.0
        %2103 = vmatprep.subr.mxu0 0.0
        %2104 = vmatpush1.msra.mxu0 0.0
        %2105 = vmatprep.subr.mxu0 0.0
        %2106 = vmatpush1.msra.mxu0 0.0
        %2107 = vmatprep.subr.mxu0 %v1714
        %2108 = vmatpush1.msra.mxu0 %v1711
        %2109 = vmatprep.subr.mxu0 %v1704
        %2110 = vmatpush1.msra.mxu0 %v1703
        %2111 = vmatprep.subr.mxu0 %v1702
        %2112 = vmatpush1.msra.mxu0 %v1701
        %2113 = vmatprep.subr.mxu0 0.0
        %2114 = vmatpush2.msra.mxu0 0.0
        %2115 = vmatprep.subr.mxu0 0.0
        %2116 = vmatpush2.msra.mxu0 0.0
        %2117 = vmatprep.subr.mxu0 0.0
        %2118 = vmatpush2.msra.mxu0 0.0
        %2119 = vmatprep.subr.mxu0 0.0
        %2120 = vmatpush2.msra.mxu0 0.0
        %2121 = vmatprep.subr.mxu0 0.0
        %2122 = vmatpush2.msra.mxu0 0.0
        %2123 = vmatprep.subr.mxu0 0.0
        %2124 = vmatpush2.msra.mxu0 0.0
        %2125 = vmatprep.subr.mxu0 0.0
        %2126 = vmatpush2.msra.mxu0 0.0
        %2127 = vmatprep.subr.mxu0 0.0
        %2128 = vmatpush2.msra.mxu0 0.0
        %2129 = vmatprep.subr.mxu0 0.0
        %2130 = vmatpush2.msra.mxu0 0.0
        %2131 = vmatprep.subr.mxu0 0.0
        %2132 = vmatpush2.msra.mxu0 0.0
        %2133 = vmatprep.subr.mxu0 0.0
        %2134 = vmatpush2.msra.mxu0 0.0
        %2135 = vmatprep.subr.mxu0 0.0
        %2136 = vmatpush2.msra.mxu0 0.0
        %2137 = vmatprep.subr.mxu0 0.0
        %2138 = vmatpush2.msra.mxu0 0.0
        %2139 = vmatprep.subr.mxu0 0.0
        %2140 = vmatpush2.msra.mxu0 0.0
        %2141 = vmatprep.subr.mxu0 0.0
        %2142 = vmatpush2.msra.mxu0 0.0
        %2143 = vmatprep.subr.mxu0 0.0
        %2144 = vmatpush2.msra.mxu0 0.0
        %2145 = vmatprep.mubr.f32.mxu0 0.0
        %2146 = vmatmul.mubr.f32.gmra.mxu0 %v2079
        %v2147 = vpop.f32.mrf.mxu0
        %v2148 = vadd.f32 0.0, %v2147
        %v2149 = vpop.f32.mrf.mxu0
        %v2150 = vadd.f32 0.0, %v2149
        %2151 = vdwg.mxu0
        %s2152 = scalar_lea.vmem [#allocation14], 144
        %v2153 = vld [vmem:[%s2152] sm:$0xf]
        %v2154 = vld [vmem:[%s2152 + $0x4] sm:$0xf]
        %v2155 = vld [vmem:[%s2152 + $0x8] sm:$0xf]
        %v2156 = vld [vmem:[%s2152 + $0xc] sm:$0xf]
        %v2157 = vld [vmem:[%s2152 + $0x10] sm:$0xf]
        %v2158 = vld [vmem:[%s2152 + $0x14] sm:$0xf]
        %v2159 = vld [vmem:[%s2152 + $0x18] sm:$0xf]
        %v2160 = vld [vmem:[%s2152 + $0x1c] sm:$0xf]
        %v2161 = vld [vmem:[%s2152 + $0x20] sm:$0xf]
        %v2162 = vld [vmem:[%s2152 + $0x24] sm:$0xf]
        %v2163 = vld [vmem:[%s2152 + $0x28] sm:$0xf]
        %v2164 = vld [vmem:[%s2152 + $0x2c] sm:$0xf]
        %v2165 = vld [vmem:[%s2152 + $0x30] sm:$0xf]
        %v2166 = vld [vmem:[%s2152 + $0x34] sm:$0xf]
        %v2167 = vld [vmem:[%s2152 + $0x38] sm:$0xf]
        %v2168 = vld [vmem:[%s2152 + $0x3c] sm:$0xf]
        %v2169 = vld [vmem:[%s2152 + $0x40] sm:$0xf]
        %v2170 = vld [vmem:[%s2152 + $0x44] sm:$0xf]
        %v2171 = vunpack.c.l.bf16 %v2153
        %v2172 = vunpack.c.l.bf16 %v2154
        %v2173 = vunpack.c.l.bf16 %v2155
        %v2174 = vunpack.c.l.bf16 %v2156
        %v2175 = vunpack.c.l.bf16 %v2157
        %v2176 = vunpack.c.l.bf16 %v2158
        %v2177 = vunpack.c.l.bf16 %v2159
        %v2178 = vunpack.c.l.bf16 %v2160
        %v2179 = vunpack.c.l.bf16 %v2161
        %v2180 = vunpack.c.l.bf16 %v2162
        %v2181 = vunpack.c.l.bf16 %v2163
        %v2182 = vunpack.c.l.bf16 %v2164
        %v2183 = vunpack.c.l.bf16 %v2165
        %v2184 = vunpack.c.l.bf16 %v2166
        %v2185 = vunpack.c.l.bf16 %v2167
        %v2186 = vunpack.c.l.bf16 %v2168
        %v2187 = vunpack.c.l.bf16 %v2169
        %v2188 = vunpack.c.l.bf16 %v2170
        %v2190 = vsel %vm714, %v2150, 0
        %2192 = vmatprep.subr.mxu0 0.0
        %2193 = vmatpush1.msra.mxu0 %v2186
        %2194 = vmatprep.subr.mxu0 0.0
        %2195 = vmatpush1.msra.mxu0 %v2185
        %2196 = vmatprep.subr.mxu0 0.0
        %2197 = vmatpush1.msra.mxu0 %v2184
        %2198 = vmatprep.subr.mxu0 0.0
        %2199 = vmatpush1.msra.mxu0 %v2183
        %2200 = vmatprep.subr.mxu0 0.0
        %2201 = vmatpush1.msra.mxu0 %v2182
        %2202 = vmatprep.subr.mxu0 0.0
        %2203 = vmatpush1.msra.mxu0 %v2181
        %2204 = vmatprep.subr.mxu0 0.0
        %2205 = vmatpush1.msra.mxu0 %v2180
        %2206 = vmatprep.subr.mxu0 0.0
        %2207 = vmatpush1.msra.mxu0 %v2179
        %2208 = vmatprep.subr.mxu0 0.0
        %2209 = vmatpush1.msra.mxu0 %v2178
        %2210 = vmatprep.subr.mxu0 0.0
        %2211 = vmatpush1.msra.mxu0 %v2177
        %2212 = vmatprep.subr.mxu0 0.0
        %2213 = vmatpush1.msra.mxu0 %v2176
        %2214 = vmatprep.subr.mxu0 0.0
        %2215 = vmatpush1.msra.mxu0 %v2175
        %2216 = vmatprep.subr.mxu0 0.0
        %2217 = vmatpush1.msra.mxu0 %v2174
        %2218 = vmatprep.subr.mxu0 0.0
        %2219 = vmatpush1.msra.mxu0 %v2173
        %2220 = vmatprep.subr.mxu0 0.0
        %2221 = vmatpush1.msra.mxu0 %v2172
        %2222 = vmatprep.subr.mxu0 0.0
        %2223 = vmatpush1.msra.mxu0 %v2171
        %2224 = vmatprep.subr.mxu0 0.0
        %2225 = vmatpush2.msra.mxu0 0.0
        %2226 = vmatprep.subr.mxu0 0.0
        %2227 = vmatpush2.msra.mxu0 0.0
        %2228 = vmatprep.subr.mxu0 0.0
        %2229 = vmatpush2.msra.mxu0 0.0
        %2230 = vmatprep.subr.mxu0 0.0
        %2231 = vmatpush2.msra.mxu0 0.0
        %2232 = vmatprep.subr.mxu0 0.0
        %2233 = vmatpush2.msra.mxu0 0.0
        %2234 = vmatprep.subr.mxu0 0.0
        %2235 = vmatpush2.msra.mxu0 0.0
        %2236 = vmatprep.subr.mxu0 0.0
        %2237 = vmatpush2.msra.mxu0 0.0
        %2238 = vmatprep.subr.mxu0 0.0
        %2239 = vmatpush2.msra.mxu0 0.0
        %2240 = vmatprep.subr.mxu0 0.0
        %2241 = vmatpush2.msra.mxu0 0.0
        %2242 = vmatprep.subr.mxu0 0.0
        %2243 = vmatpush2.msra.mxu0 0.0
        %2244 = vmatprep.subr.mxu0 0.0
        %2245 = vmatpush2.msra.mxu0 0.0
        %2246 = vmatprep.subr.mxu0 0.0
        %2247 = vmatpush2.msra.mxu0 0.0
        %2248 = vmatprep.subr.mxu0 0.0
        %2249 = vmatpush2.msra.mxu0 0.0
        %2250 = vmatprep.subr.mxu0 0.0
        %2251 = vmatpush2.msra.mxu0 0.0
        %2252 = vmatprep.subr.mxu0 0.0
        %2253 = vmatpush2.msra.mxu0 %v2188
        %2254 = vmatprep.subr.mxu0 0.0
        %2255 = vmatpush2.msra.mxu0 %v2187
        %2256 = vmatprep.mubr.f32.mxu0 %v2190
        %2257 = vmatmul.mubr.f32.gmra.mxu0 %v2148
        %v2258 = vpop.f32.mrf.mxu0
        %v2259 = vadd.f32 0.0, %v2258
        %v2260 = vpop.f32.mrf.mxu0
        %2261 = vdwg.mxu0
        %v2262 = vadd.f32 %v2076, %v2259
        %v2263 = vld [vmem:[#allocation23] sm:$0x1]
        %v2265 = vlaneseq
        %v2266 = vshrl.u32 %v2265, 7
        %v2267 = vsub.s32 0, %v2266
        %v2268 = vrot.slane %v2263, %v2267
        %v2270 = vadd.f32 %v2262, %v2268
        %v2271 = vmul.f32 %v2270, 0.2
        %v2272 = vmax.f32 %v2270, %v2271
        %v2274 = vrot.slane %v2272, 7
        %2275 = vrot.lane.b32.xlu0 %v2274, 16
        %v2276 = vpop.permute.xlu0 %2275
        %vm2278 = vcmask 1047681
        %2279 = vst.msk [vmem:[#allocation5] sm:$0xfe] %vm2278, %v2276
        %vm2280 = vcmask 130049
        %2281 = vst.msk [vmem:[#allocation5 + $0x8] sm:$0xfe] %vm2280, %v2276
        %vm2282 = vcmask 1040512
        %2283 = vst.msk [vmem:[#allocation5 + $0x10] sm:$0x1] %vm2282, %v2276
        %vm2284 = vcmask 122880
        %2285 = vst.msk [vmem:[#allocation5 + $0x18] sm:$0x1] %vm2284, %v2276
        %v2286 = vld [vmem:[#allocation5] sm:$0xff]
        %v2287 = vld [vmem:[#allocation5 + $0x8] sm:$0xff]
        %v2288 = vld [vmem:[#allocation16] sm:$0xff]
        %v2289 = vld [vmem:[#allocation16 + $0x8] sm:$0xff]
        %v2290 = vld [vmem:[#allocation16 + $0x10] sm:$0xff]
        %v2291 = vld [vmem:[#allocation16 + $0x18] sm:$0xff]
        %v2292 = vld [vmem:[#allocation16 + $0x20] sm:$0xff]
        %v2293 = vld [vmem:[#allocation16 + $0x28] sm:$0xff]
        %v2294 = vld [vmem:[#allocation16 + $0x30] sm:$0xff]
        %v2295 = vld [vmem:[#allocation16 + $0x38] sm:$0xff]
        %v2296 = vld [vmem:[#allocation16 + $0x40] sm:$0xff]
        %v2297 = vld [vmem:[#allocation16 + $0x48] sm:$0xff]
        %v2298 = vld [vmem:[#allocation16 + $0x50] sm:$0xff]
        %v2299 = vld [vmem:[#allocation16 + $0x58] sm:$0xff]
        %v2300 = vld [vmem:[#allocation16 + $0x60] sm:$0xff]
        %v2301 = vld [vmem:[#allocation16 + $0x68] sm:$0xff]
        %v2302 = vld [vmem:[#allocation16 + $0x70] sm:$0xff]
        %v2303 = vld [vmem:[#allocation16 + $0x78] sm:$0xff]
        %v2304 = vld [vmem:[#allocation16 + $0x80] sm:$0xff]
        %v2305 = vld [vmem:[#allocation16 + $0x88] sm:$0xff]
        %v2306 = vld [vmem:[#allocation16 + $0x90] sm:$0xff]
        %v2307 = vld [vmem:[#allocation16 + $0x98] sm:$0xff]
        %v2308 = vunpack.c.l.bf16 %v2288
        %v2309 = vunpack.c.h.bf16 %v2288
        %v2310 = vunpack.c.l.bf16 %v2289
        %v2311 = vunpack.c.h.bf16 %v2289
        %v2312 = vunpack.c.l.bf16 %v2290
        %v2313 = vunpack.c.h.bf16 %v2290
        %v2314 = vunpack.c.l.bf16 %v2291
        %v2315 = vunpack.c.h.bf16 %v2291
        %v2316 = vunpack.c.l.bf16 %v2292
        %v2317 = vunpack.c.h.bf16 %v2292
        %v2318 = vunpack.c.l.bf16 %v2293
        %v2319 = vunpack.c.h.bf16 %v2293
        %v2320 = vunpack.c.l.bf16 %v2294
        %v2321 = vunpack.c.h.bf16 %v2294
        %v2322 = vunpack.c.l.bf16 %v2295
        %v2323 = vunpack.c.h.bf16 %v2295
        %v2324 = vunpack.c.l.bf16 %v2296
        %v2325 = vunpack.c.h.bf16 %v2296
        %v2326 = vunpack.c.l.bf16 %v2297
        %v2327 = vunpack.c.h.bf16 %v2297
        %v2328 = vunpack.c.l.bf16 %v2298
        %v2329 = vunpack.c.h.bf16 %v2298
        %v2330 = vunpack.c.l.bf16 %v2299
        %v2331 = vunpack.c.h.bf16 %v2299
        %v2332 = vunpack.c.l.bf16 %v2300
        %v2333 = vunpack.c.h.bf16 %v2300
        %v2334 = vunpack.c.l.bf16 %v2301
        %v2335 = vunpack.c.h.bf16 %v2301
        %v2336 = vunpack.c.l.bf16 %v2302
        %v2337 = vunpack.c.h.bf16 %v2302
        %v2338 = vunpack.c.l.bf16 %v2303
        %v2339 = vunpack.c.h.bf16 %v2303
        %v2340 = vunpack.c.l.bf16 %v2304
        %v2341 = vunpack.c.h.bf16 %v2304
        %v2342 = vunpack.c.l.bf16 %v2305
        %v2343 = vunpack.c.h.bf16 %v2305
        %v2344 = vunpack.c.l.bf16 %v2306
        %v2345 = vunpack.c.h.bf16 %v2306
        %v2346 = vunpack.c.l.bf16 %v2307
        %v2347 = vunpack.c.h.bf16 %v2307
        %v2348 = vld [vmem:[#allocation5] sm:$0xfe]
        %v2349 = vld [vmem:[#allocation5 + $0x8] sm:$0xfe]
        %v2350 = vld [vmem:[#allocation5 + $0x10] sm:$0x1]
        %v2351 = vld [vmem:[#allocation5 + $0x18] sm:$0x1]
        %s2352 = scalar_lea.vmem [#allocation16], 160
        %v2353 = vld [vmem:[%s2352] sm:$0xff]
        %v2354 = vld [vmem:[%s2352 + $0x8] sm:$0xff]
        %v2355 = vld [vmem:[%s2352 + $0x10] sm:$0xff]
        %v2356 = vld [vmem:[%s2352 + $0x18] sm:$0xff]
        %v2357 = vld [vmem:[%s2352 + $0x20] sm:$0xff]
        %v2358 = vld [vmem:[%s2352 + $0x28] sm:$0xff]
        %v2359 = vld [vmem:[%s2352 + $0x30] sm:$0xff]
        %v2360 = vld [vmem:[%s2352 + $0x38] sm:$0xff]
        %v2361 = vld [vmem:[%s2352 + $0x40] sm:$0xff]
        %v2362 = vld [vmem:[%s2352 + $0x48] sm:$0xff]
        %v2363 = vld [vmem:[%s2352 + $0x50] sm:$0xff]
        %v2364 = vld [vmem:[%s2352 + $0x58] sm:$0xff]
        %v2365 = vld [vmem:[%s2352 + $0x60] sm:$0xff]
        %v2366 = vld [vmem:[%s2352 + $0x68] sm:$0xff]
        %v2367 = vld [vmem:[%s2352 + $0x70] sm:$0xff]
        %v2368 = vld [vmem:[%s2352 + $0x78] sm:$0xff]
        %v2369 = vld [vmem:[%s2352 + $0x80] sm:$0xff]
        %v2370 = vld [vmem:[%s2352 + $0x88] sm:$0xff]
        %v2371 = vld [vmem:[%s2352 + $0x90] sm:$0xff]
        %v2372 = vld [vmem:[%s2352 + $0x98] sm:$0xff]
        %v2373 = vunpack.c.l.bf16 %v2353
        %v2374 = vunpack.c.h.bf16 %v2353
        %v2375 = vunpack.c.l.bf16 %v2354
        %v2376 = vunpack.c.h.bf16 %v2354
        %v2377 = vunpack.c.l.bf16 %v2355
        %v2378 = vunpack.c.h.bf16 %v2355
        %v2379 = vunpack.c.l.bf16 %v2356
        %v2380 = vunpack.c.h.bf16 %v2356
        %v2381 = vunpack.c.l.bf16 %v2357
        %v2382 = vunpack.c.h.bf16 %v2357
        %v2383 = vunpack.c.l.bf16 %v2358
        %v2384 = vunpack.c.h.bf16 %v2358
        %v2385 = vunpack.c.l.bf16 %v2359
        %v2386 = vunpack.c.h.bf16 %v2359
        %v2387 = vunpack.c.l.bf16 %v2360
        %v2388 = vunpack.c.h.bf16 %v2360
        %v2389 = vunpack.c.l.bf16 %v2361
        %v2390 = vunpack.c.h.bf16 %v2361
        %v2391 = vunpack.c.l.bf16 %v2362
        %v2392 = vunpack.c.h.bf16 %v2362
        %v2393 = vunpack.c.l.bf16 %v2363
        %v2394 = vunpack.c.h.bf16 %v2363
        %v2395 = vunpack.c.l.bf16 %v2364
        %v2396 = vunpack.c.h.bf16 %v2364
        %v2397 = vunpack.c.l.bf16 %v2365
        %v2398 = vunpack.c.h.bf16 %v2365
        %v2399 = vunpack.c.l.bf16 %v2366
        %v2400 = vunpack.c.h.bf16 %v2366
        %v2401 = vunpack.c.l.bf16 %v2367
        %v2402 = vunpack.c.h.bf16 %v2367
        %v2403 = vunpack.c.l.bf16 %v2368
        %v2404 = vunpack.c.h.bf16 %v2368
        %v2405 = vunpack.c.l.bf16 %v2369
        %v2406 = vunpack.c.h.bf16 %v2369
        %v2407 = vunpack.c.l.bf16 %v2370
        %v2408 = vunpack.c.h.bf16 %v2370
        %v2409 = vunpack.c.l.bf16 %v2371
        %v2410 = vunpack.c.h.bf16 %v2371
        %v2411 = vunpack.c.l.bf16 %v2372
        %v2412 = vunpack.c.h.bf16 %v2372
        %vm2417 = vcmask 1046528
        %v2418 = vrot.slane %v2348, 1
        %v2419 = vrot.slane %v2350, 1
        %v2420 = vsel %vm2417, %v2418, %v2419
        %v2421 = vrot.slane %v2349, 1
        %v2422 = vrot.slane %v2351, 1
        %v2423 = vsel %vm2417, %v2421, %v2422
        %v2425 = vsel %vm722, %v2423, 0
        %2427 = vmatprep.subr.mxu0 %v2404
        %2428 = vmatpush1.msra.mxu0 %v2403
        %2429 = vmatprep.subr.mxu0 %v2402
        %2430 = vmatpush1.msra.mxu0 %v2401
        %2431 = vmatprep.subr.mxu0 %v2400
        %2432 = vmatpush1.msra.mxu0 %v2399
        %2433 = vmatprep.subr.mxu0 %v2398
        %2434 = vmatpush1.msra.mxu0 %v2397
        %2435 = vmatprep.subr.mxu0 %v2396
        %2436 = vmatpush1.msra.mxu0 %v2395
        %2437 = vmatprep.subr.mxu0 %v2394
        %2438 = vmatpush1.msra.mxu0 %v2393
        %2439 = vmatprep.subr.mxu0 %v2392
        %2440 = vmatpush1.msra.mxu0 %v2391
        %2441 = vmatprep.subr.mxu0 %v2390
        %2442 = vmatpush1.msra.mxu0 %v2389
        %2443 = vmatprep.subr.mxu0 %v2388
        %2444 = vmatpush1.msra.mxu0 %v2387
        %2445 = vmatprep.subr.mxu0 %v2386
        %2446 = vmatpush1.msra.mxu0 %v2385
        %2447 = vmatprep.subr.mxu0 %v2384
        %2448 = vmatpush1.msra.mxu0 %v2383
        %2449 = vmatprep.subr.mxu0 %v2382
        %2450 = vmatpush1.msra.mxu0 %v2381
        %2451 = vmatprep.subr.mxu0 %v2380
        %2452 = vmatpush1.msra.mxu0 %v2379
        %2453 = vmatprep.subr.mxu0 %v2378
        %2454 = vmatpush1.msra.mxu0 %v2377
        %2455 = vmatprep.subr.mxu0 %v2376
        %2456 = vmatpush1.msra.mxu0 %v2375
        %2457 = vmatprep.subr.mxu0 %v2374
        %2458 = vmatpush1.msra.mxu0 %v2373
        %2459 = vmatprep.subr.mxu0 0.0
        %2460 = vmatpush2.msra.mxu0 0.0
        %2461 = vmatprep.subr.mxu0 0.0
        %2462 = vmatpush2.msra.mxu0 0.0
        %2463 = vmatprep.subr.mxu0 0.0
        %2464 = vmatpush2.msra.mxu0 0.0
        %2465 = vmatprep.subr.mxu0 0.0
        %2466 = vmatpush2.msra.mxu0 0.0
        %2467 = vmatprep.subr.mxu0 0.0
        %2468 = vmatpush2.msra.mxu0 0.0
        %2469 = vmatprep.subr.mxu0 0.0
        %2470 = vmatpush2.msra.mxu0 0.0
        %2471 = vmatprep.subr.mxu0 0.0
        %2472 = vmatpush2.msra.mxu0 0.0
        %2473 = vmatprep.subr.mxu0 0.0
        %2474 = vmatpush2.msra.mxu0 0.0
        %2475 = vmatprep.subr.mxu0 0.0
        %2476 = vmatpush2.msra.mxu0 0.0
        %2477 = vmatprep.subr.mxu0 0.0
        %2478 = vmatpush2.msra.mxu0 0.0
        %2479 = vmatprep.subr.mxu0 0.0
        %2480 = vmatpush2.msra.mxu0 0.0
        %2481 = vmatprep.subr.mxu0 0.0
        %2482 = vmatpush2.msra.mxu0 0.0
        %2483 = vmatprep.subr.mxu0 %v2412
        %2484 = vmatpush2.msra.mxu0 %v2411
        %2485 = vmatprep.subr.mxu0 %v2410
        %2486 = vmatpush2.msra.mxu0 %v2409
        %2487 = vmatprep.subr.mxu0 %v2408
        %2488 = vmatpush2.msra.mxu0 %v2407
        %2489 = vmatprep.subr.mxu0 %v2406
        %2490 = vmatpush2.msra.mxu0 %v2405
        %2491 = vmatprep.mubr.f32.mxu0 %v2425
        %2492 = vmatmul.mubr.f32.gmra.mxu0 %v2420
        %v2493 = vpop.f32.mrf.mxu0
        %v2494 = vadd.f32 0.0, %v2493
        %v2495 = vpop.f32.mrf.mxu0
        %v2496 = vadd.f32 0.0, %v2495
        %2497 = vdwg.mxu0
        %v2499 = vsel %vm722, %v2287, 0
        %2501 = vmatprep.subr.mxu0 %v2339
        %2502 = vmatpush1.msra.mxu0 %v2338
        %2503 = vmatprep.subr.mxu0 %v2337
        %2504 = vmatpush1.msra.mxu0 %v2336
        %2505 = vmatprep.subr.mxu0 %v2335
        %2506 = vmatpush1.msra.mxu0 %v2334
        %2507 = vmatprep.subr.mxu0 %v2333
        %2508 = vmatpush1.msra.mxu0 %v2332
        %2509 = vmatprep.subr.mxu0 %v2331
        %2510 = vmatpush1.msra.mxu0 %v2330
        %2511 = vmatprep.subr.mxu0 %v2329
        %2512 = vmatpush1.msra.mxu0 %v2328
        %2513 = vmatprep.subr.mxu0 %v2327
        %2514 = vmatpush1.msra.mxu0 %v2326
        %2515 = vmatprep.subr.mxu0 %v2325
        %2516 = vmatpush1.msra.mxu0 %v2324
        %2517 = vmatprep.subr.mxu0 %v2323
        %2518 = vmatpush1.msra.mxu0 %v2322
        %2519 = vmatprep.subr.mxu0 %v2321
        %2520 = vmatpush1.msra.mxu0 %v2320
        %2521 = vmatprep.subr.mxu0 %v2319
        %2522 = vmatpush1.msra.mxu0 %v2318
        %2523 = vmatprep.subr.mxu0 %v2317
        %2524 = vmatpush1.msra.mxu0 %v2316
        %2525 = vmatprep.subr.mxu0 %v2315
        %2526 = vmatpush1.msra.mxu0 %v2314
        %2527 = vmatprep.subr.mxu0 %v2313
        %2528 = vmatpush1.msra.mxu0 %v2312
        %2529 = vmatprep.subr.mxu0 %v2311
        %2530 = vmatpush1.msra.mxu0 %v2310
        %2531 = vmatprep.subr.mxu0 %v2309
        %2532 = vmatpush1.msra.mxu0 %v2308
        %2533 = vmatprep.subr.mxu0 0.0
        %2534 = vmatpush2.msra.mxu0 0.0
        %2535 = vmatprep.subr.mxu0 0.0
        %2536 = vmatpush2.msra.mxu0 0.0
        %2537 = vmatprep.subr.mxu0 0.0
        %2538 = vmatpush2.msra.mxu0 0.0
        %2539 = vmatprep.subr.mxu0 0.0
        %2540 = vmatpush2.msra.mxu0 0.0
        %2541 = vmatprep.subr.mxu0 0.0
        %2542 = vmatpush2.msra.mxu0 0.0
        %2543 = vmatprep.subr.mxu0 0.0
        %2544 = vmatpush2.msra.mxu0 0.0
        %2545 = vmatprep.subr.mxu0 0.0
        %2546 = vmatpush2.msra.mxu0 0.0
        %2547 = vmatprep.subr.mxu0 0.0
        %2548 = vmatpush2.msra.mxu0 0.0
        %2549 = vmatprep.subr.mxu0 0.0
        %2550 = vmatpush2.msra.mxu0 0.0
        %2551 = vmatprep.subr.mxu0 0.0
        %2552 = vmatpush2.msra.mxu0 0.0
        %2553 = vmatprep.subr.mxu0 0.0
        %2554 = vmatpush2.msra.mxu0 0.0
        %2555 = vmatprep.subr.mxu0 0.0
        %2556 = vmatpush2.msra.mxu0 0.0
        %2557 = vmatprep.subr.mxu0 %v2347
        %2558 = vmatpush2.msra.mxu0 %v2346
        %2559 = vmatprep.subr.mxu0 %v2345
        %2560 = vmatpush2.msra.mxu0 %v2344
        %2561 = vmatprep.subr.mxu0 %v2343
        %2562 = vmatpush2.msra.mxu0 %v2342
        %2563 = vmatprep.subr.mxu0 %v2341
        %2564 = vmatpush2.msra.mxu0 %v2340
        %2565 = vmatprep.mubr.f32.mxu0 %v2499
        %2566 = vmatmul.mubr.f32.gmra.mxu0 %v2286
        %v2567 = vpop.f32.mrf.mxu0
        %v2568 = vadd.f32 %v2494, %v2567
        %v2569 = vpop.f32.mrf.mxu0
        %v2570 = vadd.f32 %v2496, %v2569
        %2571 = vdwg.mxu0
        %v2572 = vld [vmem:[#allocation5] sm:$0xfc]
        %v2573 = vld [vmem:[#allocation5 + $0x8] sm:$0xfc]
        %v2574 = vld [vmem:[#allocation5 + $0x10] sm:$0x3]
        %v2575 = vld [vmem:[#allocation5 + $0x18] sm:$0x3]
        %s2576 = scalar_lea.vmem [#allocation16], 320
        %v2577 = vld [vmem:[%s2576] sm:$0xff]
        %v2578 = vld [vmem:[%s2576 + $0x8] sm:$0xff]
        %v2579 = vld [vmem:[%s2576 + $0x10] sm:$0xff]
        %v2580 = vld [vmem:[%s2576 + $0x18] sm:$0xff]
        %v2581 = vld [vmem:[%s2576 + $0x20] sm:$0xff]
        %v2582 = vld [vmem:[%s2576 + $0x28] sm:$0xff]
        %v2583 = vld [vmem:[%s2576 + $0x30] sm:$0xff]
        %v2584 = vld [vmem:[%s2576 + $0x38] sm:$0xff]
        %v2585 = vld [vmem:[%s2576 + $0x40] sm:$0xff]
        %v2586 = vld [vmem:[%s2576 + $0x48] sm:$0xff]
        %v2587 = vld [vmem:[%s2576 + $0x50] sm:$0xff]
        %v2588 = vld [vmem:[%s2576 + $0x58] sm:$0xff]
        %v2589 = vld [vmem:[%s2576 + $0x60] sm:$0xff]
        %v2590 = vld [vmem:[%s2576 + $0x68] sm:$0xff]
        %v2591 = vld [vmem:[%s2576 + $0x70] sm:$0xff]
        %v2592 = vld [vmem:[%s2576 + $0x78] sm:$0xff]
        %v2593 = vld [vmem:[%s2576 + $0x80] sm:$0xff]
        %v2594 = vld [vmem:[%s2576 + $0x88] sm:$0xff]
        %v2595 = vld [vmem:[%s2576 + $0x90] sm:$0xff]
        %v2596 = vld [vmem:[%s2576 + $0x98] sm:$0xff]
        %v2597 = vunpack.c.l.bf16 %v2577
        %v2598 = vunpack.c.h.bf16 %v2577
        %v2599 = vunpack.c.l.bf16 %v2578
        %v2600 = vunpack.c.h.bf16 %v2578
        %v2601 = vunpack.c.l.bf16 %v2579
        %v2602 = vunpack.c.h.bf16 %v2579
        %v2603 = vunpack.c.l.bf16 %v2580
        %v2604 = vunpack.c.h.bf16 %v2580
        %v2605 = vunpack.c.l.bf16 %v2581
        %v2606 = vunpack.c.h.bf16 %v2581
        %v2607 = vunpack.c.l.bf16 %v2582
        %v2608 = vunpack.c.h.bf16 %v2582
        %v2609 = vunpack.c.l.bf16 %v2583
        %v2610 = vunpack.c.h.bf16 %v2583
        %v2611 = vunpack.c.l.bf16 %v2584
        %v2612 = vunpack.c.h.bf16 %v2584
        %v2613 = vunpack.c.l.bf16 %v2585
        %v2614 = vunpack.c.h.bf16 %v2585
        %v2615 = vunpack.c.l.bf16 %v2586
        %v2616 = vunpack.c.h.bf16 %v2586
        %v2617 = vunpack.c.l.bf16 %v2587
        %v2618 = vunpack.c.h.bf16 %v2587
        %v2619 = vunpack.c.l.bf16 %v2588
        %v2620 = vunpack.c.h.bf16 %v2588
        %v2621 = vunpack.c.l.bf16 %v2589
        %v2622 = vunpack.c.h.bf16 %v2589
        %v2623 = vunpack.c.l.bf16 %v2590
        %v2624 = vunpack.c.h.bf16 %v2590
        %v2625 = vunpack.c.l.bf16 %v2591
        %v2626 = vunpack.c.h.bf16 %v2591
        %v2627 = vunpack.c.l.bf16 %v2592
        %v2628 = vunpack.c.h.bf16 %v2592
        %v2629 = vunpack.c.l.bf16 %v2593
        %v2630 = vunpack.c.h.bf16 %v2593
        %v2631 = vunpack.c.l.bf16 %v2594
        %v2632 = vunpack.c.h.bf16 %v2594
        %v2633 = vunpack.c.l.bf16 %v2595
        %v2634 = vunpack.c.h.bf16 %v2595
        %v2635 = vunpack.c.l.bf16 %v2596
        %v2636 = vunpack.c.h.bf16 %v2596
        %vm2641 = vcmask 1045504
        %v2642 = vrot.slane %v2572, 2
        %v2643 = vrot.slane %v2574, 2
        %v2644 = vsel %vm2641, %v2642, %v2643
        %v2645 = vrot.slane %v2573, 2
        %v2646 = vrot.slane %v2575, 2
        %v2647 = vsel %vm2641, %v2645, %v2646
        %v2649 = vsel %vm722, %v2647, 0
        %2651 = vmatprep.subr.mxu0 %v2628
        %2652 = vmatpush1.msra.mxu0 %v2627
        %2653 = vmatprep.subr.mxu0 %v2626
        %2654 = vmatpush1.msra.mxu0 %v2625
        %2655 = vmatprep.subr.mxu0 %v2624
        %2656 = vmatpush1.msra.mxu0 %v2623
        %2657 = vmatprep.subr.mxu0 %v2622
        %2658 = vmatpush1.msra.mxu0 %v2621
        %2659 = vmatprep.subr.mxu0 %v2620
        %2660 = vmatpush1.msra.mxu0 %v2619
        %2661 = vmatprep.subr.mxu0 %v2618
        %2662 = vmatpush1.msra.mxu0 %v2617
        %2663 = vmatprep.subr.mxu0 %v2616
        %2664 = vmatpush1.msra.mxu0 %v2615
        %2665 = vmatprep.subr.mxu0 %v2614
        %2666 = vmatpush1.msra.mxu0 %v2613
        %2667 = vmatprep.subr.mxu0 %v2612
        %2668 = vmatpush1.msra.mxu0 %v2611
        %2669 = vmatprep.subr.mxu0 %v2610
        %2670 = vmatpush1.msra.mxu0 %v2609
        %2671 = vmatprep.subr.mxu0 %v2608
        %2672 = vmatpush1.msra.mxu0 %v2607
        %2673 = vmatprep.subr.mxu0 %v2606
        %2674 = vmatpush1.msra.mxu0 %v2605
        %2675 = vmatprep.subr.mxu0 %v2604
        %2676 = vmatpush1.msra.mxu0 %v2603
        %2677 = vmatprep.subr.mxu0 %v2602
        %2678 = vmatpush1.msra.mxu0 %v2601
        %2679 = vmatprep.subr.mxu0 %v2600
        %2680 = vmatpush1.msra.mxu0 %v2599
        %2681 = vmatprep.subr.mxu0 %v2598
        %2682 = vmatpush1.msra.mxu0 %v2597
        %2683 = vmatprep.subr.mxu0 0.0
        %2684 = vmatpush2.msra.mxu0 0.0
        %2685 = vmatprep.subr.mxu0 0.0
        %2686 = vmatpush2.msra.mxu0 0.0
        %2687 = vmatprep.subr.mxu0 0.0
        %2688 = vmatpush2.msra.mxu0 0.0
        %2689 = vmatprep.subr.mxu0 0.0
        %2690 = vmatpush2.msra.mxu0 0.0
        %2691 = vmatprep.subr.mxu0 0.0
        %2692 = vmatpush2.msra.mxu0 0.0
        %2693 = vmatprep.subr.mxu0 0.0
        %2694 = vmatpush2.msra.mxu0 0.0
        %2695 = vmatprep.subr.mxu0 0.0
        %2696 = vmatpush2.msra.mxu0 0.0
        %2697 = vmatprep.subr.mxu0 0.0
        %2698 = vmatpush2.msra.mxu0 0.0
        %2699 = vmatprep.subr.mxu0 0.0
        %2700 = vmatpush2.msra.mxu0 0.0
        %2701 = vmatprep.subr.mxu0 0.0
        %2702 = vmatpush2.msra.mxu0 0.0
        %2703 = vmatprep.subr.mxu0 0.0
        %2704 = vmatpush2.msra.mxu0 0.0
        %2705 = vmatprep.subr.mxu0 0.0
        %2706 = vmatpush2.msra.mxu0 0.0
        %2707 = vmatprep.subr.mxu0 %v2636
        %2708 = vmatpush2.msra.mxu0 %v2635
        %2709 = vmatprep.subr.mxu0 %v2634
        %2710 = vmatpush2.msra.mxu0 %v2633
        %2711 = vmatprep.subr.mxu0 %v2632
        %2712 = vmatpush2.msra.mxu0 %v2631
        %2713 = vmatprep.subr.mxu0 %v2630
        %2714 = vmatpush2.msra.mxu0 %v2629
        %2715 = vmatprep.mubr.f32.mxu0 %v2649
        %2716 = vmatmul.mubr.f32.gmra.mxu0 %v2644
        %v2717 = vpop.f32.mrf.mxu0
        %v2718 = vadd.f32 0.0, %v2717
        %v2719 = vpop.f32.mrf.mxu0
        %v2720 = vadd.f32 0.0, %v2719
        %2721 = vdwg.mxu0
        %v2722 = vadd.f32 %v2568, %v2718
        %v2723 = vadd.f32 %v2570, %v2720
        %v2724 = vld [vmem:[#allocation25] sm:$0x3]
        %v2726 = vlaneseq
        %v2727 = vshrl.u32 %v2726, 7
        %v2728 = vsub.s32 0, %v2727
        %v2729 = vrot.slane %v2724, %v2728
        %v2730 = vlaneseq
        %v2731 = vshrl.u32 %v2730, 7
        %v2732 = vsub.s32 1, %v2731
        %v2733 = vrot.slane %v2724, %v2732
        %v2736 = vadd.f32 %v2722, %v2729
        %v2737 = vadd.f32 %v2723, %v2733
        %v2738 = vmul.f32 %v2736, 0.2
        %v2739 = vmul.f32 %v2737, 0.2
        %v2740 = vmax.f32 %v2736, %v2738
        %v2741 = vmax.f32 %v2737, %v2739
        %v2744 = vrot.slane %v2740, 7
        %v2745 = vrot.slane %v2741, 7
        %2746 = vrot.lane.b32.xlu0 %v2744, 32
        %v2747 = vpop.permute.xlu0 %2746
        %2748 = vrot.lane.b32.xlu0 %v2745, 32
        %v2749 = vpop.permute.xlu0 %2748
        %v2750 = vsel %vm722, %v2747, %v2749
        %vm2754 = vcmask 1047809
        %2755 = vst.msk [vmem:[#allocation6] sm:$0xfe] %vm2754, %v2747
        %2756 = vst [vmem:[#allocation6 + $0x8] sm:$0xfe] %v2750
        %vm2757 = vcmask 261121
        %2758 = vst.msk [vmem:[#allocation6 + $0x10] sm:$0xfe] %vm2757, %v2749
        %vm2759 = vcmask 1040640
        %2760 = vst.msk [vmem:[#allocation6 + $0x18] sm:$0x1] %vm2759, %v2747
        %2761 = vst [vmem:[#allocation6 + $0x20] sm:$0x1] %v2750
        %vm2762 = vcmask 253952
        %2763 = vst.msk [vmem:[#allocation6 + $0x28] sm:$0x1] %vm2762, %v2749
        %v2764 = vld [vmem:[#allocation6] sm:$0xff]
        %v2765 = vld [vmem:[#allocation6 + $0x8] sm:$0xff]
        %v2766 = vld [vmem:[#allocation6 + $0x10] sm:$0xff]
        %v2767 = vld [vmem:[#allocation6 + $0x18] sm:$0x3]
        %v2768 = vld [vmem:[#allocation6 + $0x20] sm:$0x3]
        %v2769 = vld [vmem:[#allocation6 + $0x28] sm:$0x3]
        %vm2770 = vcmask 80896
        %v2771 = vsel %vm2770, %v779, 0
        %v2774 = vsel %vm787, %v2767, 0
        %v2777 = vsel %vm787, %v2768, 0
        %v2780 = vsel %vm787, %v2769, 0
        %2782 = vmatprep.subr.mxu0 0.0
        %2783 = vmatpush1.msra.mxu0 0.0
        %2784 = vmatprep.subr.mxu0 0.0
        %2785 = vmatpush1.msra.mxu0 0.0
        %2786 = vmatprep.subr.mxu0 0.0
        %2787 = vmatpush1.msra.mxu0 0.0
        %2788 = vmatprep.subr.mxu0 0.0
        %2789 = vmatpush1.msra.mxu0 0.0
        %2790 = vmatprep.subr.mxu0 0.0
        %2791 = vmatpush1.msra.mxu0 0.0
        %2792 = vmatprep.subr.mxu0 0.0
        %2793 = vmatpush1.msra.mxu0 0.0
        %2794 = vmatprep.subr.mxu0 0.0
        %2795 = vmatpush1.msra.mxu0 0.0
        %2796 = vmatprep.subr.mxu0 0.0
        %2797 = vmatpush1.msra.mxu0 0.0
        %2798 = vmatprep.subr.mxu0 0.0
        %2799 = vmatpush1.msra.mxu0 0.0
        %2800 = vmatprep.subr.mxu0 0.0
        %2801 = vmatpush1.msra.mxu0 0.0
        %2802 = vmatprep.subr.mxu0 0.0
        %2803 = vmatpush1.msra.mxu0 0.0
        %2804 = vmatprep.subr.mxu0 0.0
        %2805 = vmatpush1.msra.mxu0 0.0
        %2806 = vmatprep.subr.mxu0 0.0
        %2807 = vmatpush1.msra.mxu0 0.0
        %2808 = vmatprep.subr.mxu0 0.0
        %2809 = vmatpush1.msra.mxu0 0.0
        %2810 = vmatprep.subr.mxu0 %v2777
        %2811 = vmatpush1.msra.mxu0 %v2774
        %2812 = vmatprep.subr.mxu0 %v2765
        %2813 = vmatpush1.msra.mxu0 %v2764
        %2814 = vmatprep.subr.mxu0 0.0
        %2815 = vmatpush2.msra.mxu0 0.0
        %2816 = vmatprep.subr.mxu0 0.0
        %2817 = vmatpush2.msra.mxu0 0.0
        %2818 = vmatprep.subr.mxu0 0.0
        %2819 = vmatpush2.msra.mxu0 0.0
        %2820 = vmatprep.subr.mxu0 0.0
        %2821 = vmatpush2.msra.mxu0 0.0
        %2822 = vmatprep.subr.mxu0 0.0
        %2823 = vmatpush2.msra.mxu0 0.0
        %2824 = vmatprep.subr.mxu0 0.0
        %2825 = vmatpush2.msra.mxu0 0.0
        %2826 = vmatprep.subr.mxu0 0.0
        %2827 = vmatpush2.msra.mxu0 0.0
        %2828 = vmatprep.subr.mxu0 0.0
        %2829 = vmatpush2.msra.mxu0 0.0
        %2830 = vmatprep.subr.mxu0 0.0
        %2831 = vmatpush2.msra.mxu0 0.0
        %2832 = vmatprep.subr.mxu0 0.0
        %2833 = vmatpush2.msra.mxu0 0.0
        %2834 = vmatprep.subr.mxu0 0.0
        %2835 = vmatpush2.msra.mxu0 0.0
        %2836 = vmatprep.subr.mxu0 0.0
        %2837 = vmatpush2.msra.mxu0 0.0
        %2838 = vmatprep.subr.mxu0 0.0
        %2839 = vmatpush2.msra.mxu0 0.0
        %2840 = vmatprep.subr.mxu0 0.0
        %2841 = vmatpush2.msra.mxu0 0.0
        %2842 = vmatprep.subr.mxu0 0.0
        %2843 = vmatpush2.msra.mxu0 0.0
        %2844 = vmatprep.subr.mxu0 0.0
        %2845 = vmatpush2.msra.mxu0 0.0
        %2846 = vmatprep.mubr.f32.mxu0 0.0
        %2847 = vmatmul.mubr.f32.gmra.mxu0 %v2771
        %v2848 = vpop.f32.mrf.mxu0
        %v2849 = vadd.f32 0.0, %v2848
        %v2850 = vpop.f32.mrf.mxu0
        %v2851 = vadd.f32 0.0, %v2850
        %2852 = vdwg.mxu0
        %2853 = vmatprep.subr.mxu0 0.0
        %2854 = vmatpush1.msra.mxu0 0.0
        %2855 = vmatprep.subr.mxu0 0.0
        %2856 = vmatpush1.msra.mxu0 0.0
        %2857 = vmatprep.subr.mxu0 0.0
        %2858 = vmatpush1.msra.mxu0 0.0
        %2859 = vmatprep.subr.mxu0 0.0
        %2860 = vmatpush1.msra.mxu0 0.0
        %2861 = vmatprep.subr.mxu0 0.0
        %2862 = vmatpush1.msra.mxu0 0.0
        %2863 = vmatprep.subr.mxu0 0.0
        %2864 = vmatpush1.msra.mxu0 0.0
        %2865 = vmatprep.subr.mxu0 0.0
        %2866 = vmatpush1.msra.mxu0 0.0
        %2867 = vmatprep.subr.mxu0 0.0
        %2868 = vmatpush1.msra.mxu0 0.0
        %2869 = vmatprep.subr.mxu0 0.0
        %2870 = vmatpush1.msra.mxu0 0.0
        %2871 = vmatprep.subr.mxu0 0.0
        %2872 = vmatpush1.msra.mxu0 0.0
        %2873 = vmatprep.subr.mxu0 0.0
        %2874 = vmatpush1.msra.mxu0 0.0
        %2875 = vmatprep.subr.mxu0 0.0
        %2876 = vmatpush1.msra.mxu0 0.0
        %2877 = vmatprep.subr.mxu0 0.0
        %2878 = vmatpush1.msra.mxu0 0.0
        %2879 = vmatprep.subr.mxu0 0.0
        %2880 = vmatpush1.msra.mxu0 0.0
        %2881 = vmatprep.subr.mxu0 0.0
        %2882 = vmatpush1.msra.mxu0 %v2780
        %2883 = vmatprep.subr.mxu0 0.0
        %2884 = vmatpush1.msra.mxu0 %v2766
        %2885 = vmatprep.subr.mxu0 0.0
        %2886 = vmatpush2.msra.mxu0 0.0
        %2887 = vmatprep.subr.mxu0 0.0
        %2888 = vmatpush2.msra.mxu0 0.0
        %2889 = vmatprep.subr.mxu0 0.0
        %2890 = vmatpush2.msra.mxu0 0.0
        %2891 = vmatprep.subr.mxu0 0.0
        %2892 = vmatpush2.msra.mxu0 0.0
        %2893 = vmatprep.subr.mxu0 0.0
        %2894 = vmatpush2.msra.mxu0 0.0
        %2895 = vmatprep.subr.mxu0 0.0
        %2896 = vmatpush2.msra.mxu0 0.0
        %2897 = vmatprep.subr.mxu0 0.0
        %2898 = vmatpush2.msra.mxu0 0.0
        %2899 = vmatprep.subr.mxu0 0.0
        %2900 = vmatpush2.msra.mxu0 0.0
        %2901 = vmatprep.subr.mxu0 0.0
        %2902 = vmatpush2.msra.mxu0 0.0
        %2903 = vmatprep.subr.mxu0 0.0
        %2904 = vmatpush2.msra.mxu0 0.0
        %2905 = vmatprep.subr.mxu0 0.0
        %2906 = vmatpush2.msra.mxu0 0.0
        %2907 = vmatprep.subr.mxu0 0.0
        %2908 = vmatpush2.msra.mxu0 0.0
        %2909 = vmatprep.subr.mxu0 0.0
        %2910 = vmatpush2.msra.mxu0 0.0
        %2911 = vmatprep.subr.mxu0 0.0
        %2912 = vmatpush2.msra.mxu0 0.0
        %2913 = vmatprep.subr.mxu0 0.0
        %2914 = vmatpush2.msra.mxu0 0.0
        %2915 = vmatprep.subr.mxu0 0.0
        %2916 = vmatpush2.msra.mxu0 0.0
        %2917 = vmatprep.mubr.f32.mxu0 0.0
        %2918 = vmatmul.mubr.f32.gmra.mxu0 %v2771
        %v2919 = vpop.f32.mrf.mxu0
        %v2920 = vadd.f32 0.0, %v2919
        %v2921 = vpop.f32.mrf.mxu0
        %2922 = vdwg.mxu0
        %v2923 = vld [vmem:[#allocation17] sm:$0xff]
        %v2924 = vld [vmem:[#allocation17 + $0x8] sm:$0xff]
        %v2925 = vld [vmem:[#allocation17 + $0x10] sm:$0xff]
        %v2926 = vld [vmem:[#allocation17 + $0x18] sm:$0xff]
        %v2927 = vld [vmem:[#allocation17 + $0x20] sm:$0xff]
        %v2928 = vld [vmem:[#allocation17 + $0x28] sm:$0xff]
        %v2929 = vld [vmem:[#allocation17 + $0x30] sm:$0xff]
        %v2930 = vld [vmem:[#allocation17 + $0x38] sm:$0xff]
        %v2931 = vld [vmem:[#allocation17 + $0x40] sm:$0xff]
        %v2932 = vld [vmem:[#allocation17 + $0x48] sm:$0xff]
        %v2933 = vld [vmem:[#allocation17 + $0x50] sm:$0xff]
        %v2934 = vld [vmem:[#allocation17 + $0x58] sm:$0xff]
        %v2935 = vld [vmem:[#allocation17 + $0x60] sm:$0xff]
        %v2936 = vld [vmem:[#allocation17 + $0x68] sm:$0xff]
        %v2937 = vld [vmem:[#allocation17 + $0x70] sm:$0xff]
        %v2938 = vld [vmem:[#allocation17 + $0x78] sm:$0xff]
        %v2939 = vld [vmem:[#allocation17 + $0x80] sm:$0xff]
        %v2940 = vld [vmem:[#allocation17 + $0x88] sm:$0xff]
        %v2941 = vld [vmem:[#allocation17 + $0x90] sm:$0xff]
        %v2942 = vld [vmem:[#allocation17 + $0x98] sm:$0xff]
        %v2943 = vld [vmem:[#allocation17 + $0xa0] sm:$0xff]
        %v2944 = vld [vmem:[#allocation17 + $0xa8] sm:$0xff]
        %v2945 = vld [vmem:[#allocation17 + $0xb0] sm:$0xff]
        %v2946 = vld [vmem:[#allocation17 + $0xb8] sm:$0xff]
        %v2947 = vld [vmem:[#allocation17 + $0xc0] sm:$0xff]
        %v2948 = vld [vmem:[#allocation17 + $0xc8] sm:$0xff]
        %v2949 = vld [vmem:[#allocation17 + $0xd0] sm:$0xff]
        %v2950 = vld [vmem:[#allocation17 + $0xd8] sm:$0xff]
        %v2951 = vld [vmem:[#allocation17 + $0xe0] sm:$0xff]
        %v2952 = vld [vmem:[#allocation17 + $0xe8] sm:$0xff]
        %v2953 = vld [vmem:[#allocation17 + $0xf0] sm:$0xff]
        %v2954 = vld [vmem:[#allocation17 + $0xf8] sm:$0xff]
        %v2955 = vld [vmem:[#allocation17 + $0x100] sm:$0xff]
        %v2956 = vld [vmem:[#allocation17 + $0x108] sm:$0xff]
        %v2957 = vld [vmem:[#allocation17 + $0x110] sm:$0xff]
        %v2958 = vld [vmem:[#allocation17 + $0x118] sm:$0xff]
        %v2959 = vld [vmem:[#allocation17 + $0x120] sm:$0xff]
        %v2960 = vld [vmem:[#allocation17 + $0x128] sm:$0xff]
        %v2961 = vld [vmem:[#allocation17 + $0x130] sm:$0xff]
        %v2962 = vld [vmem:[#allocation17 + $0x138] sm:$0xff]
        %v2963 = vunpack.c.l.bf16 %v2923
        %v2964 = vunpack.c.h.bf16 %v2923
        %v2965 = vunpack.c.l.bf16 %v2924
        %v2966 = vunpack.c.h.bf16 %v2924
        %v2967 = vunpack.c.l.bf16 %v2925
        %v2968 = vunpack.c.h.bf16 %v2925
        %v2969 = vunpack.c.l.bf16 %v2926
        %v2970 = vunpack.c.h.bf16 %v2926
        %v2971 = vunpack.c.l.bf16 %v2927
        %v2972 = vunpack.c.h.bf16 %v2927
        %v2973 = vunpack.c.l.bf16 %v2928
        %v2974 = vunpack.c.h.bf16 %v2928
        %v2975 = vunpack.c.l.bf16 %v2929
        %v2976 = vunpack.c.h.bf16 %v2929
        %v2977 = vunpack.c.l.bf16 %v2930
        %v2978 = vunpack.c.h.bf16 %v2930
        %v2979 = vunpack.c.l.bf16 %v2931
        %v2980 = vunpack.c.h.bf16 %v2931
        %v2981 = vunpack.c.l.bf16 %v2932
        %v2982 = vunpack.c.h.bf16 %v2932
        %v2983 = vunpack.c.l.bf16 %v2933
        %v2984 = vunpack.c.h.bf16 %v2933
        %v2985 = vunpack.c.l.bf16 %v2934
        %v2986 = vunpack.c.h.bf16 %v2934
        %v2987 = vunpack.c.l.bf16 %v2935
        %v2988 = vunpack.c.h.bf16 %v2935
        %v2989 = vunpack.c.l.bf16 %v2936
        %v2990 = vunpack.c.h.bf16 %v2936
        %v2991 = vunpack.c.l.bf16 %v2937
        %v2992 = vunpack.c.h.bf16 %v2937
        %v2993 = vunpack.c.l.bf16 %v2938
        %v2994 = vunpack.c.h.bf16 %v2938
        %v2995 = vunpack.c.l.bf16 %v2939
        %v2996 = vunpack.c.h.bf16 %v2939
        %v2997 = vunpack.c.l.bf16 %v2940
        %v2998 = vunpack.c.h.bf16 %v2940
        %v2999 = vunpack.c.l.bf16 %v2941
        %v3000 = vunpack.c.h.bf16 %v2941
        %v3001 = vunpack.c.l.bf16 %v2942
        %v3002 = vunpack.c.h.bf16 %v2942
        %v3003 = vunpack.c.l.bf16 %v2943
        %v3004 = vunpack.c.h.bf16 %v2943
        %v3005 = vunpack.c.l.bf16 %v2944
        %v3006 = vunpack.c.h.bf16 %v2944
        %v3007 = vunpack.c.l.bf16 %v2945
        %v3008 = vunpack.c.h.bf16 %v2945
        %v3009 = vunpack.c.l.bf16 %v2946
        %v3010 = vunpack.c.h.bf16 %v2946
        %v3011 = vunpack.c.l.bf16 %v2947
        %v3012 = vunpack.c.h.bf16 %v2947
        %v3013 = vunpack.c.l.bf16 %v2948
        %v3014 = vunpack.c.h.bf16 %v2948
        %v3015 = vunpack.c.l.bf16 %v2949
        %v3016 = vunpack.c.h.bf16 %v2949
        %v3017 = vunpack.c.l.bf16 %v2950
        %v3018 = vunpack.c.h.bf16 %v2950
        %v3019 = vunpack.c.l.bf16 %v2951
        %v3020 = vunpack.c.h.bf16 %v2951
        %v3021 = vunpack.c.l.bf16 %v2952
        %v3022 = vunpack.c.h.bf16 %v2952
        %v3023 = vunpack.c.l.bf16 %v2953
        %v3024 = vunpack.c.h.bf16 %v2953
        %v3025 = vunpack.c.l.bf16 %v2954
        %v3026 = vunpack.c.h.bf16 %v2954
        %v3027 = vunpack.c.l.bf16 %v2955
        %v3028 = vunpack.c.h.bf16 %v2955
        %v3029 = vunpack.c.l.bf16 %v2956
        %v3030 = vunpack.c.h.bf16 %v2956
        %v3031 = vunpack.c.l.bf16 %v2957
        %v3032 = vunpack.c.h.bf16 %v2957
        %v3033 = vunpack.c.l.bf16 %v2958
        %v3034 = vunpack.c.h.bf16 %v2958
        %v3035 = vunpack.c.l.bf16 %v2959
        %v3036 = vunpack.c.h.bf16 %v2959
        %v3037 = vunpack.c.l.bf16 %v2960
        %v3038 = vunpack.c.h.bf16 %v2960
        %v3039 = vunpack.c.l.bf16 %v2961
        %v3040 = vunpack.c.h.bf16 %v2961
        %v3041 = vunpack.c.l.bf16 %v2962
        %v3042 = vunpack.c.h.bf16 %v2962
        %v3043 = vsel %vm2770, %v882, 0
        %3045 = vmatprep.subr.mxu0 0.0
        %3046 = vmatpush1.msra.mxu0 0.0
        %3047 = vmatprep.subr.mxu0 0.0
        %3048 = vmatpush1.msra.mxu0 0.0
        %3049 = vmatprep.subr.mxu0 0.0
        %3050 = vmatpush1.msra.mxu0 0.0
        %3051 = vmatprep.subr.mxu0 0.0
        %3052 = vmatpush1.msra.mxu0 0.0
        %3053 = vmatprep.subr.mxu0 0.0
        %3054 = vmatpush1.msra.mxu0 0.0
        %3055 = vmatprep.subr.mxu0 0.0
        %3056 = vmatpush1.msra.mxu0 0.0
        %3057 = vmatprep.subr.mxu0 0.0
        %3058 = vmatpush1.msra.mxu0 0.0
        %3059 = vmatprep.subr.mxu0 0.0
        %3060 = vmatpush1.msra.mxu0 0.0
        %3061 = vmatprep.subr.mxu0 0.0
        %3062 = vmatpush1.msra.mxu0 0.0
        %3063 = vmatprep.subr.mxu0 0.0
        %3064 = vmatpush1.msra.mxu0 0.0
        %3065 = vmatprep.subr.mxu0 0.0
        %3066 = vmatpush1.msra.mxu0 0.0
        %3067 = vmatprep.subr.mxu0 0.0
        %3068 = vmatpush1.msra.mxu0 0.0
        %3069 = vmatprep.subr.mxu0 0.0
        %3070 = vmatpush1.msra.mxu0 0.0
        %3071 = vmatprep.subr.mxu0 0.0
        %3072 = vmatpush1.msra.mxu0 0.0
        %3073 = vmatprep.subr.mxu0 %v2777
        %3074 = vmatpush1.msra.mxu0 %v2774
        %3075 = vmatprep.subr.mxu0 %v2765
        %3076 = vmatpush1.msra.mxu0 %v2764
        %3077 = vmatprep.subr.mxu0 0.0
        %3078 = vmatpush2.msra.mxu0 0.0
        %3079 = vmatprep.subr.mxu0 0.0
        %3080 = vmatpush2.msra.mxu0 0.0
        %3081 = vmatprep.subr.mxu0 0.0
        %3082 = vmatpush2.msra.mxu0 0.0
        %3083 = vmatprep.subr.mxu0 0.0
        %3084 = vmatpush2.msra.mxu0 0.0
        %3085 = vmatprep.subr.mxu0 0.0
        %3086 = vmatpush2.msra.mxu0 0.0
        %3087 = vmatprep.subr.mxu0 0.0
        %3088 = vmatpush2.msra.mxu0 0.0
        %3089 = vmatprep.subr.mxu0 0.0
        %3090 = vmatpush2.msra.mxu0 0.0
        %3091 = vmatprep.subr.mxu0 0.0
        %3092 = vmatpush2.msra.mxu0 0.0
        %3093 = vmatprep.subr.mxu0 0.0
        %3094 = vmatpush2.msra.mxu0 0.0
        %3095 = vmatprep.subr.mxu0 0.0
        %3096 = vmatpush2.msra.mxu0 0.0
        %3097 = vmatprep.subr.mxu0 0.0
        %3098 = vmatpush2.msra.mxu0 0.0
        %3099 = vmatprep.subr.mxu0 0.0
        %3100 = vmatpush2.msra.mxu0 0.0
        %3101 = vmatprep.subr.mxu0 0.0
        %3102 = vmatpush2.msra.mxu0 0.0
        %3103 = vmatprep.subr.mxu0 0.0
        %3104 = vmatpush2.msra.mxu0 0.0
        %3105 = vmatprep.subr.mxu0 0.0
        %3106 = vmatpush2.msra.mxu0 0.0
        %3107 = vmatprep.subr.mxu0 0.0
        %3108 = vmatpush2.msra.mxu0 0.0
        %3109 = vmatprep.mubr.f32.mxu0 0.0
        %3110 = vmatmul.mubr.f32.gmra.mxu0 %v3043
        %v3111 = vpop.f32.mrf.mxu0
        %v3112 = vadd.f32 0.0, %v3111
        %v3113 = vpop.f32.mrf.mxu0
        %v3114 = vadd.f32 0.0, %v3113
        %3115 = vdwg.mxu0
        %3116 = vmatprep.subr.mxu0 0.0
        %3117 = vmatpush1.msra.mxu0 0.0
        %3118 = vmatprep.subr.mxu0 0.0
        %3119 = vmatpush1.msra.mxu0 0.0
        %3120 = vmatprep.subr.mxu0 0.0
        %3121 = vmatpush1.msra.mxu0 0.0
        %3122 = vmatprep.subr.mxu0 0.0
        %3123 = vmatpush1.msra.mxu0 0.0
        %3124 = vmatprep.subr.mxu0 0.0
        %3125 = vmatpush1.msra.mxu0 0.0
        %3126 = vmatprep.subr.mxu0 0.0
        %3127 = vmatpush1.msra.mxu0 0.0
        %3128 = vmatprep.subr.mxu0 0.0
        %3129 = vmatpush1.msra.mxu0 0.0
        %3130 = vmatprep.subr.mxu0 0.0
        %3131 = vmatpush1.msra.mxu0 0.0
        %3132 = vmatprep.subr.mxu0 0.0
        %3133 = vmatpush1.msra.mxu0 0.0
        %3134 = vmatprep.subr.mxu0 0.0
        %3135 = vmatpush1.msra.mxu0 0.0
        %3136 = vmatprep.subr.mxu0 0.0
        %3137 = vmatpush1.msra.mxu0 0.0
        %3138 = vmatprep.subr.mxu0 0.0
        %3139 = vmatpush1.msra.mxu0 0.0
        %3140 = vmatprep.subr.mxu0 0.0
        %3141 = vmatpush1.msra.mxu0 0.0
        %3142 = vmatprep.subr.mxu0 0.0
        %3143 = vmatpush1.msra.mxu0 0.0
        %3144 = vmatprep.subr.mxu0 0.0
        %3145 = vmatpush1.msra.mxu0 %v2780
        %3146 = vmatprep.subr.mxu0 0.0
        %3147 = vmatpush1.msra.mxu0 %v2766
        %3148 = vmatprep.subr.mxu0 0.0
        %3149 = vmatpush2.msra.mxu0 0.0
        %3150 = vmatprep.subr.mxu0 0.0
        %3151 = vmatpush2.msra.mxu0 0.0
        %3152 = vmatprep.subr.mxu0 0.0
        %3153 = vmatpush2.msra.mxu0 0.0
        %3154 = vmatprep.subr.mxu0 0.0
        %3155 = vmatpush2.msra.mxu0 0.0
        %3156 = vmatprep.subr.mxu0 0.0
        %3157 = vmatpush2.msra.mxu0 0.0
        %3158 = vmatprep.subr.mxu0 0.0
        %3159 = vmatpush2.msra.mxu0 0.0
        %3160 = vmatprep.subr.mxu0 0.0
        %3161 = vmatpush2.msra.mxu0 0.0
        %3162 = vmatprep.subr.mxu0 0.0
        %3163 = vmatpush2.msra.mxu0 0.0
        %3164 = vmatprep.subr.mxu0 0.0
        %3165 = vmatpush2.msra.mxu0 0.0
        %3166 = vmatprep.subr.mxu0 0.0
        %3167 = vmatpush2.msra.mxu0 0.0
        %3168 = vmatprep.subr.mxu0 0.0
        %3169 = vmatpush2.msra.mxu0 0.0
        %3170 = vmatprep.subr.mxu0 0.0
        %3171 = vmatpush2.msra.mxu0 0.0
        %3172 = vmatprep.subr.mxu0 0.0
        %3173 = vmatpush2.msra.mxu0 0.0
        %3174 = vmatprep.subr.mxu0 0.0
        %3175 = vmatpush2.msra.mxu0 0.0
        %3176 = vmatprep.subr.mxu0 0.0
        %3177 = vmatpush2.msra.mxu0 0.0
        %3178 = vmatprep.subr.mxu0 0.0
        %3179 = vmatpush2.msra.mxu0 0.0
        %3180 = vmatprep.mubr.f32.mxu0 0.0
        %3181 = vmatmul.mubr.f32.gmra.mxu0 %v3043
        %v3182 = vpop.f32.mrf.mxu0
        %v3183 = vadd.f32 0.0, %v3182
        %v3184 = vpop.f32.mrf.mxu0
        %3185 = vdwg.mxu0
        %s3186 = scalar_lea.vmem [#allocation17], 320
        %v3187 = vld [vmem:[%s3186] sm:$0xff]
        %v3188 = vld [vmem:[%s3186 + $0x8] sm:$0xff]
        %v3189 = vld [vmem:[%s3186 + $0x10] sm:$0xff]
        %v3190 = vld [vmem:[%s3186 + $0x18] sm:$0xff]
        %v3191 = vld [vmem:[%s3186 + $0x20] sm:$0xff]
        %v3192 = vld [vmem:[%s3186 + $0x28] sm:$0xff]
        %v3193 = vld [vmem:[%s3186 + $0x30] sm:$0xff]
        %v3194 = vld [vmem:[%s3186 + $0x38] sm:$0xff]
        %v3195 = vld [vmem:[%s3186 + $0x40] sm:$0xff]
        %v3196 = vld [vmem:[%s3186 + $0x48] sm:$0xff]
        %v3197 = vld [vmem:[%s3186 + $0x50] sm:$0xff]
        %v3198 = vld [vmem:[%s3186 + $0x58] sm:$0xff]
        %v3199 = vld [vmem:[%s3186 + $0x60] sm:$0xff]
        %v3200 = vld [vmem:[%s3186 + $0x68] sm:$0xff]
        %v3201 = vld [vmem:[%s3186 + $0x70] sm:$0xff]
        %v3202 = vld [vmem:[%s3186 + $0x78] sm:$0xff]
        %v3203 = vld [vmem:[%s3186 + $0x80] sm:$0xff]
        %v3204 = vld [vmem:[%s3186 + $0x88] sm:$0xff]
        %v3205 = vld [vmem:[%s3186 + $0x90] sm:$0xff]
        %v3206 = vld [vmem:[%s3186 + $0x98] sm:$0xff]
        %v3207 = vld [vmem:[%s3186 + $0xa0] sm:$0xff]
        %v3208 = vld [vmem:[%s3186 + $0xa8] sm:$0xff]
        %v3209 = vld [vmem:[%s3186 + $0xb0] sm:$0xff]
        %v3210 = vld [vmem:[%s3186 + $0xb8] sm:$0xff]
        %v3211 = vld [vmem:[%s3186 + $0xc0] sm:$0xff]
        %v3212 = vld [vmem:[%s3186 + $0xc8] sm:$0xff]
        %v3213 = vld [vmem:[%s3186 + $0xd0] sm:$0xff]
        %v3214 = vld [vmem:[%s3186 + $0xd8] sm:$0xff]
        %v3215 = vld [vmem:[%s3186 + $0xe0] sm:$0xff]
        %v3216 = vld [vmem:[%s3186 + $0xe8] sm:$0xff]
        %v3217 = vld [vmem:[%s3186 + $0xf0] sm:$0xff]
        %v3218 = vld [vmem:[%s3186 + $0xf8] sm:$0xff]
        %v3219 = vld [vmem:[%s3186 + $0x100] sm:$0xff]
        %v3220 = vld [vmem:[%s3186 + $0x108] sm:$0xff]
        %v3221 = vld [vmem:[%s3186 + $0x110] sm:$0xff]
        %v3222 = vld [vmem:[%s3186 + $0x118] sm:$0xff]
        %v3223 = vld [vmem:[%s3186 + $0x120] sm:$0xff]
        %v3224 = vld [vmem:[%s3186 + $0x128] sm:$0xff]
        %v3225 = vld [vmem:[%s3186 + $0x130] sm:$0xff]
        %v3226 = vld [vmem:[%s3186 + $0x138] sm:$0xff]
        %v3227 = vunpack.c.l.bf16 %v3187
        %v3228 = vunpack.c.h.bf16 %v3187
        %v3229 = vunpack.c.l.bf16 %v3188
        %v3230 = vunpack.c.h.bf16 %v3188
        %v3231 = vunpack.c.l.bf16 %v3189
        %v3232 = vunpack.c.h.bf16 %v3189
        %v3233 = vunpack.c.l.bf16 %v3190
        %v3234 = vunpack.c.h.bf16 %v3190
        %v3235 = vunpack.c.l.bf16 %v3191
        %v3236 = vunpack.c.h.bf16 %v3191
        %v3237 = vunpack.c.l.bf16 %v3192
        %v3238 = vunpack.c.h.bf16 %v3192
        %v3239 = vunpack.c.l.bf16 %v3193
        %v3240 = vunpack.c.h.bf16 %v3193
        %v3241 = vunpack.c.l.bf16 %v3194
        %v3242 = vunpack.c.h.bf16 %v3194
        %v3243 = vunpack.c.l.bf16 %v3195
        %v3244 = vunpack.c.h.bf16 %v3195
        %v3245 = vunpack.c.l.bf16 %v3196
        %v3246 = vunpack.c.h.bf16 %v3196
        %v3247 = vunpack.c.l.bf16 %v3197
        %v3248 = vunpack.c.h.bf16 %v3197
        %v3249 = vunpack.c.l.bf16 %v3198
        %v3250 = vunpack.c.h.bf16 %v3198
        %v3251 = vunpack.c.l.bf16 %v3199
        %v3252 = vunpack.c.h.bf16 %v3199
        %v3253 = vunpack.c.l.bf16 %v3200
        %v3254 = vunpack.c.h.bf16 %v3200
        %v3255 = vunpack.c.l.bf16 %v3201
        %v3256 = vunpack.c.h.bf16 %v3201
        %v3257 = vunpack.c.l.bf16 %v3202
        %v3258 = vunpack.c.h.bf16 %v3202
        %v3259 = vunpack.c.l.bf16 %v3203
        %v3260 = vunpack.c.h.bf16 %v3203
        %v3261 = vunpack.c.l.bf16 %v3204
        %v3262 = vunpack.c.h.bf16 %v3204
        %v3263 = vunpack.c.l.bf16 %v3205
        %v3264 = vunpack.c.h.bf16 %v3205
        %v3265 = vunpack.c.l.bf16 %v3206
        %v3266 = vunpack.c.h.bf16 %v3206
        %v3267 = vunpack.c.l.bf16 %v3207
        %v3268 = vunpack.c.h.bf16 %v3207
        %v3269 = vunpack.c.l.bf16 %v3208
        %v3270 = vunpack.c.h.bf16 %v3208
        %v3271 = vunpack.c.l.bf16 %v3209
        %v3272 = vunpack.c.h.bf16 %v3209
        %v3273 = vunpack.c.l.bf16 %v3210
        %v3274 = vunpack.c.h.bf16 %v3210
        %v3275 = vunpack.c.l.bf16 %v3211
        %v3276 = vunpack.c.h.bf16 %v3211
        %v3277 = vunpack.c.l.bf16 %v3212
        %v3278 = vunpack.c.h.bf16 %v3212
        %v3279 = vunpack.c.l.bf16 %v3213
        %v3280 = vunpack.c.h.bf16 %v3213
        %v3281 = vunpack.c.l.bf16 %v3214
        %v3282 = vunpack.c.h.bf16 %v3214
        %v3283 = vunpack.c.l.bf16 %v3215
        %v3284 = vunpack.c.h.bf16 %v3215
        %v3285 = vunpack.c.l.bf16 %v3216
        %v3286 = vunpack.c.h.bf16 %v3216
        %v3287 = vunpack.c.l.bf16 %v3217
        %v3288 = vunpack.c.h.bf16 %v3217
        %v3289 = vunpack.c.l.bf16 %v3218
        %v3290 = vunpack.c.h.bf16 %v3218
        %v3291 = vunpack.c.l.bf16 %v3219
        %v3292 = vunpack.c.h.bf16 %v3219
        %v3293 = vunpack.c.l.bf16 %v3220
        %v3294 = vunpack.c.h.bf16 %v3220
        %v3295 = vunpack.c.l.bf16 %v3221
        %v3296 = vunpack.c.h.bf16 %v3221
        %v3297 = vunpack.c.l.bf16 %v3222
        %v3298 = vunpack.c.h.bf16 %v3222
        %v3299 = vunpack.c.l.bf16 %v3223
        %v3300 = vunpack.c.h.bf16 %v3223
        %v3301 = vunpack.c.l.bf16 %v3224
        %v3302 = vunpack.c.h.bf16 %v3224
        %v3303 = vunpack.c.l.bf16 %v3225
        %v3304 = vunpack.c.h.bf16 %v3225
        %v3305 = vunpack.c.l.bf16 %v3226
        %v3306 = vunpack.c.h.bf16 %v3226
        %v3308 = vsel %vm729, %v3183, 0
        %3310 = vmatprep.subr.mxu0 %v3258
        %3311 = vmatpush1.msra.mxu0 %v3257
        %3312 = vmatprep.subr.mxu0 %v3256
        %3313 = vmatpush1.msra.mxu0 %v3255
        %3314 = vmatprep.subr.mxu0 %v3254
        %3315 = vmatpush1.msra.mxu0 %v3253
        %3316 = vmatprep.subr.mxu0 %v3252
        %3317 = vmatpush1.msra.mxu0 %v3251
        %3318 = vmatprep.subr.mxu0 %v3250
        %3319 = vmatpush1.msra.mxu0 %v3249
        %3320 = vmatprep.subr.mxu0 %v3248
        %3321 = vmatpush1.msra.mxu0 %v3247
        %3322 = vmatprep.subr.mxu0 %v3246
        %3323 = vmatpush1.msra.mxu0 %v3245
        %3324 = vmatprep.subr.mxu0 %v3244
        %3325 = vmatpush1.msra.mxu0 %v3243
        %3326 = vmatprep.subr.mxu0 %v3242
        %3327 = vmatpush1.msra.mxu0 %v3241
        %3328 = vmatprep.subr.mxu0 %v3240
        %3329 = vmatpush1.msra.mxu0 %v3239
        %3330 = vmatprep.subr.mxu0 %v3238
        %3331 = vmatpush1.msra.mxu0 %v3237
        %3332 = vmatprep.subr.mxu0 %v3236
        %3333 = vmatpush1.msra.mxu0 %v3235
        %3334 = vmatprep.subr.mxu0 %v3234
        %3335 = vmatpush1.msra.mxu0 %v3233
        %3336 = vmatprep.subr.mxu0 %v3232
        %3337 = vmatpush1.msra.mxu0 %v3231
        %3338 = vmatprep.subr.mxu0 %v3230
        %3339 = vmatpush1.msra.mxu0 %v3229
        %3340 = vmatprep.subr.mxu0 %v3228
        %3341 = vmatpush1.msra.mxu0 %v3227
        %3342 = vmatprep.subr.mxu0 %v3290
        %3343 = vmatpush2.msra.mxu0 %v3289
        %3344 = vmatprep.subr.mxu0 %v3288
        %3345 = vmatpush2.msra.mxu0 %v3287
        %3346 = vmatprep.subr.mxu0 %v3286
        %3347 = vmatpush2.msra.mxu0 %v3285
        %3348 = vmatprep.subr.mxu0 %v3284
        %3349 = vmatpush2.msra.mxu0 %v3283
        %3350 = vmatprep.subr.mxu0 %v3282
        %3351 = vmatpush2.msra.mxu0 %v3281
        %3352 = vmatprep.subr.mxu0 %v3280
        %3353 = vmatpush2.msra.mxu0 %v3279
        %3354 = vmatprep.subr.mxu0 %v3278
        %3355 = vmatpush2.msra.mxu0 %v3277
        %3356 = vmatprep.subr.mxu0 %v3276
        %3357 = vmatpush2.msra.mxu0 %v3275
        %3358 = vmatprep.subr.mxu0 %v3274
        %3359 = vmatpush2.msra.mxu0 %v3273
        %3360 = vmatprep.subr.mxu0 %v3272
        %3361 = vmatpush2.msra.mxu0 %v3271
        %3362 = vmatprep.subr.mxu0 %v3270
        %3363 = vmatpush2.msra.mxu0 %v3269
        %3364 = vmatprep.subr.mxu0 %v3268
        %3365 = vmatpush2.msra.mxu0 %v3267
        %3366 = vmatprep.subr.mxu0 %v3266
        %3367 = vmatpush2.msra.mxu0 %v3265
        %3368 = vmatprep.subr.mxu0 %v3264
        %3369 = vmatpush2.msra.mxu0 %v3263
        %3370 = vmatprep.subr.mxu0 %v3262
        %3371 = vmatpush2.msra.mxu0 %v3261
        %3372 = vmatprep.subr.mxu0 %v3260
        %3373 = vmatpush2.msra.mxu0 %v3259
        %3374 = vmatprep.mubr.f32.mxu0 %v3114
        %3375 = vmatmul.mubr.f32.gmra.mxu0 %v3112
        %v3376 = vpop.f32.mrf.mxu0
        %v3377 = vadd.f32 0.0, %v3376
        %v3378 = vpop.f32.mrf.mxu0
        %v3379 = vadd.f32 0.0, %v3378
        %3380 = vdwg.mxu0
        %3381 = vmatprep.subr.mxu0 0.0
        %3382 = vmatpush1.msra.mxu0 0.0
        %3383 = vmatprep.subr.mxu0 0.0
        %3384 = vmatpush1.msra.mxu0 0.0
        %3385 = vmatprep.subr.mxu0 0.0
        %3386 = vmatpush1.msra.mxu0 0.0
        %3387 = vmatprep.subr.mxu0 0.0
        %3388 = vmatpush1.msra.mxu0 0.0
        %3389 = vmatprep.subr.mxu0 0.0
        %3390 = vmatpush1.msra.mxu0 0.0
        %3391 = vmatprep.subr.mxu0 0.0
        %3392 = vmatpush1.msra.mxu0 0.0
        %3393 = vmatprep.subr.mxu0 0.0
        %3394 = vmatpush1.msra.mxu0 0.0
        %3395 = vmatprep.subr.mxu0 0.0
        %3396 = vmatpush1.msra.mxu0 0.0
        %3397 = vmatprep.subr.mxu0 %v3306
        %3398 = vmatpush1.msra.mxu0 %v3305
        %3399 = vmatprep.subr.mxu0 %v3304
        %3400 = vmatpush1.msra.mxu0 %v3303
        %3401 = vmatprep.subr.mxu0 %v3302
        %3402 = vmatpush1.msra.mxu0 %v3301
        %3403 = vmatprep.subr.mxu0 %v3300
        %3404 = vmatpush1.msra.mxu0 %v3299
        %3405 = vmatprep.subr.mxu0 %v3298
        %3406 = vmatpush1.msra.mxu0 %v3297
        %3407 = vmatprep.subr.mxu0 %v3296
        %3408 = vmatpush1.msra.mxu0 %v3295
        %3409 = vmatprep.subr.mxu0 %v3294
        %3410 = vmatpush1.msra.mxu0 %v3293
        %3411 = vmatprep.subr.mxu0 %v3292
        %3412 = vmatpush1.msra.mxu0 %v3291
        %3413 = vmatprep.subr.mxu0 0.0
        %3414 = vmatpush2.msra.mxu0 0.0
        %3415 = vmatprep.subr.mxu0 0.0
        %3416 = vmatpush2.msra.mxu0 0.0
        %3417 = vmatprep.subr.mxu0 0.0
        %3418 = vmatpush2.msra.mxu0 0.0
        %3419 = vmatprep.subr.mxu0 0.0
        %3420 = vmatpush2.msra.mxu0 0.0
        %3421 = vmatprep.subr.mxu0 0.0
        %3422 = vmatpush2.msra.mxu0 0.0
        %3423 = vmatprep.subr.mxu0 0.0
        %3424 = vmatpush2.msra.mxu0 0.0
        %3425 = vmatprep.subr.mxu0 0.0
        %3426 = vmatpush2.msra.mxu0 0.0
        %3427 = vmatprep.subr.mxu0 0.0
        %3428 = vmatpush2.msra.mxu0 0.0
        %3429 = vmatprep.subr.mxu0 0.0
        %3430 = vmatpush2.msra.mxu0 0.0
        %3431 = vmatprep.subr.mxu0 0.0
        %3432 = vmatpush2.msra.mxu0 0.0
        %3433 = vmatprep.subr.mxu0 0.0
        %3434 = vmatpush2.msra.mxu0 0.0
        %3435 = vmatprep.subr.mxu0 0.0
        %3436 = vmatpush2.msra.mxu0 0.0
        %3437 = vmatprep.subr.mxu0 0.0
        %3438 = vmatpush2.msra.mxu0 0.0
        %3439 = vmatprep.subr.mxu0 0.0
        %3440 = vmatpush2.msra.mxu0 0.0
        %3441 = vmatprep.subr.mxu0 0.0
        %3442 = vmatpush2.msra.mxu0 0.0
        %3443 = vmatprep.subr.mxu0 0.0
        %3444 = vmatpush2.msra.mxu0 0.0
        %3445 = vmatprep.mubr.f32.mxu0 0.0
        %3446 = vmatmul.mubr.f32.gmra.mxu0 %v3308
        %v3447 = vpop.f32.mrf.mxu0
        %v3448 = vadd.f32 %v3377, %v3447
        %v3449 = vpop.f32.mrf.mxu0
        %v3450 = vadd.f32 %v3379, %v3449
        %3451 = vdwg.mxu0
        %v3453 = vsel %vm729, %v2920, 0
        %3455 = vmatprep.subr.mxu0 %v2994
        %3456 = vmatpush1.msra.mxu0 %v2993
        %3457 = vmatprep.subr.mxu0 %v2992
        %3458 = vmatpush1.msra.mxu0 %v2991
        %3459 = vmatprep.subr.mxu0 %v2990
        %3460 = vmatpush1.msra.mxu0 %v2989
        %3461 = vmatprep.subr.mxu0 %v2988
        %3462 = vmatpush1.msra.mxu0 %v2987
        %3463 = vmatprep.subr.mxu0 %v2986
        %3464 = vmatpush1.msra.mxu0 %v2985
        %3465 = vmatprep.subr.mxu0 %v2984
        %3466 = vmatpush1.msra.mxu0 %v2983
        %3467 = vmatprep.subr.mxu0 %v2982
        %3468 = vmatpush1.msra.mxu0 %v2981
        %3469 = vmatprep.subr.mxu0 %v2980
        %3470 = vmatpush1.msra.mxu0 %v2979
        %3471 = vmatprep.subr.mxu0 %v2978
        %3472 = vmatpush1.msra.mxu0 %v2977
        %3473 = vmatprep.subr.mxu0 %v2976
        %3474 = vmatpush1.msra.mxu0 %v2975
        %3475 = vmatprep.subr.mxu0 %v2974
        %3476 = vmatpush1.msra.mxu0 %v2973
        %3477 = vmatprep.subr.mxu0 %v2972
        %3478 = vmatpush1.msra.mxu0 %v2971
        %3479 = vmatprep.subr.mxu0 %v2970
        %3480 = vmatpush1.msra.mxu0 %v2969
        %3481 = vmatprep.subr.mxu0 %v2968
        %3482 = vmatpush1.msra.mxu0 %v2967
        %3483 = vmatprep.subr.mxu0 %v2966
        %3484 = vmatpush1.msra.mxu0 %v2965
        %3485 = vmatprep.subr.mxu0 %v2964
        %3486 = vmatpush1.msra.mxu0 %v2963
        %3487 = vmatprep.subr.mxu0 %v3026
        %3488 = vmatpush2.msra.mxu0 %v3025
        %3489 = vmatprep.subr.mxu0 %v3024
        %3490 = vmatpush2.msra.mxu0 %v3023
        %3491 = vmatprep.subr.mxu0 %v3022
        %3492 = vmatpush2.msra.mxu0 %v3021
        %3493 = vmatprep.subr.mxu0 %v3020
        %3494 = vmatpush2.msra.mxu0 %v3019
        %3495 = vmatprep.subr.mxu0 %v3018
        %3496 = vmatpush2.msra.mxu0 %v3017
        %3497 = vmatprep.subr.mxu0 %v3016
        %3498 = vmatpush2.msra.mxu0 %v3015
        %3499 = vmatprep.subr.mxu0 %v3014
        %3500 = vmatpush2.msra.mxu0 %v3013
        %3501 = vmatprep.subr.mxu0 %v3012
        %3502 = vmatpush2.msra.mxu0 %v3011
        %3503 = vmatprep.subr.mxu0 %v3010
        %3504 = vmatpush2.msra.mxu0 %v3009
        %3505 = vmatprep.subr.mxu0 %v3008
        %3506 = vmatpush2.msra.mxu0 %v3007
        %3507 = vmatprep.subr.mxu0 %v3006
        %3508 = vmatpush2.msra.mxu0 %v3005
        %3509 = vmatprep.subr.mxu0 %v3004
        %3510 = vmatpush2.msra.mxu0 %v3003
        %3511 = vmatprep.subr.mxu0 %v3002
        %3512 = vmatpush2.msra.mxu0 %v3001
        %3513 = vmatprep.subr.mxu0 %v3000
        %3514 = vmatpush2.msra.mxu0 %v2999
        %3515 = vmatprep.subr.mxu0 %v2998
        %3516 = vmatpush2.msra.mxu0 %v2997
        %3517 = vmatprep.subr.mxu0 %v2996
        %3518 = vmatpush2.msra.mxu0 %v2995
        %3519 = vmatprep.mubr.f32.mxu0 %v2851
        %3520 = vmatmul.mubr.f32.gmra.mxu0 %v2849
        %v3521 = vpop.f32.mrf.mxu0
        %v3522 = vadd.f32 %v3448, %v3521
        %v3523 = vpop.f32.mrf.mxu0
        %v3524 = vadd.f32 %v3450, %v3523
        %3525 = vdwg.mxu0
        %3526 = vmatprep.subr.mxu0 0.0
        %3527 = vmatpush1.msra.mxu0 0.0
        %3528 = vmatprep.subr.mxu0 0.0
        %3529 = vmatpush1.msra.mxu0 0.0
        %3530 = vmatprep.subr.mxu0 0.0
        %3531 = vmatpush1.msra.mxu0 0.0
        %3532 = vmatprep.subr.mxu0 0.0
        %3533 = vmatpush1.msra.mxu0 0.0
        %3534 = vmatprep.subr.mxu0 0.0
        %3535 = vmatpush1.msra.mxu0 0.0
        %3536 = vmatprep.subr.mxu0 0.0
        %3537 = vmatpush1.msra.mxu0 0.0
        %3538 = vmatprep.subr.mxu0 0.0
        %3539 = vmatpush1.msra.mxu0 0.0
        %3540 = vmatprep.subr.mxu0 0.0
        %3541 = vmatpush1.msra.mxu0 0.0
        %3542 = vmatprep.subr.mxu0 %v3042
        %3543 = vmatpush1.msra.mxu0 %v3041
        %3544 = vmatprep.subr.mxu0 %v3040
        %3545 = vmatpush1.msra.mxu0 %v3039
        %3546 = vmatprep.subr.mxu0 %v3038
        %3547 = vmatpush1.msra.mxu0 %v3037
        %3548 = vmatprep.subr.mxu0 %v3036
        %3549 = vmatpush1.msra.mxu0 %v3035
        %3550 = vmatprep.subr.mxu0 %v3034
        %3551 = vmatpush1.msra.mxu0 %v3033
        %3552 = vmatprep.subr.mxu0 %v3032
        %3553 = vmatpush1.msra.mxu0 %v3031
        %3554 = vmatprep.subr.mxu0 %v3030
        %3555 = vmatpush1.msra.mxu0 %v3029
        %3556 = vmatprep.subr.mxu0 %v3028
        %3557 = vmatpush1.msra.mxu0 %v3027
        %3558 = vmatprep.subr.mxu0 0.0
        %3559 = vmatpush2.msra.mxu0 0.0
        %3560 = vmatprep.subr.mxu0 0.0
        %3561 = vmatpush2.msra.mxu0 0.0
        %3562 = vmatprep.subr.mxu0 0.0
        %3563 = vmatpush2.msra.mxu0 0.0
        %3564 = vmatprep.subr.mxu0 0.0
        %3565 = vmatpush2.msra.mxu0 0.0
        %3566 = vmatprep.subr.mxu0 0.0
        %3567 = vmatpush2.msra.mxu0 0.0
        %3568 = vmatprep.subr.mxu0 0.0
        %3569 = vmatpush2.msra.mxu0 0.0
        %3570 = vmatprep.subr.mxu0 0.0
        %3571 = vmatpush2.msra.mxu0 0.0
        %3572 = vmatprep.subr.mxu0 0.0
        %3573 = vmatpush2.msra.mxu0 0.0
        %3574 = vmatprep.subr.mxu0 0.0
        %3575 = vmatpush2.msra.mxu0 0.0
        %3576 = vmatprep.subr.mxu0 0.0
        %3577 = vmatpush2.msra.mxu0 0.0
        %3578 = vmatprep.subr.mxu0 0.0
        %3579 = vmatpush2.msra.mxu0 0.0
        %3580 = vmatprep.subr.mxu0 0.0
        %3581 = vmatpush2.msra.mxu0 0.0
        %3582 = vmatprep.subr.mxu0 0.0
        %3583 = vmatpush2.msra.mxu0 0.0
        %3584 = vmatprep.subr.mxu0 0.0
        %3585 = vmatpush2.msra.mxu0 0.0
        %3586 = vmatprep.subr.mxu0 0.0
        %3587 = vmatpush2.msra.mxu0 0.0
        %3588 = vmatprep.subr.mxu0 0.0
        %3589 = vmatpush2.msra.mxu0 0.0
        %3590 = vmatprep.mubr.f32.mxu0 0.0
        %3591 = vmatmul.mubr.f32.gmra.mxu0 %v3453
        %v3592 = vpop.f32.mrf.mxu0
        %v3593 = vadd.f32 %v3522, %v3592
        %v3594 = vpop.f32.mrf.mxu0
        %v3595 = vadd.f32 %v3524, %v3594
        %3596 = vdwg.mxu0
        %v3597 = vsel %vm2770, %v1150, 0
        %3599 = vmatprep.subr.mxu0 0.0
        %3600 = vmatpush1.msra.mxu0 0.0
        %3601 = vmatprep.subr.mxu0 0.0
        %3602 = vmatpush1.msra.mxu0 0.0
        %3603 = vmatprep.subr.mxu0 0.0
        %3604 = vmatpush1.msra.mxu0 0.0
        %3605 = vmatprep.subr.mxu0 0.0
        %3606 = vmatpush1.msra.mxu0 0.0
        %3607 = vmatprep.subr.mxu0 0.0
        %3608 = vmatpush1.msra.mxu0 0.0
        %3609 = vmatprep.subr.mxu0 0.0
        %3610 = vmatpush1.msra.mxu0 0.0
        %3611 = vmatprep.subr.mxu0 0.0
        %3612 = vmatpush1.msra.mxu0 0.0
        %3613 = vmatprep.subr.mxu0 0.0
        %3614 = vmatpush1.msra.mxu0 0.0
        %3615 = vmatprep.subr.mxu0 0.0
        %3616 = vmatpush1.msra.mxu0 0.0
        %3617 = vmatprep.subr.mxu0 0.0
        %3618 = vmatpush1.msra.mxu0 0.0
        %3619 = vmatprep.subr.mxu0 0.0
        %3620 = vmatpush1.msra.mxu0 0.0
        %3621 = vmatprep.subr.mxu0 0.0
        %3622 = vmatpush1.msra.mxu0 0.0
        %3623 = vmatprep.subr.mxu0 0.0
        %3624 = vmatpush1.msra.mxu0 0.0
        %3625 = vmatprep.subr.mxu0 0.0
        %3626 = vmatpush1.msra.mxu0 0.0
        %3627 = vmatprep.subr.mxu0 %v2777
        %3628 = vmatpush1.msra.mxu0 %v2774
        %3629 = vmatprep.subr.mxu0 %v2765
        %3630 = vmatpush1.msra.mxu0 %v2764
        %3631 = vmatprep.subr.mxu0 0.0
        %3632 = vmatpush2.msra.mxu0 0.0
        %3633 = vmatprep.subr.mxu0 0.0
        %3634 = vmatpush2.msra.mxu0 0.0
        %3635 = vmatprep.subr.mxu0 0.0
        %3636 = vmatpush2.msra.mxu0 0.0
        %3637 = vmatprep.subr.mxu0 0.0
        %3638 = vmatpush2.msra.mxu0 0.0
        %3639 = vmatprep.subr.mxu0 0.0
        %3640 = vmatpush2.msra.mxu0 0.0
        %3641 = vmatprep.subr.mxu0 0.0
        %3642 = vmatpush2.msra.mxu0 0.0
        %3643 = vmatprep.subr.mxu0 0.0
        %3644 = vmatpush2.msra.mxu0 0.0
        %3645 = vmatprep.subr.mxu0 0.0
        %3646 = vmatpush2.msra.mxu0 0.0
        %3647 = vmatprep.subr.mxu0 0.0
        %3648 = vmatpush2.msra.mxu0 0.0
        %3649 = vmatprep.subr.mxu0 0.0
        %3650 = vmatpush2.msra.mxu0 0.0
        %3651 = vmatprep.subr.mxu0 0.0
        %3652 = vmatpush2.msra.mxu0 0.0
        %3653 = vmatprep.subr.mxu0 0.0
        %3654 = vmatpush2.msra.mxu0 0.0
        %3655 = vmatprep.subr.mxu0 0.0
        %3656 = vmatpush2.msra.mxu0 0.0
        %3657 = vmatprep.subr.mxu0 0.0
        %3658 = vmatpush2.msra.mxu0 0.0
        %3659 = vmatprep.subr.mxu0 0.0
        %3660 = vmatpush2.msra.mxu0 0.0
        %3661 = vmatprep.subr.mxu0 0.0
        %3662 = vmatpush2.msra.mxu0 0.0
        %3663 = vmatprep.mubr.f32.mxu0 0.0
        %3664 = vmatmul.mubr.f32.gmra.mxu0 %v3597
        %v3665 = vpop.f32.mrf.mxu0
        %v3666 = vadd.f32 0.0, %v3665
        %v3667 = vpop.f32.mrf.mxu0
        %v3668 = vadd.f32 0.0, %v3667
        %3669 = vdwg.mxu0
        %3670 = vmatprep.subr.mxu0 0.0
        %3671 = vmatpush1.msra.mxu0 0.0
        %3672 = vmatprep.subr.mxu0 0.0
        %3673 = vmatpush1.msra.mxu0 0.0
        %3674 = vmatprep.subr.mxu0 0.0
        %3675 = vmatpush1.msra.mxu0 0.0
        %3676 = vmatprep.subr.mxu0 0.0
        %3677 = vmatpush1.msra.mxu0 0.0
        %3678 = vmatprep.subr.mxu0 0.0
        %3679 = vmatpush1.msra.mxu0 0.0
        %3680 = vmatprep.subr.mxu0 0.0
        %3681 = vmatpush1.msra.mxu0 0.0
        %3682 = vmatprep.subr.mxu0 0.0
        %3683 = vmatpush1.msra.mxu0 0.0
        %3684 = vmatprep.subr.mxu0 0.0
        %3685 = vmatpush1.msra.mxu0 0.0
        %3686 = vmatprep.subr.mxu0 0.0
        %3687 = vmatpush1.msra.mxu0 0.0
        %3688 = vmatprep.subr.mxu0 0.0
        %3689 = vmatpush1.msra.mxu0 0.0
        %3690 = vmatprep.subr.mxu0 0.0
        %3691 = vmatpush1.msra.mxu0 0.0
        %3692 = vmatprep.subr.mxu0 0.0
        %3693 = vmatpush1.msra.mxu0 0.0
        %3694 = vmatprep.subr.mxu0 0.0
        %3695 = vmatpush1.msra.mxu0 0.0
        %3696 = vmatprep.subr.mxu0 0.0
        %3697 = vmatpush1.msra.mxu0 0.0
        %3698 = vmatprep.subr.mxu0 0.0
        %3699 = vmatpush1.msra.mxu0 %v2780
        %3700 = vmatprep.subr.mxu0 0.0
        %3701 = vmatpush1.msra.mxu0 %v2766
        %3702 = vmatprep.subr.mxu0 0.0
        %3703 = vmatpush2.msra.mxu0 0.0
        %3704 = vmatprep.subr.mxu0 0.0
        %3705 = vmatpush2.msra.mxu0 0.0
        %3706 = vmatprep.subr.mxu0 0.0
        %3707 = vmatpush2.msra.mxu0 0.0
        %3708 = vmatprep.subr.mxu0 0.0
        %3709 = vmatpush2.msra.mxu0 0.0
        %3710 = vmatprep.subr.mxu0 0.0
        %3711 = vmatpush2.msra.mxu0 0.0
        %3712 = vmatprep.subr.mxu0 0.0
        %3713 = vmatpush2.msra.mxu0 0.0
        %3714 = vmatprep.subr.mxu0 0.0
        %3715 = vmatpush2.msra.mxu0 0.0
        %3716 = vmatprep.subr.mxu0 0.0
        %3717 = vmatpush2.msra.mxu0 0.0
        %3718 = vmatprep.subr.mxu0 0.0
        %3719 = vmatpush2.msra.mxu0 0.0
        %3720 = vmatprep.subr.mxu0 0.0
        %3721 = vmatpush2.msra.mxu0 0.0
        %3722 = vmatprep.subr.mxu0 0.0
        %3723 = vmatpush2.msra.mxu0 0.0
        %3724 = vmatprep.subr.mxu0 0.0
        %3725 = vmatpush2.msra.mxu0 0.0
        %3726 = vmatprep.subr.mxu0 0.0
        %3727 = vmatpush2.msra.mxu0 0.0
        %3728 = vmatprep.subr.mxu0 0.0
        %3729 = vmatpush2.msra.mxu0 0.0
        %3730 = vmatprep.subr.mxu0 0.0
        %3731 = vmatpush2.msra.mxu0 0.0
        %3732 = vmatprep.subr.mxu0 0.0
        %3733 = vmatpush2.msra.mxu0 0.0
        %3734 = vmatprep.mubr.f32.mxu0 0.0
        %3735 = vmatmul.mubr.f32.gmra.mxu0 %v3597
        %v3736 = vpop.f32.mrf.mxu0
        %v3737 = vadd.f32 0.0, %v3736
        %v3738 = vpop.f32.mrf.mxu0
        %3739 = vdwg.mxu0
        %s3740 = scalar_lea.vmem [#allocation17], 640
        %v3741 = vld [vmem:[%s3740] sm:$0xff]
        %v3742 = vld [vmem:[%s3740 + $0x8] sm:$0xff]
        %v3743 = vld [vmem:[%s3740 + $0x10] sm:$0xff]
        %v3744 = vld [vmem:[%s3740 + $0x18] sm:$0xff]
        %v3745 = vld [vmem:[%s3740 + $0x20] sm:$0xff]
        %v3746 = vld [vmem:[%s3740 + $0x28] sm:$0xff]
        %v3747 = vld [vmem:[%s3740 + $0x30] sm:$0xff]
        %v3748 = vld [vmem:[%s3740 + $0x38] sm:$0xff]
        %v3749 = vld [vmem:[%s3740 + $0x40] sm:$0xff]
        %v3750 = vld [vmem:[%s3740 + $0x48] sm:$0xff]
        %v3751 = vld [vmem:[%s3740 + $0x50] sm:$0xff]
        %v3752 = vld [vmem:[%s3740 + $0x58] sm:$0xff]
        %v3753 = vld [vmem:[%s3740 + $0x60] sm:$0xff]
        %v3754 = vld [vmem:[%s3740 + $0x68] sm:$0xff]
        %v3755 = vld [vmem:[%s3740 + $0x70] sm:$0xff]
        %v3756 = vld [vmem:[%s3740 + $0x78] sm:$0xff]
        %v3757 = vld [vmem:[%s3740 + $0x80] sm:$0xff]
        %v3758 = vld [vmem:[%s3740 + $0x88] sm:$0xff]
        %v3759 = vld [vmem:[%s3740 + $0x90] sm:$0xff]
        %v3760 = vld [vmem:[%s3740 + $0x98] sm:$0xff]
        %v3761 = vld [vmem:[%s3740 + $0xa0] sm:$0xff]
        %v3762 = vld [vmem:[%s3740 + $0xa8] sm:$0xff]
        %v3763 = vld [vmem:[%s3740 + $0xb0] sm:$0xff]
        %v3764 = vld [vmem:[%s3740 + $0xb8] sm:$0xff]
        %v3765 = vld [vmem:[%s3740 + $0xc0] sm:$0xff]
        %v3766 = vld [vmem:[%s3740 + $0xc8] sm:$0xff]
        %v3767 = vld [vmem:[%s3740 + $0xd0] sm:$0xff]
        %v3768 = vld [vmem:[%s3740 + $0xd8] sm:$0xff]
        %v3769 = vld [vmem:[%s3740 + $0xe0] sm:$0xff]
        %v3770 = vld [vmem:[%s3740 + $0xe8] sm:$0xff]
        %v3771 = vld [vmem:[%s3740 + $0xf0] sm:$0xff]
        %v3772 = vld [vmem:[%s3740 + $0xf8] sm:$0xff]
        %v3773 = vld [vmem:[%s3740 + $0x100] sm:$0xff]
        %v3774 = vld [vmem:[%s3740 + $0x108] sm:$0xff]
        %v3775 = vld [vmem:[%s3740 + $0x110] sm:$0xff]
        %v3776 = vld [vmem:[%s3740 + $0x118] sm:$0xff]
        %v3777 = vld [vmem:[%s3740 + $0x120] sm:$0xff]
        %v3778 = vld [vmem:[%s3740 + $0x128] sm:$0xff]
        %v3779 = vld [vmem:[%s3740 + $0x130] sm:$0xff]
        %v3780 = vld [vmem:[%s3740 + $0x138] sm:$0xff]
        %v3781 = vunpack.c.l.bf16 %v3741
        %v3782 = vunpack.c.h.bf16 %v3741
        %v3783 = vunpack.c.l.bf16 %v3742
        %v3784 = vunpack.c.h.bf16 %v3742
        %v3785 = vunpack.c.l.bf16 %v3743
        %v3786 = vunpack.c.h.bf16 %v3743
        %v3787 = vunpack.c.l.bf16 %v3744
        %v3788 = vunpack.c.h.bf16 %v3744
        %v3789 = vunpack.c.l.bf16 %v3745
        %v3790 = vunpack.c.h.bf16 %v3745
        %v3791 = vunpack.c.l.bf16 %v3746
        %v3792 = vunpack.c.h.bf16 %v3746
        %v3793 = vunpack.c.l.bf16 %v3747
        %v3794 = vunpack.c.h.bf16 %v3747
        %v3795 = vunpack.c.l.bf16 %v3748
        %v3796 = vunpack.c.h.bf16 %v3748
        %v3797 = vunpack.c.l.bf16 %v3749
        %v3798 = vunpack.c.h.bf16 %v3749
        %v3799 = vunpack.c.l.bf16 %v3750
        %v3800 = vunpack.c.h.bf16 %v3750
        %v3801 = vunpack.c.l.bf16 %v3751
        %v3802 = vunpack.c.h.bf16 %v3751
        %v3803 = vunpack.c.l.bf16 %v3752
        %v3804 = vunpack.c.h.bf16 %v3752
        %v3805 = vunpack.c.l.bf16 %v3753
        %v3806 = vunpack.c.h.bf16 %v3753
        %v3807 = vunpack.c.l.bf16 %v3754
        %v3808 = vunpack.c.h.bf16 %v3754
        %v3809 = vunpack.c.l.bf16 %v3755
        %v3810 = vunpack.c.h.bf16 %v3755
        %v3811 = vunpack.c.l.bf16 %v3756
        %v3812 = vunpack.c.h.bf16 %v3756
        %v3813 = vunpack.c.l.bf16 %v3757
        %v3814 = vunpack.c.h.bf16 %v3757
        %v3815 = vunpack.c.l.bf16 %v3758
        %v3816 = vunpack.c.h.bf16 %v3758
        %v3817 = vunpack.c.l.bf16 %v3759
        %v3818 = vunpack.c.h.bf16 %v3759
        %v3819 = vunpack.c.l.bf16 %v3760
        %v3820 = vunpack.c.h.bf16 %v3760
        %v3821 = vunpack.c.l.bf16 %v3761
        %v3822 = vunpack.c.h.bf16 %v3761
        %v3823 = vunpack.c.l.bf16 %v3762
        %v3824 = vunpack.c.h.bf16 %v3762
        %v3825 = vunpack.c.l.bf16 %v3763
        %v3826 = vunpack.c.h.bf16 %v3763
        %v3827 = vunpack.c.l.bf16 %v3764
        %v3828 = vunpack.c.h.bf16 %v3764
        %v3829 = vunpack.c.l.bf16 %v3765
        %v3830 = vunpack.c.h.bf16 %v3765
        %v3831 = vunpack.c.l.bf16 %v3766
        %v3832 = vunpack.c.h.bf16 %v3766
        %v3833 = vunpack.c.l.bf16 %v3767
        %v3834 = vunpack.c.h.bf16 %v3767
        %v3835 = vunpack.c.l.bf16 %v3768
        %v3836 = vunpack.c.h.bf16 %v3768
        %v3837 = vunpack.c.l.bf16 %v3769
        %v3838 = vunpack.c.h.bf16 %v3769
        %v3839 = vunpack.c.l.bf16 %v3770
        %v3840 = vunpack.c.h.bf16 %v3770
        %v3841 = vunpack.c.l.bf16 %v3771
        %v3842 = vunpack.c.h.bf16 %v3771
        %v3843 = vunpack.c.l.bf16 %v3772
        %v3844 = vunpack.c.h.bf16 %v3772
        %v3845 = vunpack.c.l.bf16 %v3773
        %v3846 = vunpack.c.h.bf16 %v3773
        %v3847 = vunpack.c.l.bf16 %v3774
        %v3848 = vunpack.c.h.bf16 %v3774
        %v3849 = vunpack.c.l.bf16 %v3775
        %v3850 = vunpack.c.h.bf16 %v3775
        %v3851 = vunpack.c.l.bf16 %v3776
        %v3852 = vunpack.c.h.bf16 %v3776
        %v3853 = vunpack.c.l.bf16 %v3777
        %v3854 = vunpack.c.h.bf16 %v3777
        %v3855 = vunpack.c.l.bf16 %v3778
        %v3856 = vunpack.c.h.bf16 %v3778
        %v3857 = vunpack.c.l.bf16 %v3779
        %v3858 = vunpack.c.h.bf16 %v3779
        %v3859 = vunpack.c.l.bf16 %v3780
        %v3860 = vunpack.c.h.bf16 %v3780
        %v3862 = vsel %vm729, %v3737, 0
        %3864 = vmatprep.subr.mxu0 %v3812
        %3865 = vmatpush1.msra.mxu0 %v3811
        %3866 = vmatprep.subr.mxu0 %v3810
        %3867 = vmatpush1.msra.mxu0 %v3809
        %3868 = vmatprep.subr.mxu0 %v3808
        %3869 = vmatpush1.msra.mxu0 %v3807
        %3870 = vmatprep.subr.mxu0 %v3806
        %3871 = vmatpush1.msra.mxu0 %v3805
        %3872 = vmatprep.subr.mxu0 %v3804
        %3873 = vmatpush1.msra.mxu0 %v3803
        %3874 = vmatprep.subr.mxu0 %v3802
        %3875 = vmatpush1.msra.mxu0 %v3801
        %3876 = vmatprep.subr.mxu0 %v3800
        %3877 = vmatpush1.msra.mxu0 %v3799
        %3878 = vmatprep.subr.mxu0 %v3798
        %3879 = vmatpush1.msra.mxu0 %v3797
        %3880 = vmatprep.subr.mxu0 %v3796
        %3881 = vmatpush1.msra.mxu0 %v3795
        %3882 = vmatprep.subr.mxu0 %v3794
        %3883 = vmatpush1.msra.mxu0 %v3793
        %3884 = vmatprep.subr.mxu0 %v3792
        %3885 = vmatpush1.msra.mxu0 %v3791
        %3886 = vmatprep.subr.mxu0 %v3790
        %3887 = vmatpush1.msra.mxu0 %v3789
        %3888 = vmatprep.subr.mxu0 %v3788
        %3889 = vmatpush1.msra.mxu0 %v3787
        %3890 = vmatprep.subr.mxu0 %v3786
        %3891 = vmatpush1.msra.mxu0 %v3785
        %3892 = vmatprep.subr.mxu0 %v3784
        %3893 = vmatpush1.msra.mxu0 %v3783
        %3894 = vmatprep.subr.mxu0 %v3782
        %3895 = vmatpush1.msra.mxu0 %v3781
        %3896 = vmatprep.subr.mxu0 %v3844
        %3897 = vmatpush2.msra.mxu0 %v3843
        %3898 = vmatprep.subr.mxu0 %v3842
        %3899 = vmatpush2.msra.mxu0 %v3841
        %3900 = vmatprep.subr.mxu0 %v3840
        %3901 = vmatpush2.msra.mxu0 %v3839
        %3902 = vmatprep.subr.mxu0 %v3838
        %3903 = vmatpush2.msra.mxu0 %v3837
        %3904 = vmatprep.subr.mxu0 %v3836
        %3905 = vmatpush2.msra.mxu0 %v3835
        %3906 = vmatprep.subr.mxu0 %v3834
        %3907 = vmatpush2.msra.mxu0 %v3833
        %3908 = vmatprep.subr.mxu0 %v3832
        %3909 = vmatpush2.msra.mxu0 %v3831
        %3910 = vmatprep.subr.mxu0 %v3830
        %3911 = vmatpush2.msra.mxu0 %v3829
        %3912 = vmatprep.subr.mxu0 %v3828
        %3913 = vmatpush2.msra.mxu0 %v3827
        %3914 = vmatprep.subr.mxu0 %v3826
        %3915 = vmatpush2.msra.mxu0 %v3825
        %3916 = vmatprep.subr.mxu0 %v3824
        %3917 = vmatpush2.msra.mxu0 %v3823
        %3918 = vmatprep.subr.mxu0 %v3822
        %3919 = vmatpush2.msra.mxu0 %v3821
        %3920 = vmatprep.subr.mxu0 %v3820
        %3921 = vmatpush2.msra.mxu0 %v3819
        %3922 = vmatprep.subr.mxu0 %v3818
        %3923 = vmatpush2.msra.mxu0 %v3817
        %3924 = vmatprep.subr.mxu0 %v3816
        %3925 = vmatpush2.msra.mxu0 %v3815
        %3926 = vmatprep.subr.mxu0 %v3814
        %3927 = vmatpush2.msra.mxu0 %v3813
        %3928 = vmatprep.mubr.f32.mxu0 %v3668
        %3929 = vmatmul.mubr.f32.gmra.mxu0 %v3666
        %v3930 = vpop.f32.mrf.mxu0
        %v3931 = vadd.f32 0.0, %v3930
        %v3932 = vpop.f32.mrf.mxu0
        %v3933 = vadd.f32 0.0, %v3932
        %3934 = vdwg.mxu0
        %3935 = vmatprep.subr.mxu0 0.0
        %3936 = vmatpush1.msra.mxu0 0.0
        %3937 = vmatprep.subr.mxu0 0.0
        %3938 = vmatpush1.msra.mxu0 0.0
        %3939 = vmatprep.subr.mxu0 0.0
        %3940 = vmatpush1.msra.mxu0 0.0
        %3941 = vmatprep.subr.mxu0 0.0
        %3942 = vmatpush1.msra.mxu0 0.0
        %3943 = vmatprep.subr.mxu0 0.0
        %3944 = vmatpush1.msra.mxu0 0.0
        %3945 = vmatprep.subr.mxu0 0.0
        %3946 = vmatpush1.msra.mxu0 0.0
        %3947 = vmatprep.subr.mxu0 0.0
        %3948 = vmatpush1.msra.mxu0 0.0
        %3949 = vmatprep.subr.mxu0 0.0
        %3950 = vmatpush1.msra.mxu0 0.0
        %3951 = vmatprep.subr.mxu0 %v3860
        %3952 = vmatpush1.msra.mxu0 %v3859
        %3953 = vmatprep.subr.mxu0 %v3858
        %3954 = vmatpush1.msra.mxu0 %v3857
        %3955 = vmatprep.subr.mxu0 %v3856
        %3956 = vmatpush1.msra.mxu0 %v3855
        %3957 = vmatprep.subr.mxu0 %v3854
        %3958 = vmatpush1.msra.mxu0 %v3853
        %3959 = vmatprep.subr.mxu0 %v3852
        %3960 = vmatpush1.msra.mxu0 %v3851
        %3961 = vmatprep.subr.mxu0 %v3850
        %3962 = vmatpush1.msra.mxu0 %v3849
        %3963 = vmatprep.subr.mxu0 %v3848
        %3964 = vmatpush1.msra.mxu0 %v3847
        %3965 = vmatprep.subr.mxu0 %v3846
        %3966 = vmatpush1.msra.mxu0 %v3845
        %3967 = vmatprep.subr.mxu0 0.0
        %3968 = vmatpush2.msra.mxu0 0.0
        %3969 = vmatprep.subr.mxu0 0.0
        %3970 = vmatpush2.msra.mxu0 0.0
        %3971 = vmatprep.subr.mxu0 0.0
        %3972 = vmatpush2.msra.mxu0 0.0
        %3973 = vmatprep.subr.mxu0 0.0
        %3974 = vmatpush2.msra.mxu0 0.0
        %3975 = vmatprep.subr.mxu0 0.0
        %3976 = vmatpush2.msra.mxu0 0.0
        %3977 = vmatprep.subr.mxu0 0.0
        %3978 = vmatpush2.msra.mxu0 0.0
        %3979 = vmatprep.subr.mxu0 0.0
        %3980 = vmatpush2.msra.mxu0 0.0
        %3981 = vmatprep.subr.mxu0 0.0
        %3982 = vmatpush2.msra.mxu0 0.0
        %3983 = vmatprep.subr.mxu0 0.0
        %3984 = vmatpush2.msra.mxu0 0.0
        %3985 = vmatprep.subr.mxu0 0.0
        %3986 = vmatpush2.msra.mxu0 0.0
        %3987 = vmatprep.subr.mxu0 0.0
        %3988 = vmatpush2.msra.mxu0 0.0
        %3989 = vmatprep.subr.mxu0 0.0
        %3990 = vmatpush2.msra.mxu0 0.0
        %3991 = vmatprep.subr.mxu0 0.0
        %3992 = vmatpush2.msra.mxu0 0.0
        %3993 = vmatprep.subr.mxu0 0.0
        %3994 = vmatpush2.msra.mxu0 0.0
        %3995 = vmatprep.subr.mxu0 0.0
        %3996 = vmatpush2.msra.mxu0 0.0
        %3997 = vmatprep.subr.mxu0 0.0
        %3998 = vmatpush2.msra.mxu0 0.0
        %3999 = vmatprep.mubr.f32.mxu0 0.0
        %4000 = vmatmul.mubr.f32.gmra.mxu0 %v3862
        %v4001 = vpop.f32.mrf.mxu0
        %v4002 = vadd.f32 %v3931, %v4001
        %v4003 = vpop.f32.mrf.mxu0
        %v4004 = vadd.f32 %v3933, %v4003
        %4005 = vdwg.mxu0
        %v4006 = vadd.f32 %v3593, %v4002
        %v4007 = vadd.f32 %v3595, %v4004
        %v4008 = vld [vmem:[#allocation26] sm:$0x3]
        %v4010 = vlaneseq
        %v4011 = vshrl.u32 %v4010, 7
        %v4012 = vsub.s32 0, %v4011
        %v4013 = vrot.slane %v4008, %v4012
        %v4014 = vlaneseq
        %v4015 = vshrl.u32 %v4014, 7
        %v4016 = vsub.s32 1, %v4015
        %v4017 = vrot.slane %v4008, %v4016
        %v4020 = vadd.f32 %v4006, %v4013
        %v4021 = vadd.f32 %v4007, %v4017
        %v4022 = vmul.f32 %v4020, 0.2
        %v4023 = vmul.f32 %v4021, 0.2
        %v4024 = vmax.f32 %v4020, %v4022
        %v4025 = vmax.f32 %v4021, %v4023
        %v4028 = vrot.slane %v4024, 7
        %v4029 = vrot.slane %v4025, 7
        %4030 = vrot.lane.b32.xlu0 %v4028, 64
        %v4031 = vpop.permute.xlu0 %4030
        %4032 = vrot.lane.b32.xlu0 %v4029, 64
        %v4033 = vpop.permute.xlu0 %4032
        %v4034 = vsel %vm729, %v4031, %v4033
        %vm4038 = vcmask 1044993
        %4039 = vst.msk [vmem:[#allocation7] sm:$0x1e] %vm4038, %v4031
        %4040 = vst [vmem:[#allocation7 + $0x8] sm:$0x1e] %v4034
        %vm4041 = vcmask 520193
        %4042 = vst.msk [vmem:[#allocation7 + $0x10] sm:$0x1e] %vm4041, %v4033
        %v4043 = vld [vmem:[#allocation7] sm:$0xf]
        %v4044 = vld [vmem:[#allocation7 + $0x8] sm:$0xf]
        %v4045 = vld [vmem:[#allocation7 + $0x10] sm:$0xf]
        %v4046 = vld [vmem:[#allocation19] sm:$0xff]
        %v4047 = vld [vmem:[#allocation19 + $0x8] sm:$0xff]
        %v4048 = vld [vmem:[#allocation19 + $0x10] sm:$0xff]
        %v4049 = vld [vmem:[#allocation19 + $0x18] sm:$0xff]
        %v4050 = vld [vmem:[#allocation19 + $0x20] sm:$0xff]
        %v4051 = vld [vmem:[#allocation19 + $0x28] sm:$0xff]
        %v4052 = vld [vmem:[#allocation19 + $0x30] sm:$0xff]
        %v4053 = vld [vmem:[#allocation19 + $0x38] sm:$0xff]
        %v4054 = vld [vmem:[#allocation19 + $0x40] sm:$0xff]
        %v4055 = vld [vmem:[#allocation19 + $0x48] sm:$0xff]
        %v4056 = vld [vmem:[#allocation19 + $0x50] sm:$0xff]
        %v4057 = vld [vmem:[#allocation19 + $0x58] sm:$0xff]
        %v4058 = vld [vmem:[#allocation19 + $0x60] sm:$0xff]
        %v4059 = vld [vmem:[#allocation19 + $0x68] sm:$0xff]
        %v4060 = vld [vmem:[#allocation19 + $0x70] sm:$0xff]
        %v4061 = vld [vmem:[#allocation19 + $0x78] sm:$0xff]
        %v4062 = vld [vmem:[#allocation19 + $0x80] sm:$0xff]
        %v4063 = vld [vmem:[#allocation19 + $0x88] sm:$0xff]
        %v4064 = vld [vmem:[#allocation19 + $0x90] sm:$0xff]
        %v4065 = vld [vmem:[#allocation19 + $0x98] sm:$0xff]
        %v4066 = vld [vmem:[#allocation19 + $0xa0] sm:$0xff]
        %v4067 = vld [vmem:[#allocation19 + $0xa8] sm:$0xff]
        %v4068 = vld [vmem:[#allocation19 + $0xb0] sm:$0xff]
        %v4069 = vld [vmem:[#allocation19 + $0xb8] sm:$0xff]
        %v4070 = vld [vmem:[#allocation19 + $0xc0] sm:$0xff]
        %v4071 = vld [vmem:[#allocation19 + $0xc8] sm:$0xff]
        %v4072 = vld [vmem:[#allocation19 + $0xd0] sm:$0xff]
        %v4073 = vld [vmem:[#allocation19 + $0xd8] sm:$0xff]
        %v4074 = vld [vmem:[#allocation19 + $0xe0] sm:$0xff]
        %v4075 = vld [vmem:[#allocation19 + $0xe8] sm:$0xff]
        %v4076 = vld [vmem:[#allocation19 + $0xf0] sm:$0xff]
        %v4077 = vld [vmem:[#allocation19 + $0xf8] sm:$0xff]
        %v4078 = vld [vmem:[#allocation19 + $0x100] sm:$0xff]
        %v4079 = vld [vmem:[#allocation19 + $0x108] sm:$0xff]
        %v4080 = vld [vmem:[#allocation19 + $0x110] sm:$0xff]
        %v4081 = vld [vmem:[#allocation19 + $0x118] sm:$0xff]
        %v4082 = vld [vmem:[#allocation19 + $0x120] sm:$0xff]
        %v4083 = vld [vmem:[#allocation19 + $0x128] sm:$0xff]
        %v4084 = vld [vmem:[#allocation19 + $0x130] sm:$0xff]
        %v4085 = vld [vmem:[#allocation19 + $0x138] sm:$0xff]
        %v4086 = vld [vmem:[#allocation19 + $0x140] sm:$0xff]
        %v4087 = vld [vmem:[#allocation19 + $0x148] sm:$0xff]
        %v4088 = vld [vmem:[#allocation19 + $0x150] sm:$0xff]
        %v4089 = vld [vmem:[#allocation19 + $0x158] sm:$0xff]
        %v4090 = vld [vmem:[#allocation19 + $0x160] sm:$0xff]
        %v4091 = vld [vmem:[#allocation19 + $0x168] sm:$0xff]
        %v4092 = vld [vmem:[#allocation19 + $0x170] sm:$0xff]
        %v4093 = vld [vmem:[#allocation19 + $0x178] sm:$0xff]
        %v4094 = vld [vmem:[#allocation19 + $0x180] sm:$0xff]
        %v4095 = vld [vmem:[#allocation19 + $0x188] sm:$0xff]
        %v4096 = vld [vmem:[#allocation19 + $0x190] sm:$0xff]
        %v4097 = vld [vmem:[#allocation19 + $0x198] sm:$0xff]
        %v4098 = vld [vmem:[#allocation19 + $0x1a0] sm:$0xff]
        %v4099 = vld [vmem:[#allocation19 + $0x1a8] sm:$0xff]
        %v4100 = vld [vmem:[#allocation19 + $0x1b0] sm:$0xff]
        %v4101 = vld [vmem:[#allocation19 + $0x1b8] sm:$0xff]
        %v4102 = vld [vmem:[#allocation19 + $0x1c0] sm:$0xff]
        %v4103 = vld [vmem:[#allocation19 + $0x1c8] sm:$0xff]
        %v4104 = vld [vmem:[#allocation19 + $0x1d0] sm:$0xff]
        %v4105 = vld [vmem:[#allocation19 + $0x1d8] sm:$0xff]
        %v4106 = vld [vmem:[#allocation19 + $0x1e0] sm:$0xff]
        %v4107 = vld [vmem:[#allocation19 + $0x1e8] sm:$0xff]
        %v4108 = vld [vmem:[#allocation19 + $0x1f0] sm:$0xff]
        %v4109 = vld [vmem:[#allocation19 + $0x1f8] sm:$0xff]
        %v4110 = vld [vmem:[#allocation19 + $0x200] sm:$0xff]
        %v4111 = vld [vmem:[#allocation19 + $0x208] sm:$0xff]
        %v4112 = vld [vmem:[#allocation19 + $0x210] sm:$0xff]
        %v4113 = vld [vmem:[#allocation19 + $0x218] sm:$0xff]
        %v4114 = vld [vmem:[#allocation19 + $0x220] sm:$0xff]
        %v4115 = vld [vmem:[#allocation19 + $0x228] sm:$0xff]
        %v4116 = vld [vmem:[#allocation19 + $0x230] sm:$0xff]
        %v4117 = vld [vmem:[#allocation19 + $0x238] sm:$0xff]
        %v4118 = vld [vmem:[#allocation19 + $0x240] sm:$0xff]
        %v4119 = vld [vmem:[#allocation19 + $0x248] sm:$0xff]
        %v4120 = vld [vmem:[#allocation19 + $0x250] sm:$0xff]
        %v4121 = vld [vmem:[#allocation19 + $0x258] sm:$0xff]
        %v4122 = vld [vmem:[#allocation19 + $0x260] sm:$0xff]
        %v4123 = vld [vmem:[#allocation19 + $0x268] sm:$0xff]
        %v4124 = vld [vmem:[#allocation19 + $0x270] sm:$0xff]
        %v4125 = vld [vmem:[#allocation19 + $0x278] sm:$0xff]
        %v4126 = vld [vmem:[#allocation19 + $0x280] sm:$0xff]
        %v4127 = vld [vmem:[#allocation19 + $0x288] sm:$0xff]
        %v4128 = vld [vmem:[#allocation19 + $0x290] sm:$0xff]
        %v4129 = vld [vmem:[#allocation19 + $0x298] sm:$0xff]
        %v4130 = vld [vmem:[#allocation19 + $0x2a0] sm:$0xff]
        %v4131 = vld [vmem:[#allocation19 + $0x2a8] sm:$0xff]
        %v4132 = vld [vmem:[#allocation19 + $0x2b0] sm:$0xff]
        %v4133 = vld [vmem:[#allocation19 + $0x2b8] sm:$0xff]
        %v4134 = vld [vmem:[#allocation19 + $0x2c0] sm:$0xff]
        %v4135 = vld [vmem:[#allocation19 + $0x2c8] sm:$0xff]
        %v4136 = vld [vmem:[#allocation19 + $0x2d0] sm:$0xff]
        %v4137 = vld [vmem:[#allocation19 + $0x2d8] sm:$0xff]
        %v4138 = vld [vmem:[#allocation19 + $0x2e0] sm:$0xff]
        %v4139 = vld [vmem:[#allocation19 + $0x2e8] sm:$0xff]
        %v4140 = vld [vmem:[#allocation19 + $0x2f0] sm:$0xff]
        %v4141 = vld [vmem:[#allocation19 + $0x2f8] sm:$0xff]
        %v4142 = vunpack.c.l.bf16 %v4046
        %v4143 = vunpack.c.h.bf16 %v4046
        %v4144 = vunpack.c.l.bf16 %v4047
        %v4145 = vunpack.c.h.bf16 %v4047
        %v4146 = vunpack.c.l.bf16 %v4048
        %v4147 = vunpack.c.h.bf16 %v4048
        %v4148 = vunpack.c.l.bf16 %v4049
        %v4149 = vunpack.c.h.bf16 %v4049
        %v4150 = vunpack.c.l.bf16 %v4050
        %v4151 = vunpack.c.h.bf16 %v4050
        %v4152 = vunpack.c.l.bf16 %v4051
        %v4153 = vunpack.c.h.bf16 %v4051
        %v4154 = vunpack.c.l.bf16 %v4052
        %v4155 = vunpack.c.h.bf16 %v4052
        %v4156 = vunpack.c.l.bf16 %v4053
        %v4157 = vunpack.c.h.bf16 %v4053
        %v4158 = vunpack.c.l.bf16 %v4054
        %v4159 = vunpack.c.h.bf16 %v4054
        %v4160 = vunpack.c.l.bf16 %v4055
        %v4161 = vunpack.c.h.bf16 %v4055
        %v4162 = vunpack.c.l.bf16 %v4056
        %v4163 = vunpack.c.h.bf16 %v4056
        %v4164 = vunpack.c.l.bf16 %v4057
        %v4165 = vunpack.c.h.bf16 %v4057
        %v4166 = vunpack.c.l.bf16 %v4058
        %v4167 = vunpack.c.h.bf16 %v4058
        %v4168 = vunpack.c.l.bf16 %v4059
        %v4169 = vunpack.c.h.bf16 %v4059
        %v4170 = vunpack.c.l.bf16 %v4060
        %v4171 = vunpack.c.h.bf16 %v4060
        %v4172 = vunpack.c.l.bf16 %v4061
        %v4173 = vunpack.c.h.bf16 %v4061
        %v4174 = vunpack.c.l.bf16 %v4062
        %v4175 = vunpack.c.h.bf16 %v4062
        %v4176 = vunpack.c.l.bf16 %v4063
        %v4177 = vunpack.c.h.bf16 %v4063
        %v4178 = vunpack.c.l.bf16 %v4064
        %v4179 = vunpack.c.h.bf16 %v4064
        %v4180 = vunpack.c.l.bf16 %v4065
        %v4181 = vunpack.c.h.bf16 %v4065
        %v4182 = vunpack.c.l.bf16 %v4066
        %v4183 = vunpack.c.h.bf16 %v4066
        %v4184 = vunpack.c.l.bf16 %v4067
        %v4185 = vunpack.c.h.bf16 %v4067
        %v4186 = vunpack.c.l.bf16 %v4068
        %v4187 = vunpack.c.h.bf16 %v4068
        %v4188 = vunpack.c.l.bf16 %v4069
        %v4189 = vunpack.c.h.bf16 %v4069
        %v4190 = vunpack.c.l.bf16 %v4070
        %v4191 = vunpack.c.h.bf16 %v4070
        %v4192 = vunpack.c.l.bf16 %v4071
        %v4193 = vunpack.c.h.bf16 %v4071
        %v4194 = vunpack.c.l.bf16 %v4072
        %v4195 = vunpack.c.h.bf16 %v4072
        %v4196 = vunpack.c.l.bf16 %v4073
        %v4197 = vunpack.c.h.bf16 %v4073
        %v4198 = vunpack.c.l.bf16 %v4074
        %v4199 = vunpack.c.h.bf16 %v4074
        %v4200 = vunpack.c.l.bf16 %v4075
        %v4201 = vunpack.c.h.bf16 %v4075
        %v4202 = vunpack.c.l.bf16 %v4076
        %v4203 = vunpack.c.h.bf16 %v4076
        %v4204 = vunpack.c.l.bf16 %v4077
        %v4205 = vunpack.c.h.bf16 %v4077
        %v4206 = vunpack.c.l.bf16 %v4078
        %v4207 = vunpack.c.h.bf16 %v4078
        %v4208 = vunpack.c.l.bf16 %v4079
        %v4209 = vunpack.c.h.bf16 %v4079
        %v4210 = vunpack.c.l.bf16 %v4080
        %v4211 = vunpack.c.h.bf16 %v4080
        %v4212 = vunpack.c.l.bf16 %v4081
        %v4213 = vunpack.c.h.bf16 %v4081
        %v4214 = vunpack.c.l.bf16 %v4082
        %v4215 = vunpack.c.h.bf16 %v4082
        %v4216 = vunpack.c.l.bf16 %v4083
        %v4217 = vunpack.c.h.bf16 %v4083
        %v4218 = vunpack.c.l.bf16 %v4084
        %v4219 = vunpack.c.h.bf16 %v4084
        %v4220 = vunpack.c.l.bf16 %v4085
        %v4221 = vunpack.c.h.bf16 %v4085
        %v4222 = vunpack.c.l.bf16 %v4086
        %v4223 = vunpack.c.h.bf16 %v4086
        %v4224 = vunpack.c.l.bf16 %v4087
        %v4225 = vunpack.c.h.bf16 %v4087
        %v4226 = vunpack.c.l.bf16 %v4088
        %v4227 = vunpack.c.h.bf16 %v4088
        %v4228 = vunpack.c.l.bf16 %v4089
        %v4229 = vunpack.c.h.bf16 %v4089
        %v4230 = vunpack.c.l.bf16 %v4090
        %v4231 = vunpack.c.h.bf16 %v4090
        %v4232 = vunpack.c.l.bf16 %v4091
        %v4233 = vunpack.c.h.bf16 %v4091
        %v4234 = vunpack.c.l.bf16 %v4092
        %v4235 = vunpack.c.h.bf16 %v4092
        %v4236 = vunpack.c.l.bf16 %v4093
        %v4237 = vunpack.c.h.bf16 %v4093
        %v4238 = vunpack.c.l.bf16 %v4094
        %v4239 = vunpack.c.h.bf16 %v4094
        %v4240 = vunpack.c.l.bf16 %v4095
        %v4241 = vunpack.c.h.bf16 %v4095
        %v4242 = vunpack.c.l.bf16 %v4096
        %v4243 = vunpack.c.h.bf16 %v4096
        %v4244 = vunpack.c.l.bf16 %v4097
        %v4245 = vunpack.c.h.bf16 %v4097
        %v4246 = vunpack.c.l.bf16 %v4098
        %v4247 = vunpack.c.h.bf16 %v4098
        %v4248 = vunpack.c.l.bf16 %v4099
        %v4249 = vunpack.c.h.bf16 %v4099
        %v4250 = vunpack.c.l.bf16 %v4100
        %v4251 = vunpack.c.h.bf16 %v4100
        %v4252 = vunpack.c.l.bf16 %v4101
        %v4253 = vunpack.c.h.bf16 %v4101
        %v4254 = vunpack.c.l.bf16 %v4102
        %v4255 = vunpack.c.h.bf16 %v4102
        %v4256 = vunpack.c.l.bf16 %v4103
        %v4257 = vunpack.c.h.bf16 %v4103
        %v4258 = vunpack.c.l.bf16 %v4104
        %v4259 = vunpack.c.h.bf16 %v4104
        %v4260 = vunpack.c.l.bf16 %v4105
        %v4261 = vunpack.c.h.bf16 %v4105
        %v4262 = vunpack.c.l.bf16 %v4106
        %v4263 = vunpack.c.h.bf16 %v4106
        %v4264 = vunpack.c.l.bf16 %v4107
        %v4265 = vunpack.c.h.bf16 %v4107
        %v4266 = vunpack.c.l.bf16 %v4108
        %v4267 = vunpack.c.h.bf16 %v4108
        %v4268 = vunpack.c.l.bf16 %v4109
        %v4269 = vunpack.c.h.bf16 %v4109
        %v4270 = vunpack.c.l.bf16 %v4110
        %v4271 = vunpack.c.h.bf16 %v4110
        %v4272 = vunpack.c.l.bf16 %v4111
        %v4273 = vunpack.c.h.bf16 %v4111
        %v4274 = vunpack.c.l.bf16 %v4112
        %v4275 = vunpack.c.h.bf16 %v4112
        %v4276 = vunpack.c.l.bf16 %v4113
        %v4277 = vunpack.c.h.bf16 %v4113
        %v4278 = vunpack.c.l.bf16 %v4114
        %v4279 = vunpack.c.h.bf16 %v4114
        %v4280 = vunpack.c.l.bf16 %v4115
        %v4281 = vunpack.c.h.bf16 %v4115
        %v4282 = vunpack.c.l.bf16 %v4116
        %v4283 = vunpack.c.h.bf16 %v4116
        %v4284 = vunpack.c.l.bf16 %v4117
        %v4285 = vunpack.c.h.bf16 %v4117
        %v4286 = vunpack.c.l.bf16 %v4118
        %v4287 = vunpack.c.h.bf16 %v4118
        %v4288 = vunpack.c.l.bf16 %v4119
        %v4289 = vunpack.c.h.bf16 %v4119
        %v4290 = vunpack.c.l.bf16 %v4120
        %v4291 = vunpack.c.h.bf16 %v4120
        %v4292 = vunpack.c.l.bf16 %v4121
        %v4293 = vunpack.c.h.bf16 %v4121
        %v4294 = vunpack.c.l.bf16 %v4122
        %v4295 = vunpack.c.h.bf16 %v4122
        %v4296 = vunpack.c.l.bf16 %v4123
        %v4297 = vunpack.c.h.bf16 %v4123
        %v4298 = vunpack.c.l.bf16 %v4124
        %v4299 = vunpack.c.h.bf16 %v4124
        %v4300 = vunpack.c.l.bf16 %v4125
        %v4301 = vunpack.c.h.bf16 %v4125
        %v4302 = vunpack.c.l.bf16 %v4126
        %v4303 = vunpack.c.h.bf16 %v4126
        %v4304 = vunpack.c.l.bf16 %v4127
        %v4305 = vunpack.c.h.bf16 %v4127
        %v4306 = vunpack.c.l.bf16 %v4128
        %v4307 = vunpack.c.h.bf16 %v4128
        %v4308 = vunpack.c.l.bf16 %v4129
        %v4309 = vunpack.c.h.bf16 %v4129
        %v4310 = vunpack.c.l.bf16 %v4130
        %v4311 = vunpack.c.h.bf16 %v4130
        %v4312 = vunpack.c.l.bf16 %v4131
        %v4313 = vunpack.c.h.bf16 %v4131
        %v4314 = vunpack.c.l.bf16 %v4132
        %v4315 = vunpack.c.h.bf16 %v4132
        %v4316 = vunpack.c.l.bf16 %v4133
        %v4317 = vunpack.c.h.bf16 %v4133
        %v4318 = vunpack.c.l.bf16 %v4134
        %v4319 = vunpack.c.h.bf16 %v4134
        %v4320 = vunpack.c.l.bf16 %v4135
        %v4321 = vunpack.c.h.bf16 %v4135
        %v4322 = vunpack.c.l.bf16 %v4136
        %v4323 = vunpack.c.h.bf16 %v4136
        %v4324 = vunpack.c.l.bf16 %v4137
        %v4325 = vunpack.c.h.bf16 %v4137
        %v4326 = vunpack.c.l.bf16 %v4138
        %v4327 = vunpack.c.h.bf16 %v4138
        %v4328 = vunpack.c.l.bf16 %v4139
        %v4329 = vunpack.c.h.bf16 %v4139
        %v4330 = vunpack.c.l.bf16 %v4140
        %v4331 = vunpack.c.h.bf16 %v4140
        %v4332 = vunpack.c.l.bf16 %v4141
        %v4333 = vunpack.c.h.bf16 %v4141
        %v4334 = vld [vmem:[#allocation7] sm:$0x1e]
        %v4335 = vld [vmem:[#allocation7 + $0x8] sm:$0x1e]
        %v4336 = vld [vmem:[#allocation7 + $0x10] sm:$0x1e]
        %s4337 = scalar_lea.vmem [#allocation19], 768
        %v4338 = vld [vmem:[%s4337] sm:$0xff]
        %v4339 = vld [vmem:[%s4337 + $0x8] sm:$0xff]
        %v4340 = vld [vmem:[%s4337 + $0x10] sm:$0xff]
        %v4341 = vld [vmem:[%s4337 + $0x18] sm:$0xff]
        %v4342 = vld [vmem:[%s4337 + $0x20] sm:$0xff]
        %v4343 = vld [vmem:[%s4337 + $0x28] sm:$0xff]
        %v4344 = vld [vmem:[%s4337 + $0x30] sm:$0xff]
        %v4345 = vld [vmem:[%s4337 + $0x38] sm:$0xff]
        %v4346 = vld [vmem:[%s4337 + $0x40] sm:$0xff]
        %v4347 = vld [vmem:[%s4337 + $0x48] sm:$0xff]
        %v4348 = vld [vmem:[%s4337 + $0x50] sm:$0xff]
        %v4349 = vld [vmem:[%s4337 + $0x58] sm:$0xff]
        %v4350 = vld [vmem:[%s4337 + $0x60] sm:$0xff]
        %v4351 = vld [vmem:[%s4337 + $0x68] sm:$0xff]
        %v4352 = vld [vmem:[%s4337 + $0x70] sm:$0xff]
        %v4353 = vld [vmem:[%s4337 + $0x78] sm:$0xff]
        %v4354 = vld [vmem:[%s4337 + $0x80] sm:$0xff]
        %v4355 = vld [vmem:[%s4337 + $0x88] sm:$0xff]
        %v4356 = vld [vmem:[%s4337 + $0x90] sm:$0xff]
        %v4357 = vld [vmem:[%s4337 + $0x98] sm:$0xff]
        %v4358 = vld [vmem:[%s4337 + $0xa0] sm:$0xff]
        %v4359 = vld [vmem:[%s4337 + $0xa8] sm:$0xff]
        %v4360 = vld [vmem:[%s4337 + $0xb0] sm:$0xff]
        %v4361 = vld [vmem:[%s4337 + $0xb8] sm:$0xff]
        %v4362 = vld [vmem:[%s4337 + $0xc0] sm:$0xff]
        %v4363 = vld [vmem:[%s4337 + $0xc8] sm:$0xff]
        %v4364 = vld [vmem:[%s4337 + $0xd0] sm:$0xff]
        %v4365 = vld [vmem:[%s4337 + $0xd8] sm:$0xff]
        %v4366 = vld [vmem:[%s4337 + $0xe0] sm:$0xff]
        %v4367 = vld [vmem:[%s4337 + $0xe8] sm:$0xff]
        %v4368 = vld [vmem:[%s4337 + $0xf0] sm:$0xff]
        %v4369 = vld [vmem:[%s4337 + $0xf8] sm:$0xff]
        %v4370 = vld [vmem:[%s4337 + $0x100] sm:$0xff]
        %v4371 = vld [vmem:[%s4337 + $0x108] sm:$0xff]
        %v4372 = vld [vmem:[%s4337 + $0x110] sm:$0xff]
        %v4373 = vld [vmem:[%s4337 + $0x118] sm:$0xff]
        %v4374 = vld [vmem:[%s4337 + $0x120] sm:$0xff]
        %v4375 = vld [vmem:[%s4337 + $0x128] sm:$0xff]
        %v4376 = vld [vmem:[%s4337 + $0x130] sm:$0xff]
        %v4377 = vld [vmem:[%s4337 + $0x138] sm:$0xff]
        %v4378 = vld [vmem:[%s4337 + $0x140] sm:$0xff]
        %v4379 = vld [vmem:[%s4337 + $0x148] sm:$0xff]
        %v4380 = vld [vmem:[%s4337 + $0x150] sm:$0xff]
        %v4381 = vld [vmem:[%s4337 + $0x158] sm:$0xff]
        %v4382 = vld [vmem:[%s4337 + $0x160] sm:$0xff]
        %v4383 = vld [vmem:[%s4337 + $0x168] sm:$0xff]
        %v4384 = vld [vmem:[%s4337 + $0x170] sm:$0xff]
        %v4385 = vld [vmem:[%s4337 + $0x178] sm:$0xff]
        %v4386 = vld [vmem:[%s4337 + $0x180] sm:$0xff]
        %v4387 = vld [vmem:[%s4337 + $0x188] sm:$0xff]
        %v4388 = vld [vmem:[%s4337 + $0x190] sm:$0xff]
        %v4389 = vld [vmem:[%s4337 + $0x198] sm:$0xff]
        %v4390 = vld [vmem:[%s4337 + $0x1a0] sm:$0xff]
        %v4391 = vld [vmem:[%s4337 + $0x1a8] sm:$0xff]
        %v4392 = vld [vmem:[%s4337 + $0x1b0] sm:$0xff]
        %v4393 = vld [vmem:[%s4337 + $0x1b8] sm:$0xff]
        %v4394 = vld [vmem:[%s4337 + $0x1c0] sm:$0xff]
        %v4395 = vld [vmem:[%s4337 + $0x1c8] sm:$0xff]
        %v4396 = vld [vmem:[%s4337 + $0x1d0] sm:$0xff]
        %v4397 = vld [vmem:[%s4337 + $0x1d8] sm:$0xff]
        %v4398 = vld [vmem:[%s4337 + $0x1e0] sm:$0xff]
        %v4399 = vld [vmem:[%s4337 + $0x1e8] sm:$0xff]
        %v4400 = vld [vmem:[%s4337 + $0x1f0] sm:$0xff]
        %v4401 = vld [vmem:[%s4337 + $0x1f8] sm:$0xff]
        %v4402 = vld [vmem:[%s4337 + $0x200] sm:$0xff]
        %v4403 = vld [vmem:[%s4337 + $0x208] sm:$0xff]
        %v4404 = vld [vmem:[%s4337 + $0x210] sm:$0xff]
        %v4405 = vld [vmem:[%s4337 + $0x218] sm:$0xff]
        %v4406 = vld [vmem:[%s4337 + $0x220] sm:$0xff]
        %v4407 = vld [vmem:[%s4337 + $0x228] sm:$0xff]
        %v4408 = vld [vmem:[%s4337 + $0x230] sm:$0xff]
        %v4409 = vld [vmem:[%s4337 + $0x238] sm:$0xff]
        %v4410 = vld [vmem:[%s4337 + $0x240] sm:$0xff]
        %v4411 = vld [vmem:[%s4337 + $0x248] sm:$0xff]
        %v4412 = vld [vmem:[%s4337 + $0x250] sm:$0xff]
        %v4413 = vld [vmem:[%s4337 + $0x258] sm:$0xff]
        %v4414 = vld [vmem:[%s4337 + $0x260] sm:$0xff]
        %v4415 = vld [vmem:[%s4337 + $0x268] sm:$0xff]
        %v4416 = vld [vmem:[%s4337 + $0x270] sm:$0xff]
        %v4417 = vld [vmem:[%s4337 + $0x278] sm:$0xff]
        %v4418 = vld [vmem:[%s4337 + $0x280] sm:$0xff]
        %v4419 = vld [vmem:[%s4337 + $0x288] sm:$0xff]
        %v4420 = vld [vmem:[%s4337 + $0x290] sm:$0xff]
        %v4421 = vld [vmem:[%s4337 + $0x298] sm:$0xff]
        %v4422 = vld [vmem:[%s4337 + $0x2a0] sm:$0xff]
        %v4423 = vld [vmem:[%s4337 + $0x2a8] sm:$0xff]
        %v4424 = vld [vmem:[%s4337 + $0x2b0] sm:$0xff]
        %v4425 = vld [vmem:[%s4337 + $0x2b8] sm:$0xff]
        %v4426 = vld [vmem:[%s4337 + $0x2c0] sm:$0xff]
        %v4427 = vld [vmem:[%s4337 + $0x2c8] sm:$0xff]
        %v4428 = vld [vmem:[%s4337 + $0x2d0] sm:$0xff]
        %v4429 = vld [vmem:[%s4337 + $0x2d8] sm:$0xff]
        %v4430 = vld [vmem:[%s4337 + $0x2e0] sm:$0xff]
        %v4431 = vld [vmem:[%s4337 + $0x2e8] sm:$0xff]
        %v4432 = vld [vmem:[%s4337 + $0x2f0] sm:$0xff]
        %v4433 = vld [vmem:[%s4337 + $0x2f8] sm:$0xff]
        %v4434 = vunpack.c.l.bf16 %v4338
        %v4435 = vunpack.c.h.bf16 %v4338
        %v4436 = vunpack.c.l.bf16 %v4339
        %v4437 = vunpack.c.h.bf16 %v4339
        %v4438 = vunpack.c.l.bf16 %v4340
        %v4439 = vunpack.c.h.bf16 %v4340
        %v4440 = vunpack.c.l.bf16 %v4341
        %v4441 = vunpack.c.h.bf16 %v4341
        %v4442 = vunpack.c.l.bf16 %v4342
        %v4443 = vunpack.c.h.bf16 %v4342
        %v4444 = vunpack.c.l.bf16 %v4343
        %v4445 = vunpack.c.h.bf16 %v4343
        %v4446 = vunpack.c.l.bf16 %v4344
        %v4447 = vunpack.c.h.bf16 %v4344
        %v4448 = vunpack.c.l.bf16 %v4345
        %v4449 = vunpack.c.h.bf16 %v4345
        %v4450 = vunpack.c.l.bf16 %v4346
        %v4451 = vunpack.c.h.bf16 %v4346
        %v4452 = vunpack.c.l.bf16 %v4347
        %v4453 = vunpack.c.h.bf16 %v4347
        %v4454 = vunpack.c.l.bf16 %v4348
        %v4455 = vunpack.c.h.bf16 %v4348
        %v4456 = vunpack.c.l.bf16 %v4349
        %v4457 = vunpack.c.h.bf16 %v4349
        %v4458 = vunpack.c.l.bf16 %v4350
        %v4459 = vunpack.c.h.bf16 %v4350
        %v4460 = vunpack.c.l.bf16 %v4351
        %v4461 = vunpack.c.h.bf16 %v4351
        %v4462 = vunpack.c.l.bf16 %v4352
        %v4463 = vunpack.c.h.bf16 %v4352
        %v4464 = vunpack.c.l.bf16 %v4353
        %v4465 = vunpack.c.h.bf16 %v4353
        %v4466 = vunpack.c.l.bf16 %v4354
        %v4467 = vunpack.c.h.bf16 %v4354
        %v4468 = vunpack.c.l.bf16 %v4355
        %v4469 = vunpack.c.h.bf16 %v4355
        %v4470 = vunpack.c.l.bf16 %v4356
        %v4471 = vunpack.c.h.bf16 %v4356
        %v4472 = vunpack.c.l.bf16 %v4357
        %v4473 = vunpack.c.h.bf16 %v4357
        %v4474 = vunpack.c.l.bf16 %v4358
        %v4475 = vunpack.c.h.bf16 %v4358
        %v4476 = vunpack.c.l.bf16 %v4359
        %v4477 = vunpack.c.h.bf16 %v4359
        %v4478 = vunpack.c.l.bf16 %v4360
        %v4479 = vunpack.c.h.bf16 %v4360
        %v4480 = vunpack.c.l.bf16 %v4361
        %v4481 = vunpack.c.h.bf16 %v4361
        %v4482 = vunpack.c.l.bf16 %v4362
        %v4483 = vunpack.c.h.bf16 %v4362
        %v4484 = vunpack.c.l.bf16 %v4363
        %v4485 = vunpack.c.h.bf16 %v4363
        %v4486 = vunpack.c.l.bf16 %v4364
        %v4487 = vunpack.c.h.bf16 %v4364
        %v4488 = vunpack.c.l.bf16 %v4365
        %v4489 = vunpack.c.h.bf16 %v4365
        %v4490 = vunpack.c.l.bf16 %v4366
        %v4491 = vunpack.c.h.bf16 %v4366
        %v4492 = vunpack.c.l.bf16 %v4367
        %v4493 = vunpack.c.h.bf16 %v4367
        %v4494 = vunpack.c.l.bf16 %v4368
        %v4495 = vunpack.c.h.bf16 %v4368
        %v4496 = vunpack.c.l.bf16 %v4369
        %v4497 = vunpack.c.h.bf16 %v4369
        %v4498 = vunpack.c.l.bf16 %v4370
        %v4499 = vunpack.c.h.bf16 %v4370
        %v4500 = vunpack.c.l.bf16 %v4371
        %v4501 = vunpack.c.h.bf16 %v4371
        %v4502 = vunpack.c.l.bf16 %v4372
        %v4503 = vunpack.c.h.bf16 %v4372
        %v4504 = vunpack.c.l.bf16 %v4373
        %v4505 = vunpack.c.h.bf16 %v4373
        %v4506 = vunpack.c.l.bf16 %v4374
        %v4507 = vunpack.c.h.bf16 %v4374
        %v4508 = vunpack.c.l.bf16 %v4375
        %v4509 = vunpack.c.h.bf16 %v4375
        %v4510 = vunpack.c.l.bf16 %v4376
        %v4511 = vunpack.c.h.bf16 %v4376
        %v4512 = vunpack.c.l.bf16 %v4377
        %v4513 = vunpack.c.h.bf16 %v4377
        %v4514 = vunpack.c.l.bf16 %v4378
        %v4515 = vunpack.c.h.bf16 %v4378
        %v4516 = vunpack.c.l.bf16 %v4379
        %v4517 = vunpack.c.h.bf16 %v4379
        %v4518 = vunpack.c.l.bf16 %v4380
        %v4519 = vunpack.c.h.bf16 %v4380
        %v4520 = vunpack.c.l.bf16 %v4381
        %v4521 = vunpack.c.h.bf16 %v4381
        %v4522 = vunpack.c.l.bf16 %v4382
        %v4523 = vunpack.c.h.bf16 %v4382
        %v4524 = vunpack.c.l.bf16 %v4383
        %v4525 = vunpack.c.h.bf16 %v4383
        %v4526 = vunpack.c.l.bf16 %v4384
        %v4527 = vunpack.c.h.bf16 %v4384
        %v4528 = vunpack.c.l.bf16 %v4385
        %v4529 = vunpack.c.h.bf16 %v4385
        %v4530 = vunpack.c.l.bf16 %v4386
        %v4531 = vunpack.c.h.bf16 %v4386
        %v4532 = vunpack.c.l.bf16 %v4387
        %v4533 = vunpack.c.h.bf16 %v4387
        %v4534 = vunpack.c.l.bf16 %v4388
        %v4535 = vunpack.c.h.bf16 %v4388
        %v4536 = vunpack.c.l.bf16 %v4389
        %v4537 = vunpack.c.h.bf16 %v4389
        %v4538 = vunpack.c.l.bf16 %v4390
        %v4539 = vunpack.c.h.bf16 %v4390
        %v4540 = vunpack.c.l.bf16 %v4391
        %v4541 = vunpack.c.h.bf16 %v4391
        %v4542 = vunpack.c.l.bf16 %v4392
        %v4543 = vunpack.c.h.bf16 %v4392
        %v4544 = vunpack.c.l.bf16 %v4393
        %v4545 = vunpack.c.h.bf16 %v4393
        %v4546 = vunpack.c.l.bf16 %v4394
        %v4547 = vunpack.c.h.bf16 %v4394
        %v4548 = vunpack.c.l.bf16 %v4395
        %v4549 = vunpack.c.h.bf16 %v4395
        %v4550 = vunpack.c.l.bf16 %v4396
        %v4551 = vunpack.c.h.bf16 %v4396
        %v4552 = vunpack.c.l.bf16 %v4397
        %v4553 = vunpack.c.h.bf16 %v4397
        %v4554 = vunpack.c.l.bf16 %v4398
        %v4555 = vunpack.c.h.bf16 %v4398
        %v4556 = vunpack.c.l.bf16 %v4399
        %v4557 = vunpack.c.h.bf16 %v4399
        %v4558 = vunpack.c.l.bf16 %v4400
        %v4559 = vunpack.c.h.bf16 %v4400
        %v4560 = vunpack.c.l.bf16 %v4401
        %v4561 = vunpack.c.h.bf16 %v4401
        %v4562 = vunpack.c.l.bf16 %v4402
        %v4563 = vunpack.c.h.bf16 %v4402
        %v4564 = vunpack.c.l.bf16 %v4403
        %v4565 = vunpack.c.h.bf16 %v4403
        %v4566 = vunpack.c.l.bf16 %v4404
        %v4567 = vunpack.c.h.bf16 %v4404
        %v4568 = vunpack.c.l.bf16 %v4405
        %v4569 = vunpack.c.h.bf16 %v4405
        %v4570 = vunpack.c.l.bf16 %v4406
        %v4571 = vunpack.c.h.bf16 %v4406
        %v4572 = vunpack.c.l.bf16 %v4407
        %v4573 = vunpack.c.h.bf16 %v4407
        %v4574 = vunpack.c.l.bf16 %v4408
        %v4575 = vunpack.c.h.bf16 %v4408
        %v4576 = vunpack.c.l.bf16 %v4409
        %v4577 = vunpack.c.h.bf16 %v4409
        %v4578 = vunpack.c.l.bf16 %v4410
        %v4579 = vunpack.c.h.bf16 %v4410
        %v4580 = vunpack.c.l.bf16 %v4411
        %v4581 = vunpack.c.h.bf16 %v4411
        %v4582 = vunpack.c.l.bf16 %v4412
        %v4583 = vunpack.c.h.bf16 %v4412
        %v4584 = vunpack.c.l.bf16 %v4413
        %v4585 = vunpack.c.h.bf16 %v4413
        %v4586 = vunpack.c.l.bf16 %v4414
        %v4587 = vunpack.c.h.bf16 %v4414
        %v4588 = vunpack.c.l.bf16 %v4415
        %v4589 = vunpack.c.h.bf16 %v4415
        %v4590 = vunpack.c.l.bf16 %v4416
        %v4591 = vunpack.c.h.bf16 %v4416
        %v4592 = vunpack.c.l.bf16 %v4417
        %v4593 = vunpack.c.h.bf16 %v4417
        %v4594 = vunpack.c.l.bf16 %v4418
        %v4595 = vunpack.c.h.bf16 %v4418
        %v4596 = vunpack.c.l.bf16 %v4419
        %v4597 = vunpack.c.h.bf16 %v4419
        %v4598 = vunpack.c.l.bf16 %v4420
        %v4599 = vunpack.c.h.bf16 %v4420
        %v4600 = vunpack.c.l.bf16 %v4421
        %v4601 = vunpack.c.h.bf16 %v4421
        %v4602 = vunpack.c.l.bf16 %v4422
        %v4603 = vunpack.c.h.bf16 %v4422
        %v4604 = vunpack.c.l.bf16 %v4423
        %v4605 = vunpack.c.h.bf16 %v4423
        %v4606 = vunpack.c.l.bf16 %v4424
        %v4607 = vunpack.c.h.bf16 %v4424
        %v4608 = vunpack.c.l.bf16 %v4425
        %v4609 = vunpack.c.h.bf16 %v4425
        %v4610 = vunpack.c.l.bf16 %v4426
        %v4611 = vunpack.c.h.bf16 %v4426
        %v4612 = vunpack.c.l.bf16 %v4427
        %v4613 = vunpack.c.h.bf16 %v4427
        %v4614 = vunpack.c.l.bf16 %v4428
        %v4615 = vunpack.c.h.bf16 %v4428
        %v4616 = vunpack.c.l.bf16 %v4429
        %v4617 = vunpack.c.h.bf16 %v4429
        %v4618 = vunpack.c.l.bf16 %v4430
        %v4619 = vunpack.c.h.bf16 %v4430
        %v4620 = vunpack.c.l.bf16 %v4431
        %v4621 = vunpack.c.h.bf16 %v4431
        %v4622 = vunpack.c.l.bf16 %v4432
        %v4623 = vunpack.c.h.bf16 %v4432
        %v4624 = vunpack.c.l.bf16 %v4433
        %v4625 = vunpack.c.h.bf16 %v4433
        %v4629 = vrot.slane %v4334, 1
        %v4630 = vrot.slane %v4335, 1
        %v4631 = vrot.slane %v4336, 1
        %4635 = vmatprep.subr.mxu0 %v4495
        %4636 = vmatpush1.msra.mxu0 %v4494
        %4637 = vmatprep.subr.mxu0 %v4491
        %4638 = vmatpush1.msra.mxu0 %v4490
        %4639 = vmatprep.subr.mxu0 %v4487
        %4640 = vmatpush1.msra.mxu0 %v4486
        %4641 = vmatprep.subr.mxu0 %v4483
        %4642 = vmatpush1.msra.mxu0 %v4482
        %4643 = vmatprep.subr.mxu0 %v4479
        %4644 = vmatpush1.msra.mxu0 %v4478
        %4645 = vmatprep.subr.mxu0 %v4475
        %4646 = vmatpush1.msra.mxu0 %v4474
        %4647 = vmatprep.subr.mxu0 %v4471
        %4648 = vmatpush1.msra.mxu0 %v4470
        %4649 = vmatprep.subr.mxu0 %v4467
        %4650 = vmatpush1.msra.mxu0 %v4466
        %4651 = vmatprep.subr.mxu0 %v4463
        %4652 = vmatpush1.msra.mxu0 %v4462
        %4653 = vmatprep.subr.mxu0 %v4459
        %4654 = vmatpush1.msra.mxu0 %v4458
        %4655 = vmatprep.subr.mxu0 %v4455
        %4656 = vmatpush1.msra.mxu0 %v4454
        %4657 = vmatprep.subr.mxu0 %v4451
        %4658 = vmatpush1.msra.mxu0 %v4450
        %4659 = vmatprep.subr.mxu0 %v4447
        %4660 = vmatpush1.msra.mxu0 %v4446
        %4661 = vmatprep.subr.mxu0 %v4443
        %4662 = vmatpush1.msra.mxu0 %v4442
        %4663 = vmatprep.subr.mxu0 %v4439
        %4664 = vmatpush1.msra.mxu0 %v4438
        %4665 = vmatprep.subr.mxu0 %v4435
        %4666 = vmatpush1.msra.mxu0 %v4434
        %4667 = vmatprep.subr.mxu0 %v4559
        %4668 = vmatpush2.msra.mxu0 %v4558
        %4669 = vmatprep.subr.mxu0 %v4555
        %4670 = vmatpush2.msra.mxu0 %v4554
        %4671 = vmatprep.subr.mxu0 %v4551
        %4672 = vmatpush2.msra.mxu0 %v4550
        %4673 = vmatprep.subr.mxu0 %v4547
        %4674 = vmatpush2.msra.mxu0 %v4546
        %4675 = vmatprep.subr.mxu0 %v4543
        %4676 = vmatpush2.msra.mxu0 %v4542
        %4677 = vmatprep.subr.mxu0 %v4539
        %4678 = vmatpush2.msra.mxu0 %v4538
        %4679 = vmatprep.subr.mxu0 %v4535
        %4680 = vmatpush2.msra.mxu0 %v4534
        %4681 = vmatprep.subr.mxu0 %v4531
        %4682 = vmatpush2.msra.mxu0 %v4530
        %4683 = vmatprep.subr.mxu0 %v4527
        %4684 = vmatpush2.msra.mxu0 %v4526
        %4685 = vmatprep.subr.mxu0 %v4523
        %4686 = vmatpush2.msra.mxu0 %v4522
        %4687 = vmatprep.subr.mxu0 %v4519
        %4688 = vmatpush2.msra.mxu0 %v4518
        %4689 = vmatprep.subr.mxu0 %v4515
        %4690 = vmatpush2.msra.mxu0 %v4514
        %4691 = vmatprep.subr.mxu0 %v4511
        %4692 = vmatpush2.msra.mxu0 %v4510
        %4693 = vmatprep.subr.mxu0 %v4507
        %4694 = vmatpush2.msra.mxu0 %v4506
        %4695 = vmatprep.subr.mxu0 %v4503
        %4696 = vmatpush2.msra.mxu0 %v4502
        %4697 = vmatprep.subr.mxu0 %v4499
        %4698 = vmatpush2.msra.mxu0 %v4498
        %4699 = vmatprep.mubr.f32.mxu0 %v4630
        %4700 = vmatmul.mubr.f32.gmra.mxu0 %v4629
        %v4701 = vpop.f32.mrf.mxu0
        %v4702 = vadd.f32 0.0, %v4701
        %v4703 = vpop.f32.mrf.mxu0
        %v4704 = vadd.f32 0.0, %v4703
        %4705 = vdwg.mxu0
        %4706 = vmatprep.subr.mxu0 %v4623
        %4707 = vmatpush1.msra.mxu0 %v4622
        %4708 = vmatprep.subr.mxu0 %v4619
        %4709 = vmatpush1.msra.mxu0 %v4618
        %4710 = vmatprep.subr.mxu0 %v4615
        %4711 = vmatpush1.msra.mxu0 %v4614
        %4712 = vmatprep.subr.mxu0 %v4611
        %4713 = vmatpush1.msra.mxu0 %v4610
        %4714 = vmatprep.subr.mxu0 %v4607
        %4715 = vmatpush1.msra.mxu0 %v4606
        %4716 = vmatprep.subr.mxu0 %v4603
        %4717 = vmatpush1.msra.mxu0 %v4602
        %4718 = vmatprep.subr.mxu0 %v4599
        %4719 = vmatpush1.msra.mxu0 %v4598
        %4720 = vmatprep.subr.mxu0 %v4595
        %4721 = vmatpush1.msra.mxu0 %v4594
        %4722 = vmatprep.subr.mxu0 %v4591
        %4723 = vmatpush1.msra.mxu0 %v4590
        %4724 = vmatprep.subr.mxu0 %v4587
        %4725 = vmatpush1.msra.mxu0 %v4586
        %4726 = vmatprep.subr.mxu0 %v4583
        %4727 = vmatpush1.msra.mxu0 %v4582
        %4728 = vmatprep.subr.mxu0 %v4579
        %4729 = vmatpush1.msra.mxu0 %v4578
        %4730 = vmatprep.subr.mxu0 %v4575
        %4731 = vmatpush1.msra.mxu0 %v4574
        %4732 = vmatprep.subr.mxu0 %v4571
        %4733 = vmatpush1.msra.mxu0 %v4570
        %4734 = vmatprep.subr.mxu0 %v4567
        %4735 = vmatpush1.msra.mxu0 %v4566
        %4736 = vmatprep.subr.mxu0 %v4563
        %4737 = vmatpush1.msra.mxu0 %v4562
        %4738 = vmatprep.subr.mxu0 0.0
        %4739 = vmatpush2.msra.mxu0 0.0
        %4740 = vmatprep.subr.mxu0 0.0
        %4741 = vmatpush2.msra.mxu0 0.0
        %4742 = vmatprep.subr.mxu0 0.0
        %4743 = vmatpush2.msra.mxu0 0.0
        %4744 = vmatprep.subr.mxu0 0.0
        %4745 = vmatpush2.msra.mxu0 0.0
        %4746 = vmatprep.subr.mxu0 0.0
        %4747 = vmatpush2.msra.mxu0 0.0
        %4748 = vmatprep.subr.mxu0 0.0
        %4749 = vmatpush2.msra.mxu0 0.0
        %4750 = vmatprep.subr.mxu0 0.0
        %4751 = vmatpush2.msra.mxu0 0.0
        %4752 = vmatprep.subr.mxu0 0.0
        %4753 = vmatpush2.msra.mxu0 0.0
        %4754 = vmatprep.subr.mxu0 0.0
        %4755 = vmatpush2.msra.mxu0 0.0
        %4756 = vmatprep.subr.mxu0 0.0
        %4757 = vmatpush2.msra.mxu0 0.0
        %4758 = vmatprep.subr.mxu0 0.0
        %4759 = vmatpush2.msra.mxu0 0.0
        %4760 = vmatprep.subr.mxu0 0.0
        %4761 = vmatpush2.msra.mxu0 0.0
        %4762 = vmatprep.subr.mxu0 0.0
        %4763 = vmatpush2.msra.mxu0 0.0
        %4764 = vmatprep.subr.mxu0 0.0
        %4765 = vmatpush2.msra.mxu0 0.0
        %4766 = vmatprep.subr.mxu0 0.0
        %4767 = vmatpush2.msra.mxu0 0.0
        %4768 = vmatprep.subr.mxu0 0.0
        %4769 = vmatpush2.msra.mxu0 0.0
        %4770 = vmatprep.mubr.f32.mxu0 0.0
        %4771 = vmatmul.mubr.f32.gmra.mxu0 %v4631
        %v4772 = vpop.f32.mrf.mxu0
        %v4773 = vadd.f32 %v4702, %v4772
        %v4774 = vpop.f32.mrf.mxu0
        %v4775 = vadd.f32 %v4704, %v4774
        %4776 = vdwg.mxu0
        %4777 = vmatprep.subr.mxu0 %v4497
        %4778 = vmatpush1.msra.mxu0 %v4496
        %4779 = vmatprep.subr.mxu0 %v4493
        %4780 = vmatpush1.msra.mxu0 %v4492
        %4781 = vmatprep.subr.mxu0 %v4489
        %4782 = vmatpush1.msra.mxu0 %v4488
        %4783 = vmatprep.subr.mxu0 %v4485
        %4784 = vmatpush1.msra.mxu0 %v4484
        %4785 = vmatprep.subr.mxu0 %v4481
        %4786 = vmatpush1.msra.mxu0 %v4480
        %4787 = vmatprep.subr.mxu0 %v4477
        %4788 = vmatpush1.msra.mxu0 %v4476
        %4789 = vmatprep.subr.mxu0 %v4473
        %4790 = vmatpush1.msra.mxu0 %v4472
        %4791 = vmatprep.subr.mxu0 %v4469
        %4792 = vmatpush1.msra.mxu0 %v4468
        %4793 = vmatprep.subr.mxu0 %v4465
        %4794 = vmatpush1.msra.mxu0 %v4464
        %4795 = vmatprep.subr.mxu0 %v4461
        %4796 = vmatpush1.msra.mxu0 %v4460
        %4797 = vmatprep.subr.mxu0 %v4457
        %4798 = vmatpush1.msra.mxu0 %v4456
        %4799 = vmatprep.subr.mxu0 %v4453
        %4800 = vmatpush1.msra.mxu0 %v4452
        %4801 = vmatprep.subr.mxu0 %v4449
        %4802 = vmatpush1.msra.mxu0 %v4448
        %4803 = vmatprep.subr.mxu0 %v4445
        %4804 = vmatpush1.msra.mxu0 %v4444
        %4805 = vmatprep.subr.mxu0 %v4441
        %4806 = vmatpush1.msra.mxu0 %v4440
        %4807 = vmatprep.subr.mxu0 %v4437
        %4808 = vmatpush1.msra.mxu0 %v4436
        %4809 = vmatprep.subr.mxu0 %v4561
        %4810 = vmatpush2.msra.mxu0 %v4560
        %4811 = vmatprep.subr.mxu0 %v4557
        %4812 = vmatpush2.msra.mxu0 %v4556
        %4813 = vmatprep.subr.mxu0 %v4553
        %4814 = vmatpush2.msra.mxu0 %v4552
        %4815 = vmatprep.subr.mxu0 %v4549
        %4816 = vmatpush2.msra.mxu0 %v4548
        %4817 = vmatprep.subr.mxu0 %v4545
        %4818 = vmatpush2.msra.mxu0 %v4544
        %4819 = vmatprep.subr.mxu0 %v4541
        %4820 = vmatpush2.msra.mxu0 %v4540
        %4821 = vmatprep.subr.mxu0 %v4537
        %4822 = vmatpush2.msra.mxu0 %v4536
        %4823 = vmatprep.subr.mxu0 %v4533
        %4824 = vmatpush2.msra.mxu0 %v4532
        %4825 = vmatprep.subr.mxu0 %v4529
        %4826 = vmatpush2.msra.mxu0 %v4528
        %4827 = vmatprep.subr.mxu0 %v4525
        %4828 = vmatpush2.msra.mxu0 %v4524
        %4829 = vmatprep.subr.mxu0 %v4521
        %4830 = vmatpush2.msra.mxu0 %v4520
        %4831 = vmatprep.subr.mxu0 %v4517
        %4832 = vmatpush2.msra.mxu0 %v4516
        %4833 = vmatprep.subr.mxu0 %v4513
        %4834 = vmatpush2.msra.mxu0 %v4512
        %4835 = vmatprep.subr.mxu0 %v4509
        %4836 = vmatpush2.msra.mxu0 %v4508
        %4837 = vmatprep.subr.mxu0 %v4505
        %4838 = vmatpush2.msra.mxu0 %v4504
        %4839 = vmatprep.subr.mxu0 %v4501
        %4840 = vmatpush2.msra.mxu0 %v4500
        %4841 = vmatprep.mubr.f32.mxu0 %v4630
        %4842 = vmatmul.mubr.f32.gmra.mxu0 %v4629
        %v4843 = vpop.f32.mrf.mxu0
        %v4844 = vadd.f32 0.0, %v4843
        %v4845 = vpop.f32.mrf.mxu0
        %v4846 = vadd.f32 0.0, %v4845
        %4847 = vdwg.mxu0
        %4848 = vmatprep.subr.mxu0 %v4625
        %4849 = vmatpush1.msra.mxu0 %v4624
        %4850 = vmatprep.subr.mxu0 %v4621
        %4851 = vmatpush1.msra.mxu0 %v4620
        %4852 = vmatprep.subr.mxu0 %v4617
        %4853 = vmatpush1.msra.mxu0 %v4616
        %4854 = vmatprep.subr.mxu0 %v4613
        %4855 = vmatpush1.msra.mxu0 %v4612
        %4856 = vmatprep.subr.mxu0 %v4609
        %4857 = vmatpush1.msra.mxu0 %v4608
        %4858 = vmatprep.subr.mxu0 %v4605
        %4859 = vmatpush1.msra.mxu0 %v4604
        %4860 = vmatprep.subr.mxu0 %v4601
        %4861 = vmatpush1.msra.mxu0 %v4600
        %4862 = vmatprep.subr.mxu0 %v4597
        %4863 = vmatpush1.msra.mxu0 %v4596
        %4864 = vmatprep.subr.mxu0 %v4593
        %4865 = vmatpush1.msra.mxu0 %v4592
        %4866 = vmatprep.subr.mxu0 %v4589
        %4867 = vmatpush1.msra.mxu0 %v4588
        %4868 = vmatprep.subr.mxu0 %v4585
        %4869 = vmatpush1.msra.mxu0 %v4584
        %4870 = vmatprep.subr.mxu0 %v4581
        %4871 = vmatpush1.msra.mxu0 %v4580
        %4872 = vmatprep.subr.mxu0 %v4577
        %4873 = vmatpush1.msra.mxu0 %v4576
        %4874 = vmatprep.subr.mxu0 %v4573
        %4875 = vmatpush1.msra.mxu0 %v4572
        %4876 = vmatprep.subr.mxu0 %v4569
        %4877 = vmatpush1.msra.mxu0 %v4568
        %4878 = vmatprep.subr.mxu0 %v4565
        %4879 = vmatpush1.msra.mxu0 %v4564
        %4880 = vmatprep.subr.mxu0 0.0
        %4881 = vmatpush2.msra.mxu0 0.0
        %4882 = vmatprep.subr.mxu0 0.0
        %4883 = vmatpush2.msra.mxu0 0.0
        %4884 = vmatprep.subr.mxu0 0.0
        %4885 = vmatpush2.msra.mxu0 0.0
        %4886 = vmatprep.subr.mxu0 0.0
        %4887 = vmatpush2.msra.mxu0 0.0
        %4888 = vmatprep.subr.mxu0 0.0
        %4889 = vmatpush2.msra.mxu0 0.0
        %4890 = vmatprep.subr.mxu0 0.0
        %4891 = vmatpush2.msra.mxu0 0.0
        %4892 = vmatprep.subr.mxu0 0.0
        %4893 = vmatpush2.msra.mxu0 0.0
        %4894 = vmatprep.subr.mxu0 0.0
        %4895 = vmatpush2.msra.mxu0 0.0
        %4896 = vmatprep.subr.mxu0 0.0
        %4897 = vmatpush2.msra.mxu0 0.0
        %4898 = vmatprep.subr.mxu0 0.0
        %4899 = vmatpush2.msra.mxu0 0.0
        %4900 = vmatprep.subr.mxu0 0.0
        %4901 = vmatpush2.msra.mxu0 0.0
        %4902 = vmatprep.subr.mxu0 0.0
        %4903 = vmatpush2.msra.mxu0 0.0
        %4904 = vmatprep.subr.mxu0 0.0
        %4905 = vmatpush2.msra.mxu0 0.0
        %4906 = vmatprep.subr.mxu0 0.0
        %4907 = vmatpush2.msra.mxu0 0.0
        %4908 = vmatprep.subr.mxu0 0.0
        %4909 = vmatpush2.msra.mxu0 0.0
        %4910 = vmatprep.subr.mxu0 0.0
        %4911 = vmatpush2.msra.mxu0 0.0
        %4912 = vmatprep.mubr.f32.mxu0 0.0
        %4913 = vmatmul.mubr.f32.gmra.mxu0 %v4631
        %v4914 = vpop.f32.mrf.mxu0
        %v4915 = vadd.f32 %v4844, %v4914
        %v4916 = vpop.f32.mrf.mxu0
        %v4917 = vadd.f32 %v4846, %v4916
        %4918 = vdwg.mxu0
        %4919 = vmatprep.subr.mxu0 %v4203
        %4920 = vmatpush1.msra.mxu0 %v4202
        %4921 = vmatprep.subr.mxu0 %v4199
        %4922 = vmatpush1.msra.mxu0 %v4198
        %4923 = vmatprep.subr.mxu0 %v4195
        %4924 = vmatpush1.msra.mxu0 %v4194
        %4925 = vmatprep.subr.mxu0 %v4191
        %4926 = vmatpush1.msra.mxu0 %v4190
        %4927 = vmatprep.subr.mxu0 %v4187
        %4928 = vmatpush1.msra.mxu0 %v4186
        %4929 = vmatprep.subr.mxu0 %v4183
        %4930 = vmatpush1.msra.mxu0 %v4182
        %4931 = vmatprep.subr.mxu0 %v4179
        %4932 = vmatpush1.msra.mxu0 %v4178
        %4933 = vmatprep.subr.mxu0 %v4175
        %4934 = vmatpush1.msra.mxu0 %v4174
        %4935 = vmatprep.subr.mxu0 %v4171
        %4936 = vmatpush1.msra.mxu0 %v4170
        %4937 = vmatprep.subr.mxu0 %v4167
        %4938 = vmatpush1.msra.mxu0 %v4166
        %4939 = vmatprep.subr.mxu0 %v4163
        %4940 = vmatpush1.msra.mxu0 %v4162
        %4941 = vmatprep.subr.mxu0 %v4159
        %4942 = vmatpush1.msra.mxu0 %v4158
        %4943 = vmatprep.subr.mxu0 %v4155
        %4944 = vmatpush1.msra.mxu0 %v4154
        %4945 = vmatprep.subr.mxu0 %v4151
        %4946 = vmatpush1.msra.mxu0 %v4150
        %4947 = vmatprep.subr.mxu0 %v4147
        %4948 = vmatpush1.msra.mxu0 %v4146
        %4949 = vmatprep.subr.mxu0 %v4143
        %4950 = vmatpush1.msra.mxu0 %v4142
        %4951 = vmatprep.subr.mxu0 %v4267
        %4952 = vmatpush2.msra.mxu0 %v4266
        %4953 = vmatprep.subr.mxu0 %v4263
        %4954 = vmatpush2.msra.mxu0 %v4262
        %4955 = vmatprep.subr.mxu0 %v4259
        %4956 = vmatpush2.msra.mxu0 %v4258
        %4957 = vmatprep.subr.mxu0 %v4255
        %4958 = vmatpush2.msra.mxu0 %v4254
        %4959 = vmatprep.subr.mxu0 %v4251
        %4960 = vmatpush2.msra.mxu0 %v4250
        %4961 = vmatprep.subr.mxu0 %v4247
        %4962 = vmatpush2.msra.mxu0 %v4246
        %4963 = vmatprep.subr.mxu0 %v4243
        %4964 = vmatpush2.msra.mxu0 %v4242
        %4965 = vmatprep.subr.mxu0 %v4239
        %4966 = vmatpush2.msra.mxu0 %v4238
        %4967 = vmatprep.subr.mxu0 %v4235
        %4968 = vmatpush2.msra.mxu0 %v4234
        %4969 = vmatprep.subr.mxu0 %v4231
        %4970 = vmatpush2.msra.mxu0 %v4230
        %4971 = vmatprep.subr.mxu0 %v4227
        %4972 = vmatpush2.msra.mxu0 %v4226
        %4973 = vmatprep.subr.mxu0 %v4223
        %4974 = vmatpush2.msra.mxu0 %v4222
        %4975 = vmatprep.subr.mxu0 %v4219
        %4976 = vmatpush2.msra.mxu0 %v4218
        %4977 = vmatprep.subr.mxu0 %v4215
        %4978 = vmatpush2.msra.mxu0 %v4214
        %4979 = vmatprep.subr.mxu0 %v4211
        %4980 = vmatpush2.msra.mxu0 %v4210
        %4981 = vmatprep.subr.mxu0 %v4207
        %4982 = vmatpush2.msra.mxu0 %v4206
        %4983 = vmatprep.mubr.f32.mxu0 %v4044
        %4984 = vmatmul.mubr.f32.gmra.mxu0 %v4043
        %v4985 = vpop.f32.mrf.mxu0
        %v4986 = vadd.f32 %v4773, %v4985
        %v4987 = vpop.f32.mrf.mxu0
        %v4988 = vadd.f32 %v4775, %v4987
        %4989 = vdwg.mxu0
        %4990 = vmatprep.subr.mxu0 %v4331
        %4991 = vmatpush1.msra.mxu0 %v4330
        %4992 = vmatprep.subr.mxu0 %v4327
        %4993 = vmatpush1.msra.mxu0 %v4326
        %4994 = vmatprep.subr.mxu0 %v4323
        %4995 = vmatpush1.msra.mxu0 %v4322
        %4996 = vmatprep.subr.mxu0 %v4319
        %4997 = vmatpush1.msra.mxu0 %v4318
        %4998 = vmatprep.subr.mxu0 %v4315
        %4999 = vmatpush1.msra.mxu0 %v4314
        %5000 = vmatprep.subr.mxu0 %v4311
        %5001 = vmatpush1.msra.mxu0 %v4310
        %5002 = vmatprep.subr.mxu0 %v4307
        %5003 = vmatpush1.msra.mxu0 %v4306
        %5004 = vmatprep.subr.mxu0 %v4303
        %5005 = vmatpush1.msra.mxu0 %v4302
        %5006 = vmatprep.subr.mxu0 %v4299
        %5007 = vmatpush1.msra.mxu0 %v4298
        %5008 = vmatprep.subr.mxu0 %v4295
        %5009 = vmatpush1.msra.mxu0 %v4294
        %5010 = vmatprep.subr.mxu0 %v4291
        %5011 = vmatpush1.msra.mxu0 %v4290
        %5012 = vmatprep.subr.mxu0 %v4287
        %5013 = vmatpush1.msra.mxu0 %v4286
        %5014 = vmatprep.subr.mxu0 %v4283
        %5015 = vmatpush1.msra.mxu0 %v4282
        %5016 = vmatprep.subr.mxu0 %v4279
        %5017 = vmatpush1.msra.mxu0 %v4278
        %5018 = vmatprep.subr.mxu0 %v4275
        %5019 = vmatpush1.msra.mxu0 %v4274
        %5020 = vmatprep.subr.mxu0 %v4271
        %5021 = vmatpush1.msra.mxu0 %v4270
        %5022 = vmatprep.subr.mxu0 0.0
        %5023 = vmatpush2.msra.mxu0 0.0
        %5024 = vmatprep.subr.mxu0 0.0
        %5025 = vmatpush2.msra.mxu0 0.0
        %5026 = vmatprep.subr.mxu0 0.0
        %5027 = vmatpush2.msra.mxu0 0.0
        %5028 = vmatprep.subr.mxu0 0.0
        %5029 = vmatpush2.msra.mxu0 0.0
        %5030 = vmatprep.subr.mxu0 0.0
        %5031 = vmatpush2.msra.mxu0 0.0
        %5032 = vmatprep.subr.mxu0 0.0
        %5033 = vmatpush2.msra.mxu0 0.0
        %5034 = vmatprep.subr.mxu0 0.0
        %5035 = vmatpush2.msra.mxu0 0.0
        %5036 = vmatprep.subr.mxu0 0.0
        %5037 = vmatpush2.msra.mxu0 0.0
        %5038 = vmatprep.subr.mxu0 0.0
        %5039 = vmatpush2.msra.mxu0 0.0
        %5040 = vmatprep.subr.mxu0 0.0
        %5041 = vmatpush2.msra.mxu0 0.0
        %5042 = vmatprep.subr.mxu0 0.0
        %5043 = vmatpush2.msra.mxu0 0.0
        %5044 = vmatprep.subr.mxu0 0.0
        %5045 = vmatpush2.msra.mxu0 0.0
        %5046 = vmatprep.subr.mxu0 0.0
        %5047 = vmatpush2.msra.mxu0 0.0
        %5048 = vmatprep.subr.mxu0 0.0
        %5049 = vmatpush2.msra.mxu0 0.0
        %5050 = vmatprep.subr.mxu0 0.0
        %5051 = vmatpush2.msra.mxu0 0.0
        %5052 = vmatprep.subr.mxu0 0.0
        %5053 = vmatpush2.msra.mxu0 0.0
        %5054 = vmatprep.mubr.f32.mxu0 0.0
        %5055 = vmatmul.mubr.f32.gmra.mxu0 %v4045
        %v5056 = vpop.f32.mrf.mxu0
        %v5057 = vadd.f32 %v4986, %v5056
        %v5058 = vpop.f32.mrf.mxu0
        %v5059 = vadd.f32 %v4988, %v5058
        %5060 = vdwg.mxu0
        %5061 = vmatprep.subr.mxu0 %v4205
        %5062 = vmatpush1.msra.mxu0 %v4204
        %5063 = vmatprep.subr.mxu0 %v4201
        %5064 = vmatpush1.msra.mxu0 %v4200
        %5065 = vmatprep.subr.mxu0 %v4197
        %5066 = vmatpush1.msra.mxu0 %v4196
        %5067 = vmatprep.subr.mxu0 %v4193
        %5068 = vmatpush1.msra.mxu0 %v4192
        %5069 = vmatprep.subr.mxu0 %v4189
        %5070 = vmatpush1.msra.mxu0 %v4188
        %5071 = vmatprep.subr.mxu0 %v4185
        %5072 = vmatpush1.msra.mxu0 %v4184
        %5073 = vmatprep.subr.mxu0 %v4181
        %5074 = vmatpush1.msra.mxu0 %v4180
        %5075 = vmatprep.subr.mxu0 %v4177
        %5076 = vmatpush1.msra.mxu0 %v4176
        %5077 = vmatprep.subr.mxu0 %v4173
        %5078 = vmatpush1.msra.mxu0 %v4172
        %5079 = vmatprep.subr.mxu0 %v4169
        %5080 = vmatpush1.msra.mxu0 %v4168
        %5081 = vmatprep.subr.mxu0 %v4165
        %5082 = vmatpush1.msra.mxu0 %v4164
        %5083 = vmatprep.subr.mxu0 %v4161
        %5084 = vmatpush1.msra.mxu0 %v4160
        %5085 = vmatprep.subr.mxu0 %v4157
        %5086 = vmatpush1.msra.mxu0 %v4156
        %5087 = vmatprep.subr.mxu0 %v4153
        %5088 = vmatpush1.msra.mxu0 %v4152
        %5089 = vmatprep.subr.mxu0 %v4149
        %5090 = vmatpush1.msra.mxu0 %v4148
        %5091 = vmatprep.subr.mxu0 %v4145
        %5092 = vmatpush1.msra.mxu0 %v4144
        %5093 = vmatprep.subr.mxu0 %v4269
        %5094 = vmatpush2.msra.mxu0 %v4268
        %5095 = vmatprep.subr.mxu0 %v4265
        %5096 = vmatpush2.msra.mxu0 %v4264
        %5097 = vmatprep.subr.mxu0 %v4261
        %5098 = vmatpush2.msra.mxu0 %v4260
        %5099 = vmatprep.subr.mxu0 %v4257
        %5100 = vmatpush2.msra.mxu0 %v4256
        %5101 = vmatprep.subr.mxu0 %v4253
        %5102 = vmatpush2.msra.mxu0 %v4252
        %5103 = vmatprep.subr.mxu0 %v4249
        %5104 = vmatpush2.msra.mxu0 %v4248
        %5105 = vmatprep.subr.mxu0 %v4245
        %5106 = vmatpush2.msra.mxu0 %v4244
        %5107 = vmatprep.subr.mxu0 %v4241
        %5108 = vmatpush2.msra.mxu0 %v4240
        %5109 = vmatprep.subr.mxu0 %v4237
        %5110 = vmatpush2.msra.mxu0 %v4236
        %5111 = vmatprep.subr.mxu0 %v4233
        %5112 = vmatpush2.msra.mxu0 %v4232
        %5113 = vmatprep.subr.mxu0 %v4229
        %5114 = vmatpush2.msra.mxu0 %v4228
        %5115 = vmatprep.subr.mxu0 %v4225
        %5116 = vmatpush2.msra.mxu0 %v4224
        %5117 = vmatprep.subr.mxu0 %v4221
        %5118 = vmatpush2.msra.mxu0 %v4220
        %5119 = vmatprep.subr.mxu0 %v4217
        %5120 = vmatpush2.msra.mxu0 %v4216
        %5121 = vmatprep.subr.mxu0 %v4213
        %5122 = vmatpush2.msra.mxu0 %v4212
        %5123 = vmatprep.subr.mxu0 %v4209
        %5124 = vmatpush2.msra.mxu0 %v4208
        %5125 = vmatprep.mubr.f32.mxu0 %v4044
        %5126 = vmatmul.mubr.f32.gmra.mxu0 %v4043
        %v5127 = vpop.f32.mrf.mxu0
        %v5128 = vadd.f32 %v4915, %v5127
        %v5129 = vpop.f32.mrf.mxu0
        %v5130 = vadd.f32 %v4917, %v5129
        %5131 = vdwg.mxu0
        %5132 = vmatprep.subr.mxu0 %v4333
        %5133 = vmatpush1.msra.mxu0 %v4332
        %5134 = vmatprep.subr.mxu0 %v4329
        %5135 = vmatpush1.msra.mxu0 %v4328
        %5136 = vmatprep.subr.mxu0 %v4325
        %5137 = vmatpush1.msra.mxu0 %v4324
        %5138 = vmatprep.subr.mxu0 %v4321
        %5139 = vmatpush1.msra.mxu0 %v4320
        %5140 = vmatprep.subr.mxu0 %v4317
        %5141 = vmatpush1.msra.mxu0 %v4316
        %5142 = vmatprep.subr.mxu0 %v4313
        %5143 = vmatpush1.msra.mxu0 %v4312
        %5144 = vmatprep.subr.mxu0 %v4309
        %5145 = vmatpush1.msra.mxu0 %v4308
        %5146 = vmatprep.subr.mxu0 %v4305
        %5147 = vmatpush1.msra.mxu0 %v4304
        %5148 = vmatprep.subr.mxu0 %v4301
        %5149 = vmatpush1.msra.mxu0 %v4300
        %5150 = vmatprep.subr.mxu0 %v4297
        %5151 = vmatpush1.msra.mxu0 %v4296
        %5152 = vmatprep.subr.mxu0 %v4293
        %5153 = vmatpush1.msra.mxu0 %v4292
        %5154 = vmatprep.subr.mxu0 %v4289
        %5155 = vmatpush1.msra.mxu0 %v4288
        %5156 = vmatprep.subr.mxu0 %v4285
        %5157 = vmatpush1.msra.mxu0 %v4284
        %5158 = vmatprep.subr.mxu0 %v4281
        %5159 = vmatpush1.msra.mxu0 %v4280
        %5160 = vmatprep.subr.mxu0 %v4277
        %5161 = vmatpush1.msra.mxu0 %v4276
        %5162 = vmatprep.subr.mxu0 %v4273
        %5163 = vmatpush1.msra.mxu0 %v4272
        %5164 = vmatprep.subr.mxu0 0.0
        %5165 = vmatpush2.msra.mxu0 0.0
        %5166 = vmatprep.subr.mxu0 0.0
        %5167 = vmatpush2.msra.mxu0 0.0
        %5168 = vmatprep.subr.mxu0 0.0
        %5169 = vmatpush2.msra.mxu0 0.0
        %5170 = vmatprep.subr.mxu0 0.0
        %5171 = vmatpush2.msra.mxu0 0.0
        %5172 = vmatprep.subr.mxu0 0.0
        %5173 = vmatpush2.msra.mxu0 0.0
        %5174 = vmatprep.subr.mxu0 0.0
        %5175 = vmatpush2.msra.mxu0 0.0
        %5176 = vmatprep.subr.mxu0 0.0
        %5177 = vmatpush2.msra.mxu0 0.0
        %5178 = vmatprep.subr.mxu0 0.0
        %5179 = vmatpush2.msra.mxu0 0.0
        %5180 = vmatprep.subr.mxu0 0.0
        %5181 = vmatpush2.msra.mxu0 0.0
        %5182 = vmatprep.subr.mxu0 0.0
        %5183 = vmatpush2.msra.mxu0 0.0
        %5184 = vmatprep.subr.mxu0 0.0
        %5185 = vmatpush2.msra.mxu0 0.0
        %5186 = vmatprep.subr.mxu0 0.0
        %5187 = vmatpush2.msra.mxu0 0.0
        %5188 = vmatprep.subr.mxu0 0.0
        %5189 = vmatpush2.msra.mxu0 0.0
        %5190 = vmatprep.subr.mxu0 0.0
        %5191 = vmatpush2.msra.mxu0 0.0
        %5192 = vmatprep.subr.mxu0 0.0
        %5193 = vmatpush2.msra.mxu0 0.0
        %5194 = vmatprep.subr.mxu0 0.0
        %5195 = vmatpush2.msra.mxu0 0.0
        %5196 = vmatprep.mubr.f32.mxu0 0.0
        %5197 = vmatmul.mubr.f32.gmra.mxu0 %v4045
        %v5198 = vpop.f32.mrf.mxu0
        %v5199 = vadd.f32 %v5128, %v5198
        %v5200 = vpop.f32.mrf.mxu0
        %v5201 = vadd.f32 %v5130, %v5200
        %5202 = vdwg.mxu0
        %v5203 = vld [vmem:[#allocation7] sm:$0x3c]
        %v5204 = vld [vmem:[#allocation7 + $0x8] sm:$0x3c]
        %v5205 = vld [vmem:[#allocation7 + $0x10] sm:$0x3c]
        %s5206 = scalar_lea.vmem [#allocation19], 1536
        %v5207 = vld [vmem:[%s5206] sm:$0xff]
        %v5208 = vld [vmem:[%s5206 + $0x8] sm:$0xff]
        %v5209 = vld [vmem:[%s5206 + $0x10] sm:$0xff]
        %v5210 = vld [vmem:[%s5206 + $0x18] sm:$0xff]
        %v5211 = vld [vmem:[%s5206 + $0x20] sm:$0xff]
        %v5212 = vld [vmem:[%s5206 + $0x28] sm:$0xff]
        %v5213 = vld [vmem:[%s5206 + $0x30] sm:$0xff]
        %v5214 = vld [vmem:[%s5206 + $0x38] sm:$0xff]
        %v5215 = vld [vmem:[%s5206 + $0x40] sm:$0xff]
        %v5216 = vld [vmem:[%s5206 + $0x48] sm:$0xff]
        %v5217 = vld [vmem:[%s5206 + $0x50] sm:$0xff]
        %v5218 = vld [vmem:[%s5206 + $0x58] sm:$0xff]
        %v5219 = vld [vmem:[%s5206 + $0x60] sm:$0xff]
        %v5220 = vld [vmem:[%s5206 + $0x68] sm:$0xff]
        %v5221 = vld [vmem:[%s5206 + $0x70] sm:$0xff]
        %v5222 = vld [vmem:[%s5206 + $0x78] sm:$0xff]
        %v5223 = vld [vmem:[%s5206 + $0x80] sm:$0xff]
        %v5224 = vld [vmem:[%s5206 + $0x88] sm:$0xff]
        %v5225 = vld [vmem:[%s5206 + $0x90] sm:$0xff]
        %v5226 = vld [vmem:[%s5206 + $0x98] sm:$0xff]
        %v5227 = vld [vmem:[%s5206 + $0xa0] sm:$0xff]
        %v5228 = vld [vmem:[%s5206 + $0xa8] sm:$0xff]
        %v5229 = vld [vmem:[%s5206 + $0xb0] sm:$0xff]
        %v5230 = vld [vmem:[%s5206 + $0xb8] sm:$0xff]
        %v5231 = vld [vmem:[%s5206 + $0xc0] sm:$0xff]
        %v5232 = vld [vmem:[%s5206 + $0xc8] sm:$0xff]
        %v5233 = vld [vmem:[%s5206 + $0xd0] sm:$0xff]
        %v5234 = vld [vmem:[%s5206 + $0xd8] sm:$0xff]
        %v5235 = vld [vmem:[%s5206 + $0xe0] sm:$0xff]
        %v5236 = vld [vmem:[%s5206 + $0xe8] sm:$0xff]
        %v5237 = vld [vmem:[%s5206 + $0xf0] sm:$0xff]
        %v5238 = vld [vmem:[%s5206 + $0xf8] sm:$0xff]
        %v5239 = vld [vmem:[%s5206 + $0x100] sm:$0xff]
        %v5240 = vld [vmem:[%s5206 + $0x108] sm:$0xff]
        %v5241 = vld [vmem:[%s5206 + $0x110] sm:$0xff]
        %v5242 = vld [vmem:[%s5206 + $0x118] sm:$0xff]
        %v5243 = vld [vmem:[%s5206 + $0x120] sm:$0xff]
        %v5244 = vld [vmem:[%s5206 + $0x128] sm:$0xff]
        %v5245 = vld [vmem:[%s5206 + $0x130] sm:$0xff]
        %v5246 = vld [vmem:[%s5206 + $0x138] sm:$0xff]
        %v5247 = vld [vmem:[%s5206 + $0x140] sm:$0xff]
        %v5248 = vld [vmem:[%s5206 + $0x148] sm:$0xff]
        %v5249 = vld [vmem:[%s5206 + $0x150] sm:$0xff]
        %v5250 = vld [vmem:[%s5206 + $0x158] sm:$0xff]
        %v5251 = vld [vmem:[%s5206 + $0x160] sm:$0xff]
        %v5252 = vld [vmem:[%s5206 + $0x168] sm:$0xff]
        %v5253 = vld [vmem:[%s5206 + $0x170] sm:$0xff]
        %v5254 = vld [vmem:[%s5206 + $0x178] sm:$0xff]
        %v5255 = vld [vmem:[%s5206 + $0x180] sm:$0xff]
        %v5256 = vld [vmem:[%s5206 + $0x188] sm:$0xff]
        %v5257 = vld [vmem:[%s5206 + $0x190] sm:$0xff]
        %v5258 = vld [vmem:[%s5206 + $0x198] sm:$0xff]
        %v5259 = vld [vmem:[%s5206 + $0x1a0] sm:$0xff]
        %v5260 = vld [vmem:[%s5206 + $0x1a8] sm:$0xff]
        %v5261 = vld [vmem:[%s5206 + $0x1b0] sm:$0xff]
        %v5262 = vld [vmem:[%s5206 + $0x1b8] sm:$0xff]
        %v5263 = vld [vmem:[%s5206 + $0x1c0] sm:$0xff]
        %v5264 = vld [vmem:[%s5206 + $0x1c8] sm:$0xff]
        %v5265 = vld [vmem:[%s5206 + $0x1d0] sm:$0xff]
        %v5266 = vld [vmem:[%s5206 + $0x1d8] sm:$0xff]
        %v5267 = vld [vmem:[%s5206 + $0x1e0] sm:$0xff]
        %v5268 = vld [vmem:[%s5206 + $0x1e8] sm:$0xff]
        %v5269 = vld [vmem:[%s5206 + $0x1f0] sm:$0xff]
        %v5270 = vld [vmem:[%s5206 + $0x1f8] sm:$0xff]
        %v5271 = vld [vmem:[%s5206 + $0x200] sm:$0xff]
        %v5272 = vld [vmem:[%s5206 + $0x208] sm:$0xff]
        %v5273 = vld [vmem:[%s5206 + $0x210] sm:$0xff]
        %v5274 = vld [vmem:[%s5206 + $0x218] sm:$0xff]
        %v5275 = vld [vmem:[%s5206 + $0x220] sm:$0xff]
        %v5276 = vld [vmem:[%s5206 + $0x228] sm:$0xff]
        %v5277 = vld [vmem:[%s5206 + $0x230] sm:$0xff]
        %v5278 = vld [vmem:[%s5206 + $0x238] sm:$0xff]
        %v5279 = vld [vmem:[%s5206 + $0x240] sm:$0xff]
        %v5280 = vld [vmem:[%s5206 + $0x248] sm:$0xff]
        %v5281 = vld [vmem:[%s5206 + $0x250] sm:$0xff]
        %v5282 = vld [vmem:[%s5206 + $0x258] sm:$0xff]
        %v5283 = vld [vmem:[%s5206 + $0x260] sm:$0xff]
        %v5284 = vld [vmem:[%s5206 + $0x268] sm:$0xff]
        %v5285 = vld [vmem:[%s5206 + $0x270] sm:$0xff]
        %v5286 = vld [vmem:[%s5206 + $0x278] sm:$0xff]
        %v5287 = vld [vmem:[%s5206 + $0x280] sm:$0xff]
        %v5288 = vld [vmem:[%s5206 + $0x288] sm:$0xff]
        %v5289 = vld [vmem:[%s5206 + $0x290] sm:$0xff]
        %v5290 = vld [vmem:[%s5206 + $0x298] sm:$0xff]
        %v5291 = vld [vmem:[%s5206 + $0x2a0] sm:$0xff]
        %v5292 = vld [vmem:[%s5206 + $0x2a8] sm:$0xff]
        %v5293 = vld [vmem:[%s5206 + $0x2b0] sm:$0xff]
        %v5294 = vld [vmem:[%s5206 + $0x2b8] sm:$0xff]
        %v5295 = vld [vmem:[%s5206 + $0x2c0] sm:$0xff]
        %v5296 = vld [vmem:[%s5206 + $0x2c8] sm:$0xff]
        %v5297 = vld [vmem:[%s5206 + $0x2d0] sm:$0xff]
        %v5298 = vld [vmem:[%s5206 + $0x2d8] sm:$0xff]
        %v5299 = vld [vmem:[%s5206 + $0x2e0] sm:$0xff]
        %v5300 = vld [vmem:[%s5206 + $0x2e8] sm:$0xff]
        %v5301 = vld [vmem:[%s5206 + $0x2f0] sm:$0xff]
        %v5302 = vld [vmem:[%s5206 + $0x2f8] sm:$0xff]
        %v5303 = vunpack.c.l.bf16 %v5207
        %v5304 = vunpack.c.h.bf16 %v5207
        %v5305 = vunpack.c.l.bf16 %v5208
        %v5306 = vunpack.c.h.bf16 %v5208
        %v5307 = vunpack.c.l.bf16 %v5209
        %v5308 = vunpack.c.h.bf16 %v5209
        %v5309 = vunpack.c.l.bf16 %v5210
        %v5310 = vunpack.c.h.bf16 %v5210
        %v5311 = vunpack.c.l.bf16 %v5211
        %v5312 = vunpack.c.h.bf16 %v5211
        %v5313 = vunpack.c.l.bf16 %v5212
        %v5314 = vunpack.c.h.bf16 %v5212
        %v5315 = vunpack.c.l.bf16 %v5213
        %v5316 = vunpack.c.h.bf16 %v5213
        %v5317 = vunpack.c.l.bf16 %v5214
        %v5318 = vunpack.c.h.bf16 %v5214
        %v5319 = vunpack.c.l.bf16 %v5215
        %v5320 = vunpack.c.h.bf16 %v5215
        %v5321 = vunpack.c.l.bf16 %v5216
        %v5322 = vunpack.c.h.bf16 %v5216
        %v5323 = vunpack.c.l.bf16 %v5217
        %v5324 = vunpack.c.h.bf16 %v5217
        %v5325 = vunpack.c.l.bf16 %v5218
        %v5326 = vunpack.c.h.bf16 %v5218
        %v5327 = vunpack.c.l.bf16 %v5219
        %v5328 = vunpack.c.h.bf16 %v5219
        %v5329 = vunpack.c.l.bf16 %v5220
        %v5330 = vunpack.c.h.bf16 %v5220
        %v5331 = vunpack.c.l.bf16 %v5221
        %v5332 = vunpack.c.h.bf16 %v5221
        %v5333 = vunpack.c.l.bf16 %v5222
        %v5334 = vunpack.c.h.bf16 %v5222
        %v5335 = vunpack.c.l.bf16 %v5223
        %v5336 = vunpack.c.h.bf16 %v5223
        %v5337 = vunpack.c.l.bf16 %v5224
        %v5338 = vunpack.c.h.bf16 %v5224
        %v5339 = vunpack.c.l.bf16 %v5225
        %v5340 = vunpack.c.h.bf16 %v5225
        %v5341 = vunpack.c.l.bf16 %v5226
        %v5342 = vunpack.c.h.bf16 %v5226
        %v5343 = vunpack.c.l.bf16 %v5227
        %v5344 = vunpack.c.h.bf16 %v5227
        %v5345 = vunpack.c.l.bf16 %v5228
        %v5346 = vunpack.c.h.bf16 %v5228
        %v5347 = vunpack.c.l.bf16 %v5229
        %v5348 = vunpack.c.h.bf16 %v5229
        %v5349 = vunpack.c.l.bf16 %v5230
        %v5350 = vunpack.c.h.bf16 %v5230
        %v5351 = vunpack.c.l.bf16 %v5231
        %v5352 = vunpack.c.h.bf16 %v5231
        %v5353 = vunpack.c.l.bf16 %v5232
        %v5354 = vunpack.c.h.bf16 %v5232
        %v5355 = vunpack.c.l.bf16 %v5233
        %v5356 = vunpack.c.h.bf16 %v5233
        %v5357 = vunpack.c.l.bf16 %v5234
        %v5358 = vunpack.c.h.bf16 %v5234
        %v5359 = vunpack.c.l.bf16 %v5235
        %v5360 = vunpack.c.h.bf16 %v5235
        %v5361 = vunpack.c.l.bf16 %v5236
        %v5362 = vunpack.c.h.bf16 %v5236
        %v5363 = vunpack.c.l.bf16 %v5237
        %v5364 = vunpack.c.h.bf16 %v5237
        %v5365 = vunpack.c.l.bf16 %v5238
        %v5366 = vunpack.c.h.bf16 %v5238
        %v5367 = vunpack.c.l.bf16 %v5239
        %v5368 = vunpack.c.h.bf16 %v5239
        %v5369 = vunpack.c.l.bf16 %v5240
        %v5370 = vunpack.c.h.bf16 %v5240
        %v5371 = vunpack.c.l.bf16 %v5241
        %v5372 = vunpack.c.h.bf16 %v5241
        %v5373 = vunpack.c.l.bf16 %v5242
        %v5374 = vunpack.c.h.bf16 %v5242
        %v5375 = vunpack.c.l.bf16 %v5243
        %v5376 = vunpack.c.h.bf16 %v5243
        %v5377 = vunpack.c.l.bf16 %v5244
        %v5378 = vunpack.c.h.bf16 %v5244
        %v5379 = vunpack.c.l.bf16 %v5245
        %v5380 = vunpack.c.h.bf16 %v5245
        %v5381 = vunpack.c.l.bf16 %v5246
        %v5382 = vunpack.c.h.bf16 %v5246
        %v5383 = vunpack.c.l.bf16 %v5247
        %v5384 = vunpack.c.h.bf16 %v5247
        %v5385 = vunpack.c.l.bf16 %v5248
        %v5386 = vunpack.c.h.bf16 %v5248
        %v5387 = vunpack.c.l.bf16 %v5249
        %v5388 = vunpack.c.h.bf16 %v5249
        %v5389 = vunpack.c.l.bf16 %v5250
        %v5390 = vunpack.c.h.bf16 %v5250
        %v5391 = vunpack.c.l.bf16 %v5251
        %v5392 = vunpack.c.h.bf16 %v5251
        %v5393 = vunpack.c.l.bf16 %v5252
        %v5394 = vunpack.c.h.bf16 %v5252
        %v5395 = vunpack.c.l.bf16 %v5253
        %v5396 = vunpack.c.h.bf16 %v5253
        %v5397 = vunpack.c.l.bf16 %v5254
        %v5398 = vunpack.c.h.bf16 %v5254
        %v5399 = vunpack.c.l.bf16 %v5255
        %v5400 = vunpack.c.h.bf16 %v5255
        %v5401 = vunpack.c.l.bf16 %v5256
        %v5402 = vunpack.c.h.bf16 %v5256
        %v5403 = vunpack.c.l.bf16 %v5257
        %v5404 = vunpack.c.h.bf16 %v5257
        %v5405 = vunpack.c.l.bf16 %v5258
        %v5406 = vunpack.c.h.bf16 %v5258
        %v5407 = vunpack.c.l.bf16 %v5259
        %v5408 = vunpack.c.h.bf16 %v5259
        %v5409 = vunpack.c.l.bf16 %v5260
        %v5410 = vunpack.c.h.bf16 %v5260
        %v5411 = vunpack.c.l.bf16 %v5261
        %v5412 = vunpack.c.h.bf16 %v5261
        %v5413 = vunpack.c.l.bf16 %v5262
        %v5414 = vunpack.c.h.bf16 %v5262
        %v5415 = vunpack.c.l.bf16 %v5263
        %v5416 = vunpack.c.h.bf16 %v5263
        %v5417 = vunpack.c.l.bf16 %v5264
        %v5418 = vunpack.c.h.bf16 %v5264
        %v5419 = vunpack.c.l.bf16 %v5265
        %v5420 = vunpack.c.h.bf16 %v5265
        %v5421 = vunpack.c.l.bf16 %v5266
        %v5422 = vunpack.c.h.bf16 %v5266
        %v5423 = vunpack.c.l.bf16 %v5267
        %v5424 = vunpack.c.h.bf16 %v5267
        %v5425 = vunpack.c.l.bf16 %v5268
        %v5426 = vunpack.c.h.bf16 %v5268
        %v5427 = vunpack.c.l.bf16 %v5269
        %v5428 = vunpack.c.h.bf16 %v5269
        %v5429 = vunpack.c.l.bf16 %v5270
        %v5430 = vunpack.c.h.bf16 %v5270
        %v5431 = vunpack.c.l.bf16 %v5271
        %v5432 = vunpack.c.h.bf16 %v5271
        %v5433 = vunpack.c.l.bf16 %v5272
        %v5434 = vunpack.c.h.bf16 %v5272
        %v5435 = vunpack.c.l.bf16 %v5273
        %v5436 = vunpack.c.h.bf16 %v5273
        %v5437 = vunpack.c.l.bf16 %v5274
        %v5438 = vunpack.c.h.bf16 %v5274
        %v5439 = vunpack.c.l.bf16 %v5275
        %v5440 = vunpack.c.h.bf16 %v5275
        %v5441 = vunpack.c.l.bf16 %v5276
        %v5442 = vunpack.c.h.bf16 %v5276
        %v5443 = vunpack.c.l.bf16 %v5277
        %v5444 = vunpack.c.h.bf16 %v5277
        %v5445 = vunpack.c.l.bf16 %v5278
        %v5446 = vunpack.c.h.bf16 %v5278
        %v5447 = vunpack.c.l.bf16 %v5279
        %v5448 = vunpack.c.h.bf16 %v5279
        %v5449 = vunpack.c.l.bf16 %v5280
        %v5450 = vunpack.c.h.bf16 %v5280
        %v5451 = vunpack.c.l.bf16 %v5281
        %v5452 = vunpack.c.h.bf16 %v5281
        %v5453 = vunpack.c.l.bf16 %v5282
        %v5454 = vunpack.c.h.bf16 %v5282
        %v5455 = vunpack.c.l.bf16 %v5283
        %v5456 = vunpack.c.h.bf16 %v5283
        %v5457 = vunpack.c.l.bf16 %v5284
        %v5458 = vunpack.c.h.bf16 %v5284
        %v5459 = vunpack.c.l.bf16 %v5285
        %v5460 = vunpack.c.h.bf16 %v5285
        %v5461 = vunpack.c.l.bf16 %v5286
        %v5462 = vunpack.c.h.bf16 %v5286
        %v5463 = vunpack.c.l.bf16 %v5287
        %v5464 = vunpack.c.h.bf16 %v5287
        %v5465 = vunpack.c.l.bf16 %v5288
        %v5466 = vunpack.c.h.bf16 %v5288
        %v5467 = vunpack.c.l.bf16 %v5289
        %v5468 = vunpack.c.h.bf16 %v5289
        %v5469 = vunpack.c.l.bf16 %v5290
        %v5470 = vunpack.c.h.bf16 %v5290
        %v5471 = vunpack.c.l.bf16 %v5291
        %v5472 = vunpack.c.h.bf16 %v5291
        %v5473 = vunpack.c.l.bf16 %v5292
        %v5474 = vunpack.c.h.bf16 %v5292
        %v5475 = vunpack.c.l.bf16 %v5293
        %v5476 = vunpack.c.h.bf16 %v5293
        %v5477 = vunpack.c.l.bf16 %v5294
        %v5478 = vunpack.c.h.bf16 %v5294
        %v5479 = vunpack.c.l.bf16 %v5295
        %v5480 = vunpack.c.h.bf16 %v5295
        %v5481 = vunpack.c.l.bf16 %v5296
        %v5482 = vunpack.c.h.bf16 %v5296
        %v5483 = vunpack.c.l.bf16 %v5297
        %v5484 = vunpack.c.h.bf16 %v5297
        %v5485 = vunpack.c.l.bf16 %v5298
        %v5486 = vunpack.c.h.bf16 %v5298
        %v5487 = vunpack.c.l.bf16 %v5299
        %v5488 = vunpack.c.h.bf16 %v5299
        %v5489 = vunpack.c.l.bf16 %v5300
        %v5490 = vunpack.c.h.bf16 %v5300
        %v5491 = vunpack.c.l.bf16 %v5301
        %v5492 = vunpack.c.h.bf16 %v5301
        %v5493 = vunpack.c.l.bf16 %v5302
        %v5494 = vunpack.c.h.bf16 %v5302
        %v5498 = vrot.slane %v5203, 2
        %v5499 = vrot.slane %v5204, 2
        %v5500 = vrot.slane %v5205, 2
        %5504 = vmatprep.subr.mxu0 %v5364
        %5505 = vmatpush1.msra.mxu0 %v5363
        %5506 = vmatprep.subr.mxu0 %v5360
        %5507 = vmatpush1.msra.mxu0 %v5359
        %5508 = vmatprep.subr.mxu0 %v5356
        %5509 = vmatpush1.msra.mxu0 %v5355
        %5510 = vmatprep.subr.mxu0 %v5352
        %5511 = vmatpush1.msra.mxu0 %v5351
        %5512 = vmatprep.subr.mxu0 %v5348
        %5513 = vmatpush1.msra.mxu0 %v5347
        %5514 = vmatprep.subr.mxu0 %v5344
        %5515 = vmatpush1.msra.mxu0 %v5343
        %5516 = vmatprep.subr.mxu0 %v5340
        %5517 = vmatpush1.msra.mxu0 %v5339
        %5518 = vmatprep.subr.mxu0 %v5336
        %5519 = vmatpush1.msra.mxu0 %v5335
        %5520 = vmatprep.subr.mxu0 %v5332
        %5521 = vmatpush1.msra.mxu0 %v5331
        %5522 = vmatprep.subr.mxu0 %v5328
        %5523 = vmatpush1.msra.mxu0 %v5327
        %5524 = vmatprep.subr.mxu0 %v5324
        %5525 = vmatpush1.msra.mxu0 %v5323
        %5526 = vmatprep.subr.mxu0 %v5320
        %5527 = vmatpush1.msra.mxu0 %v5319
        %5528 = vmatprep.subr.mxu0 %v5316
        %5529 = vmatpush1.msra.mxu0 %v5315
        %5530 = vmatprep.subr.mxu0 %v5312
        %5531 = vmatpush1.msra.mxu0 %v5311
        %5532 = vmatprep.subr.mxu0 %v5308
        %5533 = vmatpush1.msra.mxu0 %v5307
        %5534 = vmatprep.subr.mxu0 %v5304
        %5535 = vmatpush1.msra.mxu0 %v5303
        %5536 = vmatprep.subr.mxu0 %v5428
        %5537 = vmatpush2.msra.mxu0 %v5427
        %5538 = vmatprep.subr.mxu0 %v5424
        %5539 = vmatpush2.msra.mxu0 %v5423
        %5540 = vmatprep.subr.mxu0 %v5420
        %5541 = vmatpush2.msra.mxu0 %v5419
        %5542 = vmatprep.subr.mxu0 %v5416
        %5543 = vmatpush2.msra.mxu0 %v5415
        %5544 = vmatprep.subr.mxu0 %v5412
        %5545 = vmatpush2.msra.mxu0 %v5411
        %5546 = vmatprep.subr.mxu0 %v5408
        %5547 = vmatpush2.msra.mxu0 %v5407
        %5548 = vmatprep.subr.mxu0 %v5404
        %5549 = vmatpush2.msra.mxu0 %v5403
        %5550 = vmatprep.subr.mxu0 %v5400
        %5551 = vmatpush2.msra.mxu0 %v5399
        %5552 = vmatprep.subr.mxu0 %v5396
        %5553 = vmatpush2.msra.mxu0 %v5395
        %5554 = vmatprep.subr.mxu0 %v5392
        %5555 = vmatpush2.msra.mxu0 %v5391
        %5556 = vmatprep.subr.mxu0 %v5388
        %5557 = vmatpush2.msra.mxu0 %v5387
        %5558 = vmatprep.subr.mxu0 %v5384
        %5559 = vmatpush2.msra.mxu0 %v5383
        %5560 = vmatprep.subr.mxu0 %v5380
        %5561 = vmatpush2.msra.mxu0 %v5379
        %5562 = vmatprep.subr.mxu0 %v5376
        %5563 = vmatpush2.msra.mxu0 %v5375
        %5564 = vmatprep.subr.mxu0 %v5372
        %5565 = vmatpush2.msra.mxu0 %v5371
        %5566 = vmatprep.subr.mxu0 %v5368
        %5567 = vmatpush2.msra.mxu0 %v5367
        %5568 = vmatprep.mubr.f32.mxu0 %v5499
        %5569 = vmatmul.mubr.f32.gmra.mxu0 %v5498
        %v5570 = vpop.f32.mrf.mxu0
        %v5571 = vadd.f32 0.0, %v5570
        %v5572 = vpop.f32.mrf.mxu0
        %v5573 = vadd.f32 0.0, %v5572
        %5574 = vdwg.mxu0
        %5575 = vmatprep.subr.mxu0 %v5492
        %5576 = vmatpush1.msra.mxu0 %v5491
        %5577 = vmatprep.subr.mxu0 %v5488
        %5578 = vmatpush1.msra.mxu0 %v5487
        %5579 = vmatprep.subr.mxu0 %v5484
        %5580 = vmatpush1.msra.mxu0 %v5483
        %5581 = vmatprep.subr.mxu0 %v5480
        %5582 = vmatpush1.msra.mxu0 %v5479
        %5583 = vmatprep.subr.mxu0 %v5476
        %5584 = vmatpush1.msra.mxu0 %v5475
        %5585 = vmatprep.subr.mxu0 %v5472
        %5586 = vmatpush1.msra.mxu0 %v5471
        %5587 = vmatprep.subr.mxu0 %v5468
        %5588 = vmatpush1.msra.mxu0 %v5467
        %5589 = vmatprep.subr.mxu0 %v5464
        %5590 = vmatpush1.msra.mxu0 %v5463
        %5591 = vmatprep.subr.mxu0 %v5460
        %5592 = vmatpush1.msra.mxu0 %v5459
        %5593 = vmatprep.subr.mxu0 %v5456
        %5594 = vmatpush1.msra.mxu0 %v5455
        %5595 = vmatprep.subr.mxu0 %v5452
        %5596 = vmatpush1.msra.mxu0 %v5451
        %5597 = vmatprep.subr.mxu0 %v5448
        %5598 = vmatpush1.msra.mxu0 %v5447
        %5599 = vmatprep.subr.mxu0 %v5444
        %5600 = vmatpush1.msra.mxu0 %v5443
        %5601 = vmatprep.subr.mxu0 %v5440
        %5602 = vmatpush1.msra.mxu0 %v5439
        %5603 = vmatprep.subr.mxu0 %v5436
        %5604 = vmatpush1.msra.mxu0 %v5435
        %5605 = vmatprep.subr.mxu0 %v5432
        %5606 = vmatpush1.msra.mxu0 %v5431
        %5607 = vmatprep.subr.mxu0 0.0
        %5608 = vmatpush2.msra.mxu0 0.0
        %5609 = vmatprep.subr.mxu0 0.0
        %5610 = vmatpush2.msra.mxu0 0.0
        %5611 = vmatprep.subr.mxu0 0.0
        %5612 = vmatpush2.msra.mxu0 0.0
        %5613 = vmatprep.subr.mxu0 0.0
        %5614 = vmatpush2.msra.mxu0 0.0
        %5615 = vmatprep.subr.mxu0 0.0
        %5616 = vmatpush2.msra.mxu0 0.0
        %5617 = vmatprep.subr.mxu0 0.0
        %5618 = vmatpush2.msra.mxu0 0.0
        %5619 = vmatprep.subr.mxu0 0.0
        %5620 = vmatpush2.msra.mxu0 0.0
        %5621 = vmatprep.subr.mxu0 0.0
        %5622 = vmatpush2.msra.mxu0 0.0
        %5623 = vmatprep.subr.mxu0 0.0
        %5624 = vmatpush2.msra.mxu0 0.0
        %5625 = vmatprep.subr.mxu0 0.0
        %5626 = vmatpush2.msra.mxu0 0.0
        %5627 = vmatprep.subr.mxu0 0.0
        %5628 = vmatpush2.msra.mxu0 0.0
        %5629 = vmatprep.subr.mxu0 0.0
        %5630 = vmatpush2.msra.mxu0 0.0
        %5631 = vmatprep.subr.mxu0 0.0
        %5632 = vmatpush2.msra.mxu0 0.0
        %5633 = vmatprep.subr.mxu0 0.0
        %5634 = vmatpush2.msra.mxu0 0.0
        %5635 = vmatprep.subr.mxu0 0.0
        %5636 = vmatpush2.msra.mxu0 0.0
        %5637 = vmatprep.subr.mxu0 0.0
        %5638 = vmatpush2.msra.mxu0 0.0
        %5639 = vmatprep.mubr.f32.mxu0 0.0
        %5640 = vmatmul.mubr.f32.gmra.mxu0 %v5500
        %v5641 = vpop.f32.mrf.mxu0
        %v5642 = vadd.f32 %v5571, %v5641
        %v5643 = vpop.f32.mrf.mxu0
        %v5644 = vadd.f32 %v5573, %v5643
        %5645 = vdwg.mxu0
        %5646 = vmatprep.subr.mxu0 %v5366
        %5647 = vmatpush1.msra.mxu0 %v5365
        %5648 = vmatprep.subr.mxu0 %v5362
        %5649 = vmatpush1.msra.mxu0 %v5361
        %5650 = vmatprep.subr.mxu0 %v5358
        %5651 = vmatpush1.msra.mxu0 %v5357
        %5652 = vmatprep.subr.mxu0 %v5354
        %5653 = vmatpush1.msra.mxu0 %v5353
        %5654 = vmatprep.subr.mxu0 %v5350
        %5655 = vmatpush1.msra.mxu0 %v5349
        %5656 = vmatprep.subr.mxu0 %v5346
        %5657 = vmatpush1.msra.mxu0 %v5345
        %5658 = vmatprep.subr.mxu0 %v5342
        %5659 = vmatpush1.msra.mxu0 %v5341
        %5660 = vmatprep.subr.mxu0 %v5338
        %5661 = vmatpush1.msra.mxu0 %v5337
        %5662 = vmatprep.subr.mxu0 %v5334
        %5663 = vmatpush1.msra.mxu0 %v5333
        %5664 = vmatprep.subr.mxu0 %v5330
        %5665 = vmatpush1.msra.mxu0 %v5329
        %5666 = vmatprep.subr.mxu0 %v5326
        %5667 = vmatpush1.msra.mxu0 %v5325
        %5668 = vmatprep.subr.mxu0 %v5322
        %5669 = vmatpush1.msra.mxu0 %v5321
        %5670 = vmatprep.subr.mxu0 %v5318
        %5671 = vmatpush1.msra.mxu0 %v5317
        %5672 = vmatprep.subr.mxu0 %v5314
        %5673 = vmatpush1.msra.mxu0 %v5313
        %5674 = vmatprep.subr.mxu0 %v5310
        %5675 = vmatpush1.msra.mxu0 %v5309
        %5676 = vmatprep.subr.mxu0 %v5306
        %5677 = vmatpush1.msra.mxu0 %v5305
        %5678 = vmatprep.subr.mxu0 %v5430
        %5679 = vmatpush2.msra.mxu0 %v5429
        %5680 = vmatprep.subr.mxu0 %v5426
        %5681 = vmatpush2.msra.mxu0 %v5425
        %5682 = vmatprep.subr.mxu0 %v5422
        %5683 = vmatpush2.msra.mxu0 %v5421
        %5684 = vmatprep.subr.mxu0 %v5418
        %5685 = vmatpush2.msra.mxu0 %v5417
        %5686 = vmatprep.subr.mxu0 %v5414
        %5687 = vmatpush2.msra.mxu0 %v5413
        %5688 = vmatprep.subr.mxu0 %v5410
        %5689 = vmatpush2.msra.mxu0 %v5409
        %5690 = vmatprep.subr.mxu0 %v5406
        %5691 = vmatpush2.msra.mxu0 %v5405
        %5692 = vmatprep.subr.mxu0 %v5402
        %5693 = vmatpush2.msra.mxu0 %v5401
        %5694 = vmatprep.subr.mxu0 %v5398
        %5695 = vmatpush2.msra.mxu0 %v5397
        %5696 = vmatprep.subr.mxu0 %v5394
        %5697 = vmatpush2.msra.mxu0 %v5393
        %5698 = vmatprep.subr.mxu0 %v5390
        %5699 = vmatpush2.msra.mxu0 %v5389
        %5700 = vmatprep.subr.mxu0 %v5386
        %5701 = vmatpush2.msra.mxu0 %v5385
        %5702 = vmatprep.subr.mxu0 %v5382
        %5703 = vmatpush2.msra.mxu0 %v5381
        %5704 = vmatprep.subr.mxu0 %v5378
        %5705 = vmatpush2.msra.mxu0 %v5377
        %5706 = vmatprep.subr.mxu0 %v5374
        %5707 = vmatpush2.msra.mxu0 %v5373
        %5708 = vmatprep.subr.mxu0 %v5370
        %5709 = vmatpush2.msra.mxu0 %v5369
        %5710 = vmatprep.mubr.f32.mxu0 %v5499
        %5711 = vmatmul.mubr.f32.gmra.mxu0 %v5498
        %v5712 = vpop.f32.mrf.mxu0
        %v5713 = vadd.f32 0.0, %v5712
        %v5714 = vpop.f32.mrf.mxu0
        %v5715 = vadd.f32 0.0, %v5714
        %5716 = vdwg.mxu0
        %5717 = vmatprep.subr.mxu0 %v5494
        %5718 = vmatpush1.msra.mxu0 %v5493
        %5719 = vmatprep.subr.mxu0 %v5490
        %5720 = vmatpush1.msra.mxu0 %v5489
        %5721 = vmatprep.subr.mxu0 %v5486
        %5722 = vmatpush1.msra.mxu0 %v5485
        %5723 = vmatprep.subr.mxu0 %v5482
        %5724 = vmatpush1.msra.mxu0 %v5481
        %5725 = vmatprep.subr.mxu0 %v5478
        %5726 = vmatpush1.msra.mxu0 %v5477
        %5727 = vmatprep.subr.mxu0 %v5474
        %5728 = vmatpush1.msra.mxu0 %v5473
        %5729 = vmatprep.subr.mxu0 %v5470
        %5730 = vmatpush1.msra.mxu0 %v5469
        %5731 = vmatprep.subr.mxu0 %v5466
        %5732 = vmatpush1.msra.mxu0 %v5465
        %5733 = vmatprep.subr.mxu0 %v5462
        %5734 = vmatpush1.msra.mxu0 %v5461
        %5735 = vmatprep.subr.mxu0 %v5458
        %5736 = vmatpush1.msra.mxu0 %v5457
        %5737 = vmatprep.subr.mxu0 %v5454
        %5738 = vmatpush1.msra.mxu0 %v5453
        %5739 = vmatprep.subr.mxu0 %v5450
        %5740 = vmatpush1.msra.mxu0 %v5449
        %5741 = vmatprep.subr.mxu0 %v5446
        %5742 = vmatpush1.msra.mxu0 %v5445
        %5743 = vmatprep.subr.mxu0 %v5442
        %5744 = vmatpush1.msra.mxu0 %v5441
        %5745 = vmatprep.subr.mxu0 %v5438
        %5746 = vmatpush1.msra.mxu0 %v5437
        %5747 = vmatprep.subr.mxu0 %v5434
        %5748 = vmatpush1.msra.mxu0 %v5433
        %5749 = vmatprep.subr.mxu0 0.0
        %5750 = vmatpush2.msra.mxu0 0.0
        %5751 = vmatprep.subr.mxu0 0.0
        %5752 = vmatpush2.msra.mxu0 0.0
        %5753 = vmatprep.subr.mxu0 0.0
        %5754 = vmatpush2.msra.mxu0 0.0
        %5755 = vmatprep.subr.mxu0 0.0
        %5756 = vmatpush2.msra.mxu0 0.0
        %5757 = vmatprep.subr.mxu0 0.0
        %5758 = vmatpush2.msra.mxu0 0.0
        %5759 = vmatprep.subr.mxu0 0.0
        %5760 = vmatpush2.msra.mxu0 0.0
        %5761 = vmatprep.subr.mxu0 0.0
        %5762 = vmatpush2.msra.mxu0 0.0
        %5763 = vmatprep.subr.mxu0 0.0
        %5764 = vmatpush2.msra.mxu0 0.0
        %5765 = vmatprep.subr.mxu0 0.0
        %5766 = vmatpush2.msra.mxu0 0.0
        %5767 = vmatprep.subr.mxu0 0.0
        %5768 = vmatpush2.msra.mxu0 0.0
        %5769 = vmatprep.subr.mxu0 0.0
        %5770 = vmatpush2.msra.mxu0 0.0
        %5771 = vmatprep.subr.mxu0 0.0
        %5772 = vmatpush2.msra.mxu0 0.0
        %5773 = vmatprep.subr.mxu0 0.0
        %5774 = vmatpush2.msra.mxu0 0.0
        %5775 = vmatprep.subr.mxu0 0.0
        %5776 = vmatpush2.msra.mxu0 0.0
        %5777 = vmatprep.subr.mxu0 0.0
        %5778 = vmatpush2.msra.mxu0 0.0
        %5779 = vmatprep.subr.mxu0 0.0
        %5780 = vmatpush2.msra.mxu0 0.0
        %5781 = vmatprep.mubr.f32.mxu0 0.0
        %5782 = vmatmul.mubr.f32.gmra.mxu0 %v5500
        %v5783 = vpop.f32.mrf.mxu0
        %v5784 = vadd.f32 %v5713, %v5783
        %v5785 = vpop.f32.mrf.mxu0
        %v5786 = vadd.f32 %v5715, %v5785
        %5787 = vdwg.mxu0
        %v5788 = vadd.f32 %v5057, %v5642
        %v5789 = vadd.f32 %v5059, %v5644
        %v5790 = vadd.f32 %v5199, %v5784
        %v5791 = vadd.f32 %v5201, %v5786
        %v5792 = vld [vmem:[#allocation28] sm:$0xf]
        %v5794 = vlaneseq
        %v5795 = vshrl.u32 %v5794, 7
        %v5796 = vsub.s32 0, %v5795
        %v5797 = vrot.slane %v5792, %v5796
        %v5798 = vlaneseq
        %v5799 = vshrl.u32 %v5798, 7
        %v5800 = vsub.s32 1, %v5799
        %v5801 = vrot.slane %v5792, %v5800
        %v5802 = vlaneseq
        %v5803 = vshrl.u32 %v5802, 7
        %v5804 = vsub.s32 2, %v5803
        %v5805 = vrot.slane %v5792, %v5804
        %v5806 = vlaneseq
        %v5807 = vshrl.u32 %v5806, 7
        %v5808 = vsub.s32 3, %v5807
        %v5809 = vrot.slane %v5792, %v5808
        %v5814 = vadd.f32 %v5788, %v5797
        %v5815 = vadd.f32 %v5789, %v5801
        %v5816 = vadd.f32 %v5790, %v5805
        %v5817 = vadd.f32 %v5791, %v5809
        %v5818 = vmul.f32 %v5814, 0.2
        %v5819 = vmul.f32 %v5815, 0.2
        %v5820 = vmul.f32 %v5816, 0.2
        %v5821 = vmul.f32 %v5817, 0.2
        %v5822 = vmax.f32 %v5814, %v5818
        %v5823 = vmax.f32 %v5815, %v5819
        %v5824 = vmax.f32 %v5816, %v5820
        %v5825 = vmax.f32 %v5817, %v5821
        %v5826 = vld [vmem:[#allocation31] sm:$0x1]
        %v5827 = vld [vmem:[#allocation29] sm:$0xff]
        %v5828 = vld [vmem:[#allocation29 + $0x8] sm:$0xff]
        %v5829 = vld [vmem:[#allocation29 + $0x10] sm:$0xff]
        %v5830 = vld [vmem:[#allocation29 + $0x18] sm:$0xff]
        %v5831 = vld [vmem:[#allocation29 + $0x20] sm:$0xff]
        %v5832 = vld [vmem:[#allocation29 + $0x28] sm:$0xff]
        %v5833 = vld [vmem:[#allocation29 + $0x30] sm:$0xff]
        %v5834 = vld [vmem:[#allocation29 + $0x38] sm:$0xff]
        %v5835 = vld [vmem:[#allocation29 + $0x40] sm:$0xff]
        %v5836 = vld [vmem:[#allocation29 + $0x48] sm:$0xff]
        %v5837 = vld [vmem:[#allocation29 + $0x50] sm:$0xff]
        %v5838 = vld [vmem:[#allocation29 + $0x58] sm:$0xff]
        %v5839 = vld [vmem:[#allocation29 + $0x60] sm:$0xff]
        %v5840 = vld [vmem:[#allocation29 + $0x68] sm:$0xff]
        %v5841 = vld [vmem:[#allocation29 + $0x70] sm:$0xff]
        %v5842 = vld [vmem:[#allocation29 + $0x78] sm:$0xff]
        %v5843 = vld [vmem:[#allocation29 + $0x80] sm:$0xff]
        %v5844 = vld [vmem:[#allocation29 + $0x88] sm:$0xff]
        %v5845 = vld [vmem:[#allocation29 + $0x90] sm:$0xff]
        %v5846 = vld [vmem:[#allocation29 + $0x98] sm:$0xff]
        %v5847 = vld [vmem:[#allocation29 + $0xa0] sm:$0xff]
        %v5848 = vld [vmem:[#allocation29 + $0xa8] sm:$0xff]
        %v5849 = vld [vmem:[#allocation29 + $0xb0] sm:$0xff]
        %v5850 = vld [vmem:[#allocation29 + $0xb8] sm:$0xff]
        %v5851 = vld [vmem:[#allocation29 + $0xc0] sm:$0xff]
        %v5852 = vld [vmem:[#allocation29 + $0xc8] sm:$0xff]
        %v5853 = vld [vmem:[#allocation29 + $0xd0] sm:$0xff]
        %v5854 = vld [vmem:[#allocation29 + $0xd8] sm:$0xff]
        %v5855 = vld [vmem:[#allocation29 + $0xe0] sm:$0xff]
        %v5856 = vld [vmem:[#allocation29 + $0xe8] sm:$0xff]
        %v5857 = vld [vmem:[#allocation29 + $0xf0] sm:$0xff]
        %v5858 = vld [vmem:[#allocation29 + $0xf8] sm:$0xff]
        %v5859 = vld [vmem:[#allocation29 + $0x100] sm:$0xff]
        %v5860 = vld [vmem:[#allocation29 + $0x108] sm:$0xff]
        %v5861 = vld [vmem:[#allocation29 + $0x110] sm:$0xff]
        %v5862 = vld [vmem:[#allocation29 + $0x118] sm:$0xff]
        %v5863 = vld [vmem:[#allocation29 + $0x120] sm:$0xff]
        %v5864 = vld [vmem:[#allocation29 + $0x128] sm:$0xff]
        %v5865 = vld [vmem:[#allocation29 + $0x130] sm:$0xff]
        %v5866 = vld [vmem:[#allocation29 + $0x138] sm:$0xff]
        %v5867 = vld [vmem:[#allocation29 + $0x140] sm:$0xff]
        %v5868 = vld [vmem:[#allocation29 + $0x148] sm:$0xff]
        %v5869 = vld [vmem:[#allocation29 + $0x150] sm:$0xff]
        %v5870 = vld [vmem:[#allocation29 + $0x158] sm:$0xff]
        %v5871 = vld [vmem:[#allocation29 + $0x160] sm:$0xff]
        %v5872 = vld [vmem:[#allocation29 + $0x168] sm:$0xff]
        %v5873 = vld [vmem:[#allocation29 + $0x170] sm:$0xff]
        %v5874 = vld [vmem:[#allocation29 + $0x178] sm:$0xff]
        %v5875 = vld [vmem:[#allocation29 + $0x180] sm:$0xff]
        %v5876 = vld [vmem:[#allocation29 + $0x188] sm:$0xff]
        %v5877 = vld [vmem:[#allocation29 + $0x190] sm:$0xff]
        %v5878 = vld [vmem:[#allocation29 + $0x198] sm:$0xff]
        %v5879 = vld [vmem:[#allocation29 + $0x1a0] sm:$0xff]
        %v5880 = vld [vmem:[#allocation29 + $0x1a8] sm:$0xff]
        %v5881 = vld [vmem:[#allocation29 + $0x1b0] sm:$0xff]
        %v5882 = vld [vmem:[#allocation29 + $0x1b8] sm:$0xff]
        %v5883 = vld [vmem:[#allocation29 + $0x1c0] sm:$0xff]
        %v5884 = vld [vmem:[#allocation29 + $0x1c8] sm:$0xff]
        %v5885 = vld [vmem:[#allocation29 + $0x1d0] sm:$0xff]
        %v5886 = vld [vmem:[#allocation29 + $0x1d8] sm:$0xff]
        %v5887 = vld [vmem:[#allocation29 + $0x1e0] sm:$0xff]
        %v5888 = vld [vmem:[#allocation29 + $0x1e8] sm:$0xff]
        %v5889 = vld [vmem:[#allocation29 + $0x1f0] sm:$0xff]
        %v5890 = vld [vmem:[#allocation29 + $0x1f8] sm:$0xff]
        %5891 = vmatprep.subr.mxu0 0.0
        %5892 = vmatpush1.msra.mxu0 %v5842
        %5893 = vmatprep.subr.mxu0 0.0
        %5894 = vmatpush1.msra.mxu0 %v5841
        %5895 = vmatprep.subr.mxu0 0.0
        %5896 = vmatpush1.msra.mxu0 %v5840
        %5897 = vmatprep.subr.mxu0 0.0
        %5898 = vmatpush1.msra.mxu0 %v5839
        %5899 = vmatprep.subr.mxu0 0.0
        %5900 = vmatpush1.msra.mxu0 %v5838
        %5901 = vmatprep.subr.mxu0 0.0
        %5902 = vmatpush1.msra.mxu0 %v5837
        %5903 = vmatprep.subr.mxu0 0.0
        %5904 = vmatpush1.msra.mxu0 %v5836
        %5905 = vmatprep.subr.mxu0 0.0
        %5906 = vmatpush1.msra.mxu0 %v5835
        %5907 = vmatprep.subr.mxu0 0.0
        %5908 = vmatpush1.msra.mxu0 %v5834
        %5909 = vmatprep.subr.mxu0 0.0
        %5910 = vmatpush1.msra.mxu0 %v5833
        %5911 = vmatprep.subr.mxu0 0.0
        %5912 = vmatpush1.msra.mxu0 %v5832
        %5913 = vmatprep.subr.mxu0 0.0
        %5914 = vmatpush1.msra.mxu0 %v5831
        %5915 = vmatprep.subr.mxu0 0.0
        %5916 = vmatpush1.msra.mxu0 %v5830
        %5917 = vmatprep.subr.mxu0 0.0
        %5918 = vmatpush1.msra.mxu0 %v5829
        %5919 = vmatprep.subr.mxu0 0.0
        %5920 = vmatpush1.msra.mxu0 %v5828
        %5921 = vmatprep.subr.mxu0 0.0
        %5922 = vmatpush1.msra.mxu0 %v5827
        %5923 = vmatprep.subr.mxu0 0.0
        %5924 = vmatpush2.msra.mxu0 %v5858
        %5925 = vmatprep.subr.mxu0 0.0
        %5926 = vmatpush2.msra.mxu0 %v5857
        %5927 = vmatprep.subr.mxu0 0.0
        %5928 = vmatpush2.msra.mxu0 %v5856
        %5929 = vmatprep.subr.mxu0 0.0
        %5930 = vmatpush2.msra.mxu0 %v5855
        %5931 = vmatprep.subr.mxu0 0.0
        %5932 = vmatpush2.msra.mxu0 %v5854
        %5933 = vmatprep.subr.mxu0 0.0
        %5934 = vmatpush2.msra.mxu0 %v5853
        %5935 = vmatprep.subr.mxu0 0.0
        %5936 = vmatpush2.msra.mxu0 %v5852
        %5937 = vmatprep.subr.mxu0 0.0
        %5938 = vmatpush2.msra.mxu0 %v5851
        %5939 = vmatprep.subr.mxu0 0.0
        %5940 = vmatpush2.msra.mxu0 %v5850
        %5941 = vmatprep.subr.mxu0 0.0
        %5942 = vmatpush2.msra.mxu0 %v5849
        %5943 = vmatprep.subr.mxu0 0.0
        %5944 = vmatpush2.msra.mxu0 %v5848
        %5945 = vmatprep.subr.mxu0 0.0
        %5946 = vmatpush2.msra.mxu0 %v5847
        %5947 = vmatprep.subr.mxu0 0.0
        %5948 = vmatpush2.msra.mxu0 %v5846
        %5949 = vmatprep.subr.mxu0 0.0
        %5950 = vmatpush2.msra.mxu0 %v5845
        %5951 = vmatprep.subr.mxu0 0.0
        %5952 = vmatpush2.msra.mxu0 %v5844
        %5953 = vmatprep.subr.mxu0 0.0
        %5954 = vmatpush2.msra.mxu0 %v5843
        %5955 = vmatprep.mubr.f32.mxu0 %v5823
        %5956 = vmatmul.mubr.f32.gmra.mxu0 %v5822
        %v5957 = vpop.f32.mrf.mxu0
        %v5958 = vadd.f32 0.0, %v5957
        %v5959 = vpop.f32.mrf.mxu0
        %5960 = vdwg.mxu0
        %5961 = vmatprep.subr.mxu0 0.0
        %5962 = vmatpush1.msra.mxu0 %v5874
        %5963 = vmatprep.subr.mxu0 0.0
        %5964 = vmatpush1.msra.mxu0 %v5873
        %5965 = vmatprep.subr.mxu0 0.0
        %5966 = vmatpush1.msra.mxu0 %v5872
        %5967 = vmatprep.subr.mxu0 0.0
        %5968 = vmatpush1.msra.mxu0 %v5871
        %5969 = vmatprep.subr.mxu0 0.0
        %5970 = vmatpush1.msra.mxu0 %v5870
        %5971 = vmatprep.subr.mxu0 0.0
        %5972 = vmatpush1.msra.mxu0 %v5869
        %5973 = vmatprep.subr.mxu0 0.0
        %5974 = vmatpush1.msra.mxu0 %v5868
        %5975 = vmatprep.subr.mxu0 0.0
        %5976 = vmatpush1.msra.mxu0 %v5867
        %5977 = vmatprep.subr.mxu0 0.0
        %5978 = vmatpush1.msra.mxu0 %v5866
        %5979 = vmatprep.subr.mxu0 0.0
        %5980 = vmatpush1.msra.mxu0 %v5865
        %5981 = vmatprep.subr.mxu0 0.0
        %5982 = vmatpush1.msra.mxu0 %v5864
        %5983 = vmatprep.subr.mxu0 0.0
        %5984 = vmatpush1.msra.mxu0 %v5863
        %5985 = vmatprep.subr.mxu0 0.0
        %5986 = vmatpush1.msra.mxu0 %v5862
        %5987 = vmatprep.subr.mxu0 0.0
        %5988 = vmatpush1.msra.mxu0 %v5861
        %5989 = vmatprep.subr.mxu0 0.0
        %5990 = vmatpush1.msra.mxu0 %v5860
        %5991 = vmatprep.subr.mxu0 0.0
        %5992 = vmatpush1.msra.mxu0 %v5859
        %5993 = vmatprep.subr.mxu0 0.0
        %5994 = vmatpush2.msra.mxu0 %v5890
        %5995 = vmatprep.subr.mxu0 0.0
        %5996 = vmatpush2.msra.mxu0 %v5889
        %5997 = vmatprep.subr.mxu0 0.0
        %5998 = vmatpush2.msra.mxu0 %v5888
        %5999 = vmatprep.subr.mxu0 0.0
        %6000 = vmatpush2.msra.mxu0 %v5887
        %6001 = vmatprep.subr.mxu0 0.0
        %6002 = vmatpush2.msra.mxu0 %v5886
        %6003 = vmatprep.subr.mxu0 0.0
        %6004 = vmatpush2.msra.mxu0 %v5885
        %6005 = vmatprep.subr.mxu0 0.0
        %6006 = vmatpush2.msra.mxu0 %v5884
        %6007 = vmatprep.subr.mxu0 0.0
        %6008 = vmatpush2.msra.mxu0 %v5883
        %6009 = vmatprep.subr.mxu0 0.0
        %6010 = vmatpush2.msra.mxu0 %v5882
        %6011 = vmatprep.subr.mxu0 0.0
        %6012 = vmatpush2.msra.mxu0 %v5881
        %6013 = vmatprep.subr.mxu0 0.0
        %6014 = vmatpush2.msra.mxu0 %v5880
        %6015 = vmatprep.subr.mxu0 0.0
        %6016 = vmatpush2.msra.mxu0 %v5879
        %6017 = vmatprep.subr.mxu0 0.0
        %6018 = vmatpush2.msra.mxu0 %v5878
        %6019 = vmatprep.subr.mxu0 0.0
        %6020 = vmatpush2.msra.mxu0 %v5877
        %6021 = vmatprep.subr.mxu0 0.0
        %6022 = vmatpush2.msra.mxu0 %v5876
        %6023 = vmatprep.subr.mxu0 0.0
        %6024 = vmatpush2.msra.mxu0 %v5875
        %6025 = vmatprep.mubr.f32.mxu0 %v5825
        %6026 = vmatmul.mubr.f32.gmra.mxu0 %v5824
        %v6027 = vpop.f32.mrf.mxu0
        %v6028 = vadd.f32 %v5958, %v6027
        %v6029 = vpop.f32.mrf.mxu0
        %6030 = vdwg.mxu0
        %v6031 = vadd.f32 %v5826, %v6028
        %s6032 = scalar_lea.vmem [#allocation29], 512
        %v6033 = vld [vmem:[%s6032] sm:$0xff]
        %v6034 = vld [vmem:[%s6032 + $0x8] sm:$0xff]
        %v6035 = vld [vmem:[%s6032 + $0x10] sm:$0xff]
        %v6036 = vld [vmem:[%s6032 + $0x18] sm:$0xff]
        %v6037 = vld [vmem:[%s6032 + $0x20] sm:$0xff]
        %v6038 = vld [vmem:[%s6032 + $0x28] sm:$0xff]
        %v6039 = vld [vmem:[%s6032 + $0x30] sm:$0xff]
        %v6040 = vld [vmem:[%s6032 + $0x38] sm:$0xff]
        %v6041 = vld [vmem:[%s6032 + $0x40] sm:$0xff]
        %v6042 = vld [vmem:[%s6032 + $0x48] sm:$0xff]
        %v6043 = vld [vmem:[%s6032 + $0x50] sm:$0xff]
        %v6044 = vld [vmem:[%s6032 + $0x58] sm:$0xff]
        %v6045 = vld [vmem:[%s6032 + $0x60] sm:$0xff]
        %v6046 = vld [vmem:[%s6032 + $0x68] sm:$0xff]
        %v6047 = vld [vmem:[%s6032 + $0x70] sm:$0xff]
        %v6048 = vld [vmem:[%s6032 + $0x78] sm:$0xff]
        %v6049 = vld [vmem:[%s6032 + $0x80] sm:$0xff]
        %v6050 = vld [vmem:[%s6032 + $0x88] sm:$0xff]
        %v6051 = vld [vmem:[%s6032 + $0x90] sm:$0xff]
        %v6052 = vld [vmem:[%s6032 + $0x98] sm:$0xff]
        %v6053 = vld [vmem:[%s6032 + $0xa0] sm:$0xff]
        %v6054 = vld [vmem:[%s6032 + $0xa8] sm:$0xff]
        %v6055 = vld [vmem:[%s6032 + $0xb0] sm:$0xff]
        %v6056 = vld [vmem:[%s6032 + $0xb8] sm:$0xff]
        %v6057 = vld [vmem:[%s6032 + $0xc0] sm:$0xff]
        %v6058 = vld [vmem:[%s6032 + $0xc8] sm:$0xff]
        %v6059 = vld [vmem:[%s6032 + $0xd0] sm:$0xff]
        %v6060 = vld [vmem:[%s6032 + $0xd8] sm:$0xff]
        %v6061 = vld [vmem:[%s6032 + $0xe0] sm:$0xff]
        %v6062 = vld [vmem:[%s6032 + $0xe8] sm:$0xff]
        %v6063 = vld [vmem:[%s6032 + $0xf0] sm:$0xff]
        %v6064 = vld [vmem:[%s6032 + $0xf8] sm:$0xff]
        %v6065 = vld [vmem:[%s6032 + $0x100] sm:$0xff]
        %v6066 = vld [vmem:[%s6032 + $0x108] sm:$0xff]
        %v6067 = vld [vmem:[%s6032 + $0x110] sm:$0xff]
        %v6068 = vld [vmem:[%s6032 + $0x118] sm:$0xff]
        %v6069 = vld [vmem:[%s6032 + $0x120] sm:$0xff]
        %v6070 = vld [vmem:[%s6032 + $0x128] sm:$0xff]
        %v6071 = vld [vmem:[%s6032 + $0x130] sm:$0xff]
        %v6072 = vld [vmem:[%s6032 + $0x138] sm:$0xff]
        %v6073 = vld [vmem:[%s6032 + $0x140] sm:$0xff]
        %v6074 = vld [vmem:[%s6032 + $0x148] sm:$0xff]
        %v6075 = vld [vmem:[%s6032 + $0x150] sm:$0xff]
        %v6076 = vld [vmem:[%s6032 + $0x158] sm:$0xff]
        %v6077 = vld [vmem:[%s6032 + $0x160] sm:$0xff]
        %v6078 = vld [vmem:[%s6032 + $0x168] sm:$0xff]
        %v6079 = vld [vmem:[%s6032 + $0x170] sm:$0xff]
        %v6080 = vld [vmem:[%s6032 + $0x178] sm:$0xff]
        %v6081 = vld [vmem:[%s6032 + $0x180] sm:$0xff]
        %v6082 = vld [vmem:[%s6032 + $0x188] sm:$0xff]
        %v6083 = vld [vmem:[%s6032 + $0x190] sm:$0xff]
        %v6084 = vld [vmem:[%s6032 + $0x198] sm:$0xff]
        %v6085 = vld [vmem:[%s6032 + $0x1a0] sm:$0xff]
        %v6086 = vld [vmem:[%s6032 + $0x1a8] sm:$0xff]
        %v6087 = vld [vmem:[%s6032 + $0x1b0] sm:$0xff]
        %v6088 = vld [vmem:[%s6032 + $0x1b8] sm:$0xff]
        %v6089 = vld [vmem:[%s6032 + $0x1c0] sm:$0xff]
        %v6090 = vld [vmem:[%s6032 + $0x1c8] sm:$0xff]
        %v6091 = vld [vmem:[%s6032 + $0x1d0] sm:$0xff]
        %v6092 = vld [vmem:[%s6032 + $0x1d8] sm:$0xff]
        %v6093 = vld [vmem:[%s6032 + $0x1e0] sm:$0xff]
        %v6094 = vld [vmem:[%s6032 + $0x1e8] sm:$0xff]
        %v6095 = vld [vmem:[%s6032 + $0x1f0] sm:$0xff]
        %v6096 = vld [vmem:[%s6032 + $0x1f8] sm:$0xff]
        %v6101 = vrot.slane %v5822, 1
        %v6102 = vrot.slane %v5823, 1
        %v6103 = vrot.slane %v5824, 1
        %v6104 = vrot.slane %v5825, 1
        %6109 = vmatprep.subr.mxu0 0.0
        %6110 = vmatpush1.msra.mxu0 %v6048
        %6111 = vmatprep.subr.mxu0 0.0
        %6112 = vmatpush1.msra.mxu0 %v6047
        %6113 = vmatprep.subr.mxu0 0.0
        %6114 = vmatpush1.msra.mxu0 %v6046
        %6115 = vmatprep.subr.mxu0 0.0
        %6116 = vmatpush1.msra.mxu0 %v6045
        %6117 = vmatprep.subr.mxu0 0.0
        %6118 = vmatpush1.msra.mxu0 %v6044
        %6119 = vmatprep.subr.mxu0 0.0
        %6120 = vmatpush1.msra.mxu0 %v6043
        %6121 = vmatprep.subr.mxu0 0.0
        %6122 = vmatpush1.msra.mxu0 %v6042
        %6123 = vmatprep.subr.mxu0 0.0
        %6124 = vmatpush1.msra.mxu0 %v6041
        %6125 = vmatprep.subr.mxu0 0.0
        %6126 = vmatpush1.msra.mxu0 %v6040
        %6127 = vmatprep.subr.mxu0 0.0
        %6128 = vmatpush1.msra.mxu0 %v6039
        %6129 = vmatprep.subr.mxu0 0.0
        %6130 = vmatpush1.msra.mxu0 %v6038
        %6131 = vmatprep.subr.mxu0 0.0
        %6132 = vmatpush1.msra.mxu0 %v6037
        %6133 = vmatprep.subr.mxu0 0.0
        %6134 = vmatpush1.msra.mxu0 %v6036
        %6135 = vmatprep.subr.mxu0 0.0
        %6136 = vmatpush1.msra.mxu0 %v6035
        %6137 = vmatprep.subr.mxu0 0.0
        %6138 = vmatpush1.msra.mxu0 %v6034
        %6139 = vmatprep.subr.mxu0 0.0
        %6140 = vmatpush1.msra.mxu0 %v6033
        %6141 = vmatprep.subr.mxu0 0.0
        %6142 = vmatpush2.msra.mxu0 %v6064
        %6143 = vmatprep.subr.mxu0 0.0
        %6144 = vmatpush2.msra.mxu0 %v6063
        %6145 = vmatprep.subr.mxu0 0.0
        %6146 = vmatpush2.msra.mxu0 %v6062
        %6147 = vmatprep.subr.mxu0 0.0
        %6148 = vmatpush2.msra.mxu0 %v6061
        %6149 = vmatprep.subr.mxu0 0.0
        %6150 = vmatpush2.msra.mxu0 %v6060
        %6151 = vmatprep.subr.mxu0 0.0
        %6152 = vmatpush2.msra.mxu0 %v6059
        %6153 = vmatprep.subr.mxu0 0.0
        %6154 = vmatpush2.msra.mxu0 %v6058
        %6155 = vmatprep.subr.mxu0 0.0
        %6156 = vmatpush2.msra.mxu0 %v6057
        %6157 = vmatprep.subr.mxu0 0.0
        %6158 = vmatpush2.msra.mxu0 %v6056
        %6159 = vmatprep.subr.mxu0 0.0
        %6160 = vmatpush2.msra.mxu0 %v6055
        %6161 = vmatprep.subr.mxu0 0.0
        %6162 = vmatpush2.msra.mxu0 %v6054
        %6163 = vmatprep.subr.mxu0 0.0
        %6164 = vmatpush2.msra.mxu0 %v6053
        %6165 = vmatprep.subr.mxu0 0.0
        %6166 = vmatpush2.msra.mxu0 %v6052
        %6167 = vmatprep.subr.mxu0 0.0
        %6168 = vmatpush2.msra.mxu0 %v6051
        %6169 = vmatprep.subr.mxu0 0.0
        %6170 = vmatpush2.msra.mxu0 %v6050
        %6171 = vmatprep.subr.mxu0 0.0
        %6172 = vmatpush2.msra.mxu0 %v6049
        %6173 = vmatprep.mubr.f32.mxu0 %v6102
        %6174 = vmatmul.mubr.f32.gmra.mxu0 %v6101
        %v6175 = vpop.f32.mrf.mxu0
        %v6176 = vadd.f32 0.0, %v6175
        %v6177 = vpop.f32.mrf.mxu0
        %6178 = vdwg.mxu0
        %6179 = vmatprep.subr.mxu0 0.0
        %6180 = vmatpush1.msra.mxu0 %v6080
        %6181 = vmatprep.subr.mxu0 0.0
        %6182 = vmatpush1.msra.mxu0 %v6079
        %6183 = vmatprep.subr.mxu0 0.0
        %6184 = vmatpush1.msra.mxu0 %v6078
        %6185 = vmatprep.subr.mxu0 0.0
        %6186 = vmatpush1.msra.mxu0 %v6077
        %6187 = vmatprep.subr.mxu0 0.0
        %6188 = vmatpush1.msra.mxu0 %v6076
        %6189 = vmatprep.subr.mxu0 0.0
        %6190 = vmatpush1.msra.mxu0 %v6075
        %6191 = vmatprep.subr.mxu0 0.0
        %6192 = vmatpush1.msra.mxu0 %v6074
        %6193 = vmatprep.subr.mxu0 0.0
        %6194 = vmatpush1.msra.mxu0 %v6073
        %6195 = vmatprep.subr.mxu0 0.0
        %6196 = vmatpush1.msra.mxu0 %v6072
        %6197 = vmatprep.subr.mxu0 0.0
        %6198 = vmatpush1.msra.mxu0 %v6071
        %6199 = vmatprep.subr.mxu0 0.0
        %6200 = vmatpush1.msra.mxu0 %v6070
        %6201 = vmatprep.subr.mxu0 0.0
        %6202 = vmatpush1.msra.mxu0 %v6069
        %6203 = vmatprep.subr.mxu0 0.0
        %6204 = vmatpush1.msra.mxu0 %v6068
        %6205 = vmatprep.subr.mxu0 0.0
        %6206 = vmatpush1.msra.mxu0 %v6067
        %6207 = vmatprep.subr.mxu0 0.0
        %6208 = vmatpush1.msra.mxu0 %v6066
        %6209 = vmatprep.subr.mxu0 0.0
        %6210 = vmatpush1.msra.mxu0 %v6065
        %6211 = vmatprep.subr.mxu0 0.0
        %6212 = vmatpush2.msra.mxu0 %v6096
        %6213 = vmatprep.subr.mxu0 0.0
        %6214 = vmatpush2.msra.mxu0 %v6095
        %6215 = vmatprep.subr.mxu0 0.0
        %6216 = vmatpush2.msra.mxu0 %v6094
        %6217 = vmatprep.subr.mxu0 0.0
        %6218 = vmatpush2.msra.mxu0 %v6093
        %6219 = vmatprep.subr.mxu0 0.0
        %6220 = vmatpush2.msra.mxu0 %v6092
        %6221 = vmatprep.subr.mxu0 0.0
        %6222 = vmatpush2.msra.mxu0 %v6091
        %6223 = vmatprep.subr.mxu0 0.0
        %6224 = vmatpush2.msra.mxu0 %v6090
        %6225 = vmatprep.subr.mxu0 0.0
        %6226 = vmatpush2.msra.mxu0 %v6089
        %6227 = vmatprep.subr.mxu0 0.0
        %6228 = vmatpush2.msra.mxu0 %v6088
        %6229 = vmatprep.subr.mxu0 0.0
        %6230 = vmatpush2.msra.mxu0 %v6087
        %6231 = vmatprep.subr.mxu0 0.0
        %6232 = vmatpush2.msra.mxu0 %v6086
        %6233 = vmatprep.subr.mxu0 0.0
        %6234 = vmatpush2.msra.mxu0 %v6085
        %6235 = vmatprep.subr.mxu0 0.0
        %6236 = vmatpush2.msra.mxu0 %v6084
        %6237 = vmatprep.subr.mxu0 0.0
        %6238 = vmatpush2.msra.mxu0 %v6083
        %6239 = vmatprep.subr.mxu0 0.0
        %6240 = vmatpush2.msra.mxu0 %v6082
        %6241 = vmatprep.subr.mxu0 0.0
        %6242 = vmatpush2.msra.mxu0 %v6081
        %6243 = vmatprep.mubr.f32.mxu0 %v6104
        %6244 = vmatmul.mubr.f32.gmra.mxu0 %v6103
        %v6245 = vpop.f32.mrf.mxu0
        %v6246 = vadd.f32 %v6176, %v6245
        %v6247 = vpop.f32.mrf.mxu0
        %6248 = vdwg.mxu0
        %v6249 = vadd.f32 %v6031, %v6246
        %s6250 = scalar_lea.vmem [#allocation29], 1024
        %v6251 = vld [vmem:[%s6250] sm:$0xff]
        %v6252 = vld [vmem:[%s6250 + $0x8] sm:$0xff]
        %v6253 = vld [vmem:[%s6250 + $0x10] sm:$0xff]
        %v6254 = vld [vmem:[%s6250 + $0x18] sm:$0xff]
        %v6255 = vld [vmem:[%s6250 + $0x20] sm:$0xff]
        %v6256 = vld [vmem:[%s6250 + $0x28] sm:$0xff]
        %v6257 = vld [vmem:[%s6250 + $0x30] sm:$0xff]
        %v6258 = vld [vmem:[%s6250 + $0x38] sm:$0xff]
        %v6259 = vld [vmem:[%s6250 + $0x40] sm:$0xff]
        %v6260 = vld [vmem:[%s6250 + $0x48] sm:$0xff]
        %v6261 = vld [vmem:[%s6250 + $0x50] sm:$0xff]
        %v6262 = vld [vmem:[%s6250 + $0x58] sm:$0xff]
        %v6263 = vld [vmem:[%s6250 + $0x60] sm:$0xff]
        %v6264 = vld [vmem:[%s6250 + $0x68] sm:$0xff]
        %v6265 = vld [vmem:[%s6250 + $0x70] sm:$0xff]
        %v6266 = vld [vmem:[%s6250 + $0x78] sm:$0xff]
        %v6267 = vld [vmem:[%s6250 + $0x80] sm:$0xff]
        %v6268 = vld [vmem:[%s6250 + $0x88] sm:$0xff]
        %v6269 = vld [vmem:[%s6250 + $0x90] sm:$0xff]
        %v6270 = vld [vmem:[%s6250 + $0x98] sm:$0xff]
        %v6271 = vld [vmem:[%s6250 + $0xa0] sm:$0xff]
        %v6272 = vld [vmem:[%s6250 + $0xa8] sm:$0xff]
        %v6273 = vld [vmem:[%s6250 + $0xb0] sm:$0xff]
        %v6274 = vld [vmem:[%s6250 + $0xb8] sm:$0xff]
        %v6275 = vld [vmem:[%s6250 + $0xc0] sm:$0xff]
        %v6276 = vld [vmem:[%s6250 + $0xc8] sm:$0xff]
        %v6277 = vld [vmem:[%s6250 + $0xd0] sm:$0xff]
        %v6278 = vld [vmem:[%s6250 + $0xd8] sm:$0xff]
        %v6279 = vld [vmem:[%s6250 + $0xe0] sm:$0xff]
        %v6280 = vld [vmem:[%s6250 + $0xe8] sm:$0xff]
        %v6281 = vld [vmem:[%s6250 + $0xf0] sm:$0xff]
        %v6282 = vld [vmem:[%s6250 + $0xf8] sm:$0xff]
        %v6283 = vld [vmem:[%s6250 + $0x100] sm:$0xff]
        %v6284 = vld [vmem:[%s6250 + $0x108] sm:$0xff]
        %v6285 = vld [vmem:[%s6250 + $0x110] sm:$0xff]
        %v6286 = vld [vmem:[%s6250 + $0x118] sm:$0xff]
        %v6287 = vld [vmem:[%s6250 + $0x120] sm:$0xff]
        %v6288 = vld [vmem:[%s6250 + $0x128] sm:$0xff]
        %v6289 = vld [vmem:[%s6250 + $0x130] sm:$0xff]
        %v6290 = vld [vmem:[%s6250 + $0x138] sm:$0xff]
        %v6291 = vld [vmem:[%s6250 + $0x140] sm:$0xff]
        %v6292 = vld [vmem:[%s6250 + $0x148] sm:$0xff]
        %v6293 = vld [vmem:[%s6250 + $0x150] sm:$0xff]
        %v6294 = vld [vmem:[%s6250 + $0x158] sm:$0xff]
        %v6295 = vld [vmem:[%s6250 + $0x160] sm:$0xff]
        %v6296 = vld [vmem:[%s6250 + $0x168] sm:$0xff]
        %v6297 = vld [vmem:[%s6250 + $0x170] sm:$0xff]
        %v6298 = vld [vmem:[%s6250 + $0x178] sm:$0xff]
        %v6299 = vld [vmem:[%s6250 + $0x180] sm:$0xff]
        %v6300 = vld [vmem:[%s6250 + $0x188] sm:$0xff]
        %v6301 = vld [vmem:[%s6250 + $0x190] sm:$0xff]
        %v6302 = vld [vmem:[%s6250 + $0x198] sm:$0xff]
        %v6303 = vld [vmem:[%s6250 + $0x1a0] sm:$0xff]
        %v6304 = vld [vmem:[%s6250 + $0x1a8] sm:$0xff]
        %v6305 = vld [vmem:[%s6250 + $0x1b0] sm:$0xff]
        %v6306 = vld [vmem:[%s6250 + $0x1b8] sm:$0xff]
        %v6307 = vld [vmem:[%s6250 + $0x1c0] sm:$0xff]
        %v6308 = vld [vmem:[%s6250 + $0x1c8] sm:$0xff]
        %v6309 = vld [vmem:[%s6250 + $0x1d0] sm:$0xff]
        %v6310 = vld [vmem:[%s6250 + $0x1d8] sm:$0xff]
        %v6311 = vld [vmem:[%s6250 + $0x1e0] sm:$0xff]
        %v6312 = vld [vmem:[%s6250 + $0x1e8] sm:$0xff]
        %v6313 = vld [vmem:[%s6250 + $0x1f0] sm:$0xff]
        %v6314 = vld [vmem:[%s6250 + $0x1f8] sm:$0xff]
        %v6315 = vrot.slane %v5822, 2
        %v6316 = vrot.slane %v5823, 2
        %v6317 = vrot.slane %v5824, 2
        %v6318 = vrot.slane %v5825, 2
        %6323 = vmatprep.subr.mxu0 0.0
        %6324 = vmatpush1.msra.mxu0 %v6266
        %6325 = vmatprep.subr.mxu0 0.0
        %6326 = vmatpush1.msra.mxu0 %v6265
        %6327 = vmatprep.subr.mxu0 0.0
        %6328 = vmatpush1.msra.mxu0 %v6264
        %6329 = vmatprep.subr.mxu0 0.0
        %6330 = vmatpush1.msra.mxu0 %v6263
        %6331 = vmatprep.subr.mxu0 0.0
        %6332 = vmatpush1.msra.mxu0 %v6262
        %6333 = vmatprep.subr.mxu0 0.0
        %6334 = vmatpush1.msra.mxu0 %v6261
        %6335 = vmatprep.subr.mxu0 0.0
        %6336 = vmatpush1.msra.mxu0 %v6260
        %6337 = vmatprep.subr.mxu0 0.0
        %6338 = vmatpush1.msra.mxu0 %v6259
        %6339 = vmatprep.subr.mxu0 0.0
        %6340 = vmatpush1.msra.mxu0 %v6258
        %6341 = vmatprep.subr.mxu0 0.0
        %6342 = vmatpush1.msra.mxu0 %v6257
        %6343 = vmatprep.subr.mxu0 0.0
        %6344 = vmatpush1.msra.mxu0 %v6256
        %6345 = vmatprep.subr.mxu0 0.0
        %6346 = vmatpush1.msra.mxu0 %v6255
        %6347 = vmatprep.subr.mxu0 0.0
        %6348 = vmatpush1.msra.mxu0 %v6254
        %6349 = vmatprep.subr.mxu0 0.0
        %6350 = vmatpush1.msra.mxu0 %v6253
        %6351 = vmatprep.subr.mxu0 0.0
        %6352 = vmatpush1.msra.mxu0 %v6252
        %6353 = vmatprep.subr.mxu0 0.0
        %6354 = vmatpush1.msra.mxu0 %v6251
        %6355 = vmatprep.subr.mxu0 0.0
        %6356 = vmatpush2.msra.mxu0 %v6282
        %6357 = vmatprep.subr.mxu0 0.0
        %6358 = vmatpush2.msra.mxu0 %v6281
        %6359 = vmatprep.subr.mxu0 0.0
        %6360 = vmatpush2.msra.mxu0 %v6280
        %6361 = vmatprep.subr.mxu0 0.0
        %6362 = vmatpush2.msra.mxu0 %v6279
        %6363 = vmatprep.subr.mxu0 0.0
        %6364 = vmatpush2.msra.mxu0 %v6278
        %6365 = vmatprep.subr.mxu0 0.0
        %6366 = vmatpush2.msra.mxu0 %v6277
        %6367 = vmatprep.subr.mxu0 0.0
        %6368 = vmatpush2.msra.mxu0 %v6276
        %6369 = vmatprep.subr.mxu0 0.0
        %6370 = vmatpush2.msra.mxu0 %v6275
        %6371 = vmatprep.subr.mxu0 0.0
        %6372 = vmatpush2.msra.mxu0 %v6274
        %6373 = vmatprep.subr.mxu0 0.0
        %6374 = vmatpush2.msra.mxu0 %v6273
        %6375 = vmatprep.subr.mxu0 0.0
        %6376 = vmatpush2.msra.mxu0 %v6272
        %6377 = vmatprep.subr.mxu0 0.0
        %6378 = vmatpush2.msra.mxu0 %v6271
        %6379 = vmatprep.subr.mxu0 0.0
        %6380 = vmatpush2.msra.mxu0 %v6270
        %6381 = vmatprep.subr.mxu0 0.0
        %6382 = vmatpush2.msra.mxu0 %v6269
        %6383 = vmatprep.subr.mxu0 0.0
        %6384 = vmatpush2.msra.mxu0 %v6268
        %6385 = vmatprep.subr.mxu0 0.0
        %6386 = vmatpush2.msra.mxu0 %v6267
        %6387 = vmatprep.mubr.f32.mxu0 %v6316
        %6388 = vmatmul.mubr.f32.gmra.mxu0 %v6315
        %v6389 = vpop.f32.mrf.mxu0
        %v6390 = vadd.f32 0.0, %v6389
        %v6391 = vpop.f32.mrf.mxu0
        %6392 = vdwg.mxu0
        %6393 = vmatprep.subr.mxu0 0.0
        %6394 = vmatpush1.msra.mxu0 %v6298
        %6395 = vmatprep.subr.mxu0 0.0
        %6396 = vmatpush1.msra.mxu0 %v6297
        %6397 = vmatprep.subr.mxu0 0.0
        %6398 = vmatpush1.msra.mxu0 %v6296
        %6399 = vmatprep.subr.mxu0 0.0
        %6400 = vmatpush1.msra.mxu0 %v6295
        %6401 = vmatprep.subr.mxu0 0.0
        %6402 = vmatpush1.msra.mxu0 %v6294
        %6403 = vmatprep.subr.mxu0 0.0
        %6404 = vmatpush1.msra.mxu0 %v6293
        %6405 = vmatprep.subr.mxu0 0.0
        %6406 = vmatpush1.msra.mxu0 %v6292
        %6407 = vmatprep.subr.mxu0 0.0
        %6408 = vmatpush1.msra.mxu0 %v6291
        %6409 = vmatprep.subr.mxu0 0.0
        %6410 = vmatpush1.msra.mxu0 %v6290
        %6411 = vmatprep.subr.mxu0 0.0
        %6412 = vmatpush1.msra.mxu0 %v6289
        %6413 = vmatprep.subr.mxu0 0.0
        %6414 = vmatpush1.msra.mxu0 %v6288
        %6415 = vmatprep.subr.mxu0 0.0
        %6416 = vmatpush1.msra.mxu0 %v6287
        %6417 = vmatprep.subr.mxu0 0.0
        %6418 = vmatpush1.msra.mxu0 %v6286
        %6419 = vmatprep.subr.mxu0 0.0
        %6420 = vmatpush1.msra.mxu0 %v6285
        %6421 = vmatprep.subr.mxu0 0.0
        %6422 = vmatpush1.msra.mxu0 %v6284
        %6423 = vmatprep.subr.mxu0 0.0
        %6424 = vmatpush1.msra.mxu0 %v6283
        %6425 = vmatprep.subr.mxu0 0.0
        %6426 = vmatpush2.msra.mxu0 %v6314
        %6427 = vmatprep.subr.mxu0 0.0
        %6428 = vmatpush2.msra.mxu0 %v6313
        %6429 = vmatprep.subr.mxu0 0.0
        %6430 = vmatpush2.msra.mxu0 %v6312
        %6431 = vmatprep.subr.mxu0 0.0
        %6432 = vmatpush2.msra.mxu0 %v6311
        %6433 = vmatprep.subr.mxu0 0.0
        %6434 = vmatpush2.msra.mxu0 %v6310
        %6435 = vmatprep.subr.mxu0 0.0
        %6436 = vmatpush2.msra.mxu0 %v6309
        %6437 = vmatprep.subr.mxu0 0.0
        %6438 = vmatpush2.msra.mxu0 %v6308
        %6439 = vmatprep.subr.mxu0 0.0
        %6440 = vmatpush2.msra.mxu0 %v6307
        %6441 = vmatprep.subr.mxu0 0.0
        %6442 = vmatpush2.msra.mxu0 %v6306
        %6443 = vmatprep.subr.mxu0 0.0
        %6444 = vmatpush2.msra.mxu0 %v6305
        %6445 = vmatprep.subr.mxu0 0.0
        %6446 = vmatpush2.msra.mxu0 %v6304
        %6447 = vmatprep.subr.mxu0 0.0
        %6448 = vmatpush2.msra.mxu0 %v6303
        %6449 = vmatprep.subr.mxu0 0.0
        %6450 = vmatpush2.msra.mxu0 %v6302
        %6451 = vmatprep.subr.mxu0 0.0
        %6452 = vmatpush2.msra.mxu0 %v6301
        %6453 = vmatprep.subr.mxu0 0.0
        %6454 = vmatpush2.msra.mxu0 %v6300
        %6455 = vmatprep.subr.mxu0 0.0
        %6456 = vmatpush2.msra.mxu0 %v6299
        %6457 = vmatprep.mubr.f32.mxu0 %v6318
        %6458 = vmatmul.mubr.f32.gmra.mxu0 %v6317
        %v6459 = vpop.f32.mrf.mxu0
        %v6460 = vadd.f32 %v6390, %v6459
        %v6461 = vpop.f32.mrf.mxu0
        %6462 = vdwg.mxu0
        %v6463 = vadd.f32 %v6249, %v6460
        %s6464 = scalar_lea.vmem [#allocation29], 1536
        %v6465 = vld [vmem:[%s6464] sm:$0xff]
        %v6466 = vld [vmem:[%s6464 + $0x8] sm:$0xff]
        %v6467 = vld [vmem:[%s6464 + $0x10] sm:$0xff]
        %v6468 = vld [vmem:[%s6464 + $0x18] sm:$0xff]
        %v6469 = vld [vmem:[%s6464 + $0x20] sm:$0xff]
        %v6470 = vld [vmem:[%s6464 + $0x28] sm:$0xff]
        %v6471 = vld [vmem:[%s6464 + $0x30] sm:$0xff]
        %v6472 = vld [vmem:[%s6464 + $0x38] sm:$0xff]
        %v6473 = vld [vmem:[%s6464 + $0x40] sm:$0xff]
        %v6474 = vld [vmem:[%s6464 + $0x48] sm:$0xff]
        %v6475 = vld [vmem:[%s6464 + $0x50] sm:$0xff]
        %v6476 = vld [vmem:[%s6464 + $0x58] sm:$0xff]
        %v6477 = vld [vmem:[%s6464 + $0x60] sm:$0xff]
        %v6478 = vld [vmem:[%s6464 + $0x68] sm:$0xff]
        %v6479 = vld [vmem:[%s6464 + $0x70] sm:$0xff]
        %v6480 = vld [vmem:[%s6464 + $0x78] sm:$0xff]
        %v6481 = vld [vmem:[%s6464 + $0x80] sm:$0xff]
        %v6482 = vld [vmem:[%s6464 + $0x88] sm:$0xff]
        %v6483 = vld [vmem:[%s6464 + $0x90] sm:$0xff]
        %v6484 = vld [vmem:[%s6464 + $0x98] sm:$0xff]
        %v6485 = vld [vmem:[%s6464 + $0xa0] sm:$0xff]
        %v6486 = vld [vmem:[%s6464 + $0xa8] sm:$0xff]
        %v6487 = vld [vmem:[%s6464 + $0xb0] sm:$0xff]
        %v6488 = vld [vmem:[%s6464 + $0xb8] sm:$0xff]
        %v6489 = vld [vmem:[%s6464 + $0xc0] sm:$0xff]
        %v6490 = vld [vmem:[%s6464 + $0xc8] sm:$0xff]
        %v6491 = vld [vmem:[%s6464 + $0xd0] sm:$0xff]
        %v6492 = vld [vmem:[%s6464 + $0xd8] sm:$0xff]
        %v6493 = vld [vmem:[%s6464 + $0xe0] sm:$0xff]
        %v6494 = vld [vmem:[%s6464 + $0xe8] sm:$0xff]
        %v6495 = vld [vmem:[%s6464 + $0xf0] sm:$0xff]
        %v6496 = vld [vmem:[%s6464 + $0xf8] sm:$0xff]
        %v6497 = vld [vmem:[%s6464 + $0x100] sm:$0xff]
        %v6498 = vld [vmem:[%s6464 + $0x108] sm:$0xff]
        %v6499 = vld [vmem:[%s6464 + $0x110] sm:$0xff]
        %v6500 = vld [vmem:[%s6464 + $0x118] sm:$0xff]
        %v6501 = vld [vmem:[%s6464 + $0x120] sm:$0xff]
        %v6502 = vld [vmem:[%s6464 + $0x128] sm:$0xff]
        %v6503 = vld [vmem:[%s6464 + $0x130] sm:$0xff]
        %v6504 = vld [vmem:[%s6464 + $0x138] sm:$0xff]
        %v6505 = vld [vmem:[%s6464 + $0x140] sm:$0xff]
        %v6506 = vld [vmem:[%s6464 + $0x148] sm:$0xff]
        %v6507 = vld [vmem:[%s6464 + $0x150] sm:$0xff]
        %v6508 = vld [vmem:[%s6464 + $0x158] sm:$0xff]
        %v6509 = vld [vmem:[%s6464 + $0x160] sm:$0xff]
        %v6510 = vld [vmem:[%s6464 + $0x168] sm:$0xff]
        %v6511 = vld [vmem:[%s6464 + $0x170] sm:$0xff]
        %v6512 = vld [vmem:[%s6464 + $0x178] sm:$0xff]
        %v6513 = vld [vmem:[%s6464 + $0x180] sm:$0xff]
        %v6514 = vld [vmem:[%s6464 + $0x188] sm:$0xff]
        %v6515 = vld [vmem:[%s6464 + $0x190] sm:$0xff]
        %v6516 = vld [vmem:[%s6464 + $0x198] sm:$0xff]
        %v6517 = vld [vmem:[%s6464 + $0x1a0] sm:$0xff]
        %v6518 = vld [vmem:[%s6464 + $0x1a8] sm:$0xff]
        %v6519 = vld [vmem:[%s6464 + $0x1b0] sm:$0xff]
        %v6520 = vld [vmem:[%s6464 + $0x1b8] sm:$0xff]
        %v6521 = vld [vmem:[%s6464 + $0x1c0] sm:$0xff]
        %v6522 = vld [vmem:[%s6464 + $0x1c8] sm:$0xff]
        %v6523 = vld [vmem:[%s6464 + $0x1d0] sm:$0xff]
        %v6524 = vld [vmem:[%s6464 + $0x1d8] sm:$0xff]
        %v6525 = vld [vmem:[%s6464 + $0x1e0] sm:$0xff]
        %v6526 = vld [vmem:[%s6464 + $0x1e8] sm:$0xff]
        %v6527 = vld [vmem:[%s6464 + $0x1f0] sm:$0xff]
        %v6528 = vld [vmem:[%s6464 + $0x1f8] sm:$0xff]
        %v6529 = vrot.slane %v5822, 3
        %v6530 = vrot.slane %v5823, 3
        %v6531 = vrot.slane %v5824, 3
        %v6532 = vrot.slane %v5825, 3
        %6537 = vmatprep.subr.mxu0 0.0
        %6538 = vmatpush1.msra.mxu0 %v6480
        %6539 = vmatprep.subr.mxu0 0.0
        %6540 = vmatpush1.msra.mxu0 %v6479
        %6541 = vmatprep.subr.mxu0 0.0
        %6542 = vmatpush1.msra.mxu0 %v6478
        %6543 = vmatprep.subr.mxu0 0.0
        %6544 = vmatpush1.msra.mxu0 %v6477
        %6545 = vmatprep.subr.mxu0 0.0
        %6546 = vmatpush1.msra.mxu0 %v6476
        %6547 = vmatprep.subr.mxu0 0.0
        %6548 = vmatpush1.msra.mxu0 %v6475
        %6549 = vmatprep.subr.mxu0 0.0
        %6550 = vmatpush1.msra.mxu0 %v6474
        %6551 = vmatprep.subr.mxu0 0.0
        %6552 = vmatpush1.msra.mxu0 %v6473
        %6553 = vmatprep.subr.mxu0 0.0
        %6554 = vmatpush1.msra.mxu0 %v6472
        %6555 = vmatprep.subr.mxu0 0.0
        %6556 = vmatpush1.msra.mxu0 %v6471
        %6557 = vmatprep.subr.mxu0 0.0
        %6558 = vmatpush1.msra.mxu0 %v6470
        %6559 = vmatprep.subr.mxu0 0.0
        %6560 = vmatpush1.msra.mxu0 %v6469
        %6561 = vmatprep.subr.mxu0 0.0
        %6562 = vmatpush1.msra.mxu0 %v6468
        %6563 = vmatprep.subr.mxu0 0.0
        %6564 = vmatpush1.msra.mxu0 %v6467
        %6565 = vmatprep.subr.mxu0 0.0
        %6566 = vmatpush1.msra.mxu0 %v6466
        %6567 = vmatprep.subr.mxu0 0.0
        %6568 = vmatpush1.msra.mxu0 %v6465
        %6569 = vmatprep.subr.mxu0 0.0
        %6570 = vmatpush2.msra.mxu0 %v6496
        %6571 = vmatprep.subr.mxu0 0.0
        %6572 = vmatpush2.msra.mxu0 %v6495
        %6573 = vmatprep.subr.mxu0 0.0
        %6574 = vmatpush2.msra.mxu0 %v6494
        %6575 = vmatprep.subr.mxu0 0.0
        %6576 = vmatpush2.msra.mxu0 %v6493
        %6577 = vmatprep.subr.mxu0 0.0
        %6578 = vmatpush2.msra.mxu0 %v6492
        %6579 = vmatprep.subr.mxu0 0.0
        %6580 = vmatpush2.msra.mxu0 %v6491
        %6581 = vmatprep.subr.mxu0 0.0
        %6582 = vmatpush2.msra.mxu0 %v6490
        %6583 = vmatprep.subr.mxu0 0.0
        %6584 = vmatpush2.msra.mxu0 %v6489
        %6585 = vmatprep.subr.mxu0 0.0
        %6586 = vmatpush2.msra.mxu0 %v6488
        %6587 = vmatprep.subr.mxu0 0.0
        %6588 = vmatpush2.msra.mxu0 %v6487
        %6589 = vmatprep.subr.mxu0 0.0
        %6590 = vmatpush2.msra.mxu0 %v6486
        %6591 = vmatprep.subr.mxu0 0.0
        %6592 = vmatpush2.msra.mxu0 %v6485
        %6593 = vmatprep.subr.mxu0 0.0
        %6594 = vmatpush2.msra.mxu0 %v6484
        %6595 = vmatprep.subr.mxu0 0.0
        %6596 = vmatpush2.msra.mxu0 %v6483
        %6597 = vmatprep.subr.mxu0 0.0
        %6598 = vmatpush2.msra.mxu0 %v6482
        %6599 = vmatprep.subr.mxu0 0.0
        %6600 = vmatpush2.msra.mxu0 %v6481
        %6601 = vmatprep.mubr.f32.mxu0 %v6530
        %6602 = vmatmul.mubr.f32.gmra.mxu0 %v6529
        %v6603 = vpop.f32.mrf.mxu0
        %v6604 = vadd.f32 0.0, %v6603
        %v6605 = vpop.f32.mrf.mxu0
        %6606 = vdwg.mxu0
        %6607 = vmatprep.subr.mxu0 0.0
        %6608 = vmatpush1.msra.mxu0 %v6512
        %6609 = vmatprep.subr.mxu0 0.0
        %6610 = vmatpush1.msra.mxu0 %v6511
        %6611 = vmatprep.subr.mxu0 0.0
        %6612 = vmatpush1.msra.mxu0 %v6510
        %6613 = vmatprep.subr.mxu0 0.0
        %6614 = vmatpush1.msra.mxu0 %v6509
        %6615 = vmatprep.subr.mxu0 0.0
        %6616 = vmatpush1.msra.mxu0 %v6508
        %6617 = vmatprep.subr.mxu0 0.0
        %6618 = vmatpush1.msra.mxu0 %v6507
        %6619 = vmatprep.subr.mxu0 0.0
        %6620 = vmatpush1.msra.mxu0 %v6506
        %6621 = vmatprep.subr.mxu0 0.0
        %6622 = vmatpush1.msra.mxu0 %v6505
        %6623 = vmatprep.subr.mxu0 0.0
        %6624 = vmatpush1.msra.mxu0 %v6504
        %6625 = vmatprep.subr.mxu0 0.0
        %6626 = vmatpush1.msra.mxu0 %v6503
        %6627 = vmatprep.subr.mxu0 0.0
        %6628 = vmatpush1.msra.mxu0 %v6502
        %6629 = vmatprep.subr.mxu0 0.0
        %6630 = vmatpush1.msra.mxu0 %v6501
        %6631 = vmatprep.subr.mxu0 0.0
        %6632 = vmatpush1.msra.mxu0 %v6500
        %6633 = vmatprep.subr.mxu0 0.0
        %6634 = vmatpush1.msra.mxu0 %v6499
        %6635 = vmatprep.subr.mxu0 0.0
        %6636 = vmatpush1.msra.mxu0 %v6498
        %6637 = vmatprep.subr.mxu0 0.0
        %6638 = vmatpush1.msra.mxu0 %v6497
        %6639 = vmatprep.subr.mxu0 0.0
        %6640 = vmatpush2.msra.mxu0 %v6528
        %6641 = vmatprep.subr.mxu0 0.0
        %6642 = vmatpush2.msra.mxu0 %v6527
        %6643 = vmatprep.subr.mxu0 0.0
        %6644 = vmatpush2.msra.mxu0 %v6526
        %6645 = vmatprep.subr.mxu0 0.0
        %6646 = vmatpush2.msra.mxu0 %v6525
        %6647 = vmatprep.subr.mxu0 0.0
        %6648 = vmatpush2.msra.mxu0 %v6524
        %6649 = vmatprep.subr.mxu0 0.0
        %6650 = vmatpush2.msra.mxu0 %v6523
        %6651 = vmatprep.subr.mxu0 0.0
        %6652 = vmatpush2.msra.mxu0 %v6522
        %6653 = vmatprep.subr.mxu0 0.0
        %6654 = vmatpush2.msra.mxu0 %v6521
        %6655 = vmatprep.subr.mxu0 0.0
        %6656 = vmatpush2.msra.mxu0 %v6520
        %6657 = vmatprep.subr.mxu0 0.0
        %6658 = vmatpush2.msra.mxu0 %v6519
        %6659 = vmatprep.subr.mxu0 0.0
        %6660 = vmatpush2.msra.mxu0 %v6518
        %6661 = vmatprep.subr.mxu0 0.0
        %6662 = vmatpush2.msra.mxu0 %v6517
        %6663 = vmatprep.subr.mxu0 0.0
        %6664 = vmatpush2.msra.mxu0 %v6516
        %6665 = vmatprep.subr.mxu0 0.0
        %6666 = vmatpush2.msra.mxu0 %v6515
        %6667 = vmatprep.subr.mxu0 0.0
        %6668 = vmatpush2.msra.mxu0 %v6514
        %6669 = vmatprep.subr.mxu0 0.0
        %6670 = vmatpush2.msra.mxu0 %v6513
        %6671 = vmatprep.mubr.f32.mxu0 %v6532
        %6672 = vmatmul.mubr.f32.gmra.mxu0 %v6531
        %v6673 = vpop.f32.mrf.mxu0
        %v6674 = vadd.f32 %v6604, %v6673
        %v6675 = vpop.f32.mrf.mxu0
        %6676 = vdwg.mxu0
        %v6677 = vadd.f32 %v6463, %v6674
        %v6678 = vsub.f32 0.0, %v6677
        %v6679 = vmul.f32 %v6678, 1.442695
        %v6680 = vpow.pop %v6679
        %v6681 = vadd.f32 %v6680, 1.0
        %v6682 = vrcp.pop %v6681
        %v6683 = vmul.f32 1.0, %v6682
        %vm6684 = vcmp.ge.s32.totalorder %v772, 1
        %vm6685 = vcmp.le.s32.totalorder %v772, 10
        %vm6686 = vmand %vm6684, %vm6685
        %v6687 = vsel %vm6686, %v6677, -1e+30
        %v6688 = vsel %vm1676, %v6687, -inf
        %6689 = vmax.xlane.f32.xlu0 %v6688
        %v6690 = vpop.xlane.xlu0 %6689
        %v6691 = vsub.f32 %v6687, %v6690
        %v6692 = vmul.f32 %v6691, 1.442695
        %v6693 = vpow.pop %v6692
        %v6694 = vsel %vm6686, %v6693, 0.0
        %v6695 = vsel %vm1676, %v6694, 0.0
        %6696 = vadd.xlane.f32.xlu0 %v6695
        %v6697 = vpop.xlane.xlu0 %6696
        %v6698 = vrcp.pop %v6697
        %v6699 = vmul.f32 %v6694, %v6698
        %vm6700 = vcmp.eq.s32.totalorder %v772, 0
        %v6701 = vsel %vm6700, %v6683, %v6699
        %6702 = vst [vmem:[%s700] sm:$0x1] %v6701
        %s6703 = sand.u32 %s367, 1
        %s6704 = scalar_lea.sflag [#allocation10], %s6703
        %s6705 = sand.u32 %s367, 1
        %s6706 = scalar_lea.vmem [#allocation32], %s6705
        // Predicated region
        $region141: #{tpu_custom_call.1} parent=79 // pred_check
          %p6707 = pneg %p377
        $region142: #{tpu_custom_call.1} parent=79 // pred_check_branch
          %6709 = sbr.rel (%p6707) target = $region144
        $region143: #{tpu_custom_call.1} parent=79 // pred_region
          %s6711 = ssub.s32 16, 16
          %6712 = vsyncadd %s6704, %s6711
          %s6713 = smul.addr %s39, 16
          %s6714 = scalar_lea.hbm %s15, %s6713
          %s6716 = sshll.u32 %s6706, 4
          %s6717 = int_to_ptr.vmem [resolvable:$true] %s6716
          %6719 = dma.vmem_to_hbm [thread:$0]  %s6717, 16, %s6714, %s6704
        $region144: #{tpu_custom_call.1} parent=79 // pred_fallthru
          _
      $region80: #{tpu_custom_call.1} parent=5 // pred_fallthru
        _
      %p6720 = scmp.le.s32.totalorder 2, %s34
      // Predicated region
      $region145: #{tpu_custom_call.1} parent=5 // pred_check
        %p6721 = pneg %p6720
      $region146: #{tpu_custom_call.1} parent=5 // pred_check_branch
        %6723 = sbr.rel (%p6721) target = $region148
      $region147: #{tpu_custom_call.1} parent=5 // pred_region
        %s6724 = ssub.s32 %s34, 2
        // Predicated region
        $region149: #{tpu_custom_call.1} parent=147 // pred_check
          %p6725 = pneg %p383
        $region150: #{tpu_custom_call.1} parent=147 // pred_check_branch
          %6727 = sbr.rel (%p6725) target = $region152
        $region151: #{tpu_custom_call.1} parent=147 // pred_region
          %s6728 = sand.u32 %s368, 1
          %s6729 = scalar_lea.sflag [#allocation10], %s6728
          %s6730 = sand.u32 %s368, 1
          %s6731 = scalar_lea.vmem [#allocation32], %s6730
          %6732 = dma.done %s6729, 16
        $region152: #{tpu_custom_call.1} parent=147 // pred_fallthru
          _
      $region148: #{tpu_custom_call.1} parent=5 // pred_fallthru
        _
    $region6: #{tpu_custom_call.1} parent=1 // loop_footer
      %s38 = sadd.s32 1, %s34
    $region7: #{tpu_custom_call.1} parent=1 // loop_footer_branch
      %33 = sbr.rel target = $region3
    $region8: #{tpu_custom_call.1} parent=1 // loop_exit
      _
    %6733 = vsyncpa [#allocation9], 1
    %s6734 = scalar_lea.sflag [#allocation9], 1
    %6735 = vsyncpa %s6734, 1
    %6736 = vsyncpa [#allocation12], 1
    %6737 = vsyncpa [#allocation15], 1
    %6738 = vsyncpa [#allocation18], 1
    %6739 = vsyncpa [#allocation21], 1
    %6740 = vsyncpa [#allocation24], 1
    %6741 = vsyncpa [#allocation27], 1
    %6742 = vsyncpa [#allocation30], 1
    %6743 = vsyncpa [#allocation10], 1
    %s6744 = scalar_lea.sflag [#allocation10], 1
    %6745 = vsyncpa %s6744, 1

</llo_original>
